<compile_context>
chip_gen: v6e
topology: v6e:2x2x1
jax: 0.10.0
libtpu: 0.0.40
codegen_flags: <defaults>
</compile_context>

<pallas_src>
import math
from functools import partial

import jax
import jax.numpy as jnp
from jax.experimental import pallas as pl
from jax.experimental.pallas import tpu as pltpu

WEIGHT_DTYPE = jnp.bfloat16          # MXU operands
ACT_DTYPE = jnp.bfloat16             # inter-kernel activations
VMEM_LIMIT = 48 * 1024 * 1024        # below v7x's 64 MiB physical; safe everywhere

# matmul tile preferences (fallback to a smaller divisor or the full dim)
TM, TN, TK = 256, 512, 512
T_ATTN = 256                         # attention q/kv tile preference


def _cp(dim_sems):
    return pltpu.CompilerParams(dimension_semantics=dim_sems,
                                vmem_limit_bytes=VMEM_LIMIT)


def _tile(dim, pref):
    """Largest lane/sublane-friendly tile <= pref dividing dim, else full dim."""
    for cand in (pref, 512, 256, 128):
        if cand <= pref and dim % cand == 0:
            return cand
    # TODO(synk): ragged dims (e.g. vocab=50257) should use cdiv grids + masked
    # edge tiles rather than a full-dim fallback.
    return dim


# --------------------------- Pallas kernels ---------------------------------

def matmul_kernel(x_ref, w_ref, o_ref, acc_ref):
    # out = x @ w   (w pre-transposed (K, N); bf16 operands, f32 accumulate)
    @pl.when(pl.program_id(2) == 0)
    def _():
        acc_ref[...] = jnp.zeros_like(acc_ref)

    acc_ref[...] += jnp.dot(x_ref[...], w_ref[...],
                            preferred_element_type=jnp.float32)

    @pl.when(pl.program_id(2) == pl.num_programs(2) - 1)
    def _():
        o_ref[...] = acc_ref[...].astype(o_ref.dtype)


def lmhead_kernel(x_ref, w_ref, b_ref, s_ref, o_ref, acc_ref):
    # out = (x @ w + b) * sz
    @pl.when(pl.program_id(2) == 0)
    def _():
        acc_ref[...] = jnp.zeros_like(acc_ref)

    acc_ref[...] += jnp.dot(x_ref[...], w_ref[...],
                            preferred_element_type=jnp.float32)

    @pl.when(pl.program_id(2) == pl.num_programs(2) - 1)
    def _():
        o_ref[...] = ((acc_ref[...] + b_ref[...]) * s_ref[...]).astype(o_ref.dtype)


def uv_gate_kernel(x_ref, wu_ref, wv_ref, su_ref, sv_ref, o_ref,
                   u_acc, v_acc, *, sqrt_dim):
    # fused: u = x@Wu^T * su,  v = x@Wv^T * sv * sqrt(dim),  out = u * silu(v)
    @pl.when(pl.program_id(2) == 0)
    def _():
        u_acc[...] = jnp.zeros_like(u_acc)
        v_acc[...] = jnp.zeros_like(v_acc)

    xb = x_ref[...]
    u_acc[...] += jnp.dot(xb, wu_ref[...], preferred_element_type=jnp.float32)
    v_acc[...] += jnp.dot(xb, wv_ref[...], preferred_element_type=jnp.float32)

    @pl.when(pl.program_id(2) == pl.num_programs(2) - 1)
    def _():
        u = u_acc[...] * su_ref[...]
        v = v_acc[...] * sv_ref[...] * sqrt_dim
        o_ref[...] = (u * (v * jax.nn.sigmoid(v))).astype(o_ref.dtype)


def proj_resnorm_kernel(h_ref, w_ref, xres_ref, lr_ref, o_ref, acc_ref):
    # fused: h = normalize(h_in @ Wo^T); out = normalize(x + (h - x) * lr)
    @pl.when(pl.program_id(1) == 0)
    def _():
        acc_ref[...] = jnp.zeros_like(acc_ref)

    acc_ref[...] += jnp.dot(h_ref[...], w_ref[...],
                            preferred_element_type=jnp.float32)

    @pl.when(pl.program_id(1) == pl.num_programs(1) - 1)
    def _():
        h = acc_ref[...]
        h = h * jax.lax.rsqrt(jnp.maximum(jnp.sum(h * h, -1, keepdims=True), 1e-24))
        x = xres_ref[...].astype(jnp.float32)
        y = x + (h - x) * lr_ref[...]
        y = y * jax.lax.rsqrt(jnp.maximum(jnp.sum(y * y, -1, keepdims=True), 1e-24))
        o_ref[...] = y.astype(o_ref.dtype)


def rope_scale_kernel(q_ref, k_ref, cos_ref, sin_ref, sqk_ref, qo_ref, ko_ref, *,
                      scale):
    # RoPE (rotate-half via XLU roll, sign folded into sin table) + sqk scale.
    # softmax scale sqrt(head_dim) is folded into q here (hoisted out of the
    # flash-attention inner loop).
    half = q_ref.shape[-1] // 2
    cos = cos_ref[...]
    sin = sin_ref[...]
    sqk = sqk_ref[...]                       # (1, hd) f32

    def rope(t):
        # positive axis index (pltpu.roll rejects axis=-1)
        return t * cos + pltpu.roll(t, half, axis=1) * sin

    q = rope(q_ref[...].astype(jnp.float32)) * (sqk * scale)
    k = rope(k_ref[...].astype(jnp.float32)) * sqk
    qo_ref[...] = q.astype(qo_ref.dtype)
    ko_ref[...] = k.astype(ko_ref.dtype)


def flash_attn_kernel(q_ref, k_ref, v_ref, o_ref, m_sc, l_sc, acc_sc, *, tq, tkv):
    # one (batch, head, q-tile) accumulates over kv-tiles (online softmax).
    # q already carries rope*sqk*sqrt(hd); k carries rope*sqk.  All MXU dots
    # take bf16 operands with f32 accumulation.
    qi = pl.program_id(2)
    ki = pl.program_id(3)

    @pl.when(ki == 0)
    def _():
        m_sc[...] = jnp.full_like(m_sc, -jnp.inf)
        l_sc[...] = jnp.zeros_like(l_sc)
        acc_sc[...] = jnp.zeros_like(acc_sc)

    def update(masked):
        q = q_ref[...]                                       # (tq, hd) bf16
        k = k_ref[...]                                       # (tkv, hd) bf16
        s = jax.lax.dot_general(q, k, (((1,), (1,)), ((), ())),
                                preferred_element_type=jnp.float32)
        if masked:
            row = qi * tq + jax.lax.broadcasted_iota(jnp.int32, (tq, tkv), 0)
            col = ki * tkv + jax.lax.broadcasted_iota(jnp.int32, (tq, tkv), 1)
            s = jnp.where(row >= col, s, -1e30)
        m_prev = m_sc[...]
        m_new = jnp.maximum(m_prev, jnp.max(s, axis=-1, keepdims=True))
        alpha = jnp.exp(m_prev - m_new)
        p = jnp.exp(s - m_new)
        l_sc[...] = alpha * l_sc[...] + jnp.sum(p, axis=-1, keepdims=True)
        acc_sc[...] = alpha * acc_sc[...] + jnp.dot(
            p.astype(v_ref.dtype), v_ref[...], preferred_element_type=jnp.float32)
        m_sc[...] = m_new

    @pl.when(ki < qi)            # fully-visible tile: no mask needed
    def _():
        update(masked=False)

    @pl.when(ki == qi)           # diagonal tile: apply causal mask
    def _():
        update(masked=True)

    # tiles with ki > qi are causally dead: no compute, and their K/V blocks
    # are never DMA'd (index_map clamps ki to qi).

    @pl.when(ki == pl.num_programs(3) - 1)
    def _():
        inv_l = pl.reciprocal(l_sc[...], approx=True)
        o_ref[...] = (acc_sc[...] * inv_l).astype(o_ref.dtype)


# --------------------------- pallas_call wrappers ----------------------------

def linear(x, wt):
    """x: (M, K) bf16, wt: (K, N) bf16 pre-transposed weight -> (M, N) bf16."""
    M, K = x.shape
    N = wt.shape[1]
    tm, tn, tk = _tile(M, TM), _tile(N, TN), _tile(K, TK)
    grid = (M // tm, N // tn, K // tk)
    return pl.pallas_call(
        matmul_kernel,
        grid=grid,
        in_specs=[pl.BlockSpec((tm, tk), lambda i, j, k: (i, k)),
                  pl.BlockSpec((tk, tn), lambda i, j, k: (k, j))],
        out_specs=pl.BlockSpec((tm, tn), lambda i, j, k: (i, j)),
        out_shape=jax.ShapeDtypeStruct((M, N), ACT_DTYPE),
        scratch_shapes=[pltpu.VMEM((tm, tn), jnp.float32)],
        compiler_params=_cp(("parallel", "parallel", "arbitrary")),
    )(x, wt)


def lmhead(x, wt, b, sz):
    M, K = x.shape
    N = wt.shape[1]
    tm, tn, tk = _tile(M, TM), _tile(N, TN), _tile(K, TK)
    grid = (M // tm, N // tn, K // tk)
    return pl.pallas_call(
        lmhead_kernel,
        grid=grid,
        in_specs=[pl.BlockSpec((tm, tk), lambda i, j, k: (i, k)),
                  pl.BlockSpec((tk, tn), lambda i, j, k: (k, j)),
                  pl.BlockSpec((1, tn), lambda i, j, k: (0, j)),
                  pl.BlockSpec((1, tn), lambda i, j, k: (0, j))],
        out_specs=pl.BlockSpec((tm, tn), lambda i, j, k: (i, j)),
        out_shape=jax.ShapeDtypeStruct((M, N), jnp.float32),
        scratch_shapes=[pltpu.VMEM((tm, tn), jnp.float32)],
        compiler_params=_cp(("parallel", "parallel", "arbitrary")),
    )(x, wt, b, sz)


def uv_gate(x, wu_t, wv_t, su, sv):
    M, K = x.shape
    N = wu_t.shape[1]
    tm, tn, tk = _tile(M, TM), _tile(N, TN), _tile(K, TK)
    grid = (M // tm, N // tn, K // tk)
    return pl.pallas_call(
        partial(uv_gate_kernel, sqrt_dim=float(K) ** 0.5),
        grid=grid,
        in_specs=[pl.BlockSpec((tm, tk), lambda i, j, k: (i, k)),
                  pl.BlockSpec((tk, tn), lambda i, j, k: (k, j)),
                  pl.BlockSpec((tk, tn), lambda i, j, k: (k, j)),
                  pl.BlockSpec((1, tn), lambda i, j, k: (0, j)),
                  pl.BlockSpec((1, tn), lambda i, j, k: (0, j))],
        out_specs=pl.BlockSpec((tm, tn), lambda i, j, k: (i, j)),
        out_shape=jax.ShapeDtypeStruct((M, N), ACT_DTYPE),
        scratch_shapes=[pltpu.VMEM((tm, tn), jnp.float32),
                        pltpu.VMEM((tm, tn), jnp.float32)],
        compiler_params=_cp(("parallel", "parallel", "arbitrary")),
    )(x, wu_t, wv_t, su, sv)


def proj_resnorm(h, wt, x_res, lr):
    """fused o_proj + L2-norm + residual-lerp + L2-norm (full-C output rows)."""
    M, K = h.shape
    C = wt.shape[1]
    tm, tk = _tile(M, min(TM, 128)), _tile(K, TK)   # tm=128 keeps v7x VMEM headroom
    grid = (M // tm, K // tk)
    return pl.pallas_call(
        proj_resnorm_kernel,
        grid=grid,
        in_specs=[pl.BlockSpec((tm, tk), lambda i, k: (i, k)),
                  pl.BlockSpec((tk, C), lambda i, k: (k, 0)),
                  pl.BlockSpec((tm, C), lambda i, k: (i, 0)),
                  pl.BlockSpec((1, C), lambda i, k: (0, 0))],
        out_specs=pl.BlockSpec((tm, C), lambda i, k: (i, 0)),
        out_shape=jax.ShapeDtypeStruct((M, C), ACT_DTYPE),
        scratch_shapes=[pltpu.VMEM((tm, C), jnp.float32)],
        compiler_params=_cp(("parallel", "arbitrary")),
    )(h, wt, x_res, lr)


def rope_scale(qkv, cos, sin_signed, sqk, B, T, H, hd):
    """Apply RoPE + sqk (+ sqrt(hd) on q) once to the fused QKV output.

    qkv: (B*T, 3C) bf16.  Returns (q_r, k_r) each (B*T, C) bf16."""
    C = H * hd
    M = B * T
    tr = _tile(T, 256)
    nt = T // tr
    grid = (B, nt, H)
    scale = float(hd) ** 0.5

    q_spec = pl.BlockSpec((tr, hd), lambda b, ti, h: (b * nt + ti, h))
    k_spec = pl.BlockSpec((tr, hd), lambda b, ti, h: (b * nt + ti, H + h))
    tab_spec = pl.BlockSpec((tr, hd), lambda b, ti, h: (ti, 0))
    sqk_spec = pl.BlockSpec((None, 1, hd), lambda b, ti, h: (h, 0, 0))
    out_spec = pl.BlockSpec((tr, hd), lambda b, ti, h: (b * nt + ti, h))

    return pl.pallas_call(
        partial(rope_scale_kernel, scale=scale),
        grid=grid,
        in_specs=[q_spec, k_spec, tab_spec, tab_spec, sqk_spec],
        out_specs=(out_spec, out_spec),
        out_shape=(jax.ShapeDtypeStruct((M, C), ACT_DTYPE),
                   jax.ShapeDtypeStruct((M, C), ACT_DTYPE)),
        compiler_params=_cp(("parallel", "parallel", "parallel")),
    )(qkv, qkv, cos, sin_signed, sqk)


def flash_attention(q_r, k_r, qkv, B, T, H, hd):
    """q_r/k_r: (B*T, C) roped+scaled bf16; V is read straight out of qkv.

    Returns (B*T, C) attention output (bf16), no transposes anywhere."""
    C = H * hd
    tq = _tile(T, T_ATTN)
    tkv = tq                                   # keep q/kv tiles equal
    nq, nk = T // tq, T // tkv
    grid = (B, H, nq, nk)

    q_spec = pl.BlockSpec((tq, hd), lambda b, h, qi, ki: (b * nq + qi, h))
    # clamp kv block to the diagonal: causally-dead tiles re-use the previous
    # block (no DMA issued for them).
    k_spec = pl.BlockSpec(
        (tkv, hd), lambda b, h, qi, ki: (b * nk + jnp.minimum(ki, qi), h))
    v_spec = pl.BlockSpec(
        (tkv, hd), lambda b, h, qi, ki: (b * nk + jnp.minimum(ki, qi), 2 * H + h))
    out_spec = pl.BlockSpec((tq, hd), lambda b, h, qi, ki: (b * nq + qi, h))

    return pl.pallas_call(
        partial(flash_attn_kernel, tq=tq, tkv=tkv),
        grid=grid,
        in_specs=[q_spec, k_spec, v_spec],
        out_specs=out_spec,
        out_shape=jax.ShapeDtypeStruct((B * T, C), ACT_DTYPE),
        scratch_shapes=[pltpu.VMEM((tq, 1), jnp.float32),
                        pltpu.VMEM((tq, 1), jnp.float32),
                        pltpu.VMEM((tq, hd), jnp.float32)],
        compiler_params=_cp(("parallel", "parallel", "parallel", "arbitrary")),
    )(q_r, k_r, qkv)


# --------------------------- model forward ----------------------------------

def block_forward(x2, p, cos, sin_signed, B, T, n_heads):
    C = x2.shape[1]
    hd = C // n_heads
    # fused QKV projection (single matmul, no transposes around attention)
    qkv = linear(x2, p["wqkv_t"])                                    # (B*T, 3C)
    # RoPE + sqk + softmax scale applied once (hoisted out of attention)
    q_r, k_r = rope_scale(qkv, cos, sin_signed, p["sqk"], B, T, n_heads, hd)
    attn_out = flash_attention(q_r, k_r, qkv, B, T, n_heads, hd)     # (B*T, C)
    # o_proj + normalize + residual-lerp + normalize (fused)
    x2 = proj_resnorm(attn_out, p["wo_t"], x2, p["lr_a"])
    # fused u/v projection + silu gate
    g = uv_gate(x2, p["wu_t"], p["wv_t"], p["su"], p["sv"])          # (B*T, hidden)
    # mlp o_proj + normalize + residual-lerp + normalize (fused)
    x2 = proj_resnorm(g, p["wo_mlp_t"], x2, p["lr_m"])
    return x2


def ngpt_forward(tokens, params, n_heads):
    # TODO(synk): embedding gather (wte row lookup) kept in plain JAX glue.
    # TODO(synk): dropout is identity here (inference forward).
    x = jnp.take(params["wte"], tokens, axis=0)                      # (B, T, C) f32
    B, T, C = x.shape
    x2 = x.reshape(B * T, C).astype(ACT_DTYPE)
    cos = params["cos"][:T]
    sin_signed = params["sin"][:T]
    for p in params["blocks"]:
        x2 = block_forward(x2, p, cos, sin_signed, B, T, n_heads)
    logits = lmhead(x2, params["lmhead_wt"], params["lmhead_b"], params["sz"])
    return logits.reshape(B, T, -1)


# --------------------------- parameter init ---------------------------------

def _l2n(w, axis=-1):
    n = jnp.sqrt(jnp.sum(w * w, axis=axis, keepdims=True))
    return w / jnp.maximum(n, 1e-12)


def init_params(key, vocab, dim, max_length, n_heads, n_blocks,
                w_dtype=WEIGHT_DTYPE):
    hd = dim // n_heads
    hidden = 4 * dim
    keys = iter(jax.random.split(key, 4 + 8 * n_blocks))

    def nrm(shape):
        return jax.random.normal(next(keys), shape, dtype=jnp.float32)

    # RoPE tables, lane-dense (max_length, head_dim); sign folded into sin.
    positions = jnp.arange(max_length, dtype=jnp.float32)
    theta = 1.0 / (10000.0 ** (jnp.arange(0, hd, 2, dtype=jnp.float32) / hd))
    pt = positions[:, None] * theta[None, :]                          # (L, hd/2)
    cos_full = jnp.concatenate([jnp.cos(pt), jnp.cos(pt)], axis=-1)   # (L, hd)
    sin_sgn = jnp.concatenate([-jnp.sin(pt), jnp.sin(pt)], axis=-1)   # (L, hd)

    blocks = []
    for _ in range(n_blocks):
        wq = _l2n(nrm((dim, dim)))
        wk = _l2n(nrm((dim, dim)))
        wv = _l2n(nrm((dim, dim)))
        wo = _l2n(nrm((dim, dim)), axis=0)
        wu = _l2n(nrm((hidden, dim)))
        wvm = _l2n(nrm((hidden, dim)))
        wom = _l2n(nrm((dim, hidden)), axis=0)
        blocks.append({
            # weights stored once, pre-transposed (K, N), bf16 for the MXU
            "wqkv_t": jnp.concatenate([wq.T, wk.T, wv.T], axis=1).astype(w_dtype),
            "wo_t": wo.T.astype(w_dtype),
            "wu_t": wu.T.astype(w_dtype),
            "wv_t": wvm.T.astype(w_dtype),
            "wo_mlp_t": wom.T.astype(w_dtype),
            # actual_sqk = sqk * restore_scale_sqk = ones at init
            "sqk": jnp.ones((n_heads, 1, hd), jnp.float32),
            "su": jnp.ones((1, hidden), jnp.float32),
            "sv": jnp.ones((1, hidden), jnp.float32),
            # actual_lr = lr * restore_scale = 0.05 at init
            "lr_a": jnp.full((1, dim), 0.05, jnp.float32),
            "lr_m": jnp.full((1, dim), 0.05, jnp.float32),
        })

    bound = 1.0 / math.sqrt(dim)
    params = {
        "wte": _l2n(nrm((vocab, dim))),                               # f32 gather table
        "lmhead_wt": _l2n(nrm((vocab, dim))).T.astype(w_dtype),       # (dim, vocab)
        "lmhead_b": jax.random.uniform(next(keys), (1, vocab), jnp.float32,
                                       minval=-bound, maxval=bound),
        # actual_sz = sz * restore_scale = ones at init
        "sz": jnp.ones((1, vocab), jnp.float32),
        "cos": cos_full,
        "sin": sin_sgn,
        "blocks": blocks,
    }
    return params


# --------------------------- main --------------------------------------------

if __name__ == "__main__":
    # Small but lane-aligned demo shapes: head_dim = 128 so attention tiles
    # are lane-dense; everything else falls back to full-dim / divisor tiles.
    VOCAB, DIM, MAX_LEN, N_HEADS, N_BLOCKS = 256, 256, 32, 2, 2
    B, T = 2, 32

    key = jax.random.PRNGKey(0)
    pkey, tkey = jax.random.split(key)
    params = init_params(pkey, VOCAB, DIM, MAX_LEN, N_HEADS, N_BLOCKS)
    tokens = jax.random.randint(tkey, (B, T), 0, VOCAB, dtype=jnp.int32)

    fwd = jax.jit(ngpt_forward, static_argnums=(2,))
    out = jax.block_until_ready(fwd(tokens, params, N_HEADS))

    assert out.shape == (B, T, VOCAB), out.shape
    assert bool(jnp.all(jnp.isfinite(out)))
    print("KERNEL_OK")
</pallas_src>

<mosaic_0001>
module attributes {stable_mosaic.version = 11 : i64} {
  func.func @rope_scale_kernel(%arg0: i32, %arg1: i32, %arg2: i32, %arg3: memref<32x128xbf16, #tpu.memory_space<vmem>>, %arg4: memref<32x128xbf16, #tpu.memory_space<vmem>>, %arg5: memref<32x128xf32, #tpu.memory_space<vmem>>, %arg6: memref<32x128xf32, #tpu.memory_space<vmem>>, %arg7: memref<1x1x128xf32, #tpu.memory_space<vmem>>, %arg8: memref<32x128xbf16, #tpu.memory_space<vmem>>, %arg9: memref<32x128xbf16, #tpu.memory_space<vmem>>) attributes {dimension_semantics = [#tpu.dimension_semantics<parallel>, #tpu.dimension_semantics<parallel>, #tpu.dimension_semantics<parallel>], iteration_bounds = array<i64: 2, 1, 2>, scalar_prefetch = 0 : i64, scratch_operands = 0 : i64, tpu.core_type = #tpu.core_type<tc>, window_params = [{transform_indices = @transform_0, window_bounds = array<i64: 32, 128>}, {transform_indices = @transform_1, window_bounds = array<i64: 32, 128>}, {transform_indices = @transform_2, window_bounds = array<i64: 32, 128>}, {transform_indices = @transform_3, window_bounds = array<i64: 32, 128>}, {transform_indices = @transform_4, window_bounds = array<i64: 1, 1, 128>}, {transform_indices = @transform_5, window_bounds = array<i64: 32, 128>}, {transform_indices = @transform_6, window_bounds = array<i64: 32, 128>}]} {
    %c0 = arith.constant 0 : index
    %c0_0 = arith.constant 0 : index
    %0 = vector.load %arg5[%c0, %c0_0] : memref<32x128xf32, #tpu.memory_space<vmem>>, vector<32x128xf32>
    %c0_1 = arith.constant 0 : index
    %c0_2 = arith.constant 0 : index
    %1 = vector.load %arg6[%c0_1, %c0_2] : memref<32x128xf32, #tpu.memory_space<vmem>>, vector<32x128xf32>
    %c0_3 = arith.constant 0 : index
    %c0_4 = arith.constant 0 : index
    %c0_5 = arith.constant 0 : index
    %2 = vector.load %arg7[%c0_3, %c0_4, %c0_5] : memref<1x1x128xf32, #tpu.memory_space<vmem>>, vector<1x1x128xf32>
    %3 = vector.shape_cast %2 : vector<1x1x128xf32> to vector<1x128xf32>
    %c0_6 = arith.constant 0 : index
    %c0_7 = arith.constant 0 : index
    %4 = vector.load %arg3[%c0_6, %c0_7] : memref<32x128xbf16, #tpu.memory_space<vmem>>, vector<32x128xbf16>
    %5 = arith.extf %4 : vector<32x128xbf16> to vector<32x128xf32>
    %6 = arith.mulf %5, %0 : vector<32x128xf32>
    %c64_i32 = arith.constant 64 : i32
    %7 = tpu.dynamic_rotate %5 by %c64_i32 dim 1 : vector<32x128xf32>, i32 -> vector<32x128xf32>
    %8 = arith.mulf %7, %1 : vector<32x128xf32>
    %9 = arith.addf %6, %8 : vector<32x128xf32>
    %cst = arith.constant 11.3137083 : f32
    %10 = vector.broadcast %cst : f32 to vector<1x128xf32>
    %11 = arith.mulf %3, %10 : vector<1x128xf32>
    %12 = vector.broadcast %11 : vector<1x128xf32> to vector<32x128xf32>
    %13 = arith.mulf %9, %12 : vector<32x128xf32>
    %c0_8 = arith.constant 0 : index
    %c0_9 = arith.constant 0 : index
    %14 = vector.load %arg4[%c0_8, %c0_9] : memref<32x128xbf16, #tpu.memory_space<vmem>>, vector<32x128xbf16>
    %15 = arith.extf %14 : vector<32x128xbf16> to vector<32x128xf32>
    %16 = arith.mulf %15, %0 : vector<32x128xf32>
    %c64_i32_10 = arith.constant 64 : i32
    %17 = tpu.dynamic_rotate %15 by %c64_i32_10 dim 1 : vector<32x128xf32>, i32 -> vector<32x128xf32>
    %18 = arith.mulf %17, %1 : vector<32x128xf32>
    %19 = arith.addf %16, %18 : vector<32x128xf32>
    %20 = vector.broadcast %3 : vector<1x128xf32> to vector<32x128xf32>
    %21 = arith.mulf %19, %20 : vector<32x128xf32>
    %22 = arith.truncf %13 : vector<32x128xf32> to vector<32x128xbf16>
    %c0_11 = arith.constant 0 : index
    %c0_12 = arith.constant 0 : index
    %23 = vector.load %arg8[%c0_11, %c0_12] : memref<32x128xbf16, #tpu.memory_space<vmem>>, vector<32x128xbf16>
    tpu.vector_store %arg8[%c0_11, %c0_12], %22 {strides = array<i32>} : memref<32x128xbf16, #tpu.memory_space<vmem>>, vector<32x128xbf16>,
    %24 = arith.truncf %21 : vector<32x128xf32> to vector<32x128xbf16>
    %c0_13 = arith.constant 0 : index
    %c0_14 = arith.constant 0 : index
    %25 = vector.load %arg9[%c0_13, %c0_14] : memref<32x128xbf16, #tpu.memory_space<vmem>>, vector<32x128xbf16>
    tpu.vector_store %arg9[%c0_13, %c0_14], %24 {strides = array<i32>} : memref<32x128xbf16, #tpu.memory_space<vmem>>, vector<32x128xbf16>,
    return
  }
  func.func @transform_0(%arg0: i32, %arg1: i32, %arg2: i32) -> (i32, i32) {
    %c1_i32 = arith.constant 1 : i32
    %0 = arith.muli %arg0, %c1_i32 : i32
    %1 = arith.addi %0, %arg1 : i32
    %c0_i32 = arith.constant 0 : i32
    return %1, %arg2 : i32, i32
  }
  func.func @transform_1(%arg0: i32, %arg1: i32, %arg2: i32) -> (i32, i32) {
    %c1_i32 = arith.constant 1 : i32
    %0 = arith.muli %arg0, %c1_i32 : i32
    %1 = arith.addi %0, %arg1 : i32
    %c2_i32 = arith.constant 2 : i32
    %2 = arith.addi %c2_i32, %arg2 : i32
    %c0_i32 = arith.constant 0 : i32
    return %1, %2 : i32, i32
  }
  func.func @transform_2(%arg0: i32, %arg1: i32, %arg2: i32) -> (i32, i32) {
    %c0_i32 = arith.constant 0 : i32
    %c0_i32_0 = arith.constant 0 : i32
    return %arg1, %c0_i32 : i32, i32
  }
  func.func @transform_3(%arg0: i32, %arg1: i32, %arg2: i32) -> (i32, i32) {
    %c0_i32 = arith.constant 0 : i32
    %c0_i32_0 = arith.constant 0 : i32
    return %arg1, %c0_i32 : i32, i32
  }
  func.func @transform_4(%arg0: i32, %arg1: i32, %arg2: i32) -> (i32, i32, i32) {
    %c0_i32 = arith.constant 0 : i32
    %c0_i32_0 = arith.constant 0 : i32
    %c0_i32_1 = arith.constant 0 : i32
    return %arg2, %c0_i32, %c0_i32_0 : i32, i32, i32
  }
  func.func @transform_5(%arg0: i32, %arg1: i32, %arg2: i32) -> (i32, i32) {
    %c1_i32 = arith.constant 1 : i32
    %0 = arith.muli %arg0, %c1_i32 : i32
    %1 = arith.addi %0, %arg1 : i32
    %c0_i32 = arith.constant 0 : i32
    return %1, %arg2 : i32, i32
  }
  func.func @transform_6(%arg0: i32, %arg1: i32, %arg2: i32) -> (i32, i32) {
    %c1_i32 = arith.constant 1 : i32
    %0 = arith.muli %arg0, %c1_i32 : i32
    %1 = arith.addi %0, %arg1 : i32
    %c0_i32 = arith.constant 0 : i32
    return %1, %arg2 : i32, i32
  }
}

module attributes {stable_mosaic.version = 11 : i64} {
  func.func @proj_resnorm_kernel(%arg0: i32, %arg1: i32, %arg2: memref<64x256xbf16, #tpu.memory_space<vmem>>, %arg3: memref<256x256xbf16, #tpu.memory_space<vmem>>, %arg4: memref<64x256xbf16, #tpu.memory_space<vmem>>, %arg5: memref<1x256xf32, #tpu.memory_space<vmem>>, %arg6: memref<64x256xbf16, #tpu.memory_space<vmem>>, %arg7: memref<64x256xf32, #tpu.memory_space<vmem>>) attributes {dimension_semantics = [#tpu.dimension_semantics<parallel>, #tpu.dimension_semantics<arbitrary>], iteration_bounds = array<i64: 1, 1>, scalar_prefetch = 0 : i64, scratch_operands = 1 : i64, tpu.core_type = #tpu.core_type<tc>, window_params = [{transform_indices = @transform_0, window_bounds = array<i64: 64, 256>}, {transform_indices = @transform_1, window_bounds = array<i64: 256, 256>}, {transform_indices = @transform_2, window_bounds = array<i64: 64, 256>}, {pipeline_mode = #tpu.pipeline_mode<synchronous>, transform_indices = @transform_3, window_bounds = array<i64: 1, 256>}, {transform_indices = @transform_4, window_bounds = array<i64: 64, 256>}]} {
    %c0_i32 = arith.constant 0 : i32
    %0 = arith.cmpi eq, %arg1, %c0_i32 : i32
    %1 = arith.extui %0 : i1 to i32
    %c0_i32_0 = arith.constant 0 : i32
    %2 = arith.cmpi ne, %1, %c0_i32_0 : i32
    scf.if %2 {
      %cst_10 = arith.constant 0.000000e+00 : f32
      %12 = vector.broadcast %cst_10 : f32 to vector<64x256xf32>
      %c0_11 = arith.constant 0 : index
      %c0_12 = arith.constant 0 : index
      %13 = vector.load %arg7[%c0_11, %c0_12] : memref<64x256xf32, #tpu.memory_space<vmem>>, vector<64x256xf32>
      tpu.vector_store %arg7[%c0_11, %c0_12], %12 {strides = array<i32>} : memref<64x256xf32, #tpu.memory_space<vmem>>, vector<64x256xf32>,
    } else {
    }
    %c0 = arith.constant 0 : index
    %c0_1 = arith.constant 0 : index
    %3 = vector.load %arg7[%c0, %c0_1] : memref<64x256xf32, #tpu.memory_space<vmem>>, vector<64x256xf32>
    %c0_2 = arith.constant 0 : index
    %c0_3 = arith.constant 0 : index
    %4 = vector.load %arg2[%c0_2, %c0_3] : memref<64x256xbf16, #tpu.memory_space<vmem>>, vector<64x256xbf16>
    %c0_4 = arith.constant 0 : index
    %c0_5 = arith.constant 0 : index
    %5 = vector.load %arg3[%c0_4, %c0_5] : memref<256x256xbf16, #tpu.memory_space<vmem>>, vector<256x256xbf16>
    %cst = arith.constant dense<0.000000e+00> : vector<64x256xf32>
    %6 = tpu.matmul %4, %5, %cst {dimension_numbers = #tpu.dot_dimension_numbers<[1], [0], [0], [1], [0, 0, 1, 1], [], []>} : vector<64x256xbf16>, vector<256x256xbf16>, vector<64x256xf32> -> vector<64x256xf32>
    %7 = arith.addf %3, %6 : vector<64x256xf32>
    %c0_6 = arith.constant 0 : index
    %c0_7 = arith.constant 0 : index
    %8 = vector.load %arg7[%c0_6, %c0_7] : memref<64x256xf32, #tpu.memory_space<vmem>>, vector<64x256xf32>
    tpu.vector_store %arg7[%c0_6, %c0_7], %7 {strides = array<i32>} : memref<64x256xf32, #tpu.memory_space<vmem>>, vector<64x256xf32>,
    %c0_i32_8 = arith.constant 0 : i32
    %9 = arith.cmpi eq, %arg1, %c0_i32_8 : i32
    %10 = arith.extui %9 : i1 to i32
    %c0_i32_9 = arith.constant 0 : i32
    %11 = arith.cmpi ne, %10, %c0_i32_9 : i32
    scf.if %11 {
      %c0_10 = arith.constant 0 : index
      %c0_11 = arith.constant 0 : index
      %12 = vector.load %arg7[%c0_10, %c0_11] : memref<64x256xf32, #tpu.memory_space<vmem>>, vector<64x256xf32>
      %13 = arith.mulf %12, %12 : vector<64x256xf32>
      %cst_12 = arith.constant dense<0.000000e+00> : vector<64xf32>
      %14 = vector.multi_reduction <add>, %13, %cst_12 [1] : vector<64x256xf32> to vector<64xf32>
      %15 = vector.shape_cast %14 : vector<64xf32> to vector<64x1xf32>
      %cst_13 = arith.constant 1.000000e-24 : f32
      %16 = vector.broadcast %cst_13 : f32 to vector<64x1xf32>
      %17 = arith.maximumf %15, %16 : vector<64x1xf32>
      %18 = math.rsqrt %17 : vector<64x1xf32>
      %19 = vector.broadcast %18 : vector<64x1xf32> to vector<64x256xf32>
      %20 = arith.mulf %12, %19 : vector<64x256xf32>
      %c0_14 = arith.constant 0 : index
      %c0_15 = arith.constant 0 : index
      %21 = vector.load %arg4[%c0_14, %c0_15] : memref<64x256xbf16, #tpu.memory_space<vmem>>, vector<64x256xbf16>
      %22 = arith.extf %21 : vector<64x256xbf16> to vector<64x256xf32>
      %23 = arith.subf %20, %22 : vector<64x256xf32>
      %c0_16 = arith.constant 0 : index
      %c0_17 = arith.constant 0 : index
      %24 = vector.load %arg5[%c0_16, %c0_17] : memref<1x256xf32, #tpu.memory_space<vmem>>, vector<1x256xf32>
      %25 = vector.broadcast %24 : vector<1x256xf32> to vector<64x256xf32>
      %26 = arith.mulf %23, %25 : vector<64x256xf32>
      %27 = arith.addf %22, %26 : vector<64x256xf32>
      %28 = arith.mulf %27, %27 : vector<64x256xf32>
      %cst_18 = arith.constant dense<0.000000e+00> : vector<64xf32>
      %29 = vector.multi_reduction <add>, %28, %cst_18 [1] : vector<64x256xf32> to vector<64xf32>
      %30 = vector.shape_cast %29 : vector<64xf32> to vector<64x1xf32>
      %cst_19 = arith.constant 1.000000e-24 : f32
      %31 = vector.broadcast %cst_19 : f32 to vector<64x1xf32>
      %32 = arith.maximumf %30, %31 : vector<64x1xf32>
      %33 = math.rsqrt %32 : vector<64x1xf32>
      %34 = vector.broadcast %33 : vector<64x1xf32> to vector<64x256xf32>
      %35 = arith.mulf %27, %34 : vector<64x256xf32>
      %36 = arith.truncf %35 : vector<64x256xf32> to vector<64x256xbf16>
      %c0_20 = arith.constant 0 : index
      %c0_21 = arith.constant 0 : index
      %37 = vector.load %arg6[%c0_20, %c0_21] : memref<64x256xbf16, #tpu.memory_space<vmem>>, vector<64x256xbf16>
      tpu.vector_store %arg6[%c0_20, %c0_21], %36 {strides = array<i32>} : memref<64x256xbf16, #tpu.memory_space<vmem>>, vector<64x256xbf16>,
    } else {
    }
    return
  }
  func.func @transform_0(%arg0: i32, %arg1: i32) -> (i32, i32) {
    %c0_i32 = arith.constant 0 : i32
    return %arg0, %arg1 : i32, i32
  }
  func.func @transform_1(%arg0: i32, %arg1: i32) -> (i32, i32) {
    %c0_i32 = arith.constant 0 : i32
    %c0_i32_0 = arith.constant 0 : i32
    return %arg1, %c0_i32 : i32, i32
  }
  func.func @transform_2(%arg0: i32, %arg1: i32) -> (i32, i32) {
    %c0_i32 = arith.constant 0 : i32
    %c0_i32_0 = arith.constant 0 : i32
    return %arg0, %c0_i32 : i32, i32
  }
  func.func @transform_3(%arg0: i32, %arg1: i32) -> (i32, i32) {
    %c0_i32 = arith.constant 0 : i32
    %c0_i32_0 = arith.constant 0 : i32
    %c0_i32_1 = arith.constant 0 : i32
    return %c0_i32, %c0_i32_0 : i32, i32
  }
  func.func @transform_4(%arg0: i32, %arg1: i32) -> (i32, i32) {
    %c0_i32 = arith.constant 0 : i32
    %c0_i32_0 = arith.constant 0 : i32
    return %arg0, %c0_i32 : i32, i32
  }
}

module attributes {stable_mosaic.version = 11 : i64} {
  func.func @matmul_kernel(%arg0: i32, %arg1: i32, %arg2: i32, %arg3: memref<64x256xbf16, #tpu.memory_space<vmem>>, %arg4: memref<256x256xbf16, #tpu.memory_space<vmem>>, %arg5: memref<64x256xbf16, #tpu.memory_space<vmem>>, %arg6: memref<64x256xf32, #tpu.memory_space<vmem>>) attributes {dimension_semantics = [#tpu.dimension_semantics<parallel>, #tpu.dimension_semantics<parallel>, #tpu.dimension_semantics<arbitrary>], iteration_bounds = array<i64: 1, 3, 1>, scalar_prefetch = 0 : i64, scratch_operands = 1 : i64, tpu.core_type = #tpu.core_type<tc>, window_params = [{transform_indices = @transform_0, window_bounds = array<i64: 64, 256>}, {transform_indices = @transform_1, window_bounds = array<i64: 256, 256>}, {transform_indices = @transform_2, window_bounds = array<i64: 64, 256>}]} {
    %c0_i32 = arith.constant 0 : i32
    %0 = arith.cmpi eq, %arg2, %c0_i32 : i32
    %1 = arith.extui %0 : i1 to i32
    %c0_i32_0 = arith.constant 0 : i32
    %2 = arith.cmpi ne, %1, %c0_i32_0 : i32
    scf.if %2 {
      %cst_10 = arith.constant 0.000000e+00 : f32
      %12 = vector.broadcast %cst_10 : f32 to vector<64x256xf32>
      %c0_11 = arith.constant 0 : index
      %c0_12 = arith.constant 0 : index
      %13 = vector.load %arg6[%c0_11, %c0_12] : memref<64x256xf32, #tpu.memory_space<vmem>>, vector<64x256xf32>
      tpu.vector_store %arg6[%c0_11, %c0_12], %12 {strides = array<i32>} : memref<64x256xf32, #tpu.memory_space<vmem>>, vector<64x256xf32>,
    } else {
    }
    %c0 = arith.constant 0 : index
    %c0_1 = arith.constant 0 : index
    %3 = vector.load %arg6[%c0, %c0_1] : memref<64x256xf32, #tpu.memory_space<vmem>>, vector<64x256xf32>
    %c0_2 = arith.constant 0 : index
    %c0_3 = arith.constant 0 : index
    %4 = vector.load %arg3[%c0_2, %c0_3] : memref<64x256xbf16, #tpu.memory_space<vmem>>, vector<64x256xbf16>
    %c0_4 = arith.constant 0 : index
    %c0_5 = arith.constant 0 : index
    %5 = vector.load %arg4[%c0_4, %c0_5] : memref<256x256xbf16, #tpu.memory_space<vmem>>, vector<256x256xbf16>
    %cst = arith.constant dense<0.000000e+00> : vector<64x256xf32>
    %6 = tpu.matmul %4, %5, %cst {dimension_numbers = #tpu.dot_dimension_numbers<[1], [0], [0], [1], [0, 0, 1, 1], [], []>} : vector<64x256xbf16>, vector<256x256xbf16>, vector<64x256xf32> -> vector<64x256xf32>
    %7 = arith.addf %3, %6 : vector<64x256xf32>
    %c0_6 = arith.constant 0 : index
    %c0_7 = arith.constant 0 : index
    %8 = vector.load %arg6[%c0_6, %c0_7] : memref<64x256xf32, #tpu.memory_space<vmem>>, vector<64x256xf32>
    tpu.vector_store %arg6[%c0_6, %c0_7], %7 {strides = array<i32>} : memref<64x256xf32, #tpu.memory_space<vmem>>, vector<64x256xf32>,
    %c0_i32_8 = arith.constant 0 : i32
    %9 = arith.cmpi eq, %arg2, %c0_i32_8 : i32
    %10 = arith.extui %9 : i1 to i32
    %c0_i32_9 = arith.constant 0 : i32
    %11 = arith.cmpi ne, %10, %c0_i32_9 : i32
    scf.if %11 {
      %c0_10 = arith.constant 0 : index
      %c0_11 = arith.constant 0 : index
      %12 = vector.load %arg6[%c0_10, %c0_11] : memref<64x256xf32, #tpu.memory_space<vmem>>, vector<64x256xf32>
      %13 = arith.truncf %12 : vector<64x256xf32> to vector<64x256xbf16>
      %c0_12 = arith.constant 0 : index
      %c0_13 = arith.constant 0 : index
      %14 = vector.load %arg5[%c0_12, %c0_13] : memref<64x256xbf16, #tpu.memory_space<vmem>>, vector<64x256xbf16>
      tpu.vector_store %arg5[%c0_12, %c0_13], %13 {strides = array<i32>} : memref<64x256xbf16, #tpu.memory_space<vmem>>, vector<64x256xbf16>,
    } else {
    }
    return
  }
  func.func @transform_0(%arg0: i32, %arg1: i32, %arg2: i32) -> (i32, i32) {
    %c0_i32 = arith.constant 0 : i32
    return %arg0, %arg2 : i32, i32
  }
  func.func @transform_1(%arg0: i32, %arg1: i32, %arg2: i32) -> (i32, i32) {
    %c0_i32 = arith.constant 0 : i32
    return %arg2, %arg1 : i32, i32
  }
  func.func @transform_2(%arg0: i32, %arg1: i32, %arg2: i32) -> (i32, i32) {
    %c0_i32 = arith.constant 0 : i32
    return %arg0, %arg1 : i32, i32
  }
}

module attributes {stable_mosaic.version = 11 : i64} {
  func.func @flash_attn_kernel(%arg0: i32, %arg1: i32, %arg2: i32, %arg3: i32, %arg4: memref<32x128xbf16, #tpu.memory_space<vmem>>, %arg5: memref<32x128xbf16, #tpu.memory_space<vmem>>, %arg6: memref<32x128xbf16, #tpu.memory_space<vmem>>, %arg7: memref<32x128xbf16, #tpu.memory_space<vmem>>, %arg8: memref<32x1xf32, #tpu.memory_space<vmem>>, %arg9: memref<32x1xf32, #tpu.memory_space<vmem>>, %arg10: memref<32x128xf32, #tpu.memory_space<vmem>>) attributes {dimension_semantics = [#tpu.dimension_semantics<parallel>, #tpu.dimension_semantics<parallel>, #tpu.dimension_semantics<parallel>, #tpu.dimension_semantics<arbitrary>], iteration_bounds = array<i64: 2, 2, 1, 1>, scalar_prefetch = 0 : i64, scratch_operands = 3 : i64, tpu.core_type = #tpu.core_type<tc>, window_params = [{transform_indices = @transform_0, window_bounds = array<i64: 32, 128>}, {transform_indices = @transform_1, window_bounds = array<i64: 32, 128>}, {transform_indices = @transform_2, window_bounds = array<i64: 32, 128>}, {transform_indices = @transform_3, window_bounds = array<i64: 32, 128>}]} {
    %c0_i32 = arith.constant 0 : i32
    %0 = arith.cmpi eq, %arg3, %c0_i32 : i32
    %1 = arith.extui %0 : i1 to i32
    %c0_i32_0 = arith.constant 0 : i32
    %2 = arith.cmpi ne, %1, %c0_i32_0 : i32
    scf.if %2 {
      %cst = arith.constant 0xFF800000 : f32
      %12 = vector.broadcast %cst : f32 to vector<32x1xf32>
      %c0 = arith.constant 0 : index
      %c0_5 = arith.constant 0 : index
      %13 = vector.load %arg8[%c0, %c0_5] : memref<32x1xf32, #tpu.memory_space<vmem>>, vector<32x1xf32>
      tpu.vector_store %arg8[%c0, %c0_5], %12 {strides = array<i32>} : memref<32x1xf32, #tpu.memory_space<vmem>>, vector<32x1xf32>,
      %cst_6 = arith.constant 0.000000e+00 : f32
      %14 = vector.broadcast %cst_6 : f32 to vector<32x1xf32>
      %c0_7 = arith.constant 0 : index
      %c0_8 = arith.constant 0 : index
      %15 = vector.load %arg9[%c0_7, %c0_8] : memref<32x1xf32, #tpu.memory_space<vmem>>, vector<32x1xf32>
      tpu.vector_store %arg9[%c0_7, %c0_8], %14 {strides = array<i32>} : memref<32x1xf32, #tpu.memory_space<vmem>>, vector<32x1xf32>,
      %cst_9 = arith.constant 0.000000e+00 : f32
      %16 = vector.broadcast %cst_9 : f32 to vector<32x128xf32>
      %c0_10 = arith.constant 0 : index
      %c0_11 = arith.constant 0 : index
      %17 = vector.load %arg10[%c0_10, %c0_11] : memref<32x128xf32, #tpu.memory_space<vmem>>, vector<32x128xf32>
      tpu.vector_store %arg10[%c0_10, %c0_11], %16 {strides = array<i32>} : memref<32x128xf32, #tpu.memory_space<vmem>>, vector<32x128xf32>,
    } else {
    }
    %3 = arith.cmpi slt, %arg3, %arg2 : i32
    %4 = arith.extui %3 : i1 to i32
    %c0_i32_1 = arith.constant 0 : i32
    %5 = arith.cmpi ne, %4, %c0_i32_1 : i32
    scf.if %5 {
      %c0 = arith.constant 0 : index
      %c0_5 = arith.constant 0 : index
      %12 = vector.load %arg4[%c0, %c0_5] : memref<32x128xbf16, #tpu.memory_space<vmem>>, vector<32x128xbf16>
      %c0_6 = arith.constant 0 : index
      %c0_7 = arith.constant 0 : index
      %13 = vector.load %arg5[%c0_6, %c0_7] : memref<32x128xbf16, #tpu.memory_space<vmem>>, vector<32x128xbf16>
      %cst = arith.constant dense<0.000000e+00> : vector<32x32xf32>
      %14 = tpu.matmul %12, %13, %cst {dimension_numbers = #tpu.dot_dimension_numbers<[1], [1], [0], [0], [0, 0, 1, 0], [], []>} : vector<32x128xbf16>, vector<32x128xbf16>, vector<32x32xf32> -> vector<32x32xf32>
      %c0_8 = arith.constant 0 : index
      %c0_9 = arith.constant 0 : index
      %15 = vector.load %arg8[%c0_8, %c0_9] : memref<32x1xf32, #tpu.memory_space<vmem>>, vector<32x1xf32>
      %cst_10 = arith.constant dense<0xFF800000> : vector<32xf32>
      %16 = vector.multi_reduction <maximumf>, %14, %cst_10 [1] : vector<32x32xf32> to vector<32xf32>
      %17 = vector.shape_cast %16 : vector<32xf32> to vector<32x1xf32>
      %18 = arith.maximumf %15, %17 : vector<32x1xf32>
      %19 = arith.subf %15, %18 : vector<32x1xf32>
      %20 = math.exp %19 : vector<32x1xf32>
      %21 = vector.broadcast %18 : vector<32x1xf32> to vector<32x32xf32>
      %22 = arith.subf %14, %21 : vector<32x32xf32>
      %23 = math.exp %22 : vector<32x32xf32>
      %c0_11 = arith.constant 0 : index
      %c0_12 = arith.constant 0 : index
      %24 = vector.load %arg9[%c0_11, %c0_12] : memref<32x1xf32, #tpu.memory_space<vmem>>, vector<32x1xf32>
      %25 = arith.mulf %20, %24 : vector<32x1xf32>
      %cst_13 = arith.constant dense<0.000000e+00> : vector<32xf32>
      %26 = vector.multi_reduction <add>, %23, %cst_13 [1] : vector<32x32xf32> to vector<32xf32>
      %27 = vector.shape_cast %26 : vector<32xf32> to vector<32x1xf32>
      %28 = arith.addf %25, %27 : vector<32x1xf32>
      %c0_14 = arith.constant 0 : index
      %c0_15 = arith.constant 0 : index
      %29 = vector.load %arg9[%c0_14, %c0_15] : memref<32x1xf32, #tpu.memory_space<vmem>>, vector<32x1xf32>
      tpu.vector_store %arg9[%c0_14, %c0_15], %28 {strides = array<i32>} : memref<32x1xf32, #tpu.memory_space<vmem>>, vector<32x1xf32>,
      %c0_16 = arith.constant 0 : index
      %c0_17 = arith.constant 0 : index
      %30 = vector.load %arg10[%c0_16, %c0_17] : memref<32x128xf32, #tpu.memory_space<vmem>>, vector<32x128xf32>
      %31 = vector.broadcast %20 : vector<32x1xf32> to vector<32x128xf32>
      %32 = arith.mulf %31, %30 : vector<32x128xf32>
      %33 = arith.truncf %23 : vector<32x32xf32> to vector<32x32xbf16>
      %c0_18 = arith.constant 0 : index
      %c0_19 = arith.constant 0 : index
      %34 = vector.load %arg6[%c0_18, %c0_19] : memref<32x128xbf16, #tpu.memory_space<vmem>>, vector<32x128xbf16>
      %cst_20 = arith.constant dense<0.000000e+00> : vector<32x128xf32>
      %35 = tpu.matmul %33, %34, %cst_20 {dimension_numbers = #tpu.dot_dimension_numbers<[1], [0], [0], [1], [0, 0, 1, 1], [], []>} : vector<32x32xbf16>, vector<32x128xbf16>, vector<32x128xf32> -> vector<32x128xf32>
      %36 = arith.addf %32, %35 : vector<32x128xf32>
      %c0_21 = arith.constant 0 : index
      %c0_22 = arith.constant 0 : index
      %37 = vector.load %arg10[%c0_21, %c0_22] : memref<32x128xf32, #tpu.memory_space<vmem>>, vector<32x128xf32>
      tpu.vector_store %arg10[%c0_21, %c0_22], %36 {strides = array<i32>} : memref<32x128xf32, #tpu.memory_space<vmem>>, vector<32x128xf32>,
      %c0_23 = arith.constant 0 : index
      %c0_24 = arith.constant 0 : index
      %38 = vector.load %arg8[%c0_23, %c0_24] : memref<32x1xf32, #tpu.memory_space<vmem>>, vector<32x1xf32>
      tpu.vector_store %arg8[%c0_23, %c0_24], %18 {strides = array<i32>} : memref<32x1xf32, #tpu.memory_space<vmem>>, vector<32x1xf32>,
    } else {
    }
    %6 = arith.cmpi eq, %arg3, %arg2 : i32
    %7 = arith.extui %6 : i1 to i32
    %c0_i32_2 = arith.constant 0 : i32
    %8 = arith.cmpi ne, %7, %c0_i32_2 : i32
    scf.if %8 {
      %c0 = arith.constant 0 : index
      %c0_5 = arith.constant 0 : index
      %12 = vector.load %arg4[%c0, %c0_5] : memref<32x128xbf16, #tpu.memory_space<vmem>>, vector<32x128xbf16>
      %c0_6 = arith.constant 0 : index
      %c0_7 = arith.constant 0 : index
      %13 = vector.load %arg5[%c0_6, %c0_7] : memref<32x128xbf16, #tpu.memory_space<vmem>>, vector<32x128xbf16>
      %cst = arith.constant dense<0.000000e+00> : vector<32x32xf32>
      %14 = tpu.matmul %12, %13, %cst {dimension_numbers = #tpu.dot_dimension_numbers<[1], [1], [0], [0], [0, 0, 1, 0], [], []>} : vector<32x128xbf16>, vector<32x128xbf16>, vector<32x32xf32> -> vector<32x32xf32>
      %c32_i32 = arith.constant 32 : i32
      %15 = arith.muli %arg2, %c32_i32 : i32
      %16 = tpu.iota {dimensions = array<i32: 0>} : vector<32x32xi32>
      %17 = vector.broadcast %15 : i32 to vector<32x32xi32>
      %18 = arith.addi %17, %16 : vector<32x32xi32>
      %c32_i32_8 = arith.constant 32 : i32
      %19 = arith.muli %arg3, %c32_i32_8 : i32
      %20 = tpu.iota {dimensions = array<i32: 1>} : vector<32x32xi32>
      %21 = vector.broadcast %19 : i32 to vector<32x32xi32>
      %22 = arith.addi %21, %20 : vector<32x32xi32>
      %23 = arith.cmpi sge, %18, %22 : vector<32x32xi32>
      %cst_9 = arith.constant -1.000000e+30 : f32
      %24 = vector.broadcast %cst_9 : f32 to vector<32x32xf32>
      %25 = arith.select %23, %14, %24 : vector<32x32xi1>, vector<32x32xf32>
      %c0_10 = arith.constant 0 : index
      %c0_11 = arith.constant 0 : index
      %26 = vector.load %arg8[%c0_10, %c0_11] : memref<32x1xf32, #tpu.memory_space<vmem>>, vector<32x1xf32>
      %cst_12 = arith.constant dense<0xFF800000> : vector<32xf32>
      %27 = vector.multi_reduction <maximumf>, %25, %cst_12 [1] : vector<32x32xf32> to vector<32xf32>
      %28 = vector.shape_cast %27 : vector<32xf32> to vector<32x1xf32>
      %29 = arith.maximumf %26, %28 : vector<32x1xf32>
      %30 = arith.subf %26, %29 : vector<32x1xf32>
      %31 = math.exp %30 : vector<32x1xf32>
      %32 = vector.broadcast %29 : vector<32x1xf32> to vector<32x32xf32>
      %33 = arith.subf %25, %32 : vector<32x32xf32>
      %34 = math.exp %33 : vector<32x32xf32>
      %c0_13 = arith.constant 0 : index
      %c0_14 = arith.constant 0 : index
      %35 = vector.load %arg9[%c0_13, %c0_14] : memref<32x1xf32, #tpu.memory_space<vmem>>, vector<32x1xf32>
      %36 = arith.mulf %31, %35 : vector<32x1xf32>
      %cst_15 = arith.constant dense<0.000000e+00> : vector<32xf32>
      %37 = vector.multi_reduction <add>, %34, %cst_15 [1] : vector<32x32xf32> to vector<32xf32>
      %38 = vector.shape_cast %37 : vector<32xf32> to vector<32x1xf32>
      %39 = arith.addf %36, %38 : vector<32x1xf32>
      %c0_16 = arith.constant 0 : index
      %c0_17 = arith.constant 0 : index
      %40 = vector.load %arg9[%c0_16, %c0_17] : memref<32x1xf32, #tpu.memory_space<vmem>>, vector<32x1xf32>
      tpu.vector_store %arg9[%c0_16, %c0_17], %39 {strides = array<i32>} : memref<32x1xf32, #tpu.memory_space<vmem>>, vector<32x1xf32>,
      %c0_18 = arith.constant 0 : index
      %c0_19 = arith.constant 0 : index
      %41 = vector.load %arg10[%c0_18, %c0_19] : memref<32x128xf32, #tpu.memory_space<vmem>>, vector<32x128xf32>
      %42 = vector.broadcast %31 : vector<32x1xf32> to vector<32x128xf32>
      %43 = arith.mulf %42, %41 : vector<32x128xf32>
      %44 = arith.truncf %34 : vector<32x32xf32> to vector<32x32xbf16>
      %c0_20 = arith.constant 0 : index
      %c0_21 = arith.constant 0 : index
      %45 = vector.load %arg6[%c0_20, %c0_21] : memref<32x128xbf16, #tpu.memory_space<vmem>>, vector<32x128xbf16>
      %cst_22 = arith.constant dense<0.000000e+00> : vector<32x128xf32>
      %46 = tpu.matmul %44, %45, %cst_22 {dimension_numbers = #tpu.dot_dimension_numbers<[1], [0], [0], [1], [0, 0, 1, 1], [], []>} : vector<32x32xbf16>, vector<32x128xbf16>, vector<32x128xf32> -> vector<32x128xf32>
      %47 = arith.addf %43, %46 : vector<32x128xf32>
      %c0_23 = arith.constant 0 : index
      %c0_24 = arith.constant 0 : index
      %48 = vector.load %arg10[%c0_23, %c0_24] : memref<32x128xf32, #tpu.memory_space<vmem>>, vector<32x128xf32>
      tpu.vector_store %arg10[%c0_23, %c0_24], %47 {strides = array<i32>} : memref<32x128xf32, #tpu.memory_space<vmem>>, vector<32x128xf32>,
      %c0_25 = arith.constant 0 : index
      %c0_26 = arith.constant 0 : index
      %49 = vector.load %arg8[%c0_25, %c0_26] : memref<32x1xf32, #tpu.memory_space<vmem>>, vector<32x1xf32>
      tpu.vector_store %arg8[%c0_25, %c0_26], %29 {strides = array<i32>} : memref<32x1xf32, #tpu.memory_space<vmem>>, vector<32x1xf32>,
    } else {
    }
    %c0_i32_3 = arith.constant 0 : i32
    %9 = arith.cmpi eq, %arg3, %c0_i32_3 : i32
    %10 = arith.extui %9 : i1 to i32
    %c0_i32_4 = arith.constant 0 : i32
    %11 = arith.cmpi ne, %10, %c0_i32_4 : i32
    scf.if %11 {
      %c0 = arith.constant 0 : index
      %c0_5 = arith.constant 0 : index
      %12 = vector.load %arg9[%c0, %c0_5] : memref<32x1xf32, #tpu.memory_space<vmem>>, vector<32x1xf32>
      %13 = tpu.reciprocal %12 {approx = true} : vector<32x1xf32> -> vector<32x1xf32>
      %c0_6 = arith.constant 0 : index
      %c0_7 = arith.constant 0 : index
      %14 = vector.load %arg10[%c0_6, %c0_7] : memref<32x128xf32, #tpu.memory_space<vmem>>, vector<32x128xf32>
      %15 = vector.broadcast %13 : vector<32x1xf32> to vector<32x128xf32>
      %16 = arith.mulf %14, %15 : vector<32x128xf32>
      %17 = arith.truncf %16 : vector<32x128xf32> to vector<32x128xbf16>
      %c0_8 = arith.constant 0 : index
      %c0_9 = arith.constant 0 : index
      %18 = vector.load %arg7[%c0_8, %c0_9] : memref<32x128xbf16, #tpu.memory_space<vmem>>, vector<32x128xbf16>
      tpu.vector_store %arg7[%c0_8, %c0_9], %17 {strides = array<i32>} : memref<32x128xbf16, #tpu.memory_space<vmem>>, vector<32x128xbf16>,
    } else {
    }
    return
  }
  func.func @transform_0(%arg0: i32, %arg1: i32, %arg2: i32, %arg3: i32) -> (i32, i32) {
    %c1_i32 = arith.constant 1 : i32
    %0 = arith.muli %arg0, %c1_i32 : i32
    %1 = arith.addi %0, %arg2 : i32
    %c0_i32 = arith.constant 0 : i32
    return %1, %arg1 : i32, i32
  }
  func.func @transform_1(%arg0: i32, %arg1: i32, %arg2: i32, %arg3: i32) -> (i32, i32) {
    %c1_i32 = arith.constant 1 : i32
    %0 = arith.muli %arg0, %c1_i32 : i32
    %1 = arith.minsi %arg3, %arg2 : i32
    %2 = arith.addi %0, %1 : i32
    %c0_i32 = arith.constant 0 : i32
    return %2, %arg1 : i32, i32
  }
  func.func @transform_2(%arg0: i32, %arg1: i32, %arg2: i32, %arg3: i32) -> (i32, i32) {
    %c1_i32 = arith.constant 1 : i32
    %0 = arith.muli %arg0, %c1_i32 : i32
    %1 = arith.minsi %arg3, %arg2 : i32
    %2 = arith.addi %0, %1 : i32
    %c4_i32 = arith.constant 4 : i32
    %3 = arith.addi %c4_i32, %arg1 : i32
    %c0_i32 = arith.constant 0 : i32
    return %2, %3 : i32, i32
  }
  func.func @transform_3(%arg0: i32, %arg1: i32, %arg2: i32, %arg3: i32) -> (i32, i32) {
    %c1_i32 = arith.constant 1 : i32
    %0 = arith.muli %arg0, %c1_i32 : i32
    %1 = arith.addi %0, %arg2 : i32
    %c0_i32 = arith.constant 0 : i32
    return %1, %arg1 : i32, i32
  }
}

module attributes {stable_mosaic.version = 11 : i64} {
  func.func @uv_gate_kernel(%arg0: i32, %arg1: i32, %arg2: i32, %arg3: memref<64x256xbf16, #tpu.memory_space<vmem>>, %arg4: memref<256x512xbf16, #tpu.memory_space<vmem>>, %arg5: memref<256x512xbf16, #tpu.memory_space<vmem>>, %arg6: memref<1x512xf32, #tpu.memory_space<vmem>>, %arg7: memref<1x512xf32, #tpu.memory_space<vmem>>, %arg8: memref<64x512xbf16, #tpu.memory_space<vmem>>, %arg9: memref<64x512xf32, #tpu.memory_space<vmem>>, %arg10: memref<64x512xf32, #tpu.memory_space<vmem>>) attributes {dimension_semantics = [#tpu.dimension_semantics<parallel>, #tpu.dimension_semantics<parallel>, #tpu.dimension_semantics<arbitrary>], iteration_bounds = array<i64: 1, 2, 1>, scalar_prefetch = 0 : i64, scratch_operands = 2 : i64, tpu.core_type = #tpu.core_type<tc>, window_params = [{transform_indices = @transform_0, window_bounds = array<i64: 64, 256>}, {transform_indices = @transform_1, window_bounds = array<i64: 256, 512>}, {transform_indices = @transform_2, window_bounds = array<i64: 256, 512>}, {transform_indices = @transform_3, window_bounds = array<i64: 1, 512>}, {transform_indices = @transform_4, window_bounds = array<i64: 1, 512>}, {transform_indices = @transform_5, window_bounds = array<i64: 64, 512>}]} {
    %c0_i32 = arith.constant 0 : i32
    %0 = arith.cmpi eq, %arg2, %c0_i32 : i32
    %1 = arith.extui %0 : i1 to i32
    %c0_i32_0 = arith.constant 0 : i32
    %2 = arith.cmpi ne, %1, %c0_i32_0 : i32
    scf.if %2 {
      %cst_17 = arith.constant 0.000000e+00 : f32
      %17 = vector.broadcast %cst_17 : f32 to vector<64x512xf32>
      %c0_18 = arith.constant 0 : index
      %c0_19 = arith.constant 0 : index
      %18 = vector.load %arg9[%c0_18, %c0_19] : memref<64x512xf32, #tpu.memory_space<vmem>>, vector<64x512xf32>
      tpu.vector_store %arg9[%c0_18, %c0_19], %17 {strides = array<i32>} : memref<64x512xf32, #tpu.memory_space<vmem>>, vector<64x512xf32>,
      %cst_20 = arith.constant 0.000000e+00 : f32
      %19 = vector.broadcast %cst_20 : f32 to vector<64x512xf32>
      %c0_21 = arith.constant 0 : index
      %c0_22 = arith.constant 0 : index
      %20 = vector.load %arg10[%c0_21, %c0_22] : memref<64x512xf32, #tpu.memory_space<vmem>>, vector<64x512xf32>
      tpu.vector_store %arg10[%c0_21, %c0_22], %19 {strides = array<i32>} : memref<64x512xf32, #tpu.memory_space<vmem>>, vector<64x512xf32>,
    } else {
    }
    %c0 = arith.constant 0 : index
    %c0_1 = arith.constant 0 : index
    %3 = vector.load %arg3[%c0, %c0_1] : memref<64x256xbf16, #tpu.memory_space<vmem>>, vector<64x256xbf16>
    %c0_2 = arith.constant 0 : index
    %c0_3 = arith.constant 0 : index
    %4 = vector.load %arg9[%c0_2, %c0_3] : memref<64x512xf32, #tpu.memory_space<vmem>>, vector<64x512xf32>
    %c0_4 = arith.constant 0 : index
    %c0_5 = arith.constant 0 : index
    %5 = vector.load %arg4[%c0_4, %c0_5] : memref<256x512xbf16, #tpu.memory_space<vmem>>, vector<256x512xbf16>
    %cst = arith.constant dense<0.000000e+00> : vector<64x512xf32>
    %6 = tpu.matmul %3, %5, %cst {dimension_numbers = #tpu.dot_dimension_numbers<[1], [0], [0], [1], [0, 0, 1, 1], [], []>} : vector<64x256xbf16>, vector<256x512xbf16>, vector<64x512xf32> -> vector<64x512xf32>
    %7 = arith.addf %4, %6 : vector<64x512xf32>
    %c0_6 = arith.constant 0 : index
    %c0_7 = arith.constant 0 : index
    %8 = vector.load %arg9[%c0_6, %c0_7] : memref<64x512xf32, #tpu.memory_space<vmem>>, vector<64x512xf32>
    tpu.vector_store %arg9[%c0_6, %c0_7], %7 {strides = array<i32>} : memref<64x512xf32, #tpu.memory_space<vmem>>, vector<64x512xf32>,
    %c0_8 = arith.constant 0 : index
    %c0_9 = arith.constant 0 : index
    %9 = vector.load %arg10[%c0_8, %c0_9] : memref<64x512xf32, #tpu.memory_space<vmem>>, vector<64x512xf32>
    %c0_10 = arith.constant 0 : index
    %c0_11 = arith.constant 0 : index
    %10 = vector.load %arg5[%c0_10, %c0_11] : memref<256x512xbf16, #tpu.memory_space<vmem>>, vector<256x512xbf16>
    %cst_12 = arith.constant dense<0.000000e+00> : vector<64x512xf32>
    %11 = tpu.matmul %3, %10, %cst_12 {dimension_numbers = #tpu.dot_dimension_numbers<[1], [0], [0], [1], [0, 0, 1, 1], [], []>} : vector<64x256xbf16>, vector<256x512xbf16>, vector<64x512xf32> -> vector<64x512xf32>
    %12 = arith.addf %9, %11 : vector<64x512xf32>
    %c0_13 = arith.constant 0 : index
    %c0_14 = arith.constant 0 : index
    %13 = vector.load %arg10[%c0_13, %c0_14] : memref<64x512xf32, #tpu.memory_space<vmem>>, vector<64x512xf32>
    tpu.vector_store %arg10[%c0_13, %c0_14], %12 {strides = array<i32>} : memref<64x512xf32, #tpu.memory_space<vmem>>, vector<64x512xf32>,
    %c0_i32_15 = arith.constant 0 : i32
    %14 = arith.cmpi eq, %arg2, %c0_i32_15 : i32
    %15 = arith.extui %14 : i1 to i32
    %c0_i32_16 = arith.constant 0 : i32
    %16 = arith.cmpi ne, %15, %c0_i32_16 : i32
    scf.if %16 {
      %c0_17 = arith.constant 0 : index
      %c0_18 = arith.constant 0 : index
      %17 = vector.load %arg9[%c0_17, %c0_18] : memref<64x512xf32, #tpu.memory_space<vmem>>, vector<64x512xf32>
      %c0_19 = arith.constant 0 : index
      %c0_20 = arith.constant 0 : index
      %18 = vector.load %arg6[%c0_19, %c0_20] : memref<1x512xf32, #tpu.memory_space<vmem>>, vector<1x512xf32>
      %19 = vector.broadcast %18 : vector<1x512xf32> to vector<64x512xf32>
      %20 = arith.mulf %17, %19 : vector<64x512xf32>
      %c0_21 = arith.constant 0 : index
      %c0_22 = arith.constant 0 : index
      %21 = vector.load %arg10[%c0_21, %c0_22] : memref<64x512xf32, #tpu.memory_space<vmem>>, vector<64x512xf32>
      %c0_23 = arith.constant 0 : index
      %c0_24 = arith.constant 0 : index
      %22 = vector.load %arg7[%c0_23, %c0_24] : memref<1x512xf32, #tpu.memory_space<vmem>>, vector<1x512xf32>
      %23 = vector.broadcast %22 : vector<1x512xf32> to vector<64x512xf32>
      %24 = arith.mulf %21, %23 : vector<64x512xf32>
      %cst_25 = arith.constant 1.600000e+01 : f32
      %25 = vector.broadcast %cst_25 : f32 to vector<64x512xf32>
      %26 = arith.mulf %24, %25 : vector<64x512xf32>
      %27 = arith.negf %26 : vector<64x512xf32>
      %28 = math.exp %27 : vector<64x512xf32>
      %cst_26 = arith.constant 1.000000e+00 : f32
      %29 = vector.broadcast %cst_26 : f32 to vector<64x512xf32>
      %30 = arith.addf %29, %28 : vector<64x512xf32>
      %31 = arith.divf %29, %30 : vector<64x512xf32>
      %32 = arith.mulf %26, %31 : vector<64x512xf32>
      %33 = arith.mulf %20, %32 : vector<64x512xf32>
      %34 = arith.truncf %33 : vector<64x512xf32> to vector<64x512xbf16>
      %c0_27 = arith.constant 0 : index
      %c0_28 = arith.constant 0 : index
      %35 = vector.load %arg8[%c0_27, %c0_28] : memref<64x512xbf16, #tpu.memory_space<vmem>>, vector<64x512xbf16>
      tpu.vector_store %arg8[%c0_27, %c0_28], %34 {strides = array<i32>} : memref<64x512xbf16, #tpu.memory_space<vmem>>, vector<64x512xbf16>,
    } else {
    }
    return
  }
  func.func @transform_0(%arg0: i32, %arg1: i32, %arg2: i32) -> (i32, i32) {
    %c0_i32 = arith.constant 0 : i32
    return %arg0, %arg2 : i32, i32
  }
  func.func @transform_1(%arg0: i32, %arg1: i32, %arg2: i32) -> (i32, i32) {
    %c0_i32 = arith.constant 0 : i32
    return %arg2, %arg1 : i32, i32
  }
  func.func @transform_2(%arg0: i32, %arg1: i32, %arg2: i32) -> (i32, i32) {
    %c0_i32 = arith.constant 0 : i32
    return %arg2, %arg1 : i32, i32
  }
  func.func @transform_3(%arg0: i32, %arg1: i32, %arg2: i32) -> (i32, i32) {
    %c0_i32 = arith.constant 0 : i32
    %c0_i32_0 = arith.constant 0 : i32
    return %c0_i32, %arg1 : i32, i32
  }
  func.func @transform_4(%arg0: i32, %arg1: i32, %arg2: i32) -> (i32, i32) {
    %c0_i32 = arith.constant 0 : i32
    %c0_i32_0 = arith.constant 0 : i32
    return %c0_i32, %arg1 : i32, i32
  }
  func.func @transform_5(%arg0: i32, %arg1: i32, %arg2: i32) -> (i32, i32) {
    %c0_i32 = arith.constant 0 : i32
    return %arg0, %arg1 : i32, i32
  }
}

module attributes {stable_mosaic.version = 11 : i64} {
  func.func @proj_resnorm_kernel(%arg0: i32, %arg1: i32, %arg2: memref<64x512xbf16, #tpu.memory_space<vmem>>, %arg3: memref<512x256xbf16, #tpu.memory_space<vmem>>, %arg4: memref<64x256xbf16, #tpu.memory_space<vmem>>, %arg5: memref<1x256xf32, #tpu.memory_space<vmem>>, %arg6: memref<64x256xbf16, #tpu.memory_space<vmem>>, %arg7: memref<64x256xf32, #tpu.memory_space<vmem>>) attributes {dimension_semantics = [#tpu.dimension_semantics<parallel>, #tpu.dimension_semantics<arbitrary>], iteration_bounds = array<i64: 1, 2>, scalar_prefetch = 0 : i64, scratch_operands = 1 : i64, tpu.core_type = #tpu.core_type<tc>, window_params = [{transform_indices = @transform_0, window_bounds = array<i64: 64, 512>}, {transform_indices = @transform_1, window_bounds = array<i64: 512, 256>}, {transform_indices = @transform_2, window_bounds = array<i64: 64, 256>}, {pipeline_mode = #tpu.pipeline_mode<synchronous>, transform_indices = @transform_3, window_bounds = array<i64: 1, 256>}, {transform_indices = @transform_4, window_bounds = array<i64: 64, 256>}]} {
    %c0_i32 = arith.constant 0 : i32
    %0 = arith.cmpi eq, %arg1, %c0_i32 : i32
    %1 = arith.extui %0 : i1 to i32
    %c0_i32_0 = arith.constant 0 : i32
    %2 = arith.cmpi ne, %1, %c0_i32_0 : i32
    scf.if %2 {
      %cst_9 = arith.constant 0.000000e+00 : f32
      %12 = vector.broadcast %cst_9 : f32 to vector<64x256xf32>
      %c0_10 = arith.constant 0 : index
      %c0_11 = arith.constant 0 : index
      %13 = vector.load %arg7[%c0_10, %c0_11] : memref<64x256xf32, #tpu.memory_space<vmem>>, vector<64x256xf32>
      tpu.vector_store %arg7[%c0_10, %c0_11], %12 {strides = array<i32>} : memref<64x256xf32, #tpu.memory_space<vmem>>, vector<64x256xf32>,
    } else {
    }
    %c0 = arith.constant 0 : index
    %c0_1 = arith.constant 0 : index
    %3 = vector.load %arg7[%c0, %c0_1] : memref<64x256xf32, #tpu.memory_space<vmem>>, vector<64x256xf32>
    %c0_2 = arith.constant 0 : index
    %c0_3 = arith.constant 0 : index
    %4 = vector.load %arg2[%c0_2, %c0_3] : memref<64x512xbf16, #tpu.memory_space<vmem>>, vector<64x512xbf16>
    %c0_4 = arith.constant 0 : index
    %c0_5 = arith.constant 0 : index
    %5 = vector.load %arg3[%c0_4, %c0_5] : memref<512x256xbf16, #tpu.memory_space<vmem>>, vector<512x256xbf16>
    %cst = arith.constant dense<0.000000e+00> : vector<64x256xf32>
    %6 = tpu.matmul %4, %5, %cst {dimension_numbers = #tpu.dot_dimension_numbers<[1], [0], [0], [1], [0, 0, 1, 1], [], []>} : vector<64x512xbf16>, vector<512x256xbf16>, vector<64x256xf32> -> vector<64x256xf32>
    %7 = arith.addf %3, %6 : vector<64x256xf32>
    %c0_6 = arith.constant 0 : index
    %c0_7 = arith.constant 0 : index
    %8 = vector.load %arg7[%c0_6, %c0_7] : memref<64x256xf32, #tpu.memory_space<vmem>>, vector<64x256xf32>
    tpu.vector_store %arg7[%c0_6, %c0_7], %7 {strides = array<i32>} : memref<64x256xf32, #tpu.memory_space<vmem>>, vector<64x256xf32>,
    %c1_i32 = arith.constant 1 : i32
    %9 = arith.cmpi eq, %arg1, %c1_i32 : i32
    %10 = arith.extui %9 : i1 to i32
    %c0_i32_8 = arith.constant 0 : i32
    %11 = arith.cmpi ne, %10, %c0_i32_8 : i32
    scf.if %11 {
      %c0_9 = arith.constant 0 : index
      %c0_10 = arith.constant 0 : index
      %12 = vector.load %arg7[%c0_9, %c0_10] : memref<64x256xf32, #tpu.memory_space<vmem>>, vector<64x256xf32>
      %13 = arith.mulf %12, %12 : vector<64x256xf32>
      %cst_11 = arith.constant dense<0.000000e+00> : vector<64xf32>
      %14 = vector.multi_reduction <add>, %13, %cst_11 [1] : vector<64x256xf32> to vector<64xf32>
      %15 = vector.shape_cast %14 : vector<64xf32> to vector<64x1xf32>
      %cst_12 = arith.constant 1.000000e-24 : f32
      %16 = vector.broadcast %cst_12 : f32 to vector<64x1xf32>
      %17 = arith.maximumf %15, %16 : vector<64x1xf32>
      %18 = math.rsqrt %17 : vector<64x1xf32>
      %19 = vector.broadcast %18 : vector<64x1xf32> to vector<64x256xf32>
      %20 = arith.mulf %12, %19 : vector<64x256xf32>
      %c0_13 = arith.constant 0 : index
      %c0_14 = arith.constant 0 : index
      %21 = vector.load %arg4[%c0_13, %c0_14] : memref<64x256xbf16, #tpu.memory_space<vmem>>, vector<64x256xbf16>
      %22 = arith.extf %21 : vector<64x256xbf16> to vector<64x256xf32>
      %23 = arith.subf %20, %22 : vector<64x256xf32>
      %c0_15 = arith.constant 0 : index
      %c0_16 = arith.constant 0 : index
      %24 = vector.load %arg5[%c0_15, %c0_16] : memref<1x256xf32, #tpu.memory_space<vmem>>, vector<1x256xf32>
      %25 = vector.broadcast %24 : vector<1x256xf32> to vector<64x256xf32>
      %26 = arith.mulf %23, %25 : vector<64x256xf32>
      %27 = arith.addf %22, %26 : vector<64x256xf32>
      %28 = arith.mulf %27, %27 : vector<64x256xf32>
      %cst_17 = arith.constant dense<0.000000e+00> : vector<64xf32>
      %29 = vector.multi_reduction <add>, %28, %cst_17 [1] : vector<64x256xf32> to vector<64xf32>
      %30 = vector.shape_cast %29 : vector<64xf32> to vector<64x1xf32>
      %cst_18 = arith.constant 1.000000e-24 : f32
      %31 = vector.broadcast %cst_18 : f32 to vector<64x1xf32>
      %32 = arith.maximumf %30, %31 : vector<64x1xf32>
      %33 = math.rsqrt %32 : vector<64x1xf32>
      %34 = vector.broadcast %33 : vector<64x1xf32> to vector<64x256xf32>
      %35 = arith.mulf %27, %34 : vector<64x256xf32>
      %36 = arith.truncf %35 : vector<64x256xf32> to vector<64x256xbf16>
      %c0_19 = arith.constant 0 : index
      %c0_20 = arith.constant 0 : index
      %37 = vector.load %arg6[%c0_19, %c0_20] : memref<64x256xbf16, #tpu.memory_space<vmem>>, vector<64x256xbf16>
      tpu.vector_store %arg6[%c0_19, %c0_20], %36 {strides = array<i32>} : memref<64x256xbf16, #tpu.memory_space<vmem>>, vector<64x256xbf16>,
    } else {
    }
    return
  }
  func.func @transform_0(%arg0: i32, %arg1: i32) -> (i32, i32) {
    %c0_i32 = arith.constant 0 : i32
    return %arg0, %arg1 : i32, i32
  }
  func.func @transform_1(%arg0: i32, %arg1: i32) -> (i32, i32) {
    %c0_i32 = arith.constant 0 : i32
    %c0_i32_0 = arith.constant 0 : i32
    return %arg1, %c0_i32 : i32, i32
  }
  func.func @transform_2(%arg0: i32, %arg1: i32) -> (i32, i32) {
    %c0_i32 = arith.constant 0 : i32
    %c0_i32_0 = arith.constant 0 : i32
    return %arg0, %c0_i32 : i32, i32
  }
  func.func @transform_3(%arg0: i32, %arg1: i32) -> (i32, i32) {
    %c0_i32 = arith.constant 0 : i32
    %c0_i32_0 = arith.constant 0 : i32
    %c0_i32_1 = arith.constant 0 : i32
    return %c0_i32, %c0_i32_0 : i32, i32
  }
  func.func @transform_4(%arg0: i32, %arg1: i32) -> (i32, i32) {
    %c0_i32 = arith.constant 0 : i32
    %c0_i32_0 = arith.constant 0 : i32
    return %arg0, %c0_i32 : i32, i32
  }
}

module attributes {stable_mosaic.version = 11 : i64} {
  func.func @matmul_kernel(%arg0: i32, %arg1: i32, %arg2: i32, %arg3: memref<64x256xbf16, #tpu.memory_space<vmem>>, %arg4: memref<256x256xbf16, #tpu.memory_space<vmem>>, %arg5: memref<64x256xbf16, #tpu.memory_space<vmem>>, %arg6: memref<64x256xf32, #tpu.memory_space<vmem>>) attributes {dimension_semantics = [#tpu.dimension_semantics<parallel>, #tpu.dimension_semantics<parallel>, #tpu.dimension_semantics<arbitrary>], iteration_bounds = array<i64: 1, 3, 1>, scalar_prefetch = 0 : i64, scratch_operands = 1 : i64, tpu.core_type = #tpu.core_type<tc>, window_params = [{transform_indices = @transform_0, window_bounds = array<i64: 64, 256>}, {transform_indices = @transform_1, window_bounds = array<i64: 256, 256>}, {transform_indices = @transform_2, window_bounds = array<i64: 64, 256>}]} {
    %c0_i32 = arith.constant 0 : i32
    %0 = arith.cmpi eq, %arg2, %c0_i32 : i32
    %1 = arith.extui %0 : i1 to i32
    %c0_i32_0 = arith.constant 0 : i32
    %2 = arith.cmpi ne, %1, %c0_i32_0 : i32
    scf.if %2 {
      %cst_10 = arith.constant 0.000000e+00 : f32
      %12 = vector.broadcast %cst_10 : f32 to vector<64x256xf32>
      %c0_11 = arith.constant 0 : index
      %c0_12 = arith.constant 0 : index
      %13 = vector.load %arg6[%c0_11, %c0_12] : memref<64x256xf32, #tpu.memory_space<vmem>>, vector<64x256xf32>
      tpu.vector_store %arg6[%c0_11, %c0_12], %12 {strides = array<i32>} : memref<64x256xf32, #tpu.memory_space<vmem>>, vector<64x256xf32>,
    } else {
    }
    %c0 = arith.constant 0 : index
    %c0_1 = arith.constant 0 : index
    %3 = vector.load %arg6[%c0, %c0_1] : memref<64x256xf32, #tpu.memory_space<vmem>>, vector<64x256xf32>
    %c0_2 = arith.constant 0 : index
    %c0_3 = arith.constant 0 : index
    %4 = vector.load %arg3[%c0_2, %c0_3] : memref<64x256xbf16, #tpu.memory_space<vmem>>, vector<64x256xbf16>
    %c0_4 = arith.constant 0 : index
    %c0_5 = arith.constant 0 : index
    %5 = vector.load %arg4[%c0_4, %c0_5] : memref<256x256xbf16, #tpu.memory_space<vmem>>, vector<256x256xbf16>
    %cst = arith.constant dense<0.000000e+00> : vector<64x256xf32>
    %6 = tpu.matmul %4, %5, %cst {dimension_numbers = #tpu.dot_dimension_numbers<[1], [0], [0], [1], [0, 0, 1, 1], [], []>} : vector<64x256xbf16>, vector<256x256xbf16>, vector<64x256xf32> -> vector<64x256xf32>
    %7 = arith.addf %3, %6 : vector<64x256xf32>
    %c0_6 = arith.constant 0 : index
    %c0_7 = arith.constant 0 : index
    %8 = vector.load %arg6[%c0_6, %c0_7] : memref<64x256xf32, #tpu.memory_space<vmem>>, vector<64x256xf32>
    tpu.vector_store %arg6[%c0_6, %c0_7], %7 {strides = array<i32>} : memref<64x256xf32, #tpu.memory_space<vmem>>, vector<64x256xf32>,
    %c0_i32_8 = arith.constant 0 : i32
    %9 = arith.cmpi eq, %arg2, %c0_i32_8 : i32
    %10 = arith.extui %9 : i1 to i32
    %c0_i32_9 = arith.constant 0 : i32
    %11 = arith.cmpi ne, %10, %c0_i32_9 : i32
    scf.if %11 {
      %c0_10 = arith.constant 0 : index
      %c0_11 = arith.constant 0 : index
      %12 = vector.load %arg6[%c0_10, %c0_11] : memref<64x256xf32, #tpu.memory_space<vmem>>, vector<64x256xf32>
      %13 = arith.truncf %12 : vector<64x256xf32> to vector<64x256xbf16>
      %c0_12 = arith.constant 0 : index
      %c0_13 = arith.constant 0 : index
      %14 = vector.load %arg5[%c0_12, %c0_13] : memref<64x256xbf16, #tpu.memory_space<vmem>>, vector<64x256xbf16>
      tpu.vector_store %arg5[%c0_12, %c0_13], %13 {strides = array<i32>} : memref<64x256xbf16, #tpu.memory_space<vmem>>, vector<64x256xbf16>,
    } else {
    }
    return
  }
  func.func @transform_0(%arg0: i32, %arg1: i32, %arg2: i32) -> (i32, i32) {
    %c0_i32 = arith.constant 0 : i32
    return %arg0, %arg2 : i32, i32
  }
  func.func @transform_1(%arg0: i32, %arg1: i32, %arg2: i32) -> (i32, i32) {
    %c0_i32 = arith.constant 0 : i32
    return %arg2, %arg1 : i32, i32
  }
  func.func @transform_2(%arg0: i32, %arg1: i32, %arg2: i32) -> (i32, i32) {
    %c0_i32 = arith.constant 0 : i32
    return %arg0, %arg1 : i32, i32
  }
}

module attributes {stable_mosaic.version = 11 : i64} {
  func.func @lmhead_kernel(%arg0: i32, %arg1: i32, %arg2: i32, %arg3: memref<64x256xbf16, #tpu.memory_space<vmem>>, %arg4: memref<256x256xbf16, #tpu.memory_space<vmem>>, %arg5: memref<1x256xf32, #tpu.memory_space<vmem>>, %arg6: memref<1x256xf32, #tpu.memory_space<vmem>>, %arg7: memref<64x256xf32, #tpu.memory_space<vmem>>, %arg8: memref<64x256xf32, #tpu.memory_space<vmem>>) attributes {dimension_semantics = [#tpu.dimension_semantics<parallel>, #tpu.dimension_semantics<parallel>, #tpu.dimension_semantics<arbitrary>], iteration_bounds = array<i64: 1, 1, 1>, scalar_prefetch = 0 : i64, scratch_operands = 1 : i64, tpu.core_type = #tpu.core_type<tc>, window_params = [{transform_indices = @transform_0, window_bounds = array<i64: 64, 256>}, {transform_indices = @transform_1, window_bounds = array<i64: 256, 256>}, {transform_indices = @transform_2, window_bounds = array<i64: 1, 256>}, {transform_indices = @transform_3, window_bounds = array<i64: 1, 256>}, {transform_indices = @transform_4, window_bounds = array<i64: 64, 256>}]} {
    %c0_i32 = arith.constant 0 : i32
    %0 = arith.cmpi eq, %arg2, %c0_i32 : i32
    %1 = arith.extui %0 : i1 to i32
    %c0_i32_0 = arith.constant 0 : i32
    %2 = arith.cmpi ne, %1, %c0_i32_0 : i32
    scf.if %2 {
      %cst_10 = arith.constant 0.000000e+00 : f32
      %12 = vector.broadcast %cst_10 : f32 to vector<64x256xf32>
      %c0_11 = arith.constant 0 : index
      %c0_12 = arith.constant 0 : index
      %13 = vector.load %arg8[%c0_11, %c0_12] : memref<64x256xf32, #tpu.memory_space<vmem>>, vector<64x256xf32>
      tpu.vector_store %arg8[%c0_11, %c0_12], %12 {strides = array<i32>} : memref<64x256xf32, #tpu.memory_space<vmem>>, vector<64x256xf32>,
    } else {
    }
    %c0 = arith.constant 0 : index
    %c0_1 = arith.constant 0 : index
    %3 = vector.load %arg8[%c0, %c0_1] : memref<64x256xf32, #tpu.memory_space<vmem>>, vector<64x256xf32>
    %c0_2 = arith.constant 0 : index
    %c0_3 = arith.constant 0 : index
    %4 = vector.load %arg3[%c0_2, %c0_3] : memref<64x256xbf16, #tpu.memory_space<vmem>>, vector<64x256xbf16>
    %c0_4 = arith.constant 0 : index
    %c0_5 = arith.constant 0 : index
    %5 = vector.load %arg4[%c0_4, %c0_5] : memref<256x256xbf16, #tpu.memory_space<vmem>>, vector<256x256xbf16>
    %cst = arith.constant dense<0.000000e+00> : vector<64x256xf32>
    %6 = tpu.matmul %4, %5, %cst {dimension_numbers = #tpu.dot_dimension_numbers<[1], [0], [0], [1], [0, 0, 1, 1], [], []>} : vector<64x256xbf16>, vector<256x256xbf16>, vector<64x256xf32> -> vector<64x256xf32>
    %7 = arith.addf %3, %6 : vector<64x256xf32>
    %c0_6 = arith.constant 0 : index
    %c0_7 = arith.constant 0 : index
    %8 = vector.load %arg8[%c0_6, %c0_7] : memref<64x256xf32, #tpu.memory_space<vmem>>, vector<64x256xf32>
    tpu.vector_store %arg8[%c0_6, %c0_7], %7 {strides = array<i32>} : memref<64x256xf32, #tpu.memory_space<vmem>>, vector<64x256xf32>,
    %c0_i32_8 = arith.constant 0 : i32
    %9 = arith.cmpi eq, %arg2, %c0_i32_8 : i32
    %10 = arith.extui %9 : i1 to i32
    %c0_i32_9 = arith.constant 0 : i32
    %11 = arith.cmpi ne, %10, %c0_i32_9 : i32
    scf.if %11 {
      %c0_10 = arith.constant 0 : index
      %c0_11 = arith.constant 0 : index
      %12 = vector.load %arg8[%c0_10, %c0_11] : memref<64x256xf32, #tpu.memory_space<vmem>>, vector<64x256xf32>
      %c0_12 = arith.constant 0 : index
      %c0_13 = arith.constant 0 : index
      %13 = vector.load %arg5[%c0_12, %c0_13] : memref<1x256xf32, #tpu.memory_space<vmem>>, vector<1x256xf32>
      %14 = vector.broadcast %13 : vector<1x256xf32> to vector<64x256xf32>
      %15 = arith.addf %12, %14 : vector<64x256xf32>
      %c0_14 = arith.constant 0 : index
      %c0_15 = arith.constant 0 : index
      %16 = vector.load %arg6[%c0_14, %c0_15] : memref<1x256xf32, #tpu.memory_space<vmem>>, vector<1x256xf32>
      %17 = vector.broadcast %16 : vector<1x256xf32> to vector<64x256xf32>
      %18 = arith.mulf %15, %17 : vector<64x256xf32>
      %c0_16 = arith.constant 0 : index
      %c0_17 = arith.constant 0 : index
      %19 = vector.load %arg7[%c0_16, %c0_17] : memref<64x256xf32, #tpu.memory_space<vmem>>, vector<64x256xf32>
      tpu.vector_store %arg7[%c0_16, %c0_17], %18 {strides = array<i32>} : memref<64x256xf32, #tpu.memory_space<vmem>>, vector<64x256xf32>,
    } else {
    }
    return
  }
  func.func @transform_0(%arg0: i32, %arg1: i32, %arg2: i32) -> (i32, i32) {
    %c0_i32 = arith.constant 0 : i32
    return %arg0, %arg2 : i32, i32
  }
  func.func @transform_1(%arg0: i32, %arg1: i32, %arg2: i32) -> (i32, i32) {
    %c0_i32 = arith.constant 0 : i32
    return %arg2, %arg1 : i32, i32
  }
  func.func @transform_2(%arg0: i32, %arg1: i32, %arg2: i32) -> (i32, i32) {
    %c0_i32 = arith.constant 0 : i32
    %c0_i32_0 = arith.constant 0 : i32
    return %c0_i32, %arg1 : i32, i32
  }
  func.func @transform_3(%arg0: i32, %arg1: i32, %arg2: i32) -> (i32, i32) {
    %c0_i32 = arith.constant 0 : i32
    %c0_i32_0 = arith.constant 0 : i32
    return %c0_i32, %arg1 : i32, i32
  }
  func.func @transform_4(%arg0: i32, %arg1: i32, %arg2: i32) -> (i32, i32) {
    %c0_i32 = arith.constant 0 : i32
    return %arg0, %arg1 : i32, i32
  }
}

</mosaic_0001>

<llo_original>
// kernel: ngpt_forward.14
$region0: #{ngpt_forward.14}
  #allocation0 [shape = 'u32[]', space=smem, size = 0x4, offset = 0x4, fixed_abs, tag = 'smem constant byte address 0x4 - core index']
  #allocation1 [shape = 'u32[144,128]{1,0:T(1,128)}', space=vmem, size = 0x12000, scoped, tag = 'internal scratch']
  %s0 = inlined_call_operand.vmem [shape: bf16[64,768], index: 0, kind: input, shape index: {}, may-alias: {0,1}]
  %s1 = inlined_call_operand.vmem [shape: bf16[64,768], index: 1, kind: input, shape index: {}, may-alias: {0,1}]
  %s2 = inlined_call_operand.vmem [shape: f32[32,128], index: 2, kind: input, shape index: {}]
  %s3 = inlined_call_operand.vmem [shape: f32[32,128], index: 3, kind: input, shape index: {}]
  %s4 = inlined_call_operand.vmem [shape: f32[2,1,128], index: 4, kind: input, shape index: {}]
  %s5 = inlined_call_operand.vmem [shape: bf16[64,256], index: 5, kind: output, shape index: {0}]
  %s6 = inlined_call_operand.vmem [shape: bf16[64,256], index: 6, kind: output, shape index: {1}]
  %7 = xla_tuple %s5, %s6
  %s8 = sld [smem:[#allocation0]]
  $region217: #{ngpt_forward.14} parent=0
    _
  %s10 = ssub.s32 1, %s8
  %s11 = scalar_select 0, %s10, %s8
  $region1: #{ngpt_forward.14} parent=0
    #allocation2 [shape = 'u8[16384]{0}', space=vmem, size = 0x4000, scoped, tag = 'input window, operand 0']
    #allocation3 [shape = 'u8[16384]{0}', space=vmem, size = 0x4000, scoped, tag = 'input window, operand 1']
    #allocation4 [shape = 'u8[16384]{0}', space=vmem, size = 0x4000, scoped, tag = 'output window, operand 0']
    #allocation5 [shape = 'u8[16384]{0}', space=vmem, size = 0x4000, scoped, tag = 'output window, operand 1']
    loop: start=0, step=1, limit=6
    $region2: #{ngpt_forward.14} parent=1 // loop_pre_header
      _
    $region3: #{ngpt_forward.14} parent=1 // loop_header
      %s13 = sphi 0, %s17
      %p14 = scmp.ge.s32.totalorder %s13, 6
      %s20 = sphi 0, %s39
      %s21 = sphi 0, %s35
      %s22 = sphi 0, %s31
      %s23 = sphi 0, %s20
      %s24 = sphi 0, %s21
      %s25 = sphi 0, %s22
      %s26 = sphi 0, %s23
      %s27 = sphi 0, %s24
      %s28 = sphi 0, %s25
      %s46 = sphi 0, %s48
      %s49 = sphi 0, %s46
      %s50 = sphi 0, %s49
      %s66 = sphi 0, %s50
      %s78 = sphi 0, %s80
      %s81 = sphi 0, %s78
      %s82 = sphi 0, %s81
      %s98 = sphi 0, %s82
      %s104 = sphi 0, %s106
      %s107 = sphi 0, %s104
      %s108 = sphi 0, %s107
      %s124 = sphi 0, %s108
      %s130 = sphi 0, %s132
      %s133 = sphi 0, %s130
      %s134 = sphi 0, %s133
      %s150 = sphi 0, %s134
      %s156 = sphi 0, %s158
      %s159 = sphi 0, %s156
      %s160 = sphi 0, %s159
      %s176 = sphi 0, %s160
      %s186 = sphi 0, %s188
      %s189 = sphi 0, %s186
      %s190 = sphi 0, %s189
      %s206 = sphi 0, %s190
      %s216 = sphi 0, %s218
      %s219 = sphi 0, %s216
      %s220 = sphi 0, %s219
      %s236 = sphi 0, %s220
    $region4: #{ngpt_forward.14} parent=1 // loop_header_branch
      %16 = sbr.rel (%p14) target = $region8
    $region5: #{ngpt_forward.14} parent=1 // loop_body
      %s18 = ssub.s32 %s13, 1
      %s19 = ssub.s32 %s13, 2
      %s29 = sadd.s32 1, %s22
      %p30 = scmp.ge.s32.totalorder %s29, 2
      %s31 = scalar_select %p30, 0, %s29
      %s32 = sadd.s32 1, %s21
      %s33 = scalar_select %p30, %s32, %s21
      %p34 = scmp.ge.s32.totalorder %s33, 1
      %s35 = scalar_select %p34, 0, %s33
      %s36 = sadd.s32 1, %s20
      %s37 = scalar_select %p34, %s36, %s20
      %p38 = scmp.ge.s32.totalorder %s37, 2
      %s39 = scalar_select %p38, 0, %s37
      %s40 = sadd.s32 %s20, %s21
      %s41 = sadd.s32 %s39, %s35
      %s42 = ssub.s32 %s40, %s41
      %s43 = ssub.s32 %s22, %s31
      %s44 = sor.u32 %s42, %s43
      %p45 = scmp.eq.s32.totalorder %s44, 0
      %s47 = sadd.s32 %s46, 1
      %s48 = scalar_select %p45, %s46, %s47
      %p51 = pneg %p45
      %p52 = scmp.eq.s32.totalorder %s13, 3
      %p53 = por %p51, %p52
      %p54 = scmp.ne.s32.totalorder %s46, %s49
      %p55 = scmp.eq.s32.totalorder %s13, 0
      %p56 = por %p54, %p55
      %p57 = scmp.ne.s32.totalorder %s46, %s49
      %p58 = scmp.eq.s32.totalorder %s18, 3
      %p59 = por %p57, %p58
      %p60 = scmp.ne.s32.totalorder %s49, %s50
      %p61 = scmp.eq.s32.totalorder %s18, 0
      %p62 = por %p60, %p61
      %p63 = scmp.ne.s32.totalorder %s49, %s50
      %p64 = scmp.eq.s32.totalorder %s19, 3
      %p65 = por %p63, %p64
      %p67 = scmp.ne.s32.totalorder %s50, %s66
      %p68 = scmp.eq.s32.totalorder %s19, 0
      %p69 = por %p67, %p68
      %s70 = sadd.s32 %s20, %s21
      %s71 = sadd.s32 %s22, 2
      %s72 = sadd.s32 %s39, %s35
      %s73 = sadd.s32 %s31, 2
      %s74 = ssub.s32 %s70, %s72
      %s75 = ssub.s32 %s71, %s73
      %s76 = sor.u32 %s74, %s75
      %p77 = scmp.eq.s32.totalorder %s76, 0
      %s79 = sadd.s32 %s78, 1
      %s80 = scalar_select %p77, %s78, %s79
      %p83 = pneg %p77
      %p84 = scmp.eq.s32.totalorder %s13, 3
      %p85 = por %p83, %p84
      %p86 = scmp.ne.s32.totalorder %s78, %s81
      %p87 = scmp.eq.s32.totalorder %s13, 0
      %p88 = por %p86, %p87
      %p89 = scmp.ne.s32.totalorder %s78, %s81
      %p90 = scmp.eq.s32.totalorder %s18, 3
      %p91 = por %p89, %p90
      %p92 = scmp.ne.s32.totalorder %s81, %s82
      %p93 = scmp.eq.s32.totalorder %s18, 0
      %p94 = por %p92, %p93
      %p95 = scmp.ne.s32.totalorder %s81, %s82
      %p96 = scmp.eq.s32.totalorder %s19, 3
      %p97 = por %p95, %p96
      %p99 = scmp.ne.s32.totalorder %s82, %s98
      %p100 = scmp.eq.s32.totalorder %s19, 0
      %p101 = por %p99, %p100
      %s102 = ssub.s32 %s21, %s35
      %p103 = scmp.eq.s32.totalorder %s102, 0
      %s105 = sadd.s32 %s104, 1
      %s106 = scalar_select %p103, %s104, %s105
      %p109 = pneg %p103
      %p110 = scmp.eq.s32.totalorder %s13, 3
      %p111 = por %p109, %p110
      %p112 = scmp.ne.s32.totalorder %s104, %s107
      %p113 = scmp.eq.s32.totalorder %s13, 0
      %p114 = por %p112, %p113
      %p115 = scmp.ne.s32.totalorder %s104, %s107
      %p116 = scmp.eq.s32.totalorder %s18, 3
      %p117 = por %p115, %p116
      %p118 = scmp.ne.s32.totalorder %s107, %s108
      %p119 = scmp.eq.s32.totalorder %s18, 0
      %p120 = por %p118, %p119
      %p121 = scmp.ne.s32.totalorder %s107, %s108
      %p122 = scmp.eq.s32.totalorder %s19, 3
      %p123 = por %p121, %p122
      %p125 = scmp.ne.s32.totalorder %s108, %s124
      %p126 = scmp.eq.s32.totalorder %s19, 0
      %p127 = por %p125, %p126
      %s128 = ssub.s32 %s21, %s35
      %p129 = scmp.eq.s32.totalorder %s128, 0
      %s131 = sadd.s32 %s130, 1
      %s132 = scalar_select %p129, %s130, %s131
      %p135 = pneg %p129
      %p136 = scmp.eq.s32.totalorder %s13, 3
      %p137 = por %p135, %p136
      %p138 = scmp.ne.s32.totalorder %s130, %s133
      %p139 = scmp.eq.s32.totalorder %s13, 0
      %p140 = por %p138, %p139
      %p141 = scmp.ne.s32.totalorder %s130, %s133
      %p142 = scmp.eq.s32.totalorder %s18, 3
      %p143 = por %p141, %p142
      %p144 = scmp.ne.s32.totalorder %s133, %s134
      %p145 = scmp.eq.s32.totalorder %s18, 0
      %p146 = por %p144, %p145
      %p147 = scmp.ne.s32.totalorder %s133, %s134
      %p148 = scmp.eq.s32.totalorder %s19, 3
      %p149 = por %p147, %p148
      %p151 = scmp.ne.s32.totalorder %s134, %s150
      %p152 = scmp.eq.s32.totalorder %s19, 0
      %p153 = por %p151, %p152
      %s154 = ssub.s32 %s22, %s31
      %p155 = scmp.eq.s32.totalorder %s154, 0
      %s157 = sadd.s32 %s156, 1
      %s158 = scalar_select %p155, %s156, %s157
      %p161 = pneg %p155
      %p162 = scmp.eq.s32.totalorder %s13, 3
      %p163 = por %p161, %p162
      %p164 = scmp.ne.s32.totalorder %s156, %s159
      %p165 = scmp.eq.s32.totalorder %s13, 0
      %p166 = por %p164, %p165
      %p167 = scmp.ne.s32.totalorder %s156, %s159
      %p168 = scmp.eq.s32.totalorder %s18, 3
      %p169 = por %p167, %p168
      %p170 = scmp.ne.s32.totalorder %s159, %s160
      %p171 = scmp.eq.s32.totalorder %s18, 0
      %p172 = por %p170, %p171
      %p173 = scmp.ne.s32.totalorder %s159, %s160
      %p174 = scmp.eq.s32.totalorder %s19, 3
      %p175 = por %p173, %p174
      %p177 = scmp.ne.s32.totalorder %s160, %s176
      %p178 = scmp.eq.s32.totalorder %s19, 0
      %p179 = por %p177, %p178
      %s180 = sadd.s32 %s20, %s21
      %s181 = sadd.s32 %s39, %s35
      %s182 = ssub.s32 %s180, %s181
      %s183 = ssub.s32 %s22, %s31
      %s184 = sor.u32 %s182, %s183
      %p185 = scmp.eq.s32.totalorder %s184, 0
      %s187 = sadd.s32 %s186, 1
      %s188 = scalar_select %p185, %s186, %s187
      %p191 = pneg %p185
      %p192 = scmp.eq.s32.totalorder %s13, 3
      %p193 = por %p191, %p192
      %p194 = scmp.ne.s32.totalorder %s186, %s189
      %p195 = scmp.eq.s32.totalorder %s13, 0
      %p196 = por %p194, %p195
      %p197 = scmp.ne.s32.totalorder %s186, %s189
      %p198 = scmp.eq.s32.totalorder %s18, 3
      %p199 = por %p197, %p198
      %p200 = scmp.ne.s32.totalorder %s189, %s190
      %p201 = scmp.eq.s32.totalorder %s18, 0
      %p202 = por %p200, %p201
      %p203 = scmp.ne.s32.totalorder %s189, %s190
      %p204 = scmp.eq.s32.totalorder %s19, 3
      %p205 = por %p203, %p204
      %p207 = scmp.ne.s32.totalorder %s190, %s206
      %p208 = scmp.eq.s32.totalorder %s19, 0
      %p209 = por %p207, %p208
      %s210 = sadd.s32 %s20, %s21
      %s211 = sadd.s32 %s39, %s35
      %s212 = ssub.s32 %s210, %s211
      %s213 = ssub.s32 %s22, %s31
      %s214 = sor.u32 %s212, %s213
      %p215 = scmp.eq.s32.totalorder %s214, 0
      %s217 = sadd.s32 %s216, 1
      %s218 = scalar_select %p215, %s216, %s217
      %p221 = pneg %p215
      %p222 = scmp.eq.s32.totalorder %s13, 3
      %p223 = por %p221, %p222
      %p224 = scmp.ne.s32.totalorder %s216, %s219
      %p225 = scmp.eq.s32.totalorder %s13, 0
      %p226 = por %p224, %p225
      %p227 = scmp.ne.s32.totalorder %s216, %s219
      %p228 = scmp.eq.s32.totalorder %s18, 3
      %p229 = por %p227, %p228
      %p230 = scmp.ne.s32.totalorder %s219, %s220
      %p231 = scmp.eq.s32.totalorder %s18, 0
      %p232 = por %p230, %p231
      %p233 = scmp.ne.s32.totalorder %s219, %s220
      %p234 = scmp.eq.s32.totalorder %s19, 3
      %p235 = por %p233, %p234
      %p237 = scmp.ne.s32.totalorder %s220, %s236
      %p238 = scmp.eq.s32.totalorder %s19, 0
      %p239 = por %p237, %p238
      %p240 = scmp.le.s32.totalorder 1, %s13
      %p241 = scmp.lt.s32.totalorder %s13, 5
      %p242 = pnand %p240, %p241
      %p243 = pneg %p242
      // Predicated region
      $region9: #{ngpt_forward.14} parent=5 // pred_check
        _
      $region10: #{ngpt_forward.14} parent=5 // pred_check_branch
        %245 = sbr.rel (%p242) target = $region12
      $region11: #{ngpt_forward.14} parent=5 // pred_region
        %s246 = ssub.s32 %s13, 1
        // Predicated region
        $region13: #{ngpt_forward.14} parent=11 // pred_check
          %p247 = pneg %p120
        $region14: #{ngpt_forward.14} parent=11 // pred_check_branch
          %249 = sbr.rel (%p247) target = $region16
        $region15: #{ngpt_forward.14} parent=11 // pred_region
          %s250 = smul.u32 4, %s24
          %p251 = scmp.lt.s32.totalorder %s250, 3
          %s252 = scalar_select %p251, %s250, 3
          %s253 = smul.addr %s252, 8
          %s254 = scalar_lea.vmem %s2, %s253
          %s255 = smul.u32 4, %s24
        $region16: #{ngpt_forward.14} parent=11 // pred_fallthru
          _
        // Predicated region
        $region17: #{ngpt_forward.14} parent=11 // pred_check
          %p256 = pneg %p146
        $region18: #{ngpt_forward.14} parent=11 // pred_check_branch
          %258 = sbr.rel (%p256) target = $region20
        $region19: #{ngpt_forward.14} parent=11 // pred_region
          %s259 = smul.u32 4, %s24
          %p260 = scmp.lt.s32.totalorder %s259, 3
          %s261 = scalar_select %p260, %s259, 3
          %s262 = smul.addr %s261, 8
          %s263 = scalar_lea.vmem %s3, %s262
          %s264 = smul.u32 4, %s24
        $region20: #{ngpt_forward.14} parent=11 // pred_fallthru
          _
      $region12: #{ngpt_forward.14} parent=5 // pred_fallthru
        _
      %p265 = scmp.lt.s32.totalorder %s13, 4
      // Predicated region
      $region21: #{ngpt_forward.14} parent=5 // pred_check
        %p266 = pneg %p265
      $region22: #{ngpt_forward.14} parent=5 // pred_check_branch
        %268 = sbr.rel (%p266) target = $region24
      $region23: #{ngpt_forward.14} parent=5 // pred_region
        // Predicated region
        $region25: #{ngpt_forward.14} parent=23 // pred_check
          %p269 = pneg %p56
        $region26: #{ngpt_forward.14} parent=23 // pred_check_branch
          %271 = sbr.rel (%p269) target = $region28
        $region27: #{ngpt_forward.14} parent=23 // pred_region
          %s272 = sand.u32 %s46, 1
          %s273 = sand.u32 %s46, 1
          %s274 = smul.addr %s273, 16
          %s275 = scalar_lea.vmem [#allocation2], %s274
          %s276 = sadd.s32 %s20, %s21
          %s277 = smul.u32 4, %s276
          %s278 = smul.addr %s277, 6
          %s279 = sadd.s32 %s22, %s278
          %s280 = smul.addr %s279, 4
          %s281 = scalar_lea.vmem %s0, %s280
          // Predicated region
          $region29: #{ngpt_forward.14} parent=27 // pred_check
            _
          $region30: #{ngpt_forward.14} parent=27 // pred_check_branch
            %283 = sbr.rel (0) target = $region32
          $region31: #{ngpt_forward.14} parent=27 // pred_region
            // Predicated region
            $region33: #{ngpt_forward.14} parent=31 // pred_check
              _
            $region34: #{ngpt_forward.14} parent=31 // pred_check_branch
              %285 = sbr.rel target = $region36
            $region35: #{ngpt_forward.14} parent=31 // pred_region
              // Predicated region
              $region48: #{ngpt_forward.14} parent=35 // pred_check
                _
              $region49: #{ngpt_forward.14} parent=35 // pred_check_branch
                %307 = sbr.rel (0) target = $region51
              $region50: #{ngpt_forward.14} parent=35 // pred_region
                loop: start=0, step=1, limit=1
                $region52: #{ngpt_forward.14} parent=50 // loop_pre_header
                  _
                $region53: #{ngpt_forward.14} parent=50 // loop_header
                  %s309 = sphi 0, %s313
                  %p310 = scmp.ge.s32.totalorder %s309, 1
                  %s314 = sphi %s281, %s281
                  %s315 = sphi %s275, %s275
                $region54: #{ngpt_forward.14} parent=50 // loop_header_branch
                  %312 = sbr.rel (%p310) target = $region58
                $region55: #{ngpt_forward.14} parent=50 // loop_body
                  _
                $region56: #{ngpt_forward.14} parent=50 // loop_footer
                  %s313 = sadd.s32 1, %s309
                $region57: #{ngpt_forward.14} parent=50 // loop_footer_branch
                  %308 = sbr.rel target = $region53
                $region58: #{ngpt_forward.14} parent=50 // loop_exit
                  _
                %s317 = ssub.s32 16, 1
                loop: start=0, step=1, limit=1
                $region59: #{ngpt_forward.14} parent=50 // loop_pre_header
                  _
                $region60: #{ngpt_forward.14} parent=50 // loop_header
                  %s319 = sphi 0, %s323
                  %p320 = scmp.ge.s32.totalorder %s319, 1
                  %s324 = sphi %s281, %s281
                  %s325 = sphi %s275, %s275
                $region61: #{ngpt_forward.14} parent=50 // loop_header_branch
                  %322 = sbr.rel (%p320) target = $region65
                $region62: #{ngpt_forward.14} parent=50 // loop_body
                  %v326 = vld [vmem:[%s324] sm:%s317]
                  %327 = vst [vmem:[%s325] sm:%s317] %v326
                  %v328 = vld [vmem:[%s324 + $0x18] sm:%s317]
                  %329 = vst [vmem:[%s325 + $0x4] sm:%s317] %v328
                  %v330 = vld [vmem:[%s324 + $0x30] sm:%s317]
                  %331 = vst [vmem:[%s325 + $0x8] sm:%s317] %v330
                  %v332 = vld [vmem:[%s324 + $0x48] sm:%s317]
                  %333 = vst [vmem:[%s325 + $0xc] sm:%s317] %v332
                $region63: #{ngpt_forward.14} parent=50 // loop_footer
                  %s323 = sadd.s32 1, %s319
                $region64: #{ngpt_forward.14} parent=50 // loop_footer_branch
                  %318 = sbr.rel target = $region60
                $region65: #{ngpt_forward.14} parent=50 // loop_exit
                  _
              $region51: #{ngpt_forward.14} parent=35 // pred_fallthru
                _
            $region36: #{ngpt_forward.14} parent=31 // pred_fallthru
              _
            // Predicated region
            $region37: #{ngpt_forward.14} parent=31 // pred_check
              _
            $region38: #{ngpt_forward.14} parent=31 // pred_check_branch
              %287 = sbr.rel (0) target = $region40
            $region39: #{ngpt_forward.14} parent=31 // pred_region
              %s289 = ssub.s32 16, 1
              loop: start=0, step=1, limit=1
              $region41: #{ngpt_forward.14} parent=39 // loop_pre_header
                _
              $region42: #{ngpt_forward.14} parent=39 // loop_header
                %s291 = sphi 0, %s295
                %p292 = scmp.ge.s32.totalorder %s291, 1
                %s296 = sphi %s281, %s281
                %s297 = sphi %s275, %s275
              $region43: #{ngpt_forward.14} parent=39 // loop_header_branch
                %294 = sbr.rel (%p292) target = $region47
              $region44: #{ngpt_forward.14} parent=39 // loop_body
                %v298 = vld [vmem:[%s296] sm:%s289]
                %299 = vst [vmem:[%s297] sm:%s289] %v298
                %v300 = vld [vmem:[%s296 + $0x18] sm:%s289]
                %301 = vst [vmem:[%s297 + $0x4] sm:%s289] %v300
                %v302 = vld [vmem:[%s296 + $0x30] sm:%s289]
                %303 = vst [vmem:[%s297 + $0x8] sm:%s289] %v302
                %v304 = vld [vmem:[%s296 + $0x48] sm:%s289]
                %305 = vst [vmem:[%s297 + $0xc] sm:%s289] %v304
              $region45: #{ngpt_forward.14} parent=39 // loop_footer
                %s295 = sadd.s32 1, %s291
              $region46: #{ngpt_forward.14} parent=39 // loop_footer_branch
                %290 = sbr.rel target = $region42
              $region47: #{ngpt_forward.14} parent=39 // loop_exit
                _
            $region40: #{ngpt_forward.14} parent=31 // pred_fallthru
              _
          $region32: #{ngpt_forward.14} parent=27 // pred_fallthru
            _
          %334 = vnop
        $region28: #{ngpt_forward.14} parent=23 // pred_fallthru
          _
        // Predicated region
        $region66: #{ngpt_forward.14} parent=23 // pred_check
          %p335 = pneg %p88
        $region67: #{ngpt_forward.14} parent=23 // pred_check_branch
          %337 = sbr.rel (%p335) target = $region69
        $region68: #{ngpt_forward.14} parent=23 // pred_region
          %s338 = sand.u32 %s78, 1
          %s339 = sand.u32 %s78, 1
          %s340 = smul.addr %s339, 16
          %s341 = scalar_lea.vmem [#allocation3], %s340
          %s342 = sadd.s32 %s20, %s21
          %s343 = sadd.s32 %s22, 2
          %s344 = smul.u32 4, %s342
          %s345 = smul.addr %s344, 6
          %s346 = sadd.s32 %s343, %s345
          %s347 = smul.addr %s346, 4
          %s348 = scalar_lea.vmem %s1, %s347
          // Predicated region
          $region70: #{ngpt_forward.14} parent=68 // pred_check
            _
          $region71: #{ngpt_forward.14} parent=68 // pred_check_branch
            %350 = sbr.rel (0) target = $region73
          $region72: #{ngpt_forward.14} parent=68 // pred_region
            // Predicated region
            $region74: #{ngpt_forward.14} parent=72 // pred_check
              _
            $region75: #{ngpt_forward.14} parent=72 // pred_check_branch
              %352 = sbr.rel target = $region77
            $region76: #{ngpt_forward.14} parent=72 // pred_region
              // Predicated region
              $region89: #{ngpt_forward.14} parent=76 // pred_check
                _
              $region90: #{ngpt_forward.14} parent=76 // pred_check_branch
                %374 = sbr.rel (0) target = $region92
              $region91: #{ngpt_forward.14} parent=76 // pred_region
                loop: start=0, step=1, limit=1
                $region93: #{ngpt_forward.14} parent=91 // loop_pre_header
                  _
                $region94: #{ngpt_forward.14} parent=91 // loop_header
                  %s376 = sphi 0, %s380
                  %p377 = scmp.ge.s32.totalorder %s376, 1
                  %s381 = sphi %s348, %s348
                  %s382 = sphi %s341, %s341
                $region95: #{ngpt_forward.14} parent=91 // loop_header_branch
                  %379 = sbr.rel (%p377) target = $region99
                $region96: #{ngpt_forward.14} parent=91 // loop_body
                  _
                $region97: #{ngpt_forward.14} parent=91 // loop_footer
                  %s380 = sadd.s32 1, %s376
                $region98: #{ngpt_forward.14} parent=91 // loop_footer_branch
                  %375 = sbr.rel target = $region94
                $region99: #{ngpt_forward.14} parent=91 // loop_exit
                  _
                %s384 = ssub.s32 16, 1
                loop: start=0, step=1, limit=1
                $region100: #{ngpt_forward.14} parent=91 // loop_pre_header
                  _
                $region101: #{ngpt_forward.14} parent=91 // loop_header
                  %s386 = sphi 0, %s390
                  %p387 = scmp.ge.s32.totalorder %s386, 1
                  %s391 = sphi %s348, %s348
                  %s392 = sphi %s341, %s341
                $region102: #{ngpt_forward.14} parent=91 // loop_header_branch
                  %389 = sbr.rel (%p387) target = $region106
                $region103: #{ngpt_forward.14} parent=91 // loop_body
                  %v393 = vld [vmem:[%s391] sm:%s384]
                  %394 = vst [vmem:[%s392] sm:%s384] %v393
                  %v395 = vld [vmem:[%s391 + $0x18] sm:%s384]
                  %396 = vst [vmem:[%s392 + $0x4] sm:%s384] %v395
                  %v397 = vld [vmem:[%s391 + $0x30] sm:%s384]
                  %398 = vst [vmem:[%s392 + $0x8] sm:%s384] %v397
                  %v399 = vld [vmem:[%s391 + $0x48] sm:%s384]
                  %400 = vst [vmem:[%s392 + $0xc] sm:%s384] %v399
                $region104: #{ngpt_forward.14} parent=91 // loop_footer
                  %s390 = sadd.s32 1, %s386
                $region105: #{ngpt_forward.14} parent=91 // loop_footer_branch
                  %385 = sbr.rel target = $region101
                $region106: #{ngpt_forward.14} parent=91 // loop_exit
                  _
              $region92: #{ngpt_forward.14} parent=76 // pred_fallthru
                _
            $region77: #{ngpt_forward.14} parent=72 // pred_fallthru
              _
            // Predicated region
            $region78: #{ngpt_forward.14} parent=72 // pred_check
              _
            $region79: #{ngpt_forward.14} parent=72 // pred_check_branch
              %354 = sbr.rel (0) target = $region81
            $region80: #{ngpt_forward.14} parent=72 // pred_region
              %s356 = ssub.s32 16, 1
              loop: start=0, step=1, limit=1
              $region82: #{ngpt_forward.14} parent=80 // loop_pre_header
                _
              $region83: #{ngpt_forward.14} parent=80 // loop_header
                %s358 = sphi 0, %s362
                %p359 = scmp.ge.s32.totalorder %s358, 1
                %s363 = sphi %s348, %s348
                %s364 = sphi %s341, %s341
              $region84: #{ngpt_forward.14} parent=80 // loop_header_branch
                %361 = sbr.rel (%p359) target = $region88
              $region85: #{ngpt_forward.14} parent=80 // loop_body
                %v365 = vld [vmem:[%s363] sm:%s356]
                %366 = vst [vmem:[%s364] sm:%s356] %v365
                %v367 = vld [vmem:[%s363 + $0x18] sm:%s356]
                %368 = vst [vmem:[%s364 + $0x4] sm:%s356] %v367
                %v369 = vld [vmem:[%s363 + $0x30] sm:%s356]
                %370 = vst [vmem:[%s364 + $0x8] sm:%s356] %v369
                %v371 = vld [vmem:[%s363 + $0x48] sm:%s356]
                %372 = vst [vmem:[%s364 + $0xc] sm:%s356] %v371
              $region86: #{ngpt_forward.14} parent=80 // loop_footer
                %s362 = sadd.s32 1, %s358
              $region87: #{ngpt_forward.14} parent=80 // loop_footer_branch
                %357 = sbr.rel target = $region83
              $region88: #{ngpt_forward.14} parent=80 // loop_exit
                _
            $region81: #{ngpt_forward.14} parent=72 // pred_fallthru
              _
          $region73: #{ngpt_forward.14} parent=68 // pred_fallthru
            _
          %401 = vnop
        $region69: #{ngpt_forward.14} parent=23 // pred_fallthru
          _
        // Predicated region
        $region107: #{ngpt_forward.14} parent=23 // pred_check
          %p402 = pneg %p166
        $region108: #{ngpt_forward.14} parent=23 // pred_check_branch
          %404 = sbr.rel (%p402) target = $region110
        $region109: #{ngpt_forward.14} parent=23 // pred_region
          %p405 = scmp.lt.s32.totalorder %s22, 1
          %s406 = scalar_select %p405, %s22, 1
          %s407 = scalar_lea.vmem %s4, %s406
        $region110: #{ngpt_forward.14} parent=23 // pred_fallthru
          _
      $region24: #{ngpt_forward.14} parent=5 // pred_fallthru
        _
      %p408 = scmp.le.s32.totalorder 1, %s13
      %p409 = scmp.lt.s32.totalorder %s13, 5
      %p410 = pnand %p408, %p409
      %p411 = pneg %p410
      // Predicated region
      $region111: #{ngpt_forward.14} parent=5 // pred_check
        _
      $region112: #{ngpt_forward.14} parent=5 // pred_check_branch
        %413 = sbr.rel (%p410) target = $region114
      $region113: #{ngpt_forward.14} parent=5 // pred_region
        %s414 = ssub.s32 %s13, 1
        %s415 = sand.u32 %s49, 1
        %s416 = sand.u32 %s49, 1
        %s417 = smul.addr %s416, 16
        %s418 = scalar_lea.vmem [#allocation2], %s417
        // Predicated region
        $region115: #{ngpt_forward.14} parent=113 // pred_check
          %p419 = pneg %p62
        $region116: #{ngpt_forward.14} parent=113 // pred_check_branch
          %421 = sbr.rel (%p419) target = $region118
        $region117: #{ngpt_forward.14} parent=113 // pred_region
          _
        $region118: #{ngpt_forward.14} parent=113 // pred_fallthru
          _
        %s422 = sand.u32 %s81, 1
        %s423 = sand.u32 %s81, 1
        %s424 = smul.addr %s423, 16
        %s425 = scalar_lea.vmem [#allocation3], %s424
        // Predicated region
        $region119: #{ngpt_forward.14} parent=113 // pred_check
          %p426 = pneg %p94
        $region120: #{ngpt_forward.14} parent=113 // pred_check_branch
          %428 = sbr.rel (%p426) target = $region122
        $region121: #{ngpt_forward.14} parent=113 // pred_region
          _
        $region122: #{ngpt_forward.14} parent=113 // pred_fallthru
          _
        %s429 = sand.u32 %s49, 1
        %s430 = sand.u32 %s49, 1
        %s431 = smul.addr %s430, 16
        %s432 = scalar_lea.vmem [#allocation2], %s431
        %p433 = pneg %p62
        %p434 = pneg %p59
        %s435 = sand.u32 %s81, 1
        %s436 = sand.u32 %s81, 1
        %s437 = smul.addr %s436, 16
        %s438 = scalar_lea.vmem [#allocation3], %s437
        %p439 = pneg %p94
        %p440 = pneg %p91
        %s441 = smul.u32 4, %s24
        %p442 = scmp.lt.s32.totalorder %s441, 3
        %s443 = scalar_select %p442, %s441, 3
        %s444 = smul.addr %s443, 8
        %s445 = scalar_lea.vmem %s2, %s444
        %p446 = pneg %p120
        %p447 = pneg %p117
        %s448 = smul.u32 4, %s24
        %p449 = scmp.lt.s32.totalorder %s448, 3
        %s450 = scalar_select %p449, %s448, 3
        %s451 = smul.addr %s450, 8
        %s452 = scalar_lea.vmem %s3, %s451
        %p453 = pneg %p146
        %p454 = pneg %p143
        %p455 = scmp.lt.s32.totalorder %s25, 1
        %s456 = scalar_select %p455, %s25, 1
        %s457 = scalar_lea.vmem %s4, %s456
        %p458 = pneg %p172
        %p459 = pneg %p169
        %p460 = pneg %p202
        %p461 = pneg %p199
        %s462 = sand.u32 %s189, 1
        %s463 = sand.u32 %s189, 1
        %s464 = smul.addr %s463, 16
        %s465 = scalar_lea.vmem [#allocation4], %s464
        %p466 = pneg %p232
        %p467 = pneg %p229
        %s468 = sand.u32 %s219, 1
        %s469 = sand.u32 %s219, 1
        %s470 = smul.addr %s469, 16
        %s471 = scalar_lea.vmem [#allocation5], %s470
        %s472 = sadd.s32 %s23, %s24
        %s473 = smul.u32 4, %s472
        %s474 = sadd.s32 %s23, %s24
        %s475 = sadd.s32 %s25, 2
        %s476 = smul.u32 4, %s474
        %s477 = smul.u32 4, %s24
        %p478 = scmp.lt.s32.totalorder %s477, 3
        %s479 = scalar_select %p478, %s477, 3
        %s480 = smul.addr %s479, 8
        %s481 = scalar_lea.vmem %s2, %s480
        %s482 = smul.u32 4, %s24
        %s483 = smul.u32 4, %s24
        %p484 = scmp.lt.s32.totalorder %s483, 3
        %s485 = scalar_select %p484, %s483, 3
        %s486 = smul.addr %s485, 8
        %s487 = scalar_lea.vmem %s3, %s486
        %s488 = smul.u32 4, %s24
        %p489 = scmp.lt.s32.totalorder %s25, 1
        %s490 = scalar_select %p489, %s25, 1
        %s491 = scalar_lea.vmem %s4, %s490
        %s492 = sadd.s32 %s23, %s24
        %s493 = smul.u32 4, %s492
        %s494 = sadd.s32 %s23, %s24
        %s495 = smul.u32 4, %s494
        %v496 = vld [vmem:[%s481] sm:$0xff]
        %v497 = vld [vmem:[%s481 + $0x8] sm:$0xff]
        %v498 = vld [vmem:[%s481 + $0x10] sm:$0xff]
        %v499 = vld [vmem:[%s481 + $0x18] sm:$0xff]
        %v500 = vld [vmem:[%s487] sm:$0xff]
        %v501 = vld [vmem:[%s487 + $0x8] sm:$0xff]
        %v502 = vld [vmem:[%s487 + $0x10] sm:$0xff]
        %v503 = vld [vmem:[%s487 + $0x18] sm:$0xff]
        %v504 = vld [vmem:[%s491] sm:$0x1]
        %v505 = vld [vmem:[%s418] sm:$0xf]
        %v506 = vld [vmem:[%s418 + $0x4] sm:$0xf]
        %v507 = vld [vmem:[%s418 + $0x8] sm:$0xf]
        %v508 = vld [vmem:[%s418 + $0xc] sm:$0xf]
        %v509 = vunpack.c.l.bf16 %v505
        %v510 = vunpack.c.l.bf16 %v506
        %v511 = vunpack.c.l.bf16 %v507
        %v512 = vunpack.c.l.bf16 %v508
        %v513 = vmul.f32 %v509, %v496
        %v514 = vmul.f32 %v510, %v497
        %v515 = vmul.f32 %v511, %v498
        %v516 = vmul.f32 %v512, %v499
        %517 = vrot.lane.b32.xlu0 %v509, 64
        %v518 = vpop.permute.xlu0 %517
        %519 = vrot.lane.b32.xlu0 %v510, 64
        %v520 = vpop.permute.xlu0 %519
        %521 = vrot.lane.b32.xlu0 %v511, 64
        %v522 = vpop.permute.xlu0 %521
        %523 = vrot.lane.b32.xlu0 %v512, 64
        %v524 = vpop.permute.xlu0 %523
        %v525 = vmul.f32 %v518, %v500
        %v526 = vmul.f32 %v520, %v501
        %v527 = vmul.f32 %v522, %v502
        %v528 = vmul.f32 %v524, %v503
        %v529 = vadd.f32 %v513, %v525
        %v530 = vadd.f32 %v514, %v526
        %v531 = vadd.f32 %v515, %v527
        %v532 = vadd.f32 %v516, %v528
        %v533 = vmul.f32 %v504, 11.313708
        %v535 = vlaneseq
        %v536 = vshrl.u32 %v535, 7
        %v537 = vsub.s32 0, %v536
        %v538 = vrot.slane %v533, %v537
        %v540 = vmul.f32 %v529, %v538
        %v541 = vmul.f32 %v530, %v538
        %v542 = vmul.f32 %v531, %v538
        %v543 = vmul.f32 %v532, %v538
        %v544 = vld [vmem:[%s425] sm:$0xf]
        %v545 = vld [vmem:[%s425 + $0x4] sm:$0xf]
        %v546 = vld [vmem:[%s425 + $0x8] sm:$0xf]
        %v547 = vld [vmem:[%s425 + $0xc] sm:$0xf]
        %v548 = vunpack.c.l.bf16 %v544
        %v549 = vunpack.c.l.bf16 %v545
        %v550 = vunpack.c.l.bf16 %v546
        %v551 = vunpack.c.l.bf16 %v547
        %v552 = vmul.f32 %v548, %v496
        %v553 = vmul.f32 %v549, %v497
        %v554 = vmul.f32 %v550, %v498
        %v555 = vmul.f32 %v551, %v499
        %556 = vrot.lane.b32.xlu0 %v548, 64
        %v557 = vpop.permute.xlu0 %556
        %558 = vrot.lane.b32.xlu0 %v549, 64
        %v559 = vpop.permute.xlu0 %558
        %560 = vrot.lane.b32.xlu0 %v550, 64
        %v561 = vpop.permute.xlu0 %560
        %562 = vrot.lane.b32.xlu0 %v551, 64
        %v563 = vpop.permute.xlu0 %562
        %v564 = vmul.f32 %v557, %v500
        %v565 = vmul.f32 %v559, %v501
        %v566 = vmul.f32 %v561, %v502
        %v567 = vmul.f32 %v563, %v503
        %v568 = vadd.f32 %v552, %v564
        %v569 = vadd.f32 %v553, %v565
        %v570 = vadd.f32 %v554, %v566
        %v571 = vadd.f32 %v555, %v567
        %v573 = vlaneseq
        %v574 = vshrl.u32 %v573, 7
        %v575 = vsub.s32 0, %v574
        %v576 = vrot.slane %v504, %v575
        %v578 = vmul.f32 %v568, %v576
        %v579 = vmul.f32 %v569, %v576
        %v580 = vmul.f32 %v570, %v576
        %v581 = vmul.f32 %v571, %v576
        %v582 = vpack.c.bf16 %v541, %v540
        %v583 = vpack.c.bf16 %v543, %v542
        %v586 = vunpack.c.l.b16 %v582
        %v587 = vunpack.c.h.b16 %v582
        %v588 = vunpack.c.l.b16 %v583
        %v589 = vunpack.c.h.b16 %v583
        %v590 = vpack.c.b16 %v586, %v586
        %v591 = vpack.c.b16 %v587, %v587
        %v592 = vpack.c.b16 %v588, %v588
        %v593 = vpack.c.b16 %v589, %v589
        %598 = vst [vmem:[%s465] sm:$0xf] %v590
        %599 = vst [vmem:[%s465 + $0x4] sm:$0xf] %v591
        %600 = vst [vmem:[%s465 + $0x8] sm:$0xf] %v592
        %601 = vst [vmem:[%s465 + $0xc] sm:$0xf] %v593
        %v602 = vpack.c.bf16 %v579, %v578
        %v603 = vpack.c.bf16 %v581, %v580
        %v606 = vunpack.c.l.b16 %v602
        %v607 = vunpack.c.h.b16 %v602
        %v608 = vunpack.c.l.b16 %v603
        %v609 = vunpack.c.h.b16 %v603
        %v610 = vpack.c.b16 %v606, %v606
        %v611 = vpack.c.b16 %v607, %v607
        %v612 = vpack.c.b16 %v608, %v608
        %v613 = vpack.c.b16 %v609, %v609
        %618 = vst [vmem:[%s471] sm:$0xf] %v610
        %619 = vst [vmem:[%s471 + $0x4] sm:$0xf] %v611
        %620 = vst [vmem:[%s471 + $0x8] sm:$0xf] %v612
        %621 = vst [vmem:[%s471 + $0xc] sm:$0xf] %v613
        %s622 = sand.u32 %s189, 1
        %s623 = sand.u32 %s189, 1
        %s624 = smul.addr %s623, 16
        %s625 = scalar_lea.vmem [#allocation4], %s624
        %s626 = sand.u32 %s219, 1
        %s627 = sand.u32 %s219, 1
        %s628 = smul.addr %s627, 16
        %s629 = scalar_lea.vmem [#allocation5], %s628
        // Predicated region
        $region123: #{ngpt_forward.14} parent=113 // pred_check
          %p630 = pneg %p199
        $region124: #{ngpt_forward.14} parent=113 // pred_check_branch
          %632 = sbr.rel (%p630) target = $region126
        $region125: #{ngpt_forward.14} parent=113 // pred_region
          %s633 = sadd.s32 %s23, %s24
          %s634 = smul.u32 4, %s633
          %s635 = smul.addr %s634, 2
          %s636 = sadd.s32 %s25, %s635
          %s637 = smul.addr %s636, 4
          %s638 = scalar_lea.vmem %s5, %s637
          // Predicated region
          $region127: #{ngpt_forward.14} parent=125 // pred_check
            _
          $region128: #{ngpt_forward.14} parent=125 // pred_check_branch
            %640 = sbr.rel (0) target = $region130
          $region129: #{ngpt_forward.14} parent=125 // pred_region
            // Predicated region
            $region131: #{ngpt_forward.14} parent=129 // pred_check
              _
            $region132: #{ngpt_forward.14} parent=129 // pred_check_branch
              %642 = sbr.rel target = $region134
            $region133: #{ngpt_forward.14} parent=129 // pred_region
              // Predicated region
              $region146: #{ngpt_forward.14} parent=133 // pred_check
                _
              $region147: #{ngpt_forward.14} parent=133 // pred_check_branch
                %664 = sbr.rel (0) target = $region149
              $region148: #{ngpt_forward.14} parent=133 // pred_region
                loop: start=0, step=1, limit=1
                $region150: #{ngpt_forward.14} parent=148 // loop_pre_header
                  _
                $region151: #{ngpt_forward.14} parent=148 // loop_header
                  %s666 = sphi 0, %s670
                  %p667 = scmp.ge.s32.totalorder %s666, 1
                  %s671 = sphi %s625, %s625
                  %s672 = sphi %s638, %s638
                $region152: #{ngpt_forward.14} parent=148 // loop_header_branch
                  %669 = sbr.rel (%p667) target = $region156
                $region153: #{ngpt_forward.14} parent=148 // loop_body
                  _
                $region154: #{ngpt_forward.14} parent=148 // loop_footer
                  %s670 = sadd.s32 1, %s666
                $region155: #{ngpt_forward.14} parent=148 // loop_footer_branch
                  %665 = sbr.rel target = $region151
                $region156: #{ngpt_forward.14} parent=148 // loop_exit
                  _
                %s674 = ssub.s32 16, 1
                loop: start=0, step=1, limit=1
                $region157: #{ngpt_forward.14} parent=148 // loop_pre_header
                  _
                $region158: #{ngpt_forward.14} parent=148 // loop_header
                  %s676 = sphi 0, %s680
                  %p677 = scmp.ge.s32.totalorder %s676, 1
                  %s681 = sphi %s625, %s625
                  %s682 = sphi %s638, %s638
                $region159: #{ngpt_forward.14} parent=148 // loop_header_branch
                  %679 = sbr.rel (%p677) target = $region163
                $region160: #{ngpt_forward.14} parent=148 // loop_body
                  %v683 = vld [vmem:[%s681] sm:%s674]
                  %684 = vst [vmem:[%s682] sm:%s674] %v683
                  %v685 = vld [vmem:[%s681 + $0x4] sm:%s674]
                  %686 = vst [vmem:[%s682 + $0x8] sm:%s674] %v685
                  %v687 = vld [vmem:[%s681 + $0x8] sm:%s674]
                  %688 = vst [vmem:[%s682 + $0x10] sm:%s674] %v687
                  %v689 = vld [vmem:[%s681 + $0xc] sm:%s674]
                  %690 = vst [vmem:[%s682 + $0x18] sm:%s674] %v689
                $region161: #{ngpt_forward.14} parent=148 // loop_footer
                  %s680 = sadd.s32 1, %s676
                $region162: #{ngpt_forward.14} parent=148 // loop_footer_branch
                  %675 = sbr.rel target = $region158
                $region163: #{ngpt_forward.14} parent=148 // loop_exit
                  _
              $region149: #{ngpt_forward.14} parent=133 // pred_fallthru
                _
            $region134: #{ngpt_forward.14} parent=129 // pred_fallthru
              _
            // Predicated region
            $region135: #{ngpt_forward.14} parent=129 // pred_check
              _
            $region136: #{ngpt_forward.14} parent=129 // pred_check_branch
              %644 = sbr.rel (0) target = $region138
            $region137: #{ngpt_forward.14} parent=129 // pred_region
              %s646 = ssub.s32 16, 1
              loop: start=0, step=1, limit=1
              $region139: #{ngpt_forward.14} parent=137 // loop_pre_header
                _
              $region140: #{ngpt_forward.14} parent=137 // loop_header
                %s648 = sphi 0, %s652
                %p649 = scmp.ge.s32.totalorder %s648, 1
                %s653 = sphi %s625, %s625
                %s654 = sphi %s638, %s638
              $region141: #{ngpt_forward.14} parent=137 // loop_header_branch
                %651 = sbr.rel (%p649) target = $region145
              $region142: #{ngpt_forward.14} parent=137 // loop_body
                %v655 = vld [vmem:[%s653] sm:%s646]
                %656 = vst [vmem:[%s654] sm:%s646] %v655
                %v657 = vld [vmem:[%s653 + $0x4] sm:%s646]
                %658 = vst [vmem:[%s654 + $0x8] sm:%s646] %v657
                %v659 = vld [vmem:[%s653 + $0x8] sm:%s646]
                %660 = vst [vmem:[%s654 + $0x10] sm:%s646] %v659
                %v661 = vld [vmem:[%s653 + $0xc] sm:%s646]
                %662 = vst [vmem:[%s654 + $0x18] sm:%s646] %v661
              $region143: #{ngpt_forward.14} parent=137 // loop_footer
                %s652 = sadd.s32 1, %s648
              $region144: #{ngpt_forward.14} parent=137 // loop_footer_branch
                %647 = sbr.rel target = $region140
              $region145: #{ngpt_forward.14} parent=137 // loop_exit
                _
            $region138: #{ngpt_forward.14} parent=129 // pred_fallthru
              _
          $region130: #{ngpt_forward.14} parent=125 // pred_fallthru
            _
          %691 = vnop
        $region126: #{ngpt_forward.14} parent=113 // pred_fallthru
          _
        // Predicated region
        $region164: #{ngpt_forward.14} parent=113 // pred_check
          %p692 = pneg %p229
        $region165: #{ngpt_forward.14} parent=113 // pred_check_branch
          %694 = sbr.rel (%p692) target = $region167
        $region166: #{ngpt_forward.14} parent=113 // pred_region
          %s695 = sadd.s32 %s23, %s24
          %s696 = smul.u32 4, %s695
          %s697 = smul.addr %s696, 2
          %s698 = sadd.s32 %s25, %s697
          %s699 = smul.addr %s698, 4
          %s700 = scalar_lea.vmem %s6, %s699
          // Predicated region
          $region168: #{ngpt_forward.14} parent=166 // pred_check
            _
          $region169: #{ngpt_forward.14} parent=166 // pred_check_branch
            %702 = sbr.rel (0) target = $region171
          $region170: #{ngpt_forward.14} parent=166 // pred_region
            // Predicated region
            $region172: #{ngpt_forward.14} parent=170 // pred_check
              _
            $region173: #{ngpt_forward.14} parent=170 // pred_check_branch
              %704 = sbr.rel target = $region175
            $region174: #{ngpt_forward.14} parent=170 // pred_region
              // Predicated region
              $region187: #{ngpt_forward.14} parent=174 // pred_check
                _
              $region188: #{ngpt_forward.14} parent=174 // pred_check_branch
                %726 = sbr.rel (0) target = $region190
              $region189: #{ngpt_forward.14} parent=174 // pred_region
                loop: start=0, step=1, limit=1
                $region191: #{ngpt_forward.14} parent=189 // loop_pre_header
                  _
                $region192: #{ngpt_forward.14} parent=189 // loop_header
                  %s728 = sphi 0, %s732
                  %p729 = scmp.ge.s32.totalorder %s728, 1
                  %s733 = sphi %s629, %s629
                  %s734 = sphi %s700, %s700
                $region193: #{ngpt_forward.14} parent=189 // loop_header_branch
                  %731 = sbr.rel (%p729) target = $region197
                $region194: #{ngpt_forward.14} parent=189 // loop_body
                  _
                $region195: #{ngpt_forward.14} parent=189 // loop_footer
                  %s732 = sadd.s32 1, %s728
                $region196: #{ngpt_forward.14} parent=189 // loop_footer_branch
                  %727 = sbr.rel target = $region192
                $region197: #{ngpt_forward.14} parent=189 // loop_exit
                  _
                %s736 = ssub.s32 16, 1
                loop: start=0, step=1, limit=1
                $region198: #{ngpt_forward.14} parent=189 // loop_pre_header
                  _
                $region199: #{ngpt_forward.14} parent=189 // loop_header
                  %s738 = sphi 0, %s742
                  %p739 = scmp.ge.s32.totalorder %s738, 1
                  %s743 = sphi %s629, %s629
                  %s744 = sphi %s700, %s700
                $region200: #{ngpt_forward.14} parent=189 // loop_header_branch
                  %741 = sbr.rel (%p739) target = $region204
                $region201: #{ngpt_forward.14} parent=189 // loop_body
                  %v745 = vld [vmem:[%s743] sm:%s736]
                  %746 = vst [vmem:[%s744] sm:%s736] %v745
                  %v747 = vld [vmem:[%s743 + $0x4] sm:%s736]
                  %748 = vst [vmem:[%s744 + $0x8] sm:%s736] %v747
                  %v749 = vld [vmem:[%s743 + $0x8] sm:%s736]
                  %750 = vst [vmem:[%s744 + $0x10] sm:%s736] %v749
                  %v751 = vld [vmem:[%s743 + $0xc] sm:%s736]
                  %752 = vst [vmem:[%s744 + $0x18] sm:%s736] %v751
                $region202: #{ngpt_forward.14} parent=189 // loop_footer
                  %s742 = sadd.s32 1, %s738
                $region203: #{ngpt_forward.14} parent=189 // loop_footer_branch
                  %737 = sbr.rel target = $region199
                $region204: #{ngpt_forward.14} parent=189 // loop_exit
                  _
              $region190: #{ngpt_forward.14} parent=174 // pred_fallthru
                _
            $region175: #{ngpt_forward.14} parent=170 // pred_fallthru
              _
            // Predicated region
            $region176: #{ngpt_forward.14} parent=170 // pred_check
              _
            $region177: #{ngpt_forward.14} parent=170 // pred_check_branch
              %706 = sbr.rel (0) target = $region179
            $region178: #{ngpt_forward.14} parent=170 // pred_region
              %s708 = ssub.s32 16, 1
              loop: start=0, step=1, limit=1
              $region180: #{ngpt_forward.14} parent=178 // loop_pre_header
                _
              $region181: #{ngpt_forward.14} parent=178 // loop_header
                %s710 = sphi 0, %s714
                %p711 = scmp.ge.s32.totalorder %s710, 1
                %s715 = sphi %s629, %s629
                %s716 = sphi %s700, %s700
              $region182: #{ngpt_forward.14} parent=178 // loop_header_branch
                %713 = sbr.rel (%p711) target = $region186
              $region183: #{ngpt_forward.14} parent=178 // loop_body
                %v717 = vld [vmem:[%s715] sm:%s708]
                %718 = vst [vmem:[%s716] sm:%s708] %v717
                %v719 = vld [vmem:[%s715 + $0x4] sm:%s708]
                %720 = vst [vmem:[%s716 + $0x8] sm:%s708] %v719
                %v721 = vld [vmem:[%s715 + $0x8] sm:%s708]
                %722 = vst [vmem:[%s716 + $0x10] sm:%s708] %v721
                %v723 = vld [vmem:[%s715 + $0xc] sm:%s708]
                %724 = vst [vmem:[%s716 + $0x18] sm:%s708] %v723
              $region184: #{ngpt_forward.14} parent=178 // loop_footer
                %s714 = sadd.s32 1, %s710
              $region185: #{ngpt_forward.14} parent=178 // loop_footer_branch
                %709 = sbr.rel target = $region181
              $region186: #{ngpt_forward.14} parent=178 // loop_exit
                _
            $region179: #{ngpt_forward.14} parent=170 // pred_fallthru
              _
          $region171: #{ngpt_forward.14} parent=166 // pred_fallthru
            _
          %753 = vnop
        $region167: #{ngpt_forward.14} parent=113 // pred_fallthru
          _
      $region114: #{ngpt_forward.14} parent=5 // pred_fallthru
        _
      %p754 = scmp.le.s32.totalorder 2, %s13
      // Predicated region
      $region205: #{ngpt_forward.14} parent=5 // pred_check
        %p755 = pneg %p754
      $region206: #{ngpt_forward.14} parent=5 // pred_check_branch
        %757 = sbr.rel (%p755) target = $region208
      $region207: #{ngpt_forward.14} parent=5 // pred_region
        %s758 = ssub.s32 %s13, 2
        // Predicated region
        $region209: #{ngpt_forward.14} parent=207 // pred_check
          %p759 = pneg %p205
        $region210: #{ngpt_forward.14} parent=207 // pred_check_branch
          %761 = sbr.rel (%p759) target = $region212
        $region211: #{ngpt_forward.14} parent=207 // pred_region
          %s762 = sand.u32 %s190, 1
          %s763 = sand.u32 %s190, 1
          %s764 = smul.addr %s763, 16
          %s765 = scalar_lea.vmem [#allocation4], %s764
        $region212: #{ngpt_forward.14} parent=207 // pred_fallthru
          _
        // Predicated region
        $region213: #{ngpt_forward.14} parent=207 // pred_check
          %p766 = pneg %p235
        $region214: #{ngpt_forward.14} parent=207 // pred_check_branch
          %768 = sbr.rel (%p766) target = $region216
        $region215: #{ngpt_forward.14} parent=207 // pred_region
          %s769 = sand.u32 %s220, 1
          %s770 = sand.u32 %s220, 1
          %s771 = smul.addr %s770, 16
          %s772 = scalar_lea.vmem [#allocation5], %s771
        $region216: #{ngpt_forward.14} parent=207 // pred_fallthru
          _
      $region208: #{ngpt_forward.14} parent=5 // pred_fallthru
        _
    $region6: #{ngpt_forward.14} parent=1 // loop_footer
      %s17 = sadd.s32 1, %s13
    $region7: #{ngpt_forward.14} parent=1 // loop_footer_branch
      %12 = sbr.rel target = $region3
    $region8: #{ngpt_forward.14} parent=1 // loop_exit
      _

// kernel: ngpt_forward.16
$region0: #{ngpt_forward.16}
  #allocation0 [shape = 'u32[]', space=smem, size = 0x4, offset = 0x4, fixed_abs, tag = 'smem constant byte address 0x4 - core index']
  #allocation1 [shape = 'u32[144,128]{1,0:T(1,128)}', space=vmem, size = 0x12000, scoped, tag = 'internal scratch']
  #allocation2 [shape = 'f32[64,256]{1,0:T(8,128)}', space=vmem, size = 0x10000, scoped, tag = 'scratch operand']
  %s0 = inlined_call_operand.vmem [shape: bf16[64,256], index: 0, kind: input, shape index: {}]
  %s1 = inlined_call_operand.vmem [shape: bf16[256,256], index: 1, kind: input, shape index: {}]
  %s2 = inlined_call_operand.vmem [shape: bf16[64,256], index: 2, kind: input, shape index: {}]
  %s3 = inlined_call_operand.vmem [shape: f32[1,256], index: 3, kind: input, shape index: {}]
  %s4 = inlined_call_operand.vmem [shape: bf16[64,256], index: 4, kind: output, shape index: {}]
  %s5 = sld [smem:[#allocation0]]
  $region34: #{ngpt_forward.16} parent=0
    _
  %s7 = ssub.s32 1, %s5
  %s8 = scalar_select 0, %s7, %s5
  // Predicated region
  $region2: #{ngpt_forward.16} parent=0 // pred_check
    _
  $region3: #{ngpt_forward.16} parent=0 // pred_check_branch
    %10 = sbr.rel (0) target = $region5
  $region4: #{ngpt_forward.16} parent=0 // pred_region
    _
  $region5: #{ngpt_forward.16} parent=0 // pred_fallthru
    _
  // Predicated region
  $region6: #{ngpt_forward.16} parent=0 // pred_check
    _
  $region7: #{ngpt_forward.16} parent=0 // pred_check_branch
    %12 = sbr.rel (0) target = $region9
  $region8: #{ngpt_forward.16} parent=0 // pred_region
    _
  $region9: #{ngpt_forward.16} parent=0 // pred_fallthru
    _
  // Predicated region
  $region10: #{ngpt_forward.16} parent=0 // pred_check
    _
  $region11: #{ngpt_forward.16} parent=0 // pred_check_branch
    %14 = sbr.rel (0) target = $region13
  $region12: #{ngpt_forward.16} parent=0 // pred_region
    _
  $region13: #{ngpt_forward.16} parent=0 // pred_fallthru
    _
  // Predicated region
  $region14: #{ngpt_forward.16} parent=0 // pred_check
    _
  $region15: #{ngpt_forward.16} parent=0 // pred_check_branch
    %16 = sbr.rel (0) target = $region17
  $region16: #{ngpt_forward.16} parent=0 // pred_region
    _
  $region17: #{ngpt_forward.16} parent=0 // pred_fallthru
    _
  %p17 = scmp.eq.s32.totalorder 0, 0
  // Predicated region
  $region18: #{ngpt_forward.16} parent=0 // pred_check
    %p18 = pneg %p17
  $region19: #{ngpt_forward.16} parent=0 // pred_check_branch
    %20 = sbr.rel (%p18) target = $region21
  $region20: #{ngpt_forward.16} parent=0 // pred_region
    %21 = vst [vmem:[#allocation2] sm:$0xff] 0.0
    %22 = vst [vmem:[#allocation2 + $0x8] sm:$0xff] 0.0
    %23 = vst [vmem:[#allocation2 + $0x10] sm:$0xff] 0.0
    %24 = vst [vmem:[#allocation2 + $0x18] sm:$0xff] 0.0
    %25 = vst [vmem:[#allocation2 + $0x20] sm:$0xff] 0.0
    %26 = vst [vmem:[#allocation2 + $0x28] sm:$0xff] 0.0
    %27 = vst [vmem:[#allocation2 + $0x30] sm:$0xff] 0.0
    %28 = vst [vmem:[#allocation2 + $0x38] sm:$0xff] 0.0
    %29 = vst [vmem:[#allocation2 + $0x40] sm:$0xff] 0.0
    %30 = vst [vmem:[#allocation2 + $0x48] sm:$0xff] 0.0
    %31 = vst [vmem:[#allocation2 + $0x50] sm:$0xff] 0.0
    %32 = vst [vmem:[#allocation2 + $0x58] sm:$0xff] 0.0
    %33 = vst [vmem:[#allocation2 + $0x60] sm:$0xff] 0.0
    %34 = vst [vmem:[#allocation2 + $0x68] sm:$0xff] 0.0
    %35 = vst [vmem:[#allocation2 + $0x70] sm:$0xff] 0.0
    %36 = vst [vmem:[#allocation2 + $0x78] sm:$0xff] 0.0
  $region21: #{ngpt_forward.16} parent=0 // pred_fallthru
    _
  %v37 = vld [vmem:[#allocation2] sm:$0xff]
  %v38 = vld [vmem:[#allocation2 + $0x8] sm:$0xff]
  %v39 = vld [vmem:[#allocation2 + $0x10] sm:$0xff]
  %v40 = vld [vmem:[#allocation2 + $0x18] sm:$0xff]
  %v41 = vld [vmem:[#allocation2 + $0x20] sm:$0xff]
  %v42 = vld [vmem:[#allocation2 + $0x28] sm:$0xff]
  %v43 = vld [vmem:[#allocation2 + $0x30] sm:$0xff]
  %v44 = vld [vmem:[#allocation2 + $0x38] sm:$0xff]
  %v45 = vld [vmem:[#allocation2 + $0x40] sm:$0xff]
  %v46 = vld [vmem:[#allocation2 + $0x48] sm:$0xff]
  %v47 = vld [vmem:[#allocation2 + $0x50] sm:$0xff]
  %v48 = vld [vmem:[#allocation2 + $0x58] sm:$0xff]
  %v49 = vld [vmem:[#allocation2 + $0x60] sm:$0xff]
  %v50 = vld [vmem:[#allocation2 + $0x68] sm:$0xff]
  %v51 = vld [vmem:[#allocation2 + $0x70] sm:$0xff]
  %v52 = vld [vmem:[#allocation2 + $0x78] sm:$0xff]
  %v53 = vld [vmem:[%s0] sm:$0xff]
  %v54 = vld [vmem:[%s0 + $0x8] sm:$0xff]
  %v55 = vld [vmem:[%s0 + $0x10] sm:$0xff]
  %v56 = vld [vmem:[%s0 + $0x18] sm:$0xff]
  %v57 = vld [vmem:[%s0 + $0x20] sm:$0xff]
  %v58 = vld [vmem:[%s0 + $0x28] sm:$0xff]
  %v59 = vld [vmem:[%s0 + $0x30] sm:$0xff]
  %v60 = vld [vmem:[%s0 + $0x38] sm:$0xff]
  %v61 = vld [vmem:[%s1] sm:$0xff]
  %v62 = vld [vmem:[%s1 + $0x8] sm:$0xff]
  %v63 = vld [vmem:[%s1 + $0x10] sm:$0xff]
  %v64 = vld [vmem:[%s1 + $0x18] sm:$0xff]
  %v65 = vld [vmem:[%s1 + $0x20] sm:$0xff]
  %v66 = vld [vmem:[%s1 + $0x28] sm:$0xff]
  %v67 = vld [vmem:[%s1 + $0x30] sm:$0xff]
  %v68 = vld [vmem:[%s1 + $0x38] sm:$0xff]
  %v69 = vld [vmem:[%s1 + $0x40] sm:$0xff]
  %v70 = vld [vmem:[%s1 + $0x48] sm:$0xff]
  %v71 = vld [vmem:[%s1 + $0x50] sm:$0xff]
  %v72 = vld [vmem:[%s1 + $0x58] sm:$0xff]
  %v73 = vld [vmem:[%s1 + $0x60] sm:$0xff]
  %v74 = vld [vmem:[%s1 + $0x68] sm:$0xff]
  %v75 = vld [vmem:[%s1 + $0x70] sm:$0xff]
  %v76 = vld [vmem:[%s1 + $0x78] sm:$0xff]
  %v77 = vld [vmem:[%s1 + $0x80] sm:$0xff]
  %v78 = vld [vmem:[%s1 + $0x88] sm:$0xff]
  %v79 = vld [vmem:[%s1 + $0x90] sm:$0xff]
  %v80 = vld [vmem:[%s1 + $0x98] sm:$0xff]
  %v81 = vld [vmem:[%s1 + $0xa0] sm:$0xff]
  %v82 = vld [vmem:[%s1 + $0xa8] sm:$0xff]
  %v83 = vld [vmem:[%s1 + $0xb0] sm:$0xff]
  %v84 = vld [vmem:[%s1 + $0xb8] sm:$0xff]
  %v85 = vld [vmem:[%s1 + $0xc0] sm:$0xff]
  %v86 = vld [vmem:[%s1 + $0xc8] sm:$0xff]
  %v87 = vld [vmem:[%s1 + $0xd0] sm:$0xff]
  %v88 = vld [vmem:[%s1 + $0xd8] sm:$0xff]
  %v89 = vld [vmem:[%s1 + $0xe0] sm:$0xff]
  %v90 = vld [vmem:[%s1 + $0xe8] sm:$0xff]
  %v91 = vld [vmem:[%s1 + $0xf0] sm:$0xff]
  %v92 = vld [vmem:[%s1 + $0xf8] sm:$0xff]
  %v101 = vunpack.c.l.b16 %v53
  %v102 = vunpack.c.h.b16 %v53
  %v103 = vunpack.c.l.b16 %v54
  %v104 = vunpack.c.h.b16 %v54
  %v105 = vunpack.c.l.b16 %v55
  %v106 = vunpack.c.h.b16 %v55
  %v107 = vunpack.c.l.b16 %v56
  %v108 = vunpack.c.h.b16 %v56
  %v109 = vunpack.c.l.b16 %v57
  %v110 = vunpack.c.h.b16 %v57
  %v111 = vunpack.c.l.b16 %v58
  %v112 = vunpack.c.h.b16 %v58
  %v113 = vunpack.c.l.b16 %v59
  %v114 = vunpack.c.h.b16 %v59
  %v115 = vunpack.c.l.b16 %v60
  %v116 = vunpack.c.h.b16 %v60
  %v117 = vpack.c.b16 %v103, %v101
  %v118 = vpack.c.b16 %v104, %v102
  %v119 = vpack.c.b16 %v107, %v105
  %v120 = vpack.c.b16 %v108, %v106
  %v121 = vpack.c.b16 %v111, %v109
  %v122 = vpack.c.b16 %v112, %v110
  %v123 = vpack.c.b16 %v115, %v113
  %v124 = vpack.c.b16 %v116, %v114
  %v165 = vunpack.c.l.b16 %v61
  %v166 = vunpack.c.h.b16 %v61
  %v167 = vunpack.c.l.b16 %v62
  %v168 = vunpack.c.h.b16 %v62
  %v169 = vunpack.c.l.b16 %v63
  %v170 = vunpack.c.h.b16 %v63
  %v171 = vunpack.c.l.b16 %v64
  %v172 = vunpack.c.h.b16 %v64
  %v173 = vunpack.c.l.b16 %v65
  %v174 = vunpack.c.h.b16 %v65
  %v175 = vunpack.c.l.b16 %v66
  %v176 = vunpack.c.h.b16 %v66
  %v177 = vunpack.c.l.b16 %v67
  %v178 = vunpack.c.h.b16 %v67
  %v179 = vunpack.c.l.b16 %v68
  %v180 = vunpack.c.h.b16 %v68
  %v181 = vunpack.c.l.b16 %v69
  %v182 = vunpack.c.h.b16 %v69
  %v183 = vunpack.c.l.b16 %v70
  %v184 = vunpack.c.h.b16 %v70
  %v185 = vunpack.c.l.b16 %v71
  %v186 = vunpack.c.h.b16 %v71
  %v187 = vunpack.c.l.b16 %v72
  %v188 = vunpack.c.h.b16 %v72
  %v189 = vunpack.c.l.b16 %v73
  %v190 = vunpack.c.h.b16 %v73
  %v191 = vunpack.c.l.b16 %v74
  %v192 = vunpack.c.h.b16 %v74
  %v193 = vunpack.c.l.b16 %v75
  %v194 = vunpack.c.h.b16 %v75
  %v195 = vunpack.c.l.b16 %v76
  %v196 = vunpack.c.h.b16 %v76
  %v197 = vunpack.c.l.b16 %v77
  %v198 = vunpack.c.h.b16 %v77
  %v199 = vunpack.c.l.b16 %v78
  %v200 = vunpack.c.h.b16 %v78
  %v201 = vunpack.c.l.b16 %v79
  %v202 = vunpack.c.h.b16 %v79
  %v203 = vunpack.c.l.b16 %v80
  %v204 = vunpack.c.h.b16 %v80
  %v205 = vunpack.c.l.b16 %v81
  %v206 = vunpack.c.h.b16 %v81
  %v207 = vunpack.c.l.b16 %v82
  %v208 = vunpack.c.h.b16 %v82
  %v209 = vunpack.c.l.b16 %v83
  %v210 = vunpack.c.h.b16 %v83
  %v211 = vunpack.c.l.b16 %v84
  %v212 = vunpack.c.h.b16 %v84
  %v213 = vunpack.c.l.b16 %v85
  %v214 = vunpack.c.h.b16 %v85
  %v215 = vunpack.c.l.b16 %v86
  %v216 = vunpack.c.h.b16 %v86
  %v217 = vunpack.c.l.b16 %v87
  %v218 = vunpack.c.h.b16 %v87
  %v219 = vunpack.c.l.b16 %v88
  %v220 = vunpack.c.h.b16 %v88
  %v221 = vunpack.c.l.b16 %v89
  %v222 = vunpack.c.h.b16 %v89
  %v223 = vunpack.c.l.b16 %v90
  %v224 = vunpack.c.h.b16 %v90
  %v225 = vunpack.c.l.b16 %v91
  %v226 = vunpack.c.h.b16 %v91
  %v227 = vunpack.c.l.b16 %v92
  %v228 = vunpack.c.h.b16 %v92
  %v229 = vpack.c.b16 %v167, %v165
  %v230 = vpack.c.b16 %v168, %v166
  %v231 = vpack.c.b16 %v171, %v169
  %v232 = vpack.c.b16 %v172, %v170
  %v233 = vpack.c.b16 %v175, %v173
  %v234 = vpack.c.b16 %v176, %v174
  %v235 = vpack.c.b16 %v179, %v177
  %v236 = vpack.c.b16 %v180, %v178
  %v237 = vpack.c.b16 %v183, %v181
  %v238 = vpack.c.b16 %v184, %v182
  %v239 = vpack.c.b16 %v187, %v185
  %v240 = vpack.c.b16 %v188, %v186
  %v241 = vpack.c.b16 %v191, %v189
  %v242 = vpack.c.b16 %v192, %v190
  %v243 = vpack.c.b16 %v195, %v193
  %v244 = vpack.c.b16 %v196, %v194
  %v245 = vpack.c.b16 %v199, %v197
  %v246 = vpack.c.b16 %v200, %v198
  %v247 = vpack.c.b16 %v203, %v201
  %v248 = vpack.c.b16 %v204, %v202
  %v249 = vpack.c.b16 %v207, %v205
  %v250 = vpack.c.b16 %v208, %v206
  %v251 = vpack.c.b16 %v211, %v209
  %v252 = vpack.c.b16 %v212, %v210
  %v253 = vpack.c.b16 %v215, %v213
  %v254 = vpack.c.b16 %v216, %v214
  %v255 = vpack.c.b16 %v219, %v217
  %v256 = vpack.c.b16 %v220, %v218
  %v257 = vpack.c.b16 %v223, %v221
  %v258 = vpack.c.b16 %v224, %v222
  %v259 = vpack.c.b16 %v227, %v225
  %v260 = vpack.c.b16 %v228, %v226
  %293 = vmatprep.subr.bf16.mxu0 %v244
  %294 = vmatpush1.bf16.msra.mxu0 %v243
  %295 = vmatprep.subr.bf16.mxu0 %v242
  %296 = vmatpush1.bf16.msra.mxu0 %v241
  %297 = vmatprep.subr.bf16.mxu0 %v240
  %298 = vmatpush1.bf16.msra.mxu0 %v239
  %299 = vmatprep.subr.bf16.mxu0 %v238
  %300 = vmatpush1.bf16.msra.mxu0 %v237
  %301 = vmatprep.subr.bf16.mxu0 %v236
  %302 = vmatpush1.bf16.msra.mxu0 %v235
  %303 = vmatprep.subr.bf16.mxu0 %v234
  %304 = vmatpush1.bf16.msra.mxu0 %v233
  %305 = vmatprep.subr.bf16.mxu0 %v232
  %306 = vmatpush1.bf16.msra.mxu0 %v231
  %307 = vmatprep.subr.bf16.mxu0 %v230
  %308 = vmatpush1.bf16.msra.mxu0 %v229
  %309 = vmatprep.subr.bf16.mxu0 %v260
  %310 = vmatpush2.bf16.msra.mxu0 %v259
  %311 = vmatprep.subr.bf16.mxu0 %v258
  %312 = vmatpush2.bf16.msra.mxu0 %v257
  %313 = vmatprep.subr.bf16.mxu0 %v256
  %314 = vmatpush2.bf16.msra.mxu0 %v255
  %315 = vmatprep.subr.bf16.mxu0 %v254
  %316 = vmatpush2.bf16.msra.mxu0 %v253
  %317 = vmatprep.subr.bf16.mxu0 %v252
  %318 = vmatpush2.bf16.msra.mxu0 %v251
  %319 = vmatprep.subr.bf16.mxu0 %v250
  %320 = vmatpush2.bf16.msra.mxu0 %v249
  %321 = vmatprep.subr.bf16.mxu0 %v248
  %322 = vmatpush2.bf16.msra.mxu0 %v247
  %323 = vmatprep.subr.bf16.mxu0 %v246
  %324 = vmatpush2.bf16.msra.mxu0 %v245
  %325 = vmatprep.mubr.bf16.mxu0 %v118
  %326 = vmatmul.mubr.bf16.gmra.mxu0 %v117
  %v327 = vpop.f32.mrf.mxu0
  %v328 = vadd.f32 0.0, %v327
  %v329 = vpop.f32.mrf.mxu0
  %v330 = vadd.f32 0.0, %v329
  %v331 = vpop.f32.mrf.mxu0
  %v332 = vadd.f32 0.0, %v331
  %v333 = vpop.f32.mrf.mxu0
  %v334 = vadd.f32 0.0, %v333
  %335 = vmatprep.mubr.bf16.mxu0 %v120
  %336 = vmatmul.mubr.bf16.gmra.mxu0 %v119
  %v337 = vpop.f32.mrf.mxu0
  %v338 = vadd.f32 0.0, %v337
  %v339 = vpop.f32.mrf.mxu0
  %v340 = vadd.f32 0.0, %v339
  %v341 = vpop.f32.mrf.mxu0
  %v342 = vadd.f32 0.0, %v341
  %v343 = vpop.f32.mrf.mxu0
  %v344 = vadd.f32 0.0, %v343
  %345 = vmatprep.mubr.bf16.mxu0 %v122
  %346 = vmatmul.mubr.bf16.gmra.mxu0 %v121
  %v347 = vpop.f32.mrf.mxu0
  %v348 = vadd.f32 0.0, %v347
  %v349 = vpop.f32.mrf.mxu0
  %v350 = vadd.f32 0.0, %v349
  %v351 = vpop.f32.mrf.mxu0
  %v352 = vadd.f32 0.0, %v351
  %v353 = vpop.f32.mrf.mxu0
  %v354 = vadd.f32 0.0, %v353
  %355 = vmatprep.mubr.bf16.mxu0 %v124
  %356 = vmatmul.mubr.bf16.gmra.mxu0 %v123
  %v357 = vpop.f32.mrf.mxu0
  %v358 = vadd.f32 0.0, %v357
  %v359 = vpop.f32.mrf.mxu0
  %v360 = vadd.f32 0.0, %v359
  %v361 = vpop.f32.mrf.mxu0
  %v362 = vadd.f32 0.0, %v361
  %v363 = vpop.f32.mrf.mxu0
  %v364 = vadd.f32 0.0, %v363
  %365 = vdwg.mxu0
  %v366 = vadd.f32 %v37, %v328
  %v367 = vadd.f32 %v38, %v330
  %v368 = vadd.f32 %v39, %v332
  %v369 = vadd.f32 %v40, %v334
  %v370 = vadd.f32 %v41, %v338
  %v371 = vadd.f32 %v42, %v340
  %v372 = vadd.f32 %v43, %v342
  %v373 = vadd.f32 %v44, %v344
  %v374 = vadd.f32 %v45, %v348
  %v375 = vadd.f32 %v46, %v350
  %v376 = vadd.f32 %v47, %v352
  %v377 = vadd.f32 %v48, %v354
  %v378 = vadd.f32 %v49, %v358
  %v379 = vadd.f32 %v50, %v360
  %v380 = vadd.f32 %v51, %v362
  %v381 = vadd.f32 %v52, %v364
  %382 = vst [vmem:[#allocation2] sm:$0xff] %v366
  %383 = vst [vmem:[#allocation2 + $0x8] sm:$0xff] %v367
  %384 = vst [vmem:[#allocation2 + $0x10] sm:$0xff] %v368
  %385 = vst [vmem:[#allocation2 + $0x18] sm:$0xff] %v369
  %386 = vst [vmem:[#allocation2 + $0x20] sm:$0xff] %v370
  %387 = vst [vmem:[#allocation2 + $0x28] sm:$0xff] %v371
  %388 = vst [vmem:[#allocation2 + $0x30] sm:$0xff] %v372
  %389 = vst [vmem:[#allocation2 + $0x38] sm:$0xff] %v373
  %390 = vst [vmem:[#allocation2 + $0x40] sm:$0xff] %v374
  %391 = vst [vmem:[#allocation2 + $0x48] sm:$0xff] %v375
  %392 = vst [vmem:[#allocation2 + $0x50] sm:$0xff] %v376
  %393 = vst [vmem:[#allocation2 + $0x58] sm:$0xff] %v377
  %394 = vst [vmem:[#allocation2 + $0x60] sm:$0xff] %v378
  %395 = vst [vmem:[#allocation2 + $0x68] sm:$0xff] %v379
  %396 = vst [vmem:[#allocation2 + $0x70] sm:$0xff] %v380
  %397 = vst [vmem:[#allocation2 + $0x78] sm:$0xff] %v381
  // Predicated region
  $region22: #{ngpt_forward.16} parent=0 // pred_check
    %p398 = pneg %p17
  $region23: #{ngpt_forward.16} parent=0 // pred_check_branch
    %400 = sbr.rel (%p398) target = $region25
  $region24: #{ngpt_forward.16} parent=0 // pred_region
    %v401 = vld [vmem:[#allocation2] sm:$0xff]
    %v402 = vld [vmem:[#allocation2 + $0x8] sm:$0xff]
    %v403 = vld [vmem:[#allocation2 + $0x10] sm:$0xff]
    %v404 = vld [vmem:[#allocation2 + $0x18] sm:$0xff]
    %v405 = vld [vmem:[#allocation2 + $0x20] sm:$0xff]
    %v406 = vld [vmem:[#allocation2 + $0x28] sm:$0xff]
    %v407 = vld [vmem:[#allocation2 + $0x30] sm:$0xff]
    %v408 = vld [vmem:[#allocation2 + $0x38] sm:$0xff]
    %v409 = vld [vmem:[#allocation2 + $0x40] sm:$0xff]
    %v410 = vld [vmem:[#allocation2 + $0x48] sm:$0xff]
    %v411 = vld [vmem:[#allocation2 + $0x50] sm:$0xff]
    %v412 = vld [vmem:[#allocation2 + $0x58] sm:$0xff]
    %v413 = vld [vmem:[#allocation2 + $0x60] sm:$0xff]
    %v414 = vld [vmem:[#allocation2 + $0x68] sm:$0xff]
    %v415 = vld [vmem:[#allocation2 + $0x70] sm:$0xff]
    %v416 = vld [vmem:[#allocation2 + $0x78] sm:$0xff]
    %v417 = vmul.f32 %v401, %v401
    %v418 = vmul.f32 %v402, %v402
    %v419 = vmul.f32 %v403, %v403
    %v420 = vmul.f32 %v404, %v404
    %v421 = vmul.f32 %v405, %v405
    %v422 = vmul.f32 %v406, %v406
    %v423 = vmul.f32 %v407, %v407
    %v424 = vmul.f32 %v408, %v408
    %v425 = vmul.f32 %v409, %v409
    %v426 = vmul.f32 %v410, %v410
    %v427 = vmul.f32 %v411, %v411
    %v428 = vmul.f32 %v412, %v412
    %v429 = vmul.f32 %v413, %v413
    %v430 = vmul.f32 %v414, %v414
    %v431 = vmul.f32 %v415, %v415
    %v432 = vmul.f32 %v416, %v416
    %v433 = vadd.f32 %v417, %v418
    %434 = vadd.xlane.f32.xlu0 %v433
    %v435 = vpop.xlane.xlu0 %434
    %v436 = vadd.f32 %v419, %v420
    %437 = vadd.xlane.f32.xlu0 %v436
    %v438 = vpop.xlane.xlu0 %437
    %v439 = vadd.f32 %v421, %v422
    %440 = vadd.xlane.f32.xlu0 %v439
    %v441 = vpop.xlane.xlu0 %440
    %v442 = vadd.f32 %v423, %v424
    %443 = vadd.xlane.f32.xlu0 %v442
    %v444 = vpop.xlane.xlu0 %443
    %v445 = vadd.f32 %v425, %v426
    %446 = vadd.xlane.f32.xlu0 %v445
    %v447 = vpop.xlane.xlu0 %446
    %v448 = vadd.f32 %v427, %v428
    %449 = vadd.xlane.f32.xlu0 %v448
    %v450 = vpop.xlane.xlu0 %449
    %v451 = vadd.f32 %v429, %v430
    %452 = vadd.xlane.f32.xlu0 %v451
    %v453 = vpop.xlane.xlu0 %452
    %v454 = vadd.f32 %v431, %v432
    %455 = vadd.xlane.f32.xlu0 %v454
    %v456 = vpop.xlane.xlu0 %455
    %v457 = vmax.f32 %v435, 1e-24
    %v458 = vmax.f32 %v438, 1e-24
    %v459 = vmax.f32 %v441, 1e-24
    %v460 = vmax.f32 %v444, 1e-24
    %v461 = vmax.f32 %v447, 1e-24
    %v462 = vmax.f32 %v450, 1e-24
    %v463 = vmax.f32 %v453, 1e-24
    %v464 = vmax.f32 %v456, 1e-24
    %v465 = vrsqrt.pop %v457
    %v466 = vrsqrt.pop %v458
    %v467 = vrsqrt.pop %v459
    %v468 = vrsqrt.pop %v460
    %v469 = vrsqrt.pop %v461
    %v470 = vrsqrt.pop %v462
    %v471 = vrsqrt.pop %v463
    %v472 = vrsqrt.pop %v464
    %v473 = vmul.f32 %v401, %v465
    %v474 = vmul.f32 %v402, %v465
    %v475 = vmul.f32 %v403, %v466
    %v476 = vmul.f32 %v404, %v466
    %v477 = vmul.f32 %v405, %v467
    %v478 = vmul.f32 %v406, %v467
    %v479 = vmul.f32 %v407, %v468
    %v480 = vmul.f32 %v408, %v468
    %v481 = vmul.f32 %v409, %v469
    %v482 = vmul.f32 %v410, %v469
    %v483 = vmul.f32 %v411, %v470
    %v484 = vmul.f32 %v412, %v470
    %v485 = vmul.f32 %v413, %v471
    %v486 = vmul.f32 %v414, %v471
    %v487 = vmul.f32 %v415, %v472
    %v488 = vmul.f32 %v416, %v472
    %v489 = vld [vmem:[%s2] sm:$0xff]
    %v490 = vld [vmem:[%s2 + $0x8] sm:$0xff]
    %v491 = vld [vmem:[%s2 + $0x10] sm:$0xff]
    %v492 = vld [vmem:[%s2 + $0x18] sm:$0xff]
    %v493 = vld [vmem:[%s2 + $0x20] sm:$0xff]
    %v494 = vld [vmem:[%s2 + $0x28] sm:$0xff]
    %v495 = vld [vmem:[%s2 + $0x30] sm:$0xff]
    %v496 = vld [vmem:[%s2 + $0x38] sm:$0xff]
    %v497 = vunpack.c.l.bf16 %v489
    %v498 = vunpack.c.h.bf16 %v489
    %v499 = vunpack.c.l.bf16 %v490
    %v500 = vunpack.c.h.bf16 %v490
    %v501 = vunpack.c.l.bf16 %v491
    %v502 = vunpack.c.h.bf16 %v491
    %v503 = vunpack.c.l.bf16 %v492
    %v504 = vunpack.c.h.bf16 %v492
    %v505 = vunpack.c.l.bf16 %v493
    %v506 = vunpack.c.h.bf16 %v493
    %v507 = vunpack.c.l.bf16 %v494
    %v508 = vunpack.c.h.bf16 %v494
    %v509 = vunpack.c.l.bf16 %v495
    %v510 = vunpack.c.h.bf16 %v495
    %v511 = vunpack.c.l.bf16 %v496
    %v512 = vunpack.c.h.bf16 %v496
    %v513 = vsub.f32 %v473, %v497
    %v514 = vsub.f32 %v474, %v498
    %v515 = vsub.f32 %v475, %v499
    %v516 = vsub.f32 %v476, %v500
    %v517 = vsub.f32 %v477, %v501
    %v518 = vsub.f32 %v478, %v502
    %v519 = vsub.f32 %v479, %v503
    %v520 = vsub.f32 %v480, %v504
    %v521 = vsub.f32 %v481, %v505
    %v522 = vsub.f32 %v482, %v506
    %v523 = vsub.f32 %v483, %v507
    %v524 = vsub.f32 %v484, %v508
    %v525 = vsub.f32 %v485, %v509
    %v526 = vsub.f32 %v486, %v510
    %v527 = vsub.f32 %v487, %v511
    %v528 = vsub.f32 %v488, %v512
    %v529 = vld [vmem:[%s3] sm:$0x3]
    %v531 = vlaneseq
    %v532 = vshrl.u32 %v531, 7
    %v533 = vsub.s32 0, %v532
    %v534 = vrot.slane %v529, %v533
    %v535 = vlaneseq
    %v536 = vshrl.u32 %v535, 7
    %v537 = vsub.s32 1, %v536
    %v538 = vrot.slane %v529, %v537
    %v541 = vmul.f32 %v513, %v534
    %v542 = vmul.f32 %v514, %v538
    %v543 = vmul.f32 %v515, %v534
    %v544 = vmul.f32 %v516, %v538
    %v545 = vmul.f32 %v517, %v534
    %v546 = vmul.f32 %v518, %v538
    %v547 = vmul.f32 %v519, %v534
    %v548 = vmul.f32 %v520, %v538
    %v549 = vmul.f32 %v521, %v534
    %v550 = vmul.f32 %v522, %v538
    %v551 = vmul.f32 %v523, %v534
    %v552 = vmul.f32 %v524, %v538
    %v553 = vmul.f32 %v525, %v534
    %v554 = vmul.f32 %v526, %v538
    %v555 = vmul.f32 %v527, %v534
    %v556 = vmul.f32 %v528, %v538
    %v557 = vadd.f32 %v497, %v541
    %v558 = vadd.f32 %v498, %v542
    %v559 = vadd.f32 %v499, %v543
    %v560 = vadd.f32 %v500, %v544
    %v561 = vadd.f32 %v501, %v545
    %v562 = vadd.f32 %v502, %v546
    %v563 = vadd.f32 %v503, %v547
    %v564 = vadd.f32 %v504, %v548
    %v565 = vadd.f32 %v505, %v549
    %v566 = vadd.f32 %v506, %v550
    %v567 = vadd.f32 %v507, %v551
    %v568 = vadd.f32 %v508, %v552
    %v569 = vadd.f32 %v509, %v553
    %v570 = vadd.f32 %v510, %v554
    %v571 = vadd.f32 %v511, %v555
    %v572 = vadd.f32 %v512, %v556
    %v573 = vmul.f32 %v557, %v557
    %v574 = vmul.f32 %v558, %v558
    %v575 = vmul.f32 %v559, %v559
    %v576 = vmul.f32 %v560, %v560
    %v577 = vmul.f32 %v561, %v561
    %v578 = vmul.f32 %v562, %v562
    %v579 = vmul.f32 %v563, %v563
    %v580 = vmul.f32 %v564, %v564
    %v581 = vmul.f32 %v565, %v565
    %v582 = vmul.f32 %v566, %v566
    %v583 = vmul.f32 %v567, %v567
    %v584 = vmul.f32 %v568, %v568
    %v585 = vmul.f32 %v569, %v569
    %v586 = vmul.f32 %v570, %v570
    %v587 = vmul.f32 %v571, %v571
    %v588 = vmul.f32 %v572, %v572
    %v589 = vadd.f32 %v573, %v574
    %590 = vadd.xlane.f32.xlu0 %v589
    %v591 = vpop.xlane.xlu0 %590
    %v592 = vadd.f32 %v575, %v576
    %593 = vadd.xlane.f32.xlu0 %v592
    %v594 = vpop.xlane.xlu0 %593
    %v595 = vadd.f32 %v577, %v578
    %596 = vadd.xlane.f32.xlu0 %v595
    %v597 = vpop.xlane.xlu0 %596
    %v598 = vadd.f32 %v579, %v580
    %599 = vadd.xlane.f32.xlu0 %v598
    %v600 = vpop.xlane.xlu0 %599
    %v601 = vadd.f32 %v581, %v582
    %602 = vadd.xlane.f32.xlu0 %v601
    %v603 = vpop.xlane.xlu0 %602
    %v604 = vadd.f32 %v583, %v584
    %605 = vadd.xlane.f32.xlu0 %v604
    %v606 = vpop.xlane.xlu0 %605
    %v607 = vadd.f32 %v585, %v586
    %608 = vadd.xlane.f32.xlu0 %v607
    %v609 = vpop.xlane.xlu0 %608
    %v610 = vadd.f32 %v587, %v588
    %611 = vadd.xlane.f32.xlu0 %v610
    %v612 = vpop.xlane.xlu0 %611
    %v613 = vmax.f32 %v591, 1e-24
    %v614 = vmax.f32 %v594, 1e-24
    %v615 = vmax.f32 %v597, 1e-24
    %v616 = vmax.f32 %v600, 1e-24
    %v617 = vmax.f32 %v603, 1e-24
    %v618 = vmax.f32 %v606, 1e-24
    %v619 = vmax.f32 %v609, 1e-24
    %v620 = vmax.f32 %v612, 1e-24
    %v621 = vrsqrt.pop %v613
    %v622 = vrsqrt.pop %v614
    %v623 = vrsqrt.pop %v615
    %v624 = vrsqrt.pop %v616
    %v625 = vrsqrt.pop %v617
    %v626 = vrsqrt.pop %v618
    %v627 = vrsqrt.pop %v619
    %v628 = vrsqrt.pop %v620
    %v629 = vmul.f32 %v557, %v621
    %v630 = vmul.f32 %v558, %v621
    %v631 = vmul.f32 %v559, %v622
    %v632 = vmul.f32 %v560, %v622
    %v633 = vmul.f32 %v561, %v623
    %v634 = vmul.f32 %v562, %v623
    %v635 = vmul.f32 %v563, %v624
    %v636 = vmul.f32 %v564, %v624
    %v637 = vmul.f32 %v565, %v625
    %v638 = vmul.f32 %v566, %v625
    %v639 = vmul.f32 %v567, %v626
    %v640 = vmul.f32 %v568, %v626
    %v641 = vmul.f32 %v569, %v627
    %v642 = vmul.f32 %v570, %v627
    %v643 = vmul.f32 %v571, %v628
    %v644 = vmul.f32 %v572, %v628
    %v645 = vpack.c.bf16 %v631, %v629
    %v646 = vpack.c.bf16 %v632, %v630
    %v647 = vpack.c.bf16 %v635, %v633
    %v648 = vpack.c.bf16 %v636, %v634
    %v649 = vpack.c.bf16 %v639, %v637
    %v650 = vpack.c.bf16 %v640, %v638
    %v651 = vpack.c.bf16 %v643, %v641
    %v652 = vpack.c.bf16 %v644, %v642
    %v661 = vunpack.c.l.b16 %v645
    %v662 = vunpack.c.l.b16 %v646
    %v663 = vunpack.c.h.b16 %v645
    %v664 = vunpack.c.h.b16 %v646
    %v665 = vunpack.c.l.b16 %v647
    %v666 = vunpack.c.l.b16 %v648
    %v667 = vunpack.c.h.b16 %v647
    %v668 = vunpack.c.h.b16 %v648
    %v669 = vunpack.c.l.b16 %v649
    %v670 = vunpack.c.l.b16 %v650
    %v671 = vunpack.c.h.b16 %v649
    %v672 = vunpack.c.h.b16 %v650
    %v673 = vunpack.c.l.b16 %v651
    %v674 = vunpack.c.l.b16 %v652
    %v675 = vunpack.c.h.b16 %v651
    %v676 = vunpack.c.h.b16 %v652
    %v677 = vpack.c.b16 %v662, %v661
    %v678 = vpack.c.b16 %v664, %v663
    %v679 = vpack.c.b16 %v666, %v665
    %v680 = vpack.c.b16 %v668, %v667
    %v681 = vpack.c.b16 %v670, %v669
    %v682 = vpack.c.b16 %v672, %v671
    %v683 = vpack.c.b16 %v674, %v673
    %v684 = vpack.c.b16 %v676, %v675
    %693 = vst [vmem:[%s4] sm:$0xff] %v677
    %694 = vst [vmem:[%s4 + $0x8] sm:$0xff] %v678
    %695 = vst [vmem:[%s4 + $0x10] sm:$0xff] %v679
    %696 = vst [vmem:[%s4 + $0x18] sm:$0xff] %v680
    %697 = vst [vmem:[%s4 + $0x20] sm:$0xff] %v681
    %698 = vst [vmem:[%s4 + $0x28] sm:$0xff] %v682
    %699 = vst [vmem:[%s4 + $0x30] sm:$0xff] %v683
    %700 = vst [vmem:[%s4 + $0x38] sm:$0xff] %v684
  $region25: #{ngpt_forward.16} parent=0 // pred_fallthru
    _
  // Predicated region
  $region26: #{ngpt_forward.16} parent=0 // pred_check
    _
  $region27: #{ngpt_forward.16} parent=0 // pred_check_branch
    %702 = sbr.rel (0) target = $region29
  $region28: #{ngpt_forward.16} parent=0 // pred_region
    _
  $region29: #{ngpt_forward.16} parent=0 // pred_fallthru
    _
  // Predicated region
  $region30: #{ngpt_forward.16} parent=0 // pred_check
    _
  $region31: #{ngpt_forward.16} parent=0 // pred_check_branch
    %704 = sbr.rel (0) target = $region33
  $region32: #{ngpt_forward.16} parent=0 // pred_region
    _
  $region33: #{ngpt_forward.16} parent=0 // pred_fallthru
    _

// kernel: ngpt_forward.13
$region0: #{ngpt_forward.13}
  #allocation0 [shape = 'u32[]', space=smem, size = 0x4, offset = 0x4, fixed_abs, tag = 'smem constant byte address 0x4 - core index']
  #allocation1 [shape = 'u32[144,128]{1,0:T(1,128)}', space=vmem, size = 0x12000, scoped, tag = 'internal scratch']
  #allocation2 [shape = 'f32[64,256]{1,0:T(8,128)}', space=vmem, size = 0x10000, scoped, tag = 'scratch operand']
  %s0 = inlined_call_operand.vmem [shape: bf16[64,256], index: 0, kind: input, shape index: {}]
  %s1 = inlined_call_operand.hbm [shape: bf16[256,768], index: 1, kind: input, shape index: {}]
  %s2 = inlined_call_operand.vmem [shape: bf16[64,768], index: 2, kind: output, shape index: {}]
  %s3 = sld [smem:[#allocation0]]
  $region87: #{ngpt_forward.13} parent=0
    _
  %s5 = ssub.s32 1, %s3
  %s6 = scalar_select 0, %s5, %s3
  $region1: #{ngpt_forward.13} parent=0
    #allocation3 [shape = 'u8[262144]{0}', space=vmem, size = 0x40000, scoped, tag = 'input window, operand 1']
    #allocation4 [shape = 's32[2]{0}', space=sflag, size = 0x8, scoped, tag = 'scoped memory for ngpt_forward.13']
    #allocation5 [shape = 'u8[65536]{0}', space=vmem, size = 0x10000, scoped, tag = 'output window, operand 0']
    %7 = vsyncpa [#allocation4], 0
    %s8 = scalar_lea.sflag [#allocation4], 1
    %9 = vsyncpa %s8, 0
    loop: start=0, step=1, limit=5
    $region2: #{ngpt_forward.13} parent=1 // loop_pre_header
      _
    $region3: #{ngpt_forward.13} parent=1 // loop_header
      %s11 = sphi 0, %s15
      %p12 = scmp.ge.s32.totalorder %s11, 5
      %s18 = sphi 0, %s37
      %s19 = sphi 0, %s33
      %s20 = sphi 0, %s29
      %s21 = sphi 0, %s18
      %s22 = sphi 0, %s19
      %s23 = sphi 0, %s20
      %s24 = sphi 0, %s21
      %s25 = sphi 0, %s22
      %s26 = sphi 0, %s23
      %s42 = sphi 0, %s44
      %s45 = sphi 0, %s42
      %s46 = sphi 0, %s45
      %s62 = sphi 0, %s46
      %s70 = sphi 0, %s72
      %s73 = sphi 0, %s70
      %s74 = sphi 0, %s73
      %s90 = sphi 0, %s74
      %s98 = sphi 0, %s100
      %s101 = sphi 0, %s98
      %s102 = sphi 0, %s101
      %s118 = sphi 0, %s102
    $region4: #{ngpt_forward.13} parent=1 // loop_header_branch
      %14 = sbr.rel (%p12) target = $region8
    $region5: #{ngpt_forward.13} parent=1 // loop_body
      %s16 = ssub.s32 %s11, 1
      %s17 = ssub.s32 %s11, 2
      %s27 = sadd.s32 1, %s20
      %p28 = scmp.ge.s32.totalorder %s27, 1
      %s29 = scalar_select %p28, 0, %s27
      %s30 = sadd.s32 1, %s19
      %s31 = scalar_select %p28, %s30, %s19
      %p32 = scmp.ge.s32.totalorder %s31, 3
      %s33 = scalar_select %p32, 0, %s31
      %s34 = sadd.s32 1, %s18
      %s35 = scalar_select %p32, %s34, %s18
      %p36 = scmp.ge.s32.totalorder %s35, 1
      %s37 = scalar_select %p36, 0, %s35
      %s38 = ssub.s32 %s18, %s37
      %s39 = ssub.s32 %s20, %s29
      %s40 = sor.u32 %s38, %s39
      %p41 = scmp.eq.s32.totalorder %s40, 0
      %s43 = sadd.s32 %s42, 1
      %s44 = scalar_select %p41, %s42, %s43
      %p47 = pneg %p41
      %p48 = scmp.eq.s32.totalorder %s11, 2
      %p49 = por %p47, %p48
      %p50 = scmp.ne.s32.totalorder %s42, %s45
      %p51 = scmp.eq.s32.totalorder %s11, 0
      %p52 = por %p50, %p51
      %p53 = scmp.ne.s32.totalorder %s42, %s45
      %p54 = scmp.eq.s32.totalorder %s16, 2
      %p55 = por %p53, %p54
      %p56 = scmp.ne.s32.totalorder %s45, %s46
      %p57 = scmp.eq.s32.totalorder %s16, 0
      %p58 = por %p56, %p57
      %p59 = scmp.ne.s32.totalorder %s45, %s46
      %p60 = scmp.eq.s32.totalorder %s17, 2
      %p61 = por %p59, %p60
      %p63 = scmp.ne.s32.totalorder %s46, %s62
      %p64 = scmp.eq.s32.totalorder %s17, 0
      %p65 = por %p63, %p64
      %s66 = ssub.s32 %s20, %s29
      %s67 = ssub.s32 %s19, %s33
      %s68 = sor.u32 %s66, %s67
      %p69 = scmp.eq.s32.totalorder %s68, 0
      %s71 = sadd.s32 %s70, 1
      %s72 = scalar_select %p69, %s70, %s71
      %p75 = pneg %p69
      %p76 = scmp.eq.s32.totalorder %s11, 2
      %p77 = por %p75, %p76
      %p78 = scmp.ne.s32.totalorder %s70, %s73
      %p79 = scmp.eq.s32.totalorder %s11, 0
      %p80 = por %p78, %p79
      %p81 = scmp.ne.s32.totalorder %s70, %s73
      %p82 = scmp.eq.s32.totalorder %s16, 2
      %p83 = por %p81, %p82
      %p84 = scmp.ne.s32.totalorder %s73, %s74
      %p85 = scmp.eq.s32.totalorder %s16, 0
      %p86 = por %p84, %p85
      %p87 = scmp.ne.s32.totalorder %s73, %s74
      %p88 = scmp.eq.s32.totalorder %s17, 2
      %p89 = por %p87, %p88
      %p91 = scmp.ne.s32.totalorder %s74, %s90
      %p92 = scmp.eq.s32.totalorder %s17, 0
      %p93 = por %p91, %p92
      %s94 = ssub.s32 %s18, %s37
      %s95 = ssub.s32 %s19, %s33
      %s96 = sor.u32 %s94, %s95
      %p97 = scmp.eq.s32.totalorder %s96, 0
      %s99 = sadd.s32 %s98, 1
      %s100 = scalar_select %p97, %s98, %s99
      %p103 = pneg %p97
      %p104 = scmp.eq.s32.totalorder %s11, 2
      %p105 = por %p103, %p104
      %p106 = scmp.ne.s32.totalorder %s98, %s101
      %p107 = scmp.eq.s32.totalorder %s11, 0
      %p108 = por %p106, %p107
      %p109 = scmp.ne.s32.totalorder %s98, %s101
      %p110 = scmp.eq.s32.totalorder %s16, 2
      %p111 = por %p109, %p110
      %p112 = scmp.ne.s32.totalorder %s101, %s102
      %p113 = scmp.eq.s32.totalorder %s16, 0
      %p114 = por %p112, %p113
      %p115 = scmp.ne.s32.totalorder %s101, %s102
      %p116 = scmp.eq.s32.totalorder %s17, 2
      %p117 = por %p115, %p116
      %p119 = scmp.ne.s32.totalorder %s102, %s118
      %p120 = scmp.eq.s32.totalorder %s17, 0
      %p121 = por %p119, %p120
      %p122 = scmp.le.s32.totalorder 1, %s11
      %p123 = scmp.lt.s32.totalorder %s11, 4
      %p124 = pnand %p122, %p123
      %p125 = pneg %p124
      // Predicated region
      $region9: #{ngpt_forward.13} parent=5 // pred_check
        _
      $region10: #{ngpt_forward.13} parent=5 // pred_check_branch
        %127 = sbr.rel (%p124) target = $region12
      $region11: #{ngpt_forward.13} parent=5 // pred_region
        %s128 = ssub.s32 %s11, 1
        // Predicated region
        $region13: #{ngpt_forward.13} parent=11 // pred_check
          %p129 = pneg %p58
        $region14: #{ngpt_forward.13} parent=11 // pred_check_branch
          %131 = sbr.rel (%p129) target = $region16
        $region15: #{ngpt_forward.13} parent=11 // pred_region
          %s132 = smul.u32 8, %s21
          %s133 = smul.u32 2, %s23
          %p134 = scmp.lt.s32.totalorder %s132, 7
          %s135 = scalar_select %p134, %s132, 7
          %p136 = scmp.lt.s32.totalorder %s133, 1
          %s137 = scalar_select %p136, %s133, 1
          %s138 = smul.addr %s135, 2
          %s139 = sadd.s32 %s137, %s138
          %s140 = smul.addr %s139, 4
          %s141 = scalar_lea.vmem %s0, %s140
          %s142 = smul.u32 8, %s21
          %s143 = smul.u32 2, %s23
        $region16: #{ngpt_forward.13} parent=11 // pred_fallthru
          _
      $region12: #{ngpt_forward.13} parent=5 // pred_fallthru
        _
      %p144 = scmp.lt.s32.totalorder %s11, 3
      // Predicated region
      $region17: #{ngpt_forward.13} parent=5 // pred_check
        %p145 = pneg %p144
      $region18: #{ngpt_forward.13} parent=5 // pred_check_branch
        %147 = sbr.rel (%p145) target = $region20
      $region19: #{ngpt_forward.13} parent=5 // pred_region
        // Predicated region
        $region21: #{ngpt_forward.13} parent=19 // pred_check
          %p148 = pneg %p80
        $region22: #{ngpt_forward.13} parent=19 // pred_check_branch
          %150 = sbr.rel (%p148) target = $region24
        $region23: #{ngpt_forward.13} parent=19 // pred_region
          %s151 = sand.u32 %s70, 1
          %s152 = scalar_lea.sflag [#allocation4], %s151
          %s153 = sand.u32 %s70, 1
          %s154 = smul.addr %s153, 256
          %s155 = scalar_lea.vmem [#allocation3], %s154
          %s156 = smul.u32 32, %s20
          %s157 = smul.u32 2, %s19
          %s159 = ssub.s32 4096, 4096
          %160 = vsyncadd %s152, %s159
          %s161 = smul.addr %s156, 6
          %s162 = sadd.s32 %s157, %s161
          %s163 = smul.addr %s162, 64
          %s164 = scalar_lea.hbm %s1, %s163
          %s165 = sshll.u32 %s155, 4
          %s166 = int_to_ptr.vmem [resolvable:$true] %s165
          %171 = dma.hbm_to_vmem [thread:$0]  %s164, 4096, %s166, %s152, 384, 128, 8
        $region24: #{ngpt_forward.13} parent=19 // pred_fallthru
          _
      $region20: #{ngpt_forward.13} parent=5 // pred_fallthru
        _
      %p172 = scmp.le.s32.totalorder 1, %s11
      %p173 = scmp.lt.s32.totalorder %s11, 4
      %p174 = pnand %p172, %p173
      %p175 = pneg %p174
      // Predicated region
      $region25: #{ngpt_forward.13} parent=5 // pred_check
        _
      $region26: #{ngpt_forward.13} parent=5 // pred_check_branch
        %177 = sbr.rel (%p174) target = $region28
      $region27: #{ngpt_forward.13} parent=5 // pred_region
        %s178 = ssub.s32 %s11, 1
        %s179 = sand.u32 %s73, 1
        %s180 = scalar_lea.sflag [#allocation4], %s179
        %s181 = sand.u32 %s73, 1
        %s182 = smul.addr %s181, 256
        %s183 = scalar_lea.vmem [#allocation3], %s182
        // Predicated region
        $region29: #{ngpt_forward.13} parent=27 // pred_check
          %p184 = pneg %p86
        $region30: #{ngpt_forward.13} parent=27 // pred_check_branch
          %186 = sbr.rel (%p184) target = $region32
        $region31: #{ngpt_forward.13} parent=27 // pred_region
          %187 = dma.done %s180, 4096
        $region32: #{ngpt_forward.13} parent=27 // pred_fallthru
          _
        %s188 = smul.u32 8, %s21
        %s189 = smul.u32 2, %s23
        %p190 = scmp.lt.s32.totalorder %s188, 7
        %s191 = scalar_select %p190, %s188, 7
        %p192 = scmp.lt.s32.totalorder %s189, 1
        %s193 = scalar_select %p192, %s189, 1
        %s194 = smul.addr %s191, 2
        %s195 = sadd.s32 %s193, %s194
        %s196 = smul.addr %s195, 4
        %s197 = scalar_lea.vmem %s0, %s196
        %p198 = pneg %p58
        %p199 = pneg %p55
        %s200 = sand.u32 %s73, 1
        %s201 = scalar_lea.sflag [#allocation4], %s200
        %s202 = sand.u32 %s73, 1
        %s203 = smul.addr %s202, 256
        %s204 = scalar_lea.vmem [#allocation3], %s203
        %p205 = pneg %p86
        %p206 = pneg %p83
        %p207 = pneg %p114
        %p208 = pneg %p111
        %s209 = sand.u32 %s101, 1
        %s210 = sand.u32 %s101, 1
        %s211 = smul.addr %s210, 64
        %s212 = scalar_lea.vmem [#allocation5], %s211
        %s213 = smul.u32 8, %s21
        %s214 = smul.u32 2, %s23
        %p215 = scmp.lt.s32.totalorder %s213, 7
        %s216 = scalar_select %p215, %s213, 7
        %p217 = scmp.lt.s32.totalorder %s214, 1
        %s218 = scalar_select %p217, %s214, 1
        %s219 = smul.addr %s216, 2
        %s220 = sadd.s32 %s218, %s219
        %s221 = smul.addr %s220, 4
        %s222 = scalar_lea.vmem %s0, %s221
        %s223 = smul.u32 8, %s21
        %s224 = smul.u32 2, %s23
        %s225 = smul.u32 32, %s23
        %s226 = smul.u32 2, %s22
        %s227 = smul.u32 8, %s21
        %s228 = smul.u32 2, %s22
        %p229 = scmp.eq.s32.totalorder %s23, 0
        // Predicated region
        $region33: #{ngpt_forward.13} parent=27 // pred_check
          %p230 = pneg %p229
        $region34: #{ngpt_forward.13} parent=27 // pred_check_branch
          %232 = sbr.rel (%p230) target = $region36
        $region35: #{ngpt_forward.13} parent=27 // pred_region
          %233 = vst [vmem:[#allocation2] sm:$0xff] 0.0
          %234 = vst [vmem:[#allocation2 + $0x8] sm:$0xff] 0.0
          %235 = vst [vmem:[#allocation2 + $0x10] sm:$0xff] 0.0
          %236 = vst [vmem:[#allocation2 + $0x18] sm:$0xff] 0.0
          %237 = vst [vmem:[#allocation2 + $0x20] sm:$0xff] 0.0
          %238 = vst [vmem:[#allocation2 + $0x28] sm:$0xff] 0.0
          %239 = vst [vmem:[#allocation2 + $0x30] sm:$0xff] 0.0
          %240 = vst [vmem:[#allocation2 + $0x38] sm:$0xff] 0.0
          %241 = vst [vmem:[#allocation2 + $0x40] sm:$0xff] 0.0
          %242 = vst [vmem:[#allocation2 + $0x48] sm:$0xff] 0.0
          %243 = vst [vmem:[#allocation2 + $0x50] sm:$0xff] 0.0
          %244 = vst [vmem:[#allocation2 + $0x58] sm:$0xff] 0.0
          %245 = vst [vmem:[#allocation2 + $0x60] sm:$0xff] 0.0
          %246 = vst [vmem:[#allocation2 + $0x68] sm:$0xff] 0.0
          %247 = vst [vmem:[#allocation2 + $0x70] sm:$0xff] 0.0
          %248 = vst [vmem:[#allocation2 + $0x78] sm:$0xff] 0.0
        $region36: #{ngpt_forward.13} parent=27 // pred_fallthru
          _
        %v249 = vld [vmem:[#allocation2] sm:$0xff]
        %v250 = vld [vmem:[#allocation2 + $0x8] sm:$0xff]
        %v251 = vld [vmem:[#allocation2 + $0x10] sm:$0xff]
        %v252 = vld [vmem:[#allocation2 + $0x18] sm:$0xff]
        %v253 = vld [vmem:[#allocation2 + $0x20] sm:$0xff]
        %v254 = vld [vmem:[#allocation2 + $0x28] sm:$0xff]
        %v255 = vld [vmem:[#allocation2 + $0x30] sm:$0xff]
        %v256 = vld [vmem:[#allocation2 + $0x38] sm:$0xff]
        %v257 = vld [vmem:[#allocation2 + $0x40] sm:$0xff]
        %v258 = vld [vmem:[#allocation2 + $0x48] sm:$0xff]
        %v259 = vld [vmem:[#allocation2 + $0x50] sm:$0xff]
        %v260 = vld [vmem:[#allocation2 + $0x58] sm:$0xff]
        %v261 = vld [vmem:[#allocation2 + $0x60] sm:$0xff]
        %v262 = vld [vmem:[#allocation2 + $0x68] sm:$0xff]
        %v263 = vld [vmem:[#allocation2 + $0x70] sm:$0xff]
        %v264 = vld [vmem:[#allocation2 + $0x78] sm:$0xff]
        %v265 = vld [vmem:[%s222] sm:$0xff]
        %v266 = vld [vmem:[%s222 + $0x8] sm:$0xff]
        %v267 = vld [vmem:[%s222 + $0x10] sm:$0xff]
        %v268 = vld [vmem:[%s222 + $0x18] sm:$0xff]
        %v269 = vld [vmem:[%s222 + $0x20] sm:$0xff]
        %v270 = vld [vmem:[%s222 + $0x28] sm:$0xff]
        %v271 = vld [vmem:[%s222 + $0x30] sm:$0xff]
        %v272 = vld [vmem:[%s222 + $0x38] sm:$0xff]
        %v273 = vld [vmem:[%s183] sm:$0xff]
        %v274 = vld [vmem:[%s183 + $0x8] sm:$0xff]
        %v275 = vld [vmem:[%s183 + $0x10] sm:$0xff]
        %v276 = vld [vmem:[%s183 + $0x18] sm:$0xff]
        %v277 = vld [vmem:[%s183 + $0x20] sm:$0xff]
        %v278 = vld [vmem:[%s183 + $0x28] sm:$0xff]
        %v279 = vld [vmem:[%s183 + $0x30] sm:$0xff]
        %v280 = vld [vmem:[%s183 + $0x38] sm:$0xff]
        %v281 = vld [vmem:[%s183 + $0x40] sm:$0xff]
        %v282 = vld [vmem:[%s183 + $0x48] sm:$0xff]
        %v283 = vld [vmem:[%s183 + $0x50] sm:$0xff]
        %v284 = vld [vmem:[%s183 + $0x58] sm:$0xff]
        %v285 = vld [vmem:[%s183 + $0x60] sm:$0xff]
        %v286 = vld [vmem:[%s183 + $0x68] sm:$0xff]
        %v287 = vld [vmem:[%s183 + $0x70] sm:$0xff]
        %v288 = vld [vmem:[%s183 + $0x78] sm:$0xff]
        %v289 = vld [vmem:[%s183 + $0x80] sm:$0xff]
        %v290 = vld [vmem:[%s183 + $0x88] sm:$0xff]
        %v291 = vld [vmem:[%s183 + $0x90] sm:$0xff]
        %v292 = vld [vmem:[%s183 + $0x98] sm:$0xff]
        %v293 = vld [vmem:[%s183 + $0xa0] sm:$0xff]
        %v294 = vld [vmem:[%s183 + $0xa8] sm:$0xff]
        %v295 = vld [vmem:[%s183 + $0xb0] sm:$0xff]
        %v296 = vld [vmem:[%s183 + $0xb8] sm:$0xff]
        %v297 = vld [vmem:[%s183 + $0xc0] sm:$0xff]
        %v298 = vld [vmem:[%s183 + $0xc8] sm:$0xff]
        %v299 = vld [vmem:[%s183 + $0xd0] sm:$0xff]
        %v300 = vld [vmem:[%s183 + $0xd8] sm:$0xff]
        %v301 = vld [vmem:[%s183 + $0xe0] sm:$0xff]
        %v302 = vld [vmem:[%s183 + $0xe8] sm:$0xff]
        %v303 = vld [vmem:[%s183 + $0xf0] sm:$0xff]
        %v304 = vld [vmem:[%s183 + $0xf8] sm:$0xff]
        %v313 = vunpack.c.l.b16 %v265
        %v314 = vunpack.c.h.b16 %v265
        %v315 = vunpack.c.l.b16 %v266
        %v316 = vunpack.c.h.b16 %v266
        %v317 = vunpack.c.l.b16 %v267
        %v318 = vunpack.c.h.b16 %v267
        %v319 = vunpack.c.l.b16 %v268
        %v320 = vunpack.c.h.b16 %v268
        %v321 = vunpack.c.l.b16 %v269
        %v322 = vunpack.c.h.b16 %v269
        %v323 = vunpack.c.l.b16 %v270
        %v324 = vunpack.c.h.b16 %v270
        %v325 = vunpack.c.l.b16 %v271
        %v326 = vunpack.c.h.b16 %v271
        %v327 = vunpack.c.l.b16 %v272
        %v328 = vunpack.c.h.b16 %v272
        %v329 = vpack.c.b16 %v315, %v313
        %v330 = vpack.c.b16 %v316, %v314
        %v331 = vpack.c.b16 %v319, %v317
        %v332 = vpack.c.b16 %v320, %v318
        %v333 = vpack.c.b16 %v323, %v321
        %v334 = vpack.c.b16 %v324, %v322
        %v335 = vpack.c.b16 %v327, %v325
        %v336 = vpack.c.b16 %v328, %v326
        %v377 = vunpack.c.l.b16 %v273
        %v378 = vunpack.c.h.b16 %v273
        %v379 = vunpack.c.l.b16 %v274
        %v380 = vunpack.c.h.b16 %v274
        %v381 = vunpack.c.l.b16 %v275
        %v382 = vunpack.c.h.b16 %v275
        %v383 = vunpack.c.l.b16 %v276
        %v384 = vunpack.c.h.b16 %v276
        %v385 = vunpack.c.l.b16 %v277
        %v386 = vunpack.c.h.b16 %v277
        %v387 = vunpack.c.l.b16 %v278
        %v388 = vunpack.c.h.b16 %v278
        %v389 = vunpack.c.l.b16 %v279
        %v390 = vunpack.c.h.b16 %v279
        %v391 = vunpack.c.l.b16 %v280
        %v392 = vunpack.c.h.b16 %v280
        %v393 = vunpack.c.l.b16 %v281
        %v394 = vunpack.c.h.b16 %v281
        %v395 = vunpack.c.l.b16 %v282
        %v396 = vunpack.c.h.b16 %v282
        %v397 = vunpack.c.l.b16 %v283
        %v398 = vunpack.c.h.b16 %v283
        %v399 = vunpack.c.l.b16 %v284
        %v400 = vunpack.c.h.b16 %v284
        %v401 = vunpack.c.l.b16 %v285
        %v402 = vunpack.c.h.b16 %v285
        %v403 = vunpack.c.l.b16 %v286
        %v404 = vunpack.c.h.b16 %v286
        %v405 = vunpack.c.l.b16 %v287
        %v406 = vunpack.c.h.b16 %v287
        %v407 = vunpack.c.l.b16 %v288
        %v408 = vunpack.c.h.b16 %v288
        %v409 = vunpack.c.l.b16 %v289
        %v410 = vunpack.c.h.b16 %v289
        %v411 = vunpack.c.l.b16 %v290
        %v412 = vunpack.c.h.b16 %v290
        %v413 = vunpack.c.l.b16 %v291
        %v414 = vunpack.c.h.b16 %v291
        %v415 = vunpack.c.l.b16 %v292
        %v416 = vunpack.c.h.b16 %v292
        %v417 = vunpack.c.l.b16 %v293
        %v418 = vunpack.c.h.b16 %v293
        %v419 = vunpack.c.l.b16 %v294
        %v420 = vunpack.c.h.b16 %v294
        %v421 = vunpack.c.l.b16 %v295
        %v422 = vunpack.c.h.b16 %v295
        %v423 = vunpack.c.l.b16 %v296
        %v424 = vunpack.c.h.b16 %v296
        %v425 = vunpack.c.l.b16 %v297
        %v426 = vunpack.c.h.b16 %v297
        %v427 = vunpack.c.l.b16 %v298
        %v428 = vunpack.c.h.b16 %v298
        %v429 = vunpack.c.l.b16 %v299
        %v430 = vunpack.c.h.b16 %v299
        %v431 = vunpack.c.l.b16 %v300
        %v432 = vunpack.c.h.b16 %v300
        %v433 = vunpack.c.l.b16 %v301
        %v434 = vunpack.c.h.b16 %v301
        %v435 = vunpack.c.l.b16 %v302
        %v436 = vunpack.c.h.b16 %v302
        %v437 = vunpack.c.l.b16 %v303
        %v438 = vunpack.c.h.b16 %v303
        %v439 = vunpack.c.l.b16 %v304
        %v440 = vunpack.c.h.b16 %v304
        %v441 = vpack.c.b16 %v379, %v377
        %v442 = vpack.c.b16 %v380, %v378
        %v443 = vpack.c.b16 %v383, %v381
        %v444 = vpack.c.b16 %v384, %v382
        %v445 = vpack.c.b16 %v387, %v385
        %v446 = vpack.c.b16 %v388, %v386
        %v447 = vpack.c.b16 %v391, %v389
        %v448 = vpack.c.b16 %v392, %v390
        %v449 = vpack.c.b16 %v395, %v393
        %v450 = vpack.c.b16 %v396, %v394
        %v451 = vpack.c.b16 %v399, %v397
        %v452 = vpack.c.b16 %v400, %v398
        %v453 = vpack.c.b16 %v403, %v401
        %v454 = vpack.c.b16 %v404, %v402
        %v455 = vpack.c.b16 %v407, %v405
        %v456 = vpack.c.b16 %v408, %v406
        %v457 = vpack.c.b16 %v411, %v409
        %v458 = vpack.c.b16 %v412, %v410
        %v459 = vpack.c.b16 %v415, %v413
        %v460 = vpack.c.b16 %v416, %v414
        %v461 = vpack.c.b16 %v419, %v417
        %v462 = vpack.c.b16 %v420, %v418
        %v463 = vpack.c.b16 %v423, %v421
        %v464 = vpack.c.b16 %v424, %v422
        %v465 = vpack.c.b16 %v427, %v425
        %v466 = vpack.c.b16 %v428, %v426
        %v467 = vpack.c.b16 %v431, %v429
        %v468 = vpack.c.b16 %v432, %v430
        %v469 = vpack.c.b16 %v435, %v433
        %v470 = vpack.c.b16 %v436, %v434
        %v471 = vpack.c.b16 %v439, %v437
        %v472 = vpack.c.b16 %v440, %v438
        %505 = vmatprep.subr.bf16.mxu0 %v456
        %506 = vmatpush1.bf16.msra.mxu0 %v455
        %507 = vmatprep.subr.bf16.mxu0 %v454
        %508 = vmatpush1.bf16.msra.mxu0 %v453
        %509 = vmatprep.subr.bf16.mxu0 %v452
        %510 = vmatpush1.bf16.msra.mxu0 %v451
        %511 = vmatprep.subr.bf16.mxu0 %v450
        %512 = vmatpush1.bf16.msra.mxu0 %v449
        %513 = vmatprep.subr.bf16.mxu0 %v448
        %514 = vmatpush1.bf16.msra.mxu0 %v447
        %515 = vmatprep.subr.bf16.mxu0 %v446
        %516 = vmatpush1.bf16.msra.mxu0 %v445
        %517 = vmatprep.subr.bf16.mxu0 %v444
        %518 = vmatpush1.bf16.msra.mxu0 %v443
        %519 = vmatprep.subr.bf16.mxu0 %v442
        %520 = vmatpush1.bf16.msra.mxu0 %v441
        %521 = vmatprep.subr.bf16.mxu0 %v472
        %522 = vmatpush2.bf16.msra.mxu0 %v471
        %523 = vmatprep.subr.bf16.mxu0 %v470
        %524 = vmatpush2.bf16.msra.mxu0 %v469
        %525 = vmatprep.subr.bf16.mxu0 %v468
        %526 = vmatpush2.bf16.msra.mxu0 %v467
        %527 = vmatprep.subr.bf16.mxu0 %v466
        %528 = vmatpush2.bf16.msra.mxu0 %v465
        %529 = vmatprep.subr.bf16.mxu0 %v464
        %530 = vmatpush2.bf16.msra.mxu0 %v463
        %531 = vmatprep.subr.bf16.mxu0 %v462
        %532 = vmatpush2.bf16.msra.mxu0 %v461
        %533 = vmatprep.subr.bf16.mxu0 %v460
        %534 = vmatpush2.bf16.msra.mxu0 %v459
        %535 = vmatprep.subr.bf16.mxu0 %v458
        %536 = vmatpush2.bf16.msra.mxu0 %v457
        %537 = vmatprep.mubr.bf16.mxu0 %v330
        %538 = vmatmul.mubr.bf16.gmra.mxu0 %v329
        %v539 = vpop.f32.mrf.mxu0
        %v540 = vadd.f32 0.0, %v539
        %v541 = vpop.f32.mrf.mxu0
        %v542 = vadd.f32 0.0, %v541
        %v543 = vpop.f32.mrf.mxu0
        %v544 = vadd.f32 0.0, %v543
        %v545 = vpop.f32.mrf.mxu0
        %v546 = vadd.f32 0.0, %v545
        %547 = vmatprep.mubr.bf16.mxu0 %v332
        %548 = vmatmul.mubr.bf16.gmra.mxu0 %v331
        %v549 = vpop.f32.mrf.mxu0
        %v550 = vadd.f32 0.0, %v549
        %v551 = vpop.f32.mrf.mxu0
        %v552 = vadd.f32 0.0, %v551
        %v553 = vpop.f32.mrf.mxu0
        %v554 = vadd.f32 0.0, %v553
        %v555 = vpop.f32.mrf.mxu0
        %v556 = vadd.f32 0.0, %v555
        %557 = vmatprep.mubr.bf16.mxu0 %v334
        %558 = vmatmul.mubr.bf16.gmra.mxu0 %v333
        %v559 = vpop.f32.mrf.mxu0
        %v560 = vadd.f32 0.0, %v559
        %v561 = vpop.f32.mrf.mxu0
        %v562 = vadd.f32 0.0, %v561
        %v563 = vpop.f32.mrf.mxu0
        %v564 = vadd.f32 0.0, %v563
        %v565 = vpop.f32.mrf.mxu0
        %v566 = vadd.f32 0.0, %v565
        %567 = vmatprep.mubr.bf16.mxu0 %v336
        %568 = vmatmul.mubr.bf16.gmra.mxu0 %v335
        %v569 = vpop.f32.mrf.mxu0
        %v570 = vadd.f32 0.0, %v569
        %v571 = vpop.f32.mrf.mxu0
        %v572 = vadd.f32 0.0, %v571
        %v573 = vpop.f32.mrf.mxu0
        %v574 = vadd.f32 0.0, %v573
        %v575 = vpop.f32.mrf.mxu0
        %v576 = vadd.f32 0.0, %v575
        %577 = vdwg.mxu0
        %v578 = vadd.f32 %v249, %v540
        %v579 = vadd.f32 %v250, %v542
        %v580 = vadd.f32 %v251, %v544
        %v581 = vadd.f32 %v252, %v546
        %v582 = vadd.f32 %v253, %v550
        %v583 = vadd.f32 %v254, %v552
        %v584 = vadd.f32 %v255, %v554
        %v585 = vadd.f32 %v256, %v556
        %v586 = vadd.f32 %v257, %v560
        %v587 = vadd.f32 %v258, %v562
        %v588 = vadd.f32 %v259, %v564
        %v589 = vadd.f32 %v260, %v566
        %v590 = vadd.f32 %v261, %v570
        %v591 = vadd.f32 %v262, %v572
        %v592 = vadd.f32 %v263, %v574
        %v593 = vadd.f32 %v264, %v576
        %594 = vst [vmem:[#allocation2] sm:$0xff] %v578
        %595 = vst [vmem:[#allocation2 + $0x8] sm:$0xff] %v579
        %596 = vst [vmem:[#allocation2 + $0x10] sm:$0xff] %v580
        %597 = vst [vmem:[#allocation2 + $0x18] sm:$0xff] %v581
        %598 = vst [vmem:[#allocation2 + $0x20] sm:$0xff] %v582
        %599 = vst [vmem:[#allocation2 + $0x28] sm:$0xff] %v583
        %600 = vst [vmem:[#allocation2 + $0x30] sm:$0xff] %v584
        %601 = vst [vmem:[#allocation2 + $0x38] sm:$0xff] %v585
        %602 = vst [vmem:[#allocation2 + $0x40] sm:$0xff] %v586
        %603 = vst [vmem:[#allocation2 + $0x48] sm:$0xff] %v587
        %604 = vst [vmem:[#allocation2 + $0x50] sm:$0xff] %v588
        %605 = vst [vmem:[#allocation2 + $0x58] sm:$0xff] %v589
        %606 = vst [vmem:[#allocation2 + $0x60] sm:$0xff] %v590
        %607 = vst [vmem:[#allocation2 + $0x68] sm:$0xff] %v591
        %608 = vst [vmem:[#allocation2 + $0x70] sm:$0xff] %v592
        %609 = vst [vmem:[#allocation2 + $0x78] sm:$0xff] %v593
        // Predicated region
        $region37: #{ngpt_forward.13} parent=27 // pred_check
          %p610 = pneg %p229
        $region38: #{ngpt_forward.13} parent=27 // pred_check_branch
          %612 = sbr.rel (%p610) target = $region40
        $region39: #{ngpt_forward.13} parent=27 // pred_region
          %v613 = vld [vmem:[#allocation2] sm:$0xff]
          %v614 = vld [vmem:[#allocation2 + $0x8] sm:$0xff]
          %v615 = vld [vmem:[#allocation2 + $0x10] sm:$0xff]
          %v616 = vld [vmem:[#allocation2 + $0x18] sm:$0xff]
          %v617 = vld [vmem:[#allocation2 + $0x20] sm:$0xff]
          %v618 = vld [vmem:[#allocation2 + $0x28] sm:$0xff]
          %v619 = vld [vmem:[#allocation2 + $0x30] sm:$0xff]
          %v620 = vld [vmem:[#allocation2 + $0x38] sm:$0xff]
          %v621 = vld [vmem:[#allocation2 + $0x40] sm:$0xff]
          %v622 = vld [vmem:[#allocation2 + $0x48] sm:$0xff]
          %v623 = vld [vmem:[#allocation2 + $0x50] sm:$0xff]
          %v624 = vld [vmem:[#allocation2 + $0x58] sm:$0xff]
          %v625 = vld [vmem:[#allocation2 + $0x60] sm:$0xff]
          %v626 = vld [vmem:[#allocation2 + $0x68] sm:$0xff]
          %v627 = vld [vmem:[#allocation2 + $0x70] sm:$0xff]
          %v628 = vld [vmem:[#allocation2 + $0x78] sm:$0xff]
          %v629 = vpack.c.bf16 %v615, %v613
          %v630 = vpack.c.bf16 %v616, %v614
          %v631 = vpack.c.bf16 %v619, %v617
          %v632 = vpack.c.bf16 %v620, %v618
          %v633 = vpack.c.bf16 %v623, %v621
          %v634 = vpack.c.bf16 %v624, %v622
          %v635 = vpack.c.bf16 %v627, %v625
          %v636 = vpack.c.bf16 %v628, %v626
          %v645 = vunpack.c.l.b16 %v629
          %v646 = vunpack.c.l.b16 %v630
          %v647 = vunpack.c.h.b16 %v629
          %v648 = vunpack.c.h.b16 %v630
          %v649 = vunpack.c.l.b16 %v631
          %v650 = vunpack.c.l.b16 %v632
          %v651 = vunpack.c.h.b16 %v631
          %v652 = vunpack.c.h.b16 %v632
          %v653 = vunpack.c.l.b16 %v633
          %v654 = vunpack.c.l.b16 %v634
          %v655 = vunpack.c.h.b16 %v633
          %v656 = vunpack.c.h.b16 %v634
          %v657 = vunpack.c.l.b16 %v635
          %v658 = vunpack.c.l.b16 %v636
          %v659 = vunpack.c.h.b16 %v635
          %v660 = vunpack.c.h.b16 %v636
          %v661 = vpack.c.b16 %v646, %v645
          %v662 = vpack.c.b16 %v648, %v647
          %v663 = vpack.c.b16 %v650, %v649
          %v664 = vpack.c.b16 %v652, %v651
          %v665 = vpack.c.b16 %v654, %v653
          %v666 = vpack.c.b16 %v656, %v655
          %v667 = vpack.c.b16 %v658, %v657
          %v668 = vpack.c.b16 %v660, %v659
          %677 = vst [vmem:[%s212] sm:$0xff] %v661
          %678 = vst [vmem:[%s212 + $0x8] sm:$0xff] %v662
          %679 = vst [vmem:[%s212 + $0x10] sm:$0xff] %v663
          %680 = vst [vmem:[%s212 + $0x18] sm:$0xff] %v664
          %681 = vst [vmem:[%s212 + $0x20] sm:$0xff] %v665
          %682 = vst [vmem:[%s212 + $0x28] sm:$0xff] %v666
          %683 = vst [vmem:[%s212 + $0x30] sm:$0xff] %v667
          %684 = vst [vmem:[%s212 + $0x38] sm:$0xff] %v668
        $region40: #{ngpt_forward.13} parent=27 // pred_fallthru
          _
        %s685 = sand.u32 %s101, 1
        %s686 = sand.u32 %s101, 1
        %s687 = smul.addr %s686, 64
        %s688 = scalar_lea.vmem [#allocation5], %s687
        // Predicated region
        $region41: #{ngpt_forward.13} parent=27 // pred_check
          %p689 = pneg %p111
        $region42: #{ngpt_forward.13} parent=27 // pred_check_branch
          %691 = sbr.rel (%p689) target = $region44
        $region43: #{ngpt_forward.13} parent=27 // pred_region
          %s692 = smul.u32 8, %s21
          %s693 = smul.u32 2, %s22
          %s694 = smul.addr %s692, 6
          %s695 = sadd.s32 %s693, %s694
          %s696 = smul.addr %s695, 4
          %s697 = scalar_lea.vmem %s2, %s696
          // Predicated region
          $region45: #{ngpt_forward.13} parent=43 // pred_check
            _
          $region46: #{ngpt_forward.13} parent=43 // pred_check_branch
            %699 = sbr.rel (0) target = $region48
          $region47: #{ngpt_forward.13} parent=43 // pred_region
            // Predicated region
            $region49: #{ngpt_forward.13} parent=47 // pred_check
              _
            $region50: #{ngpt_forward.13} parent=47 // pred_check_branch
              %701 = sbr.rel (0) target = $region52
            $region51: #{ngpt_forward.13} parent=47 // pred_region
              // Predicated region
              $region64: #{ngpt_forward.13} parent=51 // pred_check
                _
              $region65: #{ngpt_forward.13} parent=51 // pred_check_branch
                %731 = sbr.rel (0) target = $region67
              $region66: #{ngpt_forward.13} parent=51 // pred_region
                loop: start=0, step=1, limit=1
                $region68: #{ngpt_forward.13} parent=66 // loop_pre_header
                  _
                $region69: #{ngpt_forward.13} parent=66 // loop_header
                  %s733 = sphi 0, %s737
                  %p734 = scmp.ge.s32.totalorder %s733, 1
                  %s738 = sphi %s688, %s688
                  %s739 = sphi %s697, %s697
                $region70: #{ngpt_forward.13} parent=66 // loop_header_branch
                  %736 = sbr.rel (%p734) target = $region74
                $region71: #{ngpt_forward.13} parent=66 // loop_body
                  %v740 = vld [vmem:[%s738] sm:$0xff]
                  %741 = vst [vmem:[%s739] sm:$0xff] %v740
                  %v742 = vld [vmem:[%s738 + $0x8] sm:$0xff]
                  %743 = vst [vmem:[%s739 + $0x18] sm:$0xff] %v742
                  %v744 = vld [vmem:[%s738 + $0x10] sm:$0xff]
                  %745 = vst [vmem:[%s739 + $0x30] sm:$0xff] %v744
                  %v746 = vld [vmem:[%s738 + $0x18] sm:$0xff]
                  %747 = vst [vmem:[%s739 + $0x48] sm:$0xff] %v746
                  %v748 = vld [vmem:[%s738 + $0x20] sm:$0xff]
                  %749 = vst [vmem:[%s739 + $0x60] sm:$0xff] %v748
                  %v750 = vld [vmem:[%s738 + $0x28] sm:$0xff]
                  %751 = vst [vmem:[%s739 + $0x78] sm:$0xff] %v750
                  %v752 = vld [vmem:[%s738 + $0x30] sm:$0xff]
                  %753 = vst [vmem:[%s739 + $0x90] sm:$0xff] %v752
                  %v754 = vld [vmem:[%s738 + $0x38] sm:$0xff]
                  %755 = vst [vmem:[%s739 + $0xa8] sm:$0xff] %v754
                $region72: #{ngpt_forward.13} parent=66 // loop_footer
                  %s737 = sadd.s32 1, %s733
                $region73: #{ngpt_forward.13} parent=66 // loop_footer_branch
                  %732 = sbr.rel target = $region69
                $region74: #{ngpt_forward.13} parent=66 // loop_exit
                  _
              $region67: #{ngpt_forward.13} parent=51 // pred_fallthru
                _
              // Predicated region
              $region75: #{ngpt_forward.13} parent=51 // pred_check
                _
              $region76: #{ngpt_forward.13} parent=51 // pred_check_branch
                %757 = sbr.rel target = $region78
              $region77: #{ngpt_forward.13} parent=51 // pred_region
                _
              $region78: #{ngpt_forward.13} parent=51 // pred_fallthru
                _
            $region52: #{ngpt_forward.13} parent=47 // pred_fallthru
              _
            // Predicated region
            $region53: #{ngpt_forward.13} parent=47 // pred_check
              _
            $region54: #{ngpt_forward.13} parent=47 // pred_check_branch
              %703 = sbr.rel target = $region56
            $region55: #{ngpt_forward.13} parent=47 // pred_region
              %s705 = ssub.s32 256, 1
              loop: start=0, step=1, limit=1
              $region57: #{ngpt_forward.13} parent=55 // loop_pre_header
                _
              $region58: #{ngpt_forward.13} parent=55 // loop_header
                %s707 = sphi 0, %s711
                %p708 = scmp.ge.s32.totalorder %s707, 1
                %s712 = sphi %s688, %s688
                %s713 = sphi %s697, %s697
              $region59: #{ngpt_forward.13} parent=55 // loop_header_branch
                %710 = sbr.rel (%p708) target = $region63
              $region60: #{ngpt_forward.13} parent=55 // loop_body
                %v714 = vld [vmem:[%s712] sm:%s705]
                %715 = vst [vmem:[%s713] sm:%s705] %v714
                %v716 = vld [vmem:[%s712 + $0x8] sm:%s705]
                %717 = vst [vmem:[%s713 + $0x18] sm:%s705] %v716
                %v718 = vld [vmem:[%s712 + $0x10] sm:%s705]
                %719 = vst [vmem:[%s713 + $0x30] sm:%s705] %v718
                %v720 = vld [vmem:[%s712 + $0x18] sm:%s705]
                %721 = vst [vmem:[%s713 + $0x48] sm:%s705] %v720
                %v722 = vld [vmem:[%s712 + $0x20] sm:%s705]
                %723 = vst [vmem:[%s713 + $0x60] sm:%s705] %v722
                %v724 = vld [vmem:[%s712 + $0x28] sm:%s705]
                %725 = vst [vmem:[%s713 + $0x78] sm:%s705] %v724
                %v726 = vld [vmem:[%s712 + $0x30] sm:%s705]
                %727 = vst [vmem:[%s713 + $0x90] sm:%s705] %v726
                %v728 = vld [vmem:[%s712 + $0x38] sm:%s705]
                %729 = vst [vmem:[%s713 + $0xa8] sm:%s705] %v728
              $region61: #{ngpt_forward.13} parent=55 // loop_footer
                %s711 = sadd.s32 1, %s707
              $region62: #{ngpt_forward.13} parent=55 // loop_footer_branch
                %706 = sbr.rel target = $region58
              $region63: #{ngpt_forward.13} parent=55 // loop_exit
                _
            $region56: #{ngpt_forward.13} parent=47 // pred_fallthru
              _
          $region48: #{ngpt_forward.13} parent=43 // pred_fallthru
            _
          %758 = vnop
        $region44: #{ngpt_forward.13} parent=27 // pred_fallthru
          _
      $region28: #{ngpt_forward.13} parent=5 // pred_fallthru
        _
      %p759 = scmp.le.s32.totalorder 2, %s11
      // Predicated region
      $region79: #{ngpt_forward.13} parent=5 // pred_check
        %p760 = pneg %p759
      $region80: #{ngpt_forward.13} parent=5 // pred_check_branch
        %762 = sbr.rel (%p760) target = $region82
      $region81: #{ngpt_forward.13} parent=5 // pred_region
        %s763 = ssub.s32 %s11, 2
        // Predicated region
        $region83: #{ngpt_forward.13} parent=81 // pred_check
          %p764 = pneg %p117
        $region84: #{ngpt_forward.13} parent=81 // pred_check_branch
          %766 = sbr.rel (%p764) target = $region86
        $region85: #{ngpt_forward.13} parent=81 // pred_region
          %s767 = sand.u32 %s102, 1
          %s768 = sand.u32 %s102, 1
          %s769 = smul.addr %s768, 64
          %s770 = scalar_lea.vmem [#allocation5], %s769
        $region86: #{ngpt_forward.13} parent=81 // pred_fallthru
          _
      $region82: #{ngpt_forward.13} parent=5 // pred_fallthru
        _
    $region6: #{ngpt_forward.13} parent=1 // loop_footer
      %s15 = sadd.s32 1, %s11
    $region7: #{ngpt_forward.13} parent=1 // loop_footer_branch
      %10 = sbr.rel target = $region3
    $region8: #{ngpt_forward.13} parent=1 // loop_exit
      _
    %771 = vsyncpa [#allocation4], 1
    %s772 = scalar_lea.sflag [#allocation4], 1
    %773 = vsyncpa %s772, 1

// kernel: ngpt_forward.15
$region0: #{ngpt_forward.15}
  #allocation0 [shape = 'u32[]', space=smem, size = 0x4, offset = 0x4, fixed_abs, tag = 'smem constant byte address 0x4 - core index']
  #allocation1 [shape = 'u32[144,128]{1,0:T(1,128)}', space=vmem, size = 0x12000, scoped, tag = 'internal scratch']
  #allocation2 [shape = 'f32[32,1]{1,0:T(8,128)}', space=vmem, size = 0x4000, scoped, tag = 'scratch operand']
  #allocation3 [shape = 'f32[32,1]{1,0:T(8,128)}', space=vmem, size = 0x4000, scoped, tag = 'scratch operand']
  #allocation4 [shape = 'f32[32,128]{1,0:T(8,128)}', space=vmem, size = 0x4000, scoped, tag = 'scratch operand']
  %s0 = inlined_call_operand.vmem [shape: bf16[64,256], index: 0, kind: input, shape index: {}]
  %s1 = inlined_call_operand.vmem [shape: bf16[64,256], index: 1, kind: input, shape index: {}]
  %s2 = inlined_call_operand.vmem [shape: bf16[64,768], index: 2, kind: input, shape index: {}]
  %s3 = inlined_call_operand.vmem [shape: bf16[64,256], index: 3, kind: output, shape index: {}]
  %s4 = sld [smem:[#allocation0]]
  $region221: #{ngpt_forward.15} parent=0
    _
  %s6 = ssub.s32 1, %s4
  %s7 = scalar_select 0, %s6, %s4
  $region1: #{ngpt_forward.15} parent=0
    #allocation5 [shape = 'u8[16384]{0}', space=vmem, size = 0x4000, scoped, tag = 'input window, operand 0']
    #allocation6 [shape = 'u8[16384]{0}', space=vmem, size = 0x4000, scoped, tag = 'input window, operand 1']
    #allocation7 [shape = 'u8[16384]{0}', space=vmem, size = 0x4000, scoped, tag = 'input window, operand 2']
    #allocation8 [shape = 'u8[16384]{0}', space=vmem, size = 0x4000, scoped, tag = 'output window, operand 0']
    loop: start=0, step=1, limit=6
    $region2: #{ngpt_forward.15} parent=1 // loop_pre_header
      _
    $region3: #{ngpt_forward.15} parent=1 // loop_header
      %s9 = sphi 0, %s13
      %p10 = scmp.ge.s32.totalorder %s9, 6
      %s16 = sphi 0, %s42
      %s17 = sphi 0, %s38
      %s18 = sphi 0, %s34
      %s19 = sphi 0, %s30
      %s20 = sphi 0, %s16
      %s21 = sphi 0, %s17
      %s22 = sphi 0, %s18
      %s23 = sphi 0, %s19
      %s24 = sphi 0, %s20
      %s25 = sphi 0, %s21
      %s26 = sphi 0, %s22
      %s27 = sphi 0, %s23
      %s49 = sphi 0, %s51
      %s52 = sphi 0, %s49
      %s53 = sphi 0, %s52
      %s69 = sphi 0, %s53
      %s83 = sphi 0, %s85
      %s86 = sphi 0, %s83
      %s87 = sphi 0, %s86
      %s103 = sphi 0, %s87
      %s119 = sphi 0, %s121
      %s122 = sphi 0, %s119
      %s123 = sphi 0, %s122
      %s139 = sphi 0, %s123
      %s149 = sphi 0, %s151
      %s152 = sphi 0, %s149
      %s153 = sphi 0, %s152
      %s169 = sphi 0, %s153
    $region4: #{ngpt_forward.15} parent=1 // loop_header_branch
      %12 = sbr.rel (%p10) target = $region8
    $region5: #{ngpt_forward.15} parent=1 // loop_body
      %s14 = ssub.s32 %s9, 1
      %s15 = ssub.s32 %s9, 2
      %s28 = sadd.s32 1, %s19
      %p29 = scmp.ge.s32.totalorder %s28, 1
      %s30 = scalar_select %p29, 0, %s28
      %s31 = sadd.s32 1, %s18
      %s32 = scalar_select %p29, %s31, %s18
      %p33 = scmp.ge.s32.totalorder %s32, 1
      %s34 = scalar_select %p33, 0, %s32
      %s35 = sadd.s32 1, %s17
      %s36 = scalar_select %p33, %s35, %s17
      %p37 = scmp.ge.s32.totalorder %s36, 2
      %s38 = scalar_select %p37, 0, %s36
      %s39 = sadd.s32 1, %s16
      %s40 = scalar_select %p37, %s39, %s16
      %p41 = scmp.ge.s32.totalorder %s40, 2
      %s42 = scalar_select %p41, 0, %s40
      %s43 = sadd.s32 %s16, %s18
      %s44 = sadd.s32 %s42, %s34
      %s45 = ssub.s32 %s43, %s44
      %s46 = ssub.s32 %s17, %s38
      %s47 = sor.u32 %s45, %s46
      %p48 = scmp.eq.s32.totalorder %s47, 0
      %s50 = sadd.s32 %s49, 1
      %s51 = scalar_select %p48, %s49, %s50
      %p54 = pneg %p48
      %p55 = scmp.eq.s32.totalorder %s9, 3
      %p56 = por %p54, %p55
      %p57 = scmp.ne.s32.totalorder %s49, %s52
      %p58 = scmp.eq.s32.totalorder %s9, 0
      %p59 = por %p57, %p58
      %p60 = scmp.ne.s32.totalorder %s49, %s52
      %p61 = scmp.eq.s32.totalorder %s14, 3
      %p62 = por %p60, %p61
      %p63 = scmp.ne.s32.totalorder %s52, %s53
      %p64 = scmp.eq.s32.totalorder %s14, 0
      %p65 = por %p63, %p64
      %p66 = scmp.ne.s32.totalorder %s52, %s53
      %p67 = scmp.eq.s32.totalorder %s15, 3
      %p68 = por %p66, %p67
      %p70 = scmp.ne.s32.totalorder %s53, %s69
      %p71 = scmp.eq.s32.totalorder %s15, 0
      %p72 = por %p70, %p71
      %p73 = scmp.lt.s32.totalorder %s19, %s18
      %s74 = scalar_select %p73, %s19, %s18
      %s75 = sadd.s32 %s16, %s74
      %p76 = scmp.lt.s32.totalorder %s30, %s34
      %s77 = scalar_select %p76, %s30, %s34
      %s78 = sadd.s32 %s42, %s77
      %s79 = ssub.s32 %s75, %s78
      %s80 = ssub.s32 %s17, %s38
      %s81 = sor.u32 %s79, %s80
      %p82 = scmp.eq.s32.totalorder %s81, 0
      %s84 = sadd.s32 %s83, 1
      %s85 = scalar_select %p82, %s83, %s84
      %p88 = pneg %p82
      %p89 = scmp.eq.s32.totalorder %s9, 3
      %p90 = por %p88, %p89
      %p91 = scmp.ne.s32.totalorder %s83, %s86
      %p92 = scmp.eq.s32.totalorder %s9, 0
      %p93 = por %p91, %p92
      %p94 = scmp.ne.s32.totalorder %s83, %s86
      %p95 = scmp.eq.s32.totalorder %s14, 3
      %p96 = por %p94, %p95
      %p97 = scmp.ne.s32.totalorder %s86, %s87
      %p98 = scmp.eq.s32.totalorder %s14, 0
      %p99 = por %p97, %p98
      %p100 = scmp.ne.s32.totalorder %s86, %s87
      %p101 = scmp.eq.s32.totalorder %s15, 3
      %p102 = por %p100, %p101
      %p104 = scmp.ne.s32.totalorder %s87, %s103
      %p105 = scmp.eq.s32.totalorder %s15, 0
      %p106 = por %p104, %p105
      %p107 = scmp.lt.s32.totalorder %s19, %s18
      %s108 = scalar_select %p107, %s19, %s18
      %s109 = sadd.s32 %s16, %s108
      %s110 = sadd.s32 %s17, 4
      %p111 = scmp.lt.s32.totalorder %s30, %s34
      %s112 = scalar_select %p111, %s30, %s34
      %s113 = sadd.s32 %s42, %s112
      %s114 = sadd.s32 %s38, 4
      %s115 = ssub.s32 %s109, %s113
      %s116 = ssub.s32 %s110, %s114
      %s117 = sor.u32 %s115, %s116
      %p118 = scmp.eq.s32.totalorder %s117, 0
      %s120 = sadd.s32 %s119, 1
      %s121 = scalar_select %p118, %s119, %s120
      %p124 = pneg %p118
      %p125 = scmp.eq.s32.totalorder %s9, 3
      %p126 = por %p124, %p125
      %p127 = scmp.ne.s32.totalorder %s119, %s122
      %p128 = scmp.eq.s32.totalorder %s9, 0
      %p129 = por %p127, %p128
      %p130 = scmp.ne.s32.totalorder %s119, %s122
      %p131 = scmp.eq.s32.totalorder %s14, 3
      %p132 = por %p130, %p131
      %p133 = scmp.ne.s32.totalorder %s122, %s123
      %p134 = scmp.eq.s32.totalorder %s14, 0
      %p135 = por %p133, %p134
      %p136 = scmp.ne.s32.totalorder %s122, %s123
      %p137 = scmp.eq.s32.totalorder %s15, 3
      %p138 = por %p136, %p137
      %p140 = scmp.ne.s32.totalorder %s123, %s139
      %p141 = scmp.eq.s32.totalorder %s15, 0
      %p142 = por %p140, %p141
      %s143 = sadd.s32 %s16, %s18
      %s144 = sadd.s32 %s42, %s34
      %s145 = ssub.s32 %s143, %s144
      %s146 = ssub.s32 %s17, %s38
      %s147 = sor.u32 %s145, %s146
      %p148 = scmp.eq.s32.totalorder %s147, 0
      %s150 = sadd.s32 %s149, 1
      %s151 = scalar_select %p148, %s149, %s150
      %p154 = pneg %p148
      %p155 = scmp.eq.s32.totalorder %s9, 3
      %p156 = por %p154, %p155
      %p157 = scmp.ne.s32.totalorder %s149, %s152
      %p158 = scmp.eq.s32.totalorder %s9, 0
      %p159 = por %p157, %p158
      %p160 = scmp.ne.s32.totalorder %s149, %s152
      %p161 = scmp.eq.s32.totalorder %s14, 3
      %p162 = por %p160, %p161
      %p163 = scmp.ne.s32.totalorder %s152, %s153
      %p164 = scmp.eq.s32.totalorder %s14, 0
      %p165 = por %p163, %p164
      %p166 = scmp.ne.s32.totalorder %s152, %s153
      %p167 = scmp.eq.s32.totalorder %s15, 3
      %p168 = por %p166, %p167
      %p170 = scmp.ne.s32.totalorder %s153, %s169
      %p171 = scmp.eq.s32.totalorder %s15, 0
      %p172 = por %p170, %p171
      %p173 = scmp.le.s32.totalorder 1, %s9
      %p174 = scmp.lt.s32.totalorder %s9, 5
      %p175 = pnand %p173, %p174
      %p176 = pneg %p175
      // Predicated region
      $region9: #{ngpt_forward.15} parent=5 // pred_check
        _
      $region10: #{ngpt_forward.15} parent=5 // pred_check_branch
        %178 = sbr.rel (%p175) target = $region12
      $region11: #{ngpt_forward.15} parent=5 // pred_region
        %s179 = ssub.s32 %s9, 1
      $region12: #{ngpt_forward.15} parent=5 // pred_fallthru
        _
      %p180 = scmp.lt.s32.totalorder %s9, 4
      // Predicated region
      $region13: #{ngpt_forward.15} parent=5 // pred_check
        %p181 = pneg %p180
      $region14: #{ngpt_forward.15} parent=5 // pred_check_branch
        %183 = sbr.rel (%p181) target = $region16
      $region15: #{ngpt_forward.15} parent=5 // pred_region
        // Predicated region
        $region17: #{ngpt_forward.15} parent=15 // pred_check
          %p184 = pneg %p59
        $region18: #{ngpt_forward.15} parent=15 // pred_check_branch
          %186 = sbr.rel (%p184) target = $region20
        $region19: #{ngpt_forward.15} parent=15 // pred_region
          %s187 = sand.u32 %s49, 1
          %s188 = sand.u32 %s49, 1
          %s189 = smul.addr %s188, 16
          %s190 = scalar_lea.vmem [#allocation5], %s189
          %s191 = sadd.s32 %s16, %s18
          %s192 = smul.u32 4, %s191
          %s193 = smul.addr %s192, 2
          %s194 = sadd.s32 %s17, %s193
          %s195 = smul.addr %s194, 4
          %s196 = scalar_lea.vmem %s0, %s195
          // Predicated region
          $region21: #{ngpt_forward.15} parent=19 // pred_check
            _
          $region22: #{ngpt_forward.15} parent=19 // pred_check_branch
            %198 = sbr.rel (0) target = $region24
          $region23: #{ngpt_forward.15} parent=19 // pred_region
            // Predicated region
            $region25: #{ngpt_forward.15} parent=23 // pred_check
              _
            $region26: #{ngpt_forward.15} parent=23 // pred_check_branch
              %200 = sbr.rel target = $region28
            $region27: #{ngpt_forward.15} parent=23 // pred_region
              // Predicated region
              $region40: #{ngpt_forward.15} parent=27 // pred_check
                _
              $region41: #{ngpt_forward.15} parent=27 // pred_check_branch
                %222 = sbr.rel (0) target = $region43
              $region42: #{ngpt_forward.15} parent=27 // pred_region
                loop: start=0, step=1, limit=1
                $region44: #{ngpt_forward.15} parent=42 // loop_pre_header
                  _
                $region45: #{ngpt_forward.15} parent=42 // loop_header
                  %s224 = sphi 0, %s228
                  %p225 = scmp.ge.s32.totalorder %s224, 1
                  %s229 = sphi %s196, %s196
                  %s230 = sphi %s190, %s190
                $region46: #{ngpt_forward.15} parent=42 // loop_header_branch
                  %227 = sbr.rel (%p225) target = $region50
                $region47: #{ngpt_forward.15} parent=42 // loop_body
                  _
                $region48: #{ngpt_forward.15} parent=42 // loop_footer
                  %s228 = sadd.s32 1, %s224
                $region49: #{ngpt_forward.15} parent=42 // loop_footer_branch
                  %223 = sbr.rel target = $region45
                $region50: #{ngpt_forward.15} parent=42 // loop_exit
                  _
                %s232 = ssub.s32 16, 1
                loop: start=0, step=1, limit=1
                $region51: #{ngpt_forward.15} parent=42 // loop_pre_header
                  _
                $region52: #{ngpt_forward.15} parent=42 // loop_header
                  %s234 = sphi 0, %s238
                  %p235 = scmp.ge.s32.totalorder %s234, 1
                  %s239 = sphi %s196, %s196
                  %s240 = sphi %s190, %s190
                $region53: #{ngpt_forward.15} parent=42 // loop_header_branch
                  %237 = sbr.rel (%p235) target = $region57
                $region54: #{ngpt_forward.15} parent=42 // loop_body
                  %v241 = vld [vmem:[%s239] sm:%s232]
                  %242 = vst [vmem:[%s240] sm:%s232] %v241
                  %v243 = vld [vmem:[%s239 + $0x8] sm:%s232]
                  %244 = vst [vmem:[%s240 + $0x4] sm:%s232] %v243
                  %v245 = vld [vmem:[%s239 + $0x10] sm:%s232]
                  %246 = vst [vmem:[%s240 + $0x8] sm:%s232] %v245
                  %v247 = vld [vmem:[%s239 + $0x18] sm:%s232]
                  %248 = vst [vmem:[%s240 + $0xc] sm:%s232] %v247
                $region55: #{ngpt_forward.15} parent=42 // loop_footer
                  %s238 = sadd.s32 1, %s234
                $region56: #{ngpt_forward.15} parent=42 // loop_footer_branch
                  %233 = sbr.rel target = $region52
                $region57: #{ngpt_forward.15} parent=42 // loop_exit
                  _
              $region43: #{ngpt_forward.15} parent=27 // pred_fallthru
                _
            $region28: #{ngpt_forward.15} parent=23 // pred_fallthru
              _
            // Predicated region
            $region29: #{ngpt_forward.15} parent=23 // pred_check
              _
            $region30: #{ngpt_forward.15} parent=23 // pred_check_branch
              %202 = sbr.rel (0) target = $region32
            $region31: #{ngpt_forward.15} parent=23 // pred_region
              %s204 = ssub.s32 16, 1
              loop: start=0, step=1, limit=1
              $region33: #{ngpt_forward.15} parent=31 // loop_pre_header
                _
              $region34: #{ngpt_forward.15} parent=31 // loop_header
                %s206 = sphi 0, %s210
                %p207 = scmp.ge.s32.totalorder %s206, 1
                %s211 = sphi %s196, %s196
                %s212 = sphi %s190, %s190
              $region35: #{ngpt_forward.15} parent=31 // loop_header_branch
                %209 = sbr.rel (%p207) target = $region39
              $region36: #{ngpt_forward.15} parent=31 // loop_body
                %v213 = vld [vmem:[%s211] sm:%s204]
                %214 = vst [vmem:[%s212] sm:%s204] %v213
                %v215 = vld [vmem:[%s211 + $0x8] sm:%s204]
                %216 = vst [vmem:[%s212 + $0x4] sm:%s204] %v215
                %v217 = vld [vmem:[%s211 + $0x10] sm:%s204]
                %218 = vst [vmem:[%s212 + $0x8] sm:%s204] %v217
                %v219 = vld [vmem:[%s211 + $0x18] sm:%s204]
                %220 = vst [vmem:[%s212 + $0xc] sm:%s204] %v219
              $region37: #{ngpt_forward.15} parent=31 // loop_footer
                %s210 = sadd.s32 1, %s206
              $region38: #{ngpt_forward.15} parent=31 // loop_footer_branch
                %205 = sbr.rel target = $region34
              $region39: #{ngpt_forward.15} parent=31 // loop_exit
                _
            $region32: #{ngpt_forward.15} parent=23 // pred_fallthru
              _
          $region24: #{ngpt_forward.15} parent=19 // pred_fallthru
            _
          %249 = vnop
        $region20: #{ngpt_forward.15} parent=15 // pred_fallthru
          _
        // Predicated region
        $region58: #{ngpt_forward.15} parent=15 // pred_check
          %p250 = pneg %p93
        $region59: #{ngpt_forward.15} parent=15 // pred_check_branch
          %252 = sbr.rel (%p250) target = $region61
        $region60: #{ngpt_forward.15} parent=15 // pred_region
          %s253 = sand.u32 %s83, 1
          %s254 = sand.u32 %s83, 1
          %s255 = smul.addr %s254, 16
          %s256 = scalar_lea.vmem [#allocation6], %s255
          %p257 = scmp.lt.s32.totalorder %s19, %s18
          %s258 = scalar_select %p257, %s19, %s18
          %s259 = sadd.s32 %s16, %s258
          %s260 = smul.u32 4, %s259
          %s261 = smul.addr %s260, 2
          %s262 = sadd.s32 %s17, %s261
          %s263 = smul.addr %s262, 4
          %s264 = scalar_lea.vmem %s1, %s263
          // Predicated region
          $region62: #{ngpt_forward.15} parent=60 // pred_check
            _
          $region63: #{ngpt_forward.15} parent=60 // pred_check_branch
            %266 = sbr.rel (0) target = $region65
          $region64: #{ngpt_forward.15} parent=60 // pred_region
            // Predicated region
            $region66: #{ngpt_forward.15} parent=64 // pred_check
              _
            $region67: #{ngpt_forward.15} parent=64 // pred_check_branch
              %268 = sbr.rel target = $region69
            $region68: #{ngpt_forward.15} parent=64 // pred_region
              // Predicated region
              $region81: #{ngpt_forward.15} parent=68 // pred_check
                _
              $region82: #{ngpt_forward.15} parent=68 // pred_check_branch
                %290 = sbr.rel (0) target = $region84
              $region83: #{ngpt_forward.15} parent=68 // pred_region
                loop: start=0, step=1, limit=1
                $region85: #{ngpt_forward.15} parent=83 // loop_pre_header
                  _
                $region86: #{ngpt_forward.15} parent=83 // loop_header
                  %s292 = sphi 0, %s296
                  %p293 = scmp.ge.s32.totalorder %s292, 1
                  %s297 = sphi %s264, %s264
                  %s298 = sphi %s256, %s256
                $region87: #{ngpt_forward.15} parent=83 // loop_header_branch
                  %295 = sbr.rel (%p293) target = $region91
                $region88: #{ngpt_forward.15} parent=83 // loop_body
                  _
                $region89: #{ngpt_forward.15} parent=83 // loop_footer
                  %s296 = sadd.s32 1, %s292
                $region90: #{ngpt_forward.15} parent=83 // loop_footer_branch
                  %291 = sbr.rel target = $region86
                $region91: #{ngpt_forward.15} parent=83 // loop_exit
                  _
                %s300 = ssub.s32 16, 1
                loop: start=0, step=1, limit=1
                $region92: #{ngpt_forward.15} parent=83 // loop_pre_header
                  _
                $region93: #{ngpt_forward.15} parent=83 // loop_header
                  %s302 = sphi 0, %s306
                  %p303 = scmp.ge.s32.totalorder %s302, 1
                  %s307 = sphi %s264, %s264
                  %s308 = sphi %s256, %s256
                $region94: #{ngpt_forward.15} parent=83 // loop_header_branch
                  %305 = sbr.rel (%p303) target = $region98
                $region95: #{ngpt_forward.15} parent=83 // loop_body
                  %v309 = vld [vmem:[%s307] sm:%s300]
                  %310 = vst [vmem:[%s308] sm:%s300] %v309
                  %v311 = vld [vmem:[%s307 + $0x8] sm:%s300]
                  %312 = vst [vmem:[%s308 + $0x4] sm:%s300] %v311
                  %v313 = vld [vmem:[%s307 + $0x10] sm:%s300]
                  %314 = vst [vmem:[%s308 + $0x8] sm:%s300] %v313
                  %v315 = vld [vmem:[%s307 + $0x18] sm:%s300]
                  %316 = vst [vmem:[%s308 + $0xc] sm:%s300] %v315
                $region96: #{ngpt_forward.15} parent=83 // loop_footer
                  %s306 = sadd.s32 1, %s302
                $region97: #{ngpt_forward.15} parent=83 // loop_footer_branch
                  %301 = sbr.rel target = $region93
                $region98: #{ngpt_forward.15} parent=83 // loop_exit
                  _
              $region84: #{ngpt_forward.15} parent=68 // pred_fallthru
                _
            $region69: #{ngpt_forward.15} parent=64 // pred_fallthru
              _
            // Predicated region
            $region70: #{ngpt_forward.15} parent=64 // pred_check
              _
            $region71: #{ngpt_forward.15} parent=64 // pred_check_branch
              %270 = sbr.rel (0) target = $region73
            $region72: #{ngpt_forward.15} parent=64 // pred_region
              %s272 = ssub.s32 16, 1
              loop: start=0, step=1, limit=1
              $region74: #{ngpt_forward.15} parent=72 // loop_pre_header
                _
              $region75: #{ngpt_forward.15} parent=72 // loop_header
                %s274 = sphi 0, %s278
                %p275 = scmp.ge.s32.totalorder %s274, 1
                %s279 = sphi %s264, %s264
                %s280 = sphi %s256, %s256
              $region76: #{ngpt_forward.15} parent=72 // loop_header_branch
                %277 = sbr.rel (%p275) target = $region80
              $region77: #{ngpt_forward.15} parent=72 // loop_body
                %v281 = vld [vmem:[%s279] sm:%s272]
                %282 = vst [vmem:[%s280] sm:%s272] %v281
                %v283 = vld [vmem:[%s279 + $0x8] sm:%s272]
                %284 = vst [vmem:[%s280 + $0x4] sm:%s272] %v283
                %v285 = vld [vmem:[%s279 + $0x10] sm:%s272]
                %286 = vst [vmem:[%s280 + $0x8] sm:%s272] %v285
                %v287 = vld [vmem:[%s279 + $0x18] sm:%s272]
                %288 = vst [vmem:[%s280 + $0xc] sm:%s272] %v287
              $region78: #{ngpt_forward.15} parent=72 // loop_footer
                %s278 = sadd.s32 1, %s274
              $region79: #{ngpt_forward.15} parent=72 // loop_footer_branch
                %273 = sbr.rel target = $region75
              $region80: #{ngpt_forward.15} parent=72 // loop_exit
                _
            $region73: #{ngpt_forward.15} parent=64 // pred_fallthru
              _
          $region65: #{ngpt_forward.15} parent=60 // pred_fallthru
            _
          %317 = vnop
        $region61: #{ngpt_forward.15} parent=15 // pred_fallthru
          _
        // Predicated region
        $region99: #{ngpt_forward.15} parent=15 // pred_check
          %p318 = pneg %p129
        $region100: #{ngpt_forward.15} parent=15 // pred_check_branch
          %320 = sbr.rel (%p318) target = $region102
        $region101: #{ngpt_forward.15} parent=15 // pred_region
          %s321 = sand.u32 %s119, 1
          %s322 = sand.u32 %s119, 1
          %s323 = smul.addr %s322, 16
          %s324 = scalar_lea.vmem [#allocation7], %s323
          %p325 = scmp.lt.s32.totalorder %s19, %s18
          %s326 = scalar_select %p325, %s19, %s18
          %s327 = sadd.s32 %s16, %s326
          %s328 = sadd.s32 %s17, 4
          %s329 = smul.u32 4, %s327
          %s330 = smul.addr %s329, 6
          %s331 = sadd.s32 %s328, %s330
          %s332 = smul.addr %s331, 4
          %s333 = scalar_lea.vmem %s2, %s332
          // Predicated region
          $region103: #{ngpt_forward.15} parent=101 // pred_check
            _
          $region104: #{ngpt_forward.15} parent=101 // pred_check_branch
            %335 = sbr.rel (0) target = $region106
          $region105: #{ngpt_forward.15} parent=101 // pred_region
            // Predicated region
            $region107: #{ngpt_forward.15} parent=105 // pred_check
              _
            $region108: #{ngpt_forward.15} parent=105 // pred_check_branch
              %337 = sbr.rel target = $region110
            $region109: #{ngpt_forward.15} parent=105 // pred_region
              // Predicated region
              $region122: #{ngpt_forward.15} parent=109 // pred_check
                _
              $region123: #{ngpt_forward.15} parent=109 // pred_check_branch
                %359 = sbr.rel (0) target = $region125
              $region124: #{ngpt_forward.15} parent=109 // pred_region
                loop: start=0, step=1, limit=1
                $region126: #{ngpt_forward.15} parent=124 // loop_pre_header
                  _
                $region127: #{ngpt_forward.15} parent=124 // loop_header
                  %s361 = sphi 0, %s365
                  %p362 = scmp.ge.s32.totalorder %s361, 1
                  %s366 = sphi %s333, %s333
                  %s367 = sphi %s324, %s324
                $region128: #{ngpt_forward.15} parent=124 // loop_header_branch
                  %364 = sbr.rel (%p362) target = $region132
                $region129: #{ngpt_forward.15} parent=124 // loop_body
                  _
                $region130: #{ngpt_forward.15} parent=124 // loop_footer
                  %s365 = sadd.s32 1, %s361
                $region131: #{ngpt_forward.15} parent=124 // loop_footer_branch
                  %360 = sbr.rel target = $region127
                $region132: #{ngpt_forward.15} parent=124 // loop_exit
                  _
                %s369 = ssub.s32 16, 1
                loop: start=0, step=1, limit=1
                $region133: #{ngpt_forward.15} parent=124 // loop_pre_header
                  _
                $region134: #{ngpt_forward.15} parent=124 // loop_header
                  %s371 = sphi 0, %s375
                  %p372 = scmp.ge.s32.totalorder %s371, 1
                  %s376 = sphi %s333, %s333
                  %s377 = sphi %s324, %s324
                $region135: #{ngpt_forward.15} parent=124 // loop_header_branch
                  %374 = sbr.rel (%p372) target = $region139
                $region136: #{ngpt_forward.15} parent=124 // loop_body
                  %v378 = vld [vmem:[%s376] sm:%s369]
                  %379 = vst [vmem:[%s377] sm:%s369] %v378
                  %v380 = vld [vmem:[%s376 + $0x18] sm:%s369]
                  %381 = vst [vmem:[%s377 + $0x4] sm:%s369] %v380
                  %v382 = vld [vmem:[%s376 + $0x30] sm:%s369]
                  %383 = vst [vmem:[%s377 + $0x8] sm:%s369] %v382
                  %v384 = vld [vmem:[%s376 + $0x48] sm:%s369]
                  %385 = vst [vmem:[%s377 + $0xc] sm:%s369] %v384
                $region137: #{ngpt_forward.15} parent=124 // loop_footer
                  %s375 = sadd.s32 1, %s371
                $region138: #{ngpt_forward.15} parent=124 // loop_footer_branch
                  %370 = sbr.rel target = $region134
                $region139: #{ngpt_forward.15} parent=124 // loop_exit
                  _
              $region125: #{ngpt_forward.15} parent=109 // pred_fallthru
                _
            $region110: #{ngpt_forward.15} parent=105 // pred_fallthru
              _
            // Predicated region
            $region111: #{ngpt_forward.15} parent=105 // pred_check
              _
            $region112: #{ngpt_forward.15} parent=105 // pred_check_branch
              %339 = sbr.rel (0) target = $region114
            $region113: #{ngpt_forward.15} parent=105 // pred_region
              %s341 = ssub.s32 16, 1
              loop: start=0, step=1, limit=1
              $region115: #{ngpt_forward.15} parent=113 // loop_pre_header
                _
              $region116: #{ngpt_forward.15} parent=113 // loop_header
                %s343 = sphi 0, %s347
                %p344 = scmp.ge.s32.totalorder %s343, 1
                %s348 = sphi %s333, %s333
                %s349 = sphi %s324, %s324
              $region117: #{ngpt_forward.15} parent=113 // loop_header_branch
                %346 = sbr.rel (%p344) target = $region121
              $region118: #{ngpt_forward.15} parent=113 // loop_body
                %v350 = vld [vmem:[%s348] sm:%s341]
                %351 = vst [vmem:[%s349] sm:%s341] %v350
                %v352 = vld [vmem:[%s348 + $0x18] sm:%s341]
                %353 = vst [vmem:[%s349 + $0x4] sm:%s341] %v352
                %v354 = vld [vmem:[%s348 + $0x30] sm:%s341]
                %355 = vst [vmem:[%s349 + $0x8] sm:%s341] %v354
                %v356 = vld [vmem:[%s348 + $0x48] sm:%s341]
                %357 = vst [vmem:[%s349 + $0xc] sm:%s341] %v356
              $region119: #{ngpt_forward.15} parent=113 // loop_footer
                %s347 = sadd.s32 1, %s343
              $region120: #{ngpt_forward.15} parent=113 // loop_footer_branch
                %342 = sbr.rel target = $region116
              $region121: #{ngpt_forward.15} parent=113 // loop_exit
                _
            $region114: #{ngpt_forward.15} parent=105 // pred_fallthru
              _
          $region106: #{ngpt_forward.15} parent=101 // pred_fallthru
            _
          %386 = vnop
        $region102: #{ngpt_forward.15} parent=15 // pred_fallthru
          _
      $region16: #{ngpt_forward.15} parent=5 // pred_fallthru
        _
      %p387 = scmp.le.s32.totalorder 1, %s9
      %p388 = scmp.lt.s32.totalorder %s9, 5
      %p389 = pnand %p387, %p388
      %p390 = pneg %p389
      // Predicated region
      $region140: #{ngpt_forward.15} parent=5 // pred_check
        _
      $region141: #{ngpt_forward.15} parent=5 // pred_check_branch
        %392 = sbr.rel (%p389) target = $region143
      $region142: #{ngpt_forward.15} parent=5 // pred_region
        %s393 = ssub.s32 %s9, 1
        %s394 = sand.u32 %s52, 1
        %s395 = sand.u32 %s52, 1
        %s396 = smul.addr %s395, 16
        %s397 = scalar_lea.vmem [#allocation5], %s396
        // Predicated region
        $region144: #{ngpt_forward.15} parent=142 // pred_check
          %p398 = pneg %p65
        $region145: #{ngpt_forward.15} parent=142 // pred_check_branch
          %400 = sbr.rel (%p398) target = $region147
        $region146: #{ngpt_forward.15} parent=142 // pred_region
          _
        $region147: #{ngpt_forward.15} parent=142 // pred_fallthru
          _
        %s401 = sand.u32 %s86, 1
        %s402 = sand.u32 %s86, 1
        %s403 = smul.addr %s402, 16
        %s404 = scalar_lea.vmem [#allocation6], %s403
        // Predicated region
        $region148: #{ngpt_forward.15} parent=142 // pred_check
          %p405 = pneg %p99
        $region149: #{ngpt_forward.15} parent=142 // pred_check_branch
          %407 = sbr.rel (%p405) target = $region151
        $region150: #{ngpt_forward.15} parent=142 // pred_region
          _
        $region151: #{ngpt_forward.15} parent=142 // pred_fallthru
          _
        %s408 = sand.u32 %s122, 1
        %s409 = sand.u32 %s122, 1
        %s410 = smul.addr %s409, 16
        %s411 = scalar_lea.vmem [#allocation7], %s410
        // Predicated region
        $region152: #{ngpt_forward.15} parent=142 // pred_check
          %p412 = pneg %p135
        $region153: #{ngpt_forward.15} parent=142 // pred_check_branch
          %414 = sbr.rel (%p412) target = $region155
        $region154: #{ngpt_forward.15} parent=142 // pred_region
          _
        $region155: #{ngpt_forward.15} parent=142 // pred_fallthru
          _
        %s415 = sand.u32 %s52, 1
        %s416 = sand.u32 %s52, 1
        %s417 = smul.addr %s416, 16
        %s418 = scalar_lea.vmem [#allocation5], %s417
        %p419 = pneg %p65
        %p420 = pneg %p62
        %s421 = sand.u32 %s86, 1
        %s422 = sand.u32 %s86, 1
        %s423 = smul.addr %s422, 16
        %s424 = scalar_lea.vmem [#allocation6], %s423
        %p425 = pneg %p99
        %p426 = pneg %p96
        %s427 = sand.u32 %s122, 1
        %s428 = sand.u32 %s122, 1
        %s429 = smul.addr %s428, 16
        %s430 = scalar_lea.vmem [#allocation7], %s429
        %p431 = pneg %p135
        %p432 = pneg %p132
        %p433 = pneg %p165
        %p434 = pneg %p162
        %s435 = sand.u32 %s152, 1
        %s436 = sand.u32 %s152, 1
        %s437 = smul.addr %s436, 16
        %s438 = scalar_lea.vmem [#allocation8], %s437
        %s439 = sadd.s32 %s20, %s22
        %s440 = smul.u32 4, %s439
        %p441 = scmp.lt.s32.totalorder %s23, %s22
        %s442 = scalar_select %p441, %s23, %s22
        %s443 = sadd.s32 %s20, %s442
        %s444 = smul.u32 4, %s443
        %p445 = scmp.lt.s32.totalorder %s23, %s22
        %s446 = scalar_select %p445, %s23, %s22
        %s447 = sadd.s32 %s20, %s446
        %s448 = sadd.s32 %s21, 4
        %s449 = smul.u32 4, %s447
        %s450 = sadd.s32 %s20, %s22
        %s451 = smul.u32 4, %s450
        %p453 = scmp.eq.s32.totalorder %s23, 0
        // Predicated region
        $region156: #{ngpt_forward.15} parent=142 // pred_check
          %p454 = pneg %p453
        $region157: #{ngpt_forward.15} parent=142 // pred_check_branch
          %456 = sbr.rel (%p454) target = $region159
        $region158: #{ngpt_forward.15} parent=142 // pred_region
          %vm457 = vcmask 7168
          %458 = vst.msk [vmem:[#allocation2] sm:$0xff] %vm457, -inf
          %459 = vst.msk [vmem:[#allocation2 + $0x8] sm:$0xff] %vm457, -inf
          %460 = vst.msk [vmem:[#allocation2 + $0x10] sm:$0xff] %vm457, -inf
          %461 = vst.msk [vmem:[#allocation2 + $0x18] sm:$0xff] %vm457, -inf
          %462 = vst.msk [vmem:[#allocation3] sm:$0xff] %vm457, 0.0
          %463 = vst.msk [vmem:[#allocation3 + $0x8] sm:$0xff] %vm457, 0.0
          %464 = vst.msk [vmem:[#allocation3 + $0x10] sm:$0xff] %vm457, 0.0
          %465 = vst.msk [vmem:[#allocation3 + $0x18] sm:$0xff] %vm457, 0.0
          %466 = vst [vmem:[#allocation4] sm:$0xff] 0.0
          %467 = vst [vmem:[#allocation4 + $0x8] sm:$0xff] 0.0
          %468 = vst [vmem:[#allocation4 + $0x10] sm:$0xff] 0.0
          %469 = vst [vmem:[#allocation4 + $0x18] sm:$0xff] 0.0
        $region159: #{ngpt_forward.15} parent=142 // pred_fallthru
          _
        %p470 = scmp.lt.s32.totalorder %s23, %s22
        // Predicated region
        $region160: #{ngpt_forward.15} parent=142 // pred_check
          %p471 = pneg %p470
        $region161: #{ngpt_forward.15} parent=142 // pred_check_branch
          %473 = sbr.rel (%p471) target = $region163
        $region162: #{ngpt_forward.15} parent=142 // pred_region
          %v474 = vld [vmem:[%s397] sm:$0xf]
          %v475 = vld [vmem:[%s397 + $0x4] sm:$0xf]
          %v476 = vld [vmem:[%s397 + $0x8] sm:$0xf]
          %v477 = vld [vmem:[%s397 + $0xc] sm:$0xf]
          %v478 = vld [vmem:[%s404] sm:$0xf]
          %v479 = vld [vmem:[%s404 + $0x4] sm:$0xf]
          %v480 = vld [vmem:[%s404 + $0x8] sm:$0xf]
          %v481 = vld [vmem:[%s404 + $0xc] sm:$0xf]
          %v486 = vunpack.c.l.b16 %v474
          %v487 = vunpack.c.l.b16 %v475
          %v488 = vunpack.c.l.b16 %v476
          %v489 = vunpack.c.l.b16 %v477
          %v490 = vpack.c.b16 %v487, %v486
          %v491 = vpack.c.b16 %v489, %v488
          %v498 = vunpack.c.l.b16 %v478
          %v499 = vunpack.c.l.b16 %v479
          %v500 = vunpack.c.l.b16 %v480
          %v501 = vunpack.c.l.b16 %v481
          %v502 = vpack.c.b16 %v499, %v498
          %v503 = vpack.c.b16 %v501, %v500
          %506 = vmatprep.subr.bf16.mxu0 0
          %507 = vmatpush1.bf16.xpose.msra.mxu0 0
          %508 = vmatprep.subr.bf16.mxu0 0
          %509 = vmatpush1.bf16.xpose.msra.mxu0 0
          %510 = vmatprep.subr.bf16.mxu0 0
          %511 = vmatpush1.bf16.xpose.msra.mxu0 0
          %512 = vmatprep.subr.bf16.mxu0 0
          %513 = vmatpush1.bf16.xpose.msra.mxu0 0
          %514 = vmatprep.subr.bf16.mxu0 0
          %515 = vmatpush1.bf16.xpose.msra.mxu0 0
          %516 = vmatprep.subr.bf16.mxu0 0
          %517 = vmatpush1.bf16.xpose.msra.mxu0 0
          %518 = vmatprep.subr.bf16.mxu0 0
          %519 = vmatpush1.bf16.xpose.msra.mxu0 %v503
          %520 = vmatprep.subr.bf16.mxu0 0
          %521 = vmatpush1.bf16.xpose.msra.mxu0 %v502
          %522 = vmatprep.subr.bf16.mxu0 0
          %523 = vmatpush2.bf16.xpose.msra.mxu0 0
          %524 = vmatprep.subr.bf16.mxu0 0
          %525 = vmatpush2.bf16.xpose.msra.mxu0 0
          %526 = vmatprep.subr.bf16.mxu0 0
          %527 = vmatpush2.bf16.xpose.msra.mxu0 0
          %528 = vmatprep.subr.bf16.mxu0 0
          %529 = vmatpush2.bf16.xpose.msra.mxu0 0
          %530 = vmatprep.subr.bf16.mxu0 0
          %531 = vmatpush2.bf16.xpose.msra.mxu0 0
          %532 = vmatprep.subr.bf16.mxu0 0
          %533 = vmatpush2.bf16.xpose.msra.mxu0 0
          %534 = vmatprep.subr.bf16.mxu0 0
          %535 = vmatpush2.bf16.xpose.msra.mxu0 0
          %536 = vmatprep.subr.bf16.mxu0 0
          %537 = vmatpush2.bf16.xpose.msra.mxu0 0
          %538 = vmatprep.mubr.bf16.mxu0 0
          %539 = vmatmul.mubr.bf16.gmra.mxu0 %v490
          %v540 = vpop.f32.mrf.mxu0
          %v541 = vadd.f32 0.0, %v540
          %v542 = vpop.f32.mrf.mxu0
          %v543 = vpop.f32.mrf.mxu0
          %v544 = vadd.f32 0.0, %v543
          %v545 = vpop.f32.mrf.mxu0
          %546 = vmatprep.mubr.bf16.mxu0 0
          %547 = vmatmul.mubr.bf16.gmra.mxu0 %v491
          %v548 = vpop.f32.mrf.mxu0
          %v549 = vadd.f32 0.0, %v548
          %v550 = vpop.f32.mrf.mxu0
          %v551 = vpop.f32.mrf.mxu0
          %v552 = vadd.f32 0.0, %v551
          %v553 = vpop.f32.mrf.mxu0
          %554 = vdwg.mxu0
          %v555 = vld [vmem:[#allocation2] sm:$0xff]
          %v556 = vld [vmem:[#allocation2 + $0x8] sm:$0xff]
          %v557 = vld [vmem:[#allocation2 + $0x10] sm:$0xff]
          %v558 = vld [vmem:[#allocation2 + $0x18] sm:$0xff]
          %vm559 = vcmask 261120
          %v560 = vsel %vm559, %v541, -inf
          %561 = vmax.xlane.f32.xlu0 %v560
          %v562 = vpop.xlane.xlu0 %561
          %v563 = vsel %vm559, %v544, -inf
          %564 = vmax.xlane.f32.xlu0 %v563
          %v565 = vpop.xlane.xlu0 %564
          %v566 = vsel %vm559, %v549, -inf
          %567 = vmax.xlane.f32.xlu0 %v566
          %v568 = vpop.xlane.xlu0 %567
          %v569 = vsel %vm559, %v552, -inf
          %570 = vmax.xlane.f32.xlu0 %v569
          %v571 = vpop.xlane.xlu0 %570
          %v572 = vmax.f32 %v555, %v562
          %v573 = vmax.f32 %v556, %v565
          %v574 = vmax.f32 %v557, %v568
          %v575 = vmax.f32 %v558, %v571
          %v576 = vsub.f32 %v555, %v572
          %v577 = vsub.f32 %v556, %v573
          %v578 = vsub.f32 %v557, %v574
          %v579 = vsub.f32 %v558, %v575
          %v580 = vmul.f32 %v576, 1.442695
          %v581 = vpow.pop %v580
          %v582 = vmul.f32 %v577, 1.442695
          %v583 = vpow.pop %v582
          %v584 = vmul.f32 %v578, 1.442695
          %v585 = vpow.pop %v584
          %v586 = vmul.f32 %v579, 1.442695
          %v587 = vpow.pop %v586
          %589 = vset.pattern.permute.xlu0 0
          %590 = vperm.xlu0 %589, %v572
          %v591 = vpop.permute.xlu0 %590
          %594 = vset.pattern.permute.xlu0 0
          %595 = vperm.xlu0 %594, %v573
          %v596 = vpop.permute.xlu0 %595
          %599 = vset.pattern.permute.xlu0 0
          %600 = vperm.xlu0 %599, %v574
          %v601 = vpop.permute.xlu0 %600
          %604 = vset.pattern.permute.xlu0 0
          %605 = vperm.xlu0 %604, %v575
          %v606 = vpop.permute.xlu0 %605
          %v608 = vsub.f32 %v541, %v591
          %v609 = vsub.f32 %v544, %v596
          %v610 = vsub.f32 %v549, %v601
          %v611 = vsub.f32 %v552, %v606
          %v612 = vmul.f32 %v608, 1.442695
          %v613 = vpow.pop %v612
          %v614 = vmul.f32 %v609, 1.442695
          %v615 = vpow.pop %v614
          %v616 = vmul.f32 %v610, 1.442695
          %v617 = vpow.pop %v616
          %v618 = vmul.f32 %v611, 1.442695
          %v619 = vpow.pop %v618
          %v620 = vld [vmem:[#allocation3] sm:$0xff]
          %v621 = vld [vmem:[#allocation3 + $0x8] sm:$0xff]
          %v622 = vld [vmem:[#allocation3 + $0x10] sm:$0xff]
          %v623 = vld [vmem:[#allocation3 + $0x18] sm:$0xff]
          %v624 = vmul.f32 %v581, %v620
          %v625 = vmul.f32 %v583, %v621
          %v626 = vmul.f32 %v585, %v622
          %v627 = vmul.f32 %v587, %v623
          %v628 = vsel %vm559, %v613, 0.0
          %629 = vadd.xlane.f32.xlu0 %v628
          %v630 = vpop.xlane.xlu0 %629
          %v631 = vsel %vm559, %v615, 0.0
          %632 = vadd.xlane.f32.xlu0 %v631
          %v633 = vpop.xlane.xlu0 %632
          %v634 = vsel %vm559, %v617, 0.0
          %635 = vadd.xlane.f32.xlu0 %v634
          %v636 = vpop.xlane.xlu0 %635
          %v637 = vsel %vm559, %v619, 0.0
          %638 = vadd.xlane.f32.xlu0 %v637
          %v639 = vpop.xlane.xlu0 %638
          %v640 = vadd.f32 %v624, %v630
          %v641 = vadd.f32 %v625, %v633
          %v642 = vadd.f32 %v626, %v636
          %v643 = vadd.f32 %v627, %v639
          %vm644 = vcmask 7168
          %645 = vst.msk [vmem:[#allocation3] sm:$0xff] %vm644, %v640
          %646 = vst.msk [vmem:[#allocation3 + $0x8] sm:$0xff] %vm644, %v641
          %647 = vst.msk [vmem:[#allocation3 + $0x10] sm:$0xff] %vm644, %v642
          %648 = vst.msk [vmem:[#allocation3 + $0x18] sm:$0xff] %vm644, %v643
          %v649 = vld [vmem:[#allocation4] sm:$0xff]
          %v650 = vld [vmem:[#allocation4 + $0x8] sm:$0xff]
          %v651 = vld [vmem:[#allocation4 + $0x10] sm:$0xff]
          %v652 = vld [vmem:[#allocation4 + $0x18] sm:$0xff]
          %654 = vset.pattern.permute.xlu0 0
          %655 = vperm.xlu0 %654, %v581
          %v656 = vpop.permute.xlu0 %655
          %659 = vset.pattern.permute.xlu0 0
          %660 = vperm.xlu0 %659, %v583
          %v661 = vpop.permute.xlu0 %660
          %664 = vset.pattern.permute.xlu0 0
          %665 = vperm.xlu0 %664, %v585
          %v666 = vpop.permute.xlu0 %665
          %669 = vset.pattern.permute.xlu0 0
          %670 = vperm.xlu0 %669, %v587
          %v671 = vpop.permute.xlu0 %670
          %v673 = vmul.f32 %v656, %v649
          %v674 = vmul.f32 %v661, %v650
          %v675 = vmul.f32 %v666, %v651
          %v676 = vmul.f32 %v671, %v652
          %v677 = vpack.c.bf16 %v615, %v613
          %v678 = vpack.c.bf16 %v619, %v617
          %v679 = vld [vmem:[%s411] sm:$0xf]
          %v680 = vld [vmem:[%s411 + $0x4] sm:$0xf]
          %v681 = vld [vmem:[%s411 + $0x8] sm:$0xf]
          %v682 = vld [vmem:[%s411 + $0xc] sm:$0xf]
          %v687 = vunpack.c.l.b16 %v679
          %v688 = vunpack.c.l.b16 %v680
          %v689 = vunpack.c.l.b16 %v681
          %v690 = vunpack.c.l.b16 %v682
          %v691 = vpack.c.b16 %v688, %v687
          %v692 = vpack.c.b16 %v690, %v689
          %v696 = vsel %vm559, %v677, 0
          %v699 = vsel %vm559, %v678, 0
          %701 = vmatprep.subr.bf16.mxu0 0
          %702 = vmatpush1.bf16.msra.mxu0 0
          %703 = vmatprep.subr.bf16.mxu0 0
          %704 = vmatpush1.bf16.msra.mxu0 0
          %705 = vmatprep.subr.bf16.mxu0 0
          %706 = vmatpush1.bf16.msra.mxu0 0
          %707 = vmatprep.subr.bf16.mxu0 0
          %708 = vmatpush1.bf16.msra.mxu0 0
          %709 = vmatprep.subr.bf16.mxu0 0
          %710 = vmatpush1.bf16.msra.mxu0 0
          %711 = vmatprep.subr.bf16.mxu0 0
          %712 = vmatpush1.bf16.msra.mxu0 0
          %713 = vmatprep.subr.bf16.mxu0 0
          %714 = vmatpush1.bf16.msra.mxu0 %v692
          %715 = vmatprep.subr.bf16.mxu0 0
          %716 = vmatpush1.bf16.msra.mxu0 %v691
          %717 = vmatprep.subr.bf16.mxu0 0
          %718 = vmatpush2.bf16.msra.mxu0 0
          %719 = vmatprep.subr.bf16.mxu0 0
          %720 = vmatpush2.bf16.msra.mxu0 0
          %721 = vmatprep.subr.bf16.mxu0 0
          %722 = vmatpush2.bf16.msra.mxu0 0
          %723 = vmatprep.subr.bf16.mxu0 0
          %724 = vmatpush2.bf16.msra.mxu0 0
          %725 = vmatprep.subr.bf16.mxu0 0
          %726 = vmatpush2.bf16.msra.mxu0 0
          %727 = vmatprep.subr.bf16.mxu0 0
          %728 = vmatpush2.bf16.msra.mxu0 0
          %729 = vmatprep.subr.bf16.mxu0 0
          %730 = vmatpush2.bf16.msra.mxu0 0
          %731 = vmatprep.subr.bf16.mxu0 0
          %732 = vmatpush2.bf16.msra.mxu0 0
          %733 = vmatprep.mubr.bf16.mxu0 0
          %734 = vmatmul.mubr.bf16.gmra.mxu0 %v696
          %v735 = vpop.f32.mrf.mxu0
          %v736 = vadd.f32 0.0, %v735
          %v737 = vpop.f32.mrf.mxu0
          %v738 = vpop.f32.mrf.mxu0
          %v739 = vadd.f32 0.0, %v738
          %v740 = vpop.f32.mrf.mxu0
          %741 = vmatprep.mubr.bf16.mxu0 0
          %742 = vmatmul.mubr.bf16.gmra.mxu0 %v699
          %v743 = vpop.f32.mrf.mxu0
          %v744 = vadd.f32 0.0, %v743
          %v745 = vpop.f32.mrf.mxu0
          %v746 = vpop.f32.mrf.mxu0
          %v747 = vadd.f32 0.0, %v746
          %v748 = vpop.f32.mrf.mxu0
          %749 = vdwg.mxu0
          %v750 = vadd.f32 %v673, %v736
          %v751 = vadd.f32 %v674, %v739
          %v752 = vadd.f32 %v675, %v744
          %v753 = vadd.f32 %v676, %v747
          %754 = vst [vmem:[#allocation4] sm:$0xff] %v750
          %755 = vst [vmem:[#allocation4 + $0x8] sm:$0xff] %v751
          %756 = vst [vmem:[#allocation4 + $0x10] sm:$0xff] %v752
          %757 = vst [vmem:[#allocation4 + $0x18] sm:$0xff] %v753
          %758 = vst.msk [vmem:[#allocation2] sm:$0xff] %vm644, %v572
          %759 = vst.msk [vmem:[#allocation2 + $0x8] sm:$0xff] %vm644, %v573
          %760 = vst.msk [vmem:[#allocation2 + $0x10] sm:$0xff] %vm644, %v574
          %761 = vst.msk [vmem:[#allocation2 + $0x18] sm:$0xff] %vm644, %v575
        $region163: #{ngpt_forward.15} parent=142 // pred_fallthru
          _
        %p762 = scmp.eq.s32.totalorder %s23, %s22
        // Predicated region
        $region164: #{ngpt_forward.15} parent=142 // pred_check
          %p763 = pneg %p762
        $region165: #{ngpt_forward.15} parent=142 // pred_check_branch
          %765 = sbr.rel (%p763) target = $region167
        $region166: #{ngpt_forward.15} parent=142 // pred_region
          %v766 = vld [vmem:[%s397] sm:$0xf]
          %v767 = vld [vmem:[%s397 + $0x4] sm:$0xf]
          %v768 = vld [vmem:[%s397 + $0x8] sm:$0xf]
          %v769 = vld [vmem:[%s397 + $0xc] sm:$0xf]
          %v770 = vld [vmem:[%s404] sm:$0xf]
          %v771 = vld [vmem:[%s404 + $0x4] sm:$0xf]
          %v772 = vld [vmem:[%s404 + $0x8] sm:$0xf]
          %v773 = vld [vmem:[%s404 + $0xc] sm:$0xf]
          %v778 = vunpack.c.l.b16 %v766
          %v779 = vunpack.c.l.b16 %v767
          %v780 = vunpack.c.l.b16 %v768
          %v781 = vunpack.c.l.b16 %v769
          %v782 = vpack.c.b16 %v779, %v778
          %v783 = vpack.c.b16 %v781, %v780
          %v790 = vunpack.c.l.b16 %v770
          %v791 = vunpack.c.l.b16 %v771
          %v792 = vunpack.c.l.b16 %v772
          %v793 = vunpack.c.l.b16 %v773
          %v794 = vpack.c.b16 %v791, %v790
          %v795 = vpack.c.b16 %v793, %v792
          %798 = vmatprep.subr.bf16.mxu0 0
          %799 = vmatpush1.bf16.xpose.msra.mxu0 0
          %800 = vmatprep.subr.bf16.mxu0 0
          %801 = vmatpush1.bf16.xpose.msra.mxu0 0
          %802 = vmatprep.subr.bf16.mxu0 0
          %803 = vmatpush1.bf16.xpose.msra.mxu0 0
          %804 = vmatprep.subr.bf16.mxu0 0
          %805 = vmatpush1.bf16.xpose.msra.mxu0 0
          %806 = vmatprep.subr.bf16.mxu0 0
          %807 = vmatpush1.bf16.xpose.msra.mxu0 0
          %808 = vmatprep.subr.bf16.mxu0 0
          %809 = vmatpush1.bf16.xpose.msra.mxu0 0
          %810 = vmatprep.subr.bf16.mxu0 0
          %811 = vmatpush1.bf16.xpose.msra.mxu0 %v795
          %812 = vmatprep.subr.bf16.mxu0 0
          %813 = vmatpush1.bf16.xpose.msra.mxu0 %v794
          %814 = vmatprep.subr.bf16.mxu0 0
          %815 = vmatpush2.bf16.xpose.msra.mxu0 0
          %816 = vmatprep.subr.bf16.mxu0 0
          %817 = vmatpush2.bf16.xpose.msra.mxu0 0
          %818 = vmatprep.subr.bf16.mxu0 0
          %819 = vmatpush2.bf16.xpose.msra.mxu0 0
          %820 = vmatprep.subr.bf16.mxu0 0
          %821 = vmatpush2.bf16.xpose.msra.mxu0 0
          %822 = vmatprep.subr.bf16.mxu0 0
          %823 = vmatpush2.bf16.xpose.msra.mxu0 0
          %824 = vmatprep.subr.bf16.mxu0 0
          %825 = vmatpush2.bf16.xpose.msra.mxu0 0
          %826 = vmatprep.subr.bf16.mxu0 0
          %827 = vmatpush2.bf16.xpose.msra.mxu0 0
          %828 = vmatprep.subr.bf16.mxu0 0
          %829 = vmatpush2.bf16.xpose.msra.mxu0 0
          %830 = vmatprep.mubr.bf16.mxu0 0
          %831 = vmatmul.mubr.bf16.gmra.mxu0 %v782
          %v832 = vpop.f32.mrf.mxu0
          %v833 = vadd.f32 0.0, %v832
          %v834 = vpop.f32.mrf.mxu0
          %v835 = vpop.f32.mrf.mxu0
          %v836 = vadd.f32 0.0, %v835
          %v837 = vpop.f32.mrf.mxu0
          %838 = vmatprep.mubr.bf16.mxu0 0
          %839 = vmatmul.mubr.bf16.gmra.mxu0 %v783
          %v840 = vpop.f32.mrf.mxu0
          %v841 = vadd.f32 0.0, %v840
          %v842 = vpop.f32.mrf.mxu0
          %v843 = vpop.f32.mrf.mxu0
          %v844 = vadd.f32 0.0, %v843
          %v845 = vpop.f32.mrf.mxu0
          %846 = vdwg.mxu0
          %s847 = smul.u32 %s22, 32
          %v848 = vlaneseq
          %v849 = vshrl.u32 %v848, 7
          %v850 = vadd.s32 %v849, 8
          %v851 = vadd.s32 %v849, 16
          %v852 = vadd.s32 %v849, 24
          %v853 = vstv %s847
          %v854 = vadd.s32 %v853, %v849
          %v855 = vadd.s32 %v853, %v850
          %v856 = vadd.s32 %v853, %v851
          %v857 = vadd.s32 %v853, %v852
          %s858 = smul.u32 %s23, 32
          %v859 = vlaneseq
          %v860 = vand.u32 %v859, 127
          %v861 = vstv %s858
          %v862 = vadd.s32 %v861, %v860
          %vm863 = vcmp.ge.s32.totalorder %v854, %v862
          %vm864 = vcmp.ge.s32.totalorder %v855, %v862
          %vm865 = vcmp.ge.s32.totalorder %v856, %v862
          %vm866 = vcmp.ge.s32.totalorder %v857, %v862
          %v867 = vsel %vm863, %v833, -1e+30
          %v868 = vsel %vm864, %v836, -1e+30
          %v869 = vsel %vm865, %v841, -1e+30
          %v870 = vsel %vm866, %v844, -1e+30
          %v871 = vld [vmem:[#allocation2] sm:$0xff]
          %v872 = vld [vmem:[#allocation2 + $0x8] sm:$0xff]
          %v873 = vld [vmem:[#allocation2 + $0x10] sm:$0xff]
          %v874 = vld [vmem:[#allocation2 + $0x18] sm:$0xff]
          %vm875 = vcmask 261120
          %v876 = vsel %vm875, %v867, -inf
          %877 = vmax.xlane.f32.xlu0 %v876
          %v878 = vpop.xlane.xlu0 %877
          %v879 = vsel %vm875, %v868, -inf
          %880 = vmax.xlane.f32.xlu0 %v879
          %v881 = vpop.xlane.xlu0 %880
          %v882 = vsel %vm875, %v869, -inf
          %883 = vmax.xlane.f32.xlu0 %v882
          %v884 = vpop.xlane.xlu0 %883
          %v885 = vsel %vm875, %v870, -inf
          %886 = vmax.xlane.f32.xlu0 %v885
          %v887 = vpop.xlane.xlu0 %886
          %v888 = vmax.f32 %v871, %v878
          %v889 = vmax.f32 %v872, %v881
          %v890 = vmax.f32 %v873, %v884
          %v891 = vmax.f32 %v874, %v887
          %v892 = vsub.f32 %v871, %v888
          %v893 = vsub.f32 %v872, %v889
          %v894 = vsub.f32 %v873, %v890
          %v895 = vsub.f32 %v874, %v891
          %v896 = vmul.f32 %v892, 1.442695
          %v897 = vpow.pop %v896
          %v898 = vmul.f32 %v893, 1.442695
          %v899 = vpow.pop %v898
          %v900 = vmul.f32 %v894, 1.442695
          %v901 = vpow.pop %v900
          %v902 = vmul.f32 %v895, 1.442695
          %v903 = vpow.pop %v902
          %905 = vset.pattern.permute.xlu0 0
          %906 = vperm.xlu0 %905, %v888
          %v907 = vpop.permute.xlu0 %906
          %910 = vset.pattern.permute.xlu0 0
          %911 = vperm.xlu0 %910, %v889
          %v912 = vpop.permute.xlu0 %911
          %915 = vset.pattern.permute.xlu0 0
          %916 = vperm.xlu0 %915, %v890
          %v917 = vpop.permute.xlu0 %916
          %920 = vset.pattern.permute.xlu0 0
          %921 = vperm.xlu0 %920, %v891
          %v922 = vpop.permute.xlu0 %921
          %v924 = vsub.f32 %v867, %v907
          %v925 = vsub.f32 %v868, %v912
          %v926 = vsub.f32 %v869, %v917
          %v927 = vsub.f32 %v870, %v922
          %v928 = vmul.f32 %v924, 1.442695
          %v929 = vpow.pop %v928
          %v930 = vmul.f32 %v925, 1.442695
          %v931 = vpow.pop %v930
          %v932 = vmul.f32 %v926, 1.442695
          %v933 = vpow.pop %v932
          %v934 = vmul.f32 %v927, 1.442695
          %v935 = vpow.pop %v934
          %v936 = vld [vmem:[#allocation3] sm:$0xff]
          %v937 = vld [vmem:[#allocation3 + $0x8] sm:$0xff]
          %v938 = vld [vmem:[#allocation3 + $0x10] sm:$0xff]
          %v939 = vld [vmem:[#allocation3 + $0x18] sm:$0xff]
          %v940 = vmul.f32 %v897, %v936
          %v941 = vmul.f32 %v899, %v937
          %v942 = vmul.f32 %v901, %v938
          %v943 = vmul.f32 %v903, %v939
          %v944 = vsel %vm875, %v929, 0.0
          %945 = vadd.xlane.f32.xlu0 %v944
          %v946 = vpop.xlane.xlu0 %945
          %v947 = vsel %vm875, %v931, 0.0
          %948 = vadd.xlane.f32.xlu0 %v947
          %v949 = vpop.xlane.xlu0 %948
          %v950 = vsel %vm875, %v933, 0.0
          %951 = vadd.xlane.f32.xlu0 %v950
          %v952 = vpop.xlane.xlu0 %951
          %v953 = vsel %vm875, %v935, 0.0
          %954 = vadd.xlane.f32.xlu0 %v953
          %v955 = vpop.xlane.xlu0 %954
          %v956 = vadd.f32 %v940, %v946
          %v957 = vadd.f32 %v941, %v949
          %v958 = vadd.f32 %v942, %v952
          %v959 = vadd.f32 %v943, %v955
          %vm960 = vcmask 7168
          %961 = vst.msk [vmem:[#allocation3] sm:$0xff] %vm960, %v956
          %962 = vst.msk [vmem:[#allocation3 + $0x8] sm:$0xff] %vm960, %v957
          %963 = vst.msk [vmem:[#allocation3 + $0x10] sm:$0xff] %vm960, %v958
          %964 = vst.msk [vmem:[#allocation3 + $0x18] sm:$0xff] %vm960, %v959
          %v965 = vld [vmem:[#allocation4] sm:$0xff]
          %v966 = vld [vmem:[#allocation4 + $0x8] sm:$0xff]
          %v967 = vld [vmem:[#allocation4 + $0x10] sm:$0xff]
          %v968 = vld [vmem:[#allocation4 + $0x18] sm:$0xff]
          %970 = vset.pattern.permute.xlu0 0
          %971 = vperm.xlu0 %970, %v897
          %v972 = vpop.permute.xlu0 %971
          %975 = vset.pattern.permute.xlu0 0
          %976 = vperm.xlu0 %975, %v899
          %v977 = vpop.permute.xlu0 %976
          %980 = vset.pattern.permute.xlu0 0
          %981 = vperm.xlu0 %980, %v901
          %v982 = vpop.permute.xlu0 %981
          %985 = vset.pattern.permute.xlu0 0
          %986 = vperm.xlu0 %985, %v903
          %v987 = vpop.permute.xlu0 %986
          %v989 = vmul.f32 %v972, %v965
          %v990 = vmul.f32 %v977, %v966
          %v991 = vmul.f32 %v982, %v967
          %v992 = vmul.f32 %v987, %v968
          %v993 = vpack.c.bf16 %v931, %v929
          %v994 = vpack.c.bf16 %v935, %v933
          %v995 = vld [vmem:[%s411] sm:$0xf]
          %v996 = vld [vmem:[%s411 + $0x4] sm:$0xf]
          %v997 = vld [vmem:[%s411 + $0x8] sm:$0xf]
          %v998 = vld [vmem:[%s411 + $0xc] sm:$0xf]
          %v1003 = vunpack.c.l.b16 %v995
          %v1004 = vunpack.c.l.b16 %v996
          %v1005 = vunpack.c.l.b16 %v997
          %v1006 = vunpack.c.l.b16 %v998
          %v1007 = vpack.c.b16 %v1004, %v1003
          %v1008 = vpack.c.b16 %v1006, %v1005
          %v1012 = vsel %vm875, %v993, 0
          %v1015 = vsel %vm875, %v994, 0
          %1017 = vmatprep.subr.bf16.mxu0 0
          %1018 = vmatpush1.bf16.msra.mxu0 0
          %1019 = vmatprep.subr.bf16.mxu0 0
          %1020 = vmatpush1.bf16.msra.mxu0 0
          %1021 = vmatprep.subr.bf16.mxu0 0
          %1022 = vmatpush1.bf16.msra.mxu0 0
          %1023 = vmatprep.subr.bf16.mxu0 0
          %1024 = vmatpush1.bf16.msra.mxu0 0
          %1025 = vmatprep.subr.bf16.mxu0 0
          %1026 = vmatpush1.bf16.msra.mxu0 0
          %1027 = vmatprep.subr.bf16.mxu0 0
          %1028 = vmatpush1.bf16.msra.mxu0 0
          %1029 = vmatprep.subr.bf16.mxu0 0
          %1030 = vmatpush1.bf16.msra.mxu0 %v1008
          %1031 = vmatprep.subr.bf16.mxu0 0
          %1032 = vmatpush1.bf16.msra.mxu0 %v1007
          %1033 = vmatprep.subr.bf16.mxu0 0
          %1034 = vmatpush2.bf16.msra.mxu0 0
          %1035 = vmatprep.subr.bf16.mxu0 0
          %1036 = vmatpush2.bf16.msra.mxu0 0
          %1037 = vmatprep.subr.bf16.mxu0 0
          %1038 = vmatpush2.bf16.msra.mxu0 0
          %1039 = vmatprep.subr.bf16.mxu0 0
          %1040 = vmatpush2.bf16.msra.mxu0 0
          %1041 = vmatprep.subr.bf16.mxu0 0
          %1042 = vmatpush2.bf16.msra.mxu0 0
          %1043 = vmatprep.subr.bf16.mxu0 0
          %1044 = vmatpush2.bf16.msra.mxu0 0
          %1045 = vmatprep.subr.bf16.mxu0 0
          %1046 = vmatpush2.bf16.msra.mxu0 0
          %1047 = vmatprep.subr.bf16.mxu0 0
          %1048 = vmatpush2.bf16.msra.mxu0 0
          %1049 = vmatprep.mubr.bf16.mxu0 0
          %1050 = vmatmul.mubr.bf16.gmra.mxu0 %v1012
          %v1051 = vpop.f32.mrf.mxu0
          %v1052 = vadd.f32 0.0, %v1051
          %v1053 = vpop.f32.mrf.mxu0
          %v1054 = vpop.f32.mrf.mxu0
          %v1055 = vadd.f32 0.0, %v1054
          %v1056 = vpop.f32.mrf.mxu0
          %1057 = vmatprep.mubr.bf16.mxu0 0
          %1058 = vmatmul.mubr.bf16.gmra.mxu0 %v1015
          %v1059 = vpop.f32.mrf.mxu0
          %v1060 = vadd.f32 0.0, %v1059
          %v1061 = vpop.f32.mrf.mxu0
          %v1062 = vpop.f32.mrf.mxu0
          %v1063 = vadd.f32 0.0, %v1062
          %v1064 = vpop.f32.mrf.mxu0
          %1065 = vdwg.mxu0
          %v1066 = vadd.f32 %v989, %v1052
          %v1067 = vadd.f32 %v990, %v1055
          %v1068 = vadd.f32 %v991, %v1060
          %v1069 = vadd.f32 %v992, %v1063
          %1070 = vst [vmem:[#allocation4] sm:$0xff] %v1066
          %1071 = vst [vmem:[#allocation4 + $0x8] sm:$0xff] %v1067
          %1072 = vst [vmem:[#allocation4 + $0x10] sm:$0xff] %v1068
          %1073 = vst [vmem:[#allocation4 + $0x18] sm:$0xff] %v1069
          %1074 = vst.msk [vmem:[#allocation2] sm:$0xff] %vm960, %v888
          %1075 = vst.msk [vmem:[#allocation2 + $0x8] sm:$0xff] %vm960, %v889
          %1076 = vst.msk [vmem:[#allocation2 + $0x10] sm:$0xff] %vm960, %v890
          %1077 = vst.msk [vmem:[#allocation2 + $0x18] sm:$0xff] %vm960, %v891
        $region167: #{ngpt_forward.15} parent=142 // pred_fallthru
          _
        // Predicated region
        $region168: #{ngpt_forward.15} parent=142 // pred_check
          %p1078 = pneg %p453
        $region169: #{ngpt_forward.15} parent=142 // pred_check_branch
          %1080 = sbr.rel (%p1078) target = $region171
        $region170: #{ngpt_forward.15} parent=142 // pred_region
          %v1081 = vld [vmem:[#allocation3] sm:$0xff]
          %v1082 = vld [vmem:[#allocation3 + $0x8] sm:$0xff]
          %v1083 = vld [vmem:[#allocation3 + $0x10] sm:$0xff]
          %v1084 = vld [vmem:[#allocation3 + $0x18] sm:$0xff]
          %v1085 = vrcp.pop %v1081
          %v1086 = vrcp.pop %v1082
          %v1087 = vrcp.pop %v1083
          %v1088 = vrcp.pop %v1084
          %v1089 = vld [vmem:[#allocation4] sm:$0xff]
          %v1090 = vld [vmem:[#allocation4 + $0x8] sm:$0xff]
          %v1091 = vld [vmem:[#allocation4 + $0x10] sm:$0xff]
          %v1092 = vld [vmem:[#allocation4 + $0x18] sm:$0xff]
          %1094 = vset.pattern.permute.xlu0 0
          %1095 = vperm.xlu0 %1094, %v1085
          %v1096 = vpop.permute.xlu0 %1095
          %1099 = vset.pattern.permute.xlu0 0
          %1100 = vperm.xlu0 %1099, %v1086
          %v1101 = vpop.permute.xlu0 %1100
          %1104 = vset.pattern.permute.xlu0 0
          %1105 = vperm.xlu0 %1104, %v1087
          %v1106 = vpop.permute.xlu0 %1105
          %1109 = vset.pattern.permute.xlu0 0
          %1110 = vperm.xlu0 %1109, %v1088
          %v1111 = vpop.permute.xlu0 %1110
          %v1113 = vmul.f32 %v1089, %v1096
          %v1114 = vmul.f32 %v1090, %v1101
          %v1115 = vmul.f32 %v1091, %v1106
          %v1116 = vmul.f32 %v1092, %v1111
          %v1117 = vpack.c.bf16 %v1114, %v1113
          %v1118 = vpack.c.bf16 %v1116, %v1115
          %v1121 = vunpack.c.l.b16 %v1117
          %v1122 = vunpack.c.h.b16 %v1117
          %v1123 = vunpack.c.l.b16 %v1118
          %v1124 = vunpack.c.h.b16 %v1118
          %v1125 = vpack.c.b16 %v1121, %v1121
          %v1126 = vpack.c.b16 %v1122, %v1122
          %v1127 = vpack.c.b16 %v1123, %v1123
          %v1128 = vpack.c.b16 %v1124, %v1124
          %1133 = vst [vmem:[%s438] sm:$0xf] %v1125
          %1134 = vst [vmem:[%s438 + $0x4] sm:$0xf] %v1126
          %1135 = vst [vmem:[%s438 + $0x8] sm:$0xf] %v1127
          %1136 = vst [vmem:[%s438 + $0xc] sm:$0xf] %v1128
        $region171: #{ngpt_forward.15} parent=142 // pred_fallthru
          _
        %s1137 = sand.u32 %s152, 1
        %s1138 = sand.u32 %s152, 1
        %s1139 = smul.addr %s1138, 16
        %s1140 = scalar_lea.vmem [#allocation8], %s1139
        // Predicated region
        $region172: #{ngpt_forward.15} parent=142 // pred_check
          %p1141 = pneg %p162
        $region173: #{ngpt_forward.15} parent=142 // pred_check_branch
          %1143 = sbr.rel (%p1141) target = $region175
        $region174: #{ngpt_forward.15} parent=142 // pred_region
          %s1144 = sadd.s32 %s20, %s22
          %s1145 = smul.u32 4, %s1144
          %s1146 = smul.addr %s1145, 2
          %s1147 = sadd.s32 %s21, %s1146
          %s1148 = smul.addr %s1147, 4
          %s1149 = scalar_lea.vmem %s3, %s1148
          // Predicated region
          $region176: #{ngpt_forward.15} parent=174 // pred_check
            _
          $region177: #{ngpt_forward.15} parent=174 // pred_check_branch
            %1151 = sbr.rel (0) target = $region179
          $region178: #{ngpt_forward.15} parent=174 // pred_region
            // Predicated region
            $region180: #{ngpt_forward.15} parent=178 // pred_check
              _
            $region181: #{ngpt_forward.15} parent=178 // pred_check_branch
              %1153 = sbr.rel target = $region183
            $region182: #{ngpt_forward.15} parent=178 // pred_region
              // Predicated region
              $region195: #{ngpt_forward.15} parent=182 // pred_check
                _
              $region196: #{ngpt_forward.15} parent=182 // pred_check_branch
                %1175 = sbr.rel (0) target = $region198
              $region197: #{ngpt_forward.15} parent=182 // pred_region
                loop: start=0, step=1, limit=1
                $region199: #{ngpt_forward.15} parent=197 // loop_pre_header
                  _
                $region200: #{ngpt_forward.15} parent=197 // loop_header
                  %s1177 = sphi 0, %s1181
                  %p1178 = scmp.ge.s32.totalorder %s1177, 1
                  %s1182 = sphi %s1140, %s1140
                  %s1183 = sphi %s1149, %s1149
                $region201: #{ngpt_forward.15} parent=197 // loop_header_branch
                  %1180 = sbr.rel (%p1178) target = $region205
                $region202: #{ngpt_forward.15} parent=197 // loop_body
                  _
                $region203: #{ngpt_forward.15} parent=197 // loop_footer
                  %s1181 = sadd.s32 1, %s1177
                $region204: #{ngpt_forward.15} parent=197 // loop_footer_branch
                  %1176 = sbr.rel target = $region200
                $region205: #{ngpt_forward.15} parent=197 // loop_exit
                  _
                %s1185 = ssub.s32 16, 1
                loop: start=0, step=1, limit=1
                $region206: #{ngpt_forward.15} parent=197 // loop_pre_header
                  _
                $region207: #{ngpt_forward.15} parent=197 // loop_header
                  %s1187 = sphi 0, %s1191
                  %p1188 = scmp.ge.s32.totalorder %s1187, 1
                  %s1192 = sphi %s1140, %s1140
                  %s1193 = sphi %s1149, %s1149
                $region208: #{ngpt_forward.15} parent=197 // loop_header_branch
                  %1190 = sbr.rel (%p1188) target = $region212
                $region209: #{ngpt_forward.15} parent=197 // loop_body
                  %v1194 = vld [vmem:[%s1192] sm:%s1185]
                  %1195 = vst [vmem:[%s1193] sm:%s1185] %v1194
                  %v1196 = vld [vmem:[%s1192 + $0x4] sm:%s1185]
                  %1197 = vst [vmem:[%s1193 + $0x8] sm:%s1185] %v1196
                  %v1198 = vld [vmem:[%s1192 + $0x8] sm:%s1185]
                  %1199 = vst [vmem:[%s1193 + $0x10] sm:%s1185] %v1198
                  %v1200 = vld [vmem:[%s1192 + $0xc] sm:%s1185]
                  %1201 = vst [vmem:[%s1193 + $0x18] sm:%s1185] %v1200
                $region210: #{ngpt_forward.15} parent=197 // loop_footer
                  %s1191 = sadd.s32 1, %s1187
                $region211: #{ngpt_forward.15} parent=197 // loop_footer_branch
                  %1186 = sbr.rel target = $region207
                $region212: #{ngpt_forward.15} parent=197 // loop_exit
                  _
              $region198: #{ngpt_forward.15} parent=182 // pred_fallthru
                _
            $region183: #{ngpt_forward.15} parent=178 // pred_fallthru
              _
            // Predicated region
            $region184: #{ngpt_forward.15} parent=178 // pred_check
              _
            $region185: #{ngpt_forward.15} parent=178 // pred_check_branch
              %1155 = sbr.rel (0) target = $region187
            $region186: #{ngpt_forward.15} parent=178 // pred_region
              %s1157 = ssub.s32 16, 1
              loop: start=0, step=1, limit=1
              $region188: #{ngpt_forward.15} parent=186 // loop_pre_header
                _
              $region189: #{ngpt_forward.15} parent=186 // loop_header
                %s1159 = sphi 0, %s1163
                %p1160 = scmp.ge.s32.totalorder %s1159, 1
                %s1164 = sphi %s1140, %s1140
                %s1165 = sphi %s1149, %s1149
              $region190: #{ngpt_forward.15} parent=186 // loop_header_branch
                %1162 = sbr.rel (%p1160) target = $region194
              $region191: #{ngpt_forward.15} parent=186 // loop_body
                %v1166 = vld [vmem:[%s1164] sm:%s1157]
                %1167 = vst [vmem:[%s1165] sm:%s1157] %v1166
                %v1168 = vld [vmem:[%s1164 + $0x4] sm:%s1157]
                %1169 = vst [vmem:[%s1165 + $0x8] sm:%s1157] %v1168
                %v1170 = vld [vmem:[%s1164 + $0x8] sm:%s1157]
                %1171 = vst [vmem:[%s1165 + $0x10] sm:%s1157] %v1170
                %v1172 = vld [vmem:[%s1164 + $0xc] sm:%s1157]
                %1173 = vst [vmem:[%s1165 + $0x18] sm:%s1157] %v1172
              $region192: #{ngpt_forward.15} parent=186 // loop_footer
                %s1163 = sadd.s32 1, %s1159
              $region193: #{ngpt_forward.15} parent=186 // loop_footer_branch
                %1158 = sbr.rel target = $region189
              $region194: #{ngpt_forward.15} parent=186 // loop_exit
                _
            $region187: #{ngpt_forward.15} parent=178 // pred_fallthru
              _
          $region179: #{ngpt_forward.15} parent=174 // pred_fallthru
            _
          %1202 = vnop
        $region175: #{ngpt_forward.15} parent=142 // pred_fallthru
          _
      $region143: #{ngpt_forward.15} parent=5 // pred_fallthru
        _
      %p1203 = scmp.le.s32.totalorder 2, %s9
      // Predicated region
      $region213: #{ngpt_forward.15} parent=5 // pred_check
        %p1204 = pneg %p1203
      $region214: #{ngpt_forward.15} parent=5 // pred_check_branch
        %1206 = sbr.rel (%p1204) target = $region216
      $region215: #{ngpt_forward.15} parent=5 // pred_region
        %s1207 = ssub.s32 %s9, 2
        // Predicated region
        $region217: #{ngpt_forward.15} parent=215 // pred_check
          %p1208 = pneg %p168
        $region218: #{ngpt_forward.15} parent=215 // pred_check_branch
          %1210 = sbr.rel (%p1208) target = $region220
        $region219: #{ngpt_forward.15} parent=215 // pred_region
          %s1211 = sand.u32 %s153, 1
          %s1212 = sand.u32 %s153, 1
          %s1213 = smul.addr %s1212, 16
          %s1214 = scalar_lea.vmem [#allocation8], %s1213
        $region220: #{ngpt_forward.15} parent=215 // pred_fallthru
          _
      $region216: #{ngpt_forward.15} parent=5 // pred_fallthru
        _
    $region6: #{ngpt_forward.15} parent=1 // loop_footer
      %s13 = sadd.s32 1, %s9
    $region7: #{ngpt_forward.15} parent=1 // loop_footer_branch
      %8 = sbr.rel target = $region3
    $region8: #{ngpt_forward.15} parent=1 // loop_exit
      _

// kernel: ngpt_forward.18
$region0: #{ngpt_forward.18}
  #allocation0 [shape = 'u32[]', space=smem, size = 0x4, offset = 0x4, fixed_abs, tag = 'smem constant byte address 0x4 - core index']
  #allocation1 [shape = 'u32[144,128]{1,0:T(1,128)}', space=vmem, size = 0x12000, scoped, tag = 'internal scratch']
  #allocation2 [shape = 'f32[64,256]{1,0:T(8,128)}', space=vmem, size = 0x10000, scoped, tag = 'scratch operand']
  %s0 = inlined_call_operand.vmem [shape: bf16[64,1024], index: 0, kind: input, shape index: {}]
  %s1 = inlined_call_operand.vmem [shape: bf16[1024,256], index: 1, kind: input, shape index: {}]
  %s2 = inlined_call_operand.vmem [shape: bf16[64,256], index: 2, kind: input, shape index: {}]
  %s3 = inlined_call_operand.vmem [shape: f32[1,256], index: 3, kind: input, shape index: {}]
  %s4 = inlined_call_operand.vmem [shape: bf16[64,256], index: 4, kind: output, shape index: {}]
  %s5 = sld [smem:[#allocation0]]
  $region80: #{ngpt_forward.18} parent=0
    _
  %s7 = ssub.s32 1, %s5
  %s8 = scalar_select 0, %s7, %s5
  $region1: #{ngpt_forward.18} parent=0
    #allocation3 [shape = 'u8[131072]{0}', space=vmem, size = 0x20000, scoped, tag = 'input window, operand 0']
    loop: start=0, step=1, limit=4
    $region2: #{ngpt_forward.18} parent=1 // loop_pre_header
      _
    $region3: #{ngpt_forward.18} parent=1 // loop_header
      %s10 = sphi 0, %s14
      %p11 = scmp.ge.s32.totalorder %s10, 4
      %s17 = sphi 0, %s29
      %s18 = sphi 0, %s25
      %s19 = sphi 0, %s17
      %s20 = sphi 0, %s18
      %s21 = sphi 0, %s19
      %s22 = sphi 0, %s20
      %s34 = sphi 0, %s36
      %s37 = sphi 0, %s34
      %s38 = sphi 0, %s37
      %s54 = sphi 0, %s38
      %s60 = sphi 0, %s62
      %s63 = sphi 0, %s60
      %s64 = sphi 0, %s63
      %s80 = sphi 0, %s64
      %s86 = sphi 0, %s88
      %s89 = sphi 0, %s86
      %s90 = sphi 0, %s89
      %s106 = sphi 0, %s90
      %s110 = sphi 0, %s110
      %s112 = sphi 0, %s110
      %s113 = sphi 0, %s112
      %s127 = sphi 0, %s113
      %s133 = sphi 0, %s135
      %s136 = sphi 0, %s133
      %s137 = sphi 0, %s136
      %s153 = sphi 0, %s137
    $region4: #{ngpt_forward.18} parent=1 // loop_header_branch
      %13 = sbr.rel (%p11) target = $region8
    $region5: #{ngpt_forward.18} parent=1 // loop_body
      %s15 = ssub.s32 %s10, 1
      %s16 = ssub.s32 %s10, 2
      %s23 = sadd.s32 1, %s18
      %p24 = scmp.ge.s32.totalorder %s23, 2
      %s25 = scalar_select %p24, 0, %s23
      %s26 = sadd.s32 1, %s17
      %s27 = scalar_select %p24, %s26, %s17
      %p28 = scmp.ge.s32.totalorder %s27, 1
      %s29 = scalar_select %p28, 0, %s27
      %s30 = ssub.s32 %s17, %s29
      %s31 = ssub.s32 %s18, %s25
      %s32 = sor.u32 %s30, %s31
      %p33 = scmp.eq.s32.totalorder %s32, 0
      %s35 = sadd.s32 %s34, 1
      %s36 = scalar_select %p33, %s34, %s35
      %p39 = pneg %p33
      %p40 = scmp.eq.s32.totalorder %s10, 1
      %p41 = por %p39, %p40
      %p42 = scmp.ne.s32.totalorder %s34, %s37
      %p43 = scmp.eq.s32.totalorder %s10, 0
      %p44 = por %p42, %p43
      %p45 = scmp.ne.s32.totalorder %s34, %s37
      %p46 = scmp.eq.s32.totalorder %s15, 1
      %p47 = por %p45, %p46
      %p48 = scmp.ne.s32.totalorder %s37, %s38
      %p49 = scmp.eq.s32.totalorder %s15, 0
      %p50 = por %p48, %p49
      %p51 = scmp.ne.s32.totalorder %s37, %s38
      %p52 = scmp.eq.s32.totalorder %s16, 1
      %p53 = por %p51, %p52
      %p55 = scmp.ne.s32.totalorder %s38, %s54
      %p56 = scmp.eq.s32.totalorder %s16, 0
      %p57 = por %p55, %p56
      %s58 = ssub.s32 %s18, %s25
      %p59 = scmp.eq.s32.totalorder %s58, 0
      %s61 = sadd.s32 %s60, 1
      %s62 = scalar_select %p59, %s60, %s61
      %p65 = pneg %p59
      %p66 = scmp.eq.s32.totalorder %s10, 1
      %p67 = por %p65, %p66
      %p68 = scmp.ne.s32.totalorder %s60, %s63
      %p69 = scmp.eq.s32.totalorder %s10, 0
      %p70 = por %p68, %p69
      %p71 = scmp.ne.s32.totalorder %s60, %s63
      %p72 = scmp.eq.s32.totalorder %s15, 1
      %p73 = por %p71, %p72
      %p74 = scmp.ne.s32.totalorder %s63, %s64
      %p75 = scmp.eq.s32.totalorder %s15, 0
      %p76 = por %p74, %p75
      %p77 = scmp.ne.s32.totalorder %s63, %s64
      %p78 = scmp.eq.s32.totalorder %s16, 1
      %p79 = por %p77, %p78
      %p81 = scmp.ne.s32.totalorder %s64, %s80
      %p82 = scmp.eq.s32.totalorder %s16, 0
      %p83 = por %p81, %p82
      %s84 = ssub.s32 %s17, %s29
      %p85 = scmp.eq.s32.totalorder %s84, 0
      %s87 = sadd.s32 %s86, 1
      %s88 = scalar_select %p85, %s86, %s87
      %p91 = pneg %p85
      %p92 = scmp.eq.s32.totalorder %s10, 1
      %p93 = por %p91, %p92
      %p94 = scmp.ne.s32.totalorder %s86, %s89
      %p95 = scmp.eq.s32.totalorder %s10, 0
      %p96 = por %p94, %p95
      %p97 = scmp.ne.s32.totalorder %s86, %s89
      %p98 = scmp.eq.s32.totalorder %s15, 1
      %p99 = por %p97, %p98
      %p100 = scmp.ne.s32.totalorder %s89, %s90
      %p101 = scmp.eq.s32.totalorder %s15, 0
      %p102 = por %p100, %p101
      %p103 = scmp.ne.s32.totalorder %s89, %s90
      %p104 = scmp.eq.s32.totalorder %s16, 1
      %p105 = por %p103, %p104
      %p107 = scmp.ne.s32.totalorder %s90, %s106
      %p108 = scmp.eq.s32.totalorder %s16, 0
      %p109 = por %p107, %p108
      %s111 = sadd.s32 %s110, 1
      %p114 = scmp.eq.s32.totalorder %s10, 1
      %p115 = scmp.ne.s32.totalorder %s110, %s112
      %p116 = scmp.eq.s32.totalorder %s10, 0
      %p117 = por %p115, %p116
      %p118 = scmp.ne.s32.totalorder %s110, %s112
      %p119 = scmp.eq.s32.totalorder %s15, 1
      %p120 = por %p118, %p119
      %p121 = scmp.ne.s32.totalorder %s112, %s113
      %p122 = scmp.eq.s32.totalorder %s15, 0
      %p123 = por %p121, %p122
      %p124 = scmp.ne.s32.totalorder %s112, %s113
      %p125 = scmp.eq.s32.totalorder %s16, 1
      %p126 = por %p124, %p125
      %p128 = scmp.ne.s32.totalorder %s113, %s127
      %p129 = scmp.eq.s32.totalorder %s16, 0
      %p130 = por %p128, %p129
      %s131 = ssub.s32 %s17, %s29
      %p132 = scmp.eq.s32.totalorder %s131, 0
      %s134 = sadd.s32 %s133, 1
      %s135 = scalar_select %p132, %s133, %s134
      %p138 = pneg %p132
      %p139 = scmp.eq.s32.totalorder %s10, 1
      %p140 = por %p138, %p139
      %p141 = scmp.ne.s32.totalorder %s133, %s136
      %p142 = scmp.eq.s32.totalorder %s10, 0
      %p143 = por %p141, %p142
      %p144 = scmp.ne.s32.totalorder %s133, %s136
      %p145 = scmp.eq.s32.totalorder %s15, 1
      %p146 = por %p144, %p145
      %p147 = scmp.ne.s32.totalorder %s136, %s137
      %p148 = scmp.eq.s32.totalorder %s15, 0
      %p149 = por %p147, %p148
      %p150 = scmp.ne.s32.totalorder %s136, %s137
      %p151 = scmp.eq.s32.totalorder %s16, 1
      %p152 = por %p150, %p151
      %p154 = scmp.ne.s32.totalorder %s137, %s153
      %p155 = scmp.eq.s32.totalorder %s16, 0
      %p156 = por %p154, %p155
      %p157 = scmp.le.s32.totalorder 1, %s10
      %p158 = scmp.lt.s32.totalorder %s10, 3
      %p159 = pnand %p157, %p158
      %p160 = pneg %p159
      // Predicated region
      $region9: #{ngpt_forward.18} parent=5 // pred_check
        _
      $region10: #{ngpt_forward.18} parent=5 // pred_check_branch
        %162 = sbr.rel (%p159) target = $region12
      $region11: #{ngpt_forward.18} parent=5 // pred_region
        %s163 = ssub.s32 %s10, 1
        // Predicated region
        $region13: #{ngpt_forward.18} parent=11 // pred_check
          %p164 = pneg %p102
        $region14: #{ngpt_forward.18} parent=11 // pred_check_branch
          %166 = sbr.rel (%p164) target = $region16
        $region15: #{ngpt_forward.18} parent=11 // pred_region
          %s167 = smul.u32 8, %s19
          %p168 = scmp.lt.s32.totalorder %s167, 7
          %s169 = scalar_select %p168, %s167, 7
          %s170 = smul.addr %s169, 2
          %s171 = smul.addr %s170, 4
          %s172 = scalar_lea.vmem %s2, %s171
          %s173 = smul.u32 8, %s19
        $region16: #{ngpt_forward.18} parent=11 // pred_fallthru
          _
        // Predicated region
        $region17: #{ngpt_forward.18} parent=11 // pred_check
          %p174 = pneg %p123
        $region18: #{ngpt_forward.18} parent=11 // pred_check_branch
          %176 = sbr.rel (%p174) target = $region20
        $region19: #{ngpt_forward.18} parent=11 // pred_region
          _
        $region20: #{ngpt_forward.18} parent=11 // pred_fallthru
          _
      $region12: #{ngpt_forward.18} parent=5 // pred_fallthru
        _
      %p177 = scmp.lt.s32.totalorder %s10, 2
      // Predicated region
      $region21: #{ngpt_forward.18} parent=5 // pred_check
        %p178 = pneg %p177
      $region22: #{ngpt_forward.18} parent=5 // pred_check_branch
        %180 = sbr.rel (%p178) target = $region24
      $region23: #{ngpt_forward.18} parent=5 // pred_region
        // Predicated region
        $region25: #{ngpt_forward.18} parent=23 // pred_check
          %p181 = pneg %p44
        $region26: #{ngpt_forward.18} parent=23 // pred_check_branch
          %183 = sbr.rel (%p181) target = $region28
        $region27: #{ngpt_forward.18} parent=23 // pred_region
          %s184 = sand.u32 %s34, 1
          %s185 = sand.u32 %s34, 1
          %s186 = smul.addr %s185, 128
          %s187 = scalar_lea.vmem [#allocation3], %s186
          %s188 = smul.u32 8, %s17
          %s189 = smul.u32 4, %s18
          %s190 = smul.addr %s188, 8
          %s191 = sadd.s32 %s189, %s190
          %s192 = smul.addr %s191, 4
          %s193 = scalar_lea.vmem %s0, %s192
          // Predicated region
          $region29: #{ngpt_forward.18} parent=27 // pred_check
            _
          $region30: #{ngpt_forward.18} parent=27 // pred_check_branch
            %195 = sbr.rel (0) target = $region32
          $region31: #{ngpt_forward.18} parent=27 // pred_region
            // Predicated region
            $region33: #{ngpt_forward.18} parent=31 // pred_check
              _
            $region34: #{ngpt_forward.18} parent=31 // pred_check_branch
              %197 = sbr.rel (0) target = $region36
            $region35: #{ngpt_forward.18} parent=31 // pred_region
              loop: start=0, step=1, limit=1
              $region37: #{ngpt_forward.18} parent=35 // loop_pre_header
                _
              $region38: #{ngpt_forward.18} parent=35 // loop_header
                %s199 = sphi 0, %s203
                %p200 = scmp.ge.s32.totalorder %s199, 1
                %s204 = sphi %s193, %s193
                %s205 = sphi %s187, %s187
              $region39: #{ngpt_forward.18} parent=35 // loop_header_branch
                %202 = sbr.rel (%p200) target = $region43
              $region40: #{ngpt_forward.18} parent=35 // loop_body
                %v206 = vld [vmem:[%s204] sm:$0xff]
                %207 = vst [vmem:[%s205] sm:$0xff] %v206
                %v208 = vld [vmem:[%s204 + $0x8] sm:$0xff]
                %209 = vst [vmem:[%s205 + $0x8] sm:$0xff] %v208
                %v210 = vld [vmem:[%s204 + $0x20] sm:$0xff]
                %211 = vst [vmem:[%s205 + $0x10] sm:$0xff] %v210
                %v212 = vld [vmem:[%s204 + $0x28] sm:$0xff]
                %213 = vst [vmem:[%s205 + $0x18] sm:$0xff] %v212
                %v214 = vld [vmem:[%s204 + $0x40] sm:$0xff]
                %215 = vst [vmem:[%s205 + $0x20] sm:$0xff] %v214
                %v216 = vld [vmem:[%s204 + $0x48] sm:$0xff]
                %217 = vst [vmem:[%s205 + $0x28] sm:$0xff] %v216
                %v218 = vld [vmem:[%s204 + $0x60] sm:$0xff]
                %219 = vst [vmem:[%s205 + $0x30] sm:$0xff] %v218
                %v220 = vld [vmem:[%s204 + $0x68] sm:$0xff]
                %221 = vst [vmem:[%s205 + $0x38] sm:$0xff] %v220
                %v222 = vld [vmem:[%s204 + $0x80] sm:$0xff]
                %223 = vst [vmem:[%s205 + $0x40] sm:$0xff] %v222
                %v224 = vld [vmem:[%s204 + $0x88] sm:$0xff]
                %225 = vst [vmem:[%s205 + $0x48] sm:$0xff] %v224
                %v226 = vld [vmem:[%s204 + $0xa0] sm:$0xff]
                %227 = vst [vmem:[%s205 + $0x50] sm:$0xff] %v226
                %v228 = vld [vmem:[%s204 + $0xa8] sm:$0xff]
                %229 = vst [vmem:[%s205 + $0x58] sm:$0xff] %v228
                %v230 = vld [vmem:[%s204 + $0xc0] sm:$0xff]
                %231 = vst [vmem:[%s205 + $0x60] sm:$0xff] %v230
                %v232 = vld [vmem:[%s204 + $0xc8] sm:$0xff]
                %233 = vst [vmem:[%s205 + $0x68] sm:$0xff] %v232
                %v234 = vld [vmem:[%s204 + $0xe0] sm:$0xff]
                %235 = vst [vmem:[%s205 + $0x70] sm:$0xff] %v234
                %v236 = vld [vmem:[%s204 + $0xe8] sm:$0xff]
                %237 = vst [vmem:[%s205 + $0x78] sm:$0xff] %v236
              $region41: #{ngpt_forward.18} parent=35 // loop_footer
                %s203 = sadd.s32 1, %s199
              $region42: #{ngpt_forward.18} parent=35 // loop_footer_branch
                %198 = sbr.rel target = $region38
              $region43: #{ngpt_forward.18} parent=35 // loop_exit
                _
            $region36: #{ngpt_forward.18} parent=31 // pred_fallthru
              _
            // Predicated region
            $region44: #{ngpt_forward.18} parent=31 // pred_check
              _
            $region45: #{ngpt_forward.18} parent=31 // pred_check_branch
              %239 = sbr.rel target = $region47
            $region46: #{ngpt_forward.18} parent=31 // pred_region
              _
            $region47: #{ngpt_forward.18} parent=31 // pred_fallthru
              _
          $region32: #{ngpt_forward.18} parent=27 // pred_fallthru
            _
          %240 = vnop
        $region28: #{ngpt_forward.18} parent=23 // pred_fallthru
          _
        // Predicated region
        $region48: #{ngpt_forward.18} parent=23 // pred_check
          %p241 = pneg %p70
        $region49: #{ngpt_forward.18} parent=23 // pred_check_branch
          %243 = sbr.rel (%p241) target = $region51
        $region50: #{ngpt_forward.18} parent=23 // pred_region
          %s244 = smul.u32 64, %s18
          %p245 = scmp.lt.s32.totalorder %s244, 127
          %s246 = scalar_select %p245, %s244, 127
          %s247 = smul.addr %s246, 2
          %s248 = smul.addr %s247, 4
          %s249 = scalar_lea.vmem %s1, %s248
          %s250 = smul.u32 64, %s18
        $region51: #{ngpt_forward.18} parent=23 // pred_fallthru
          _
      $region24: #{ngpt_forward.18} parent=5 // pred_fallthru
        _
      %p251 = scmp.le.s32.totalorder 1, %s10
      %p252 = scmp.lt.s32.totalorder %s10, 3
      %p253 = pnand %p251, %p252
      %p254 = pneg %p253
      // Predicated region
      $region52: #{ngpt_forward.18} parent=5 // pred_check
        _
      $region53: #{ngpt_forward.18} parent=5 // pred_check_branch
        %256 = sbr.rel (%p253) target = $region55
      $region54: #{ngpt_forward.18} parent=5 // pred_region
        %s257 = ssub.s32 %s10, 1
        %s258 = sand.u32 %s37, 1
        %s259 = sand.u32 %s37, 1
        %s260 = smul.addr %s259, 128
        %s261 = scalar_lea.vmem [#allocation3], %s260
        // Predicated region
        $region56: #{ngpt_forward.18} parent=54 // pred_check
          %p262 = pneg %p50
        $region57: #{ngpt_forward.18} parent=54 // pred_check_branch
          %264 = sbr.rel (%p262) target = $region59
        $region58: #{ngpt_forward.18} parent=54 // pred_region
          _
        $region59: #{ngpt_forward.18} parent=54 // pred_fallthru
          _
        %s265 = sand.u32 %s37, 1
        %s266 = sand.u32 %s37, 1
        %s267 = smul.addr %s266, 128
        %s268 = scalar_lea.vmem [#allocation3], %s267
        %p269 = pneg %p50
        %p270 = pneg %p47
        %s271 = smul.u32 64, %s20
        %p272 = scmp.lt.s32.totalorder %s271, 127
        %s273 = scalar_select %p272, %s271, 127
        %s274 = smul.addr %s273, 2
        %s275 = smul.addr %s274, 4
        %s276 = scalar_lea.vmem %s1, %s275
        %p277 = pneg %p76
        %p278 = pneg %p73
        %s279 = smul.u32 8, %s19
        %p280 = scmp.lt.s32.totalorder %s279, 7
        %s281 = scalar_select %p280, %s279, 7
        %s282 = smul.addr %s281, 2
        %s283 = smul.addr %s282, 4
        %s284 = scalar_lea.vmem %s2, %s283
        %p285 = pneg %p102
        %p286 = pneg %p99
        %p287 = pneg %p123
        %p288 = pneg %p120
        %p289 = pneg %p149
        %p290 = pneg %p146
        %s291 = smul.u32 8, %s19
        %p292 = scmp.lt.s32.totalorder %s291, 7
        %s293 = scalar_select %p292, %s291, 7
        %s294 = smul.addr %s293, 2
        %s295 = smul.addr %s294, 4
        %s296 = scalar_lea.vmem %s4, %s295
        %s297 = smul.u32 8, %s19
        %s298 = smul.u32 4, %s20
        %s299 = smul.u32 64, %s20
        %p300 = scmp.lt.s32.totalorder %s299, 127
        %s301 = scalar_select %p300, %s299, 127
        %s302 = smul.addr %s301, 2
        %s303 = smul.addr %s302, 4
        %s304 = scalar_lea.vmem %s1, %s303
        %s305 = smul.u32 64, %s20
        %s306 = smul.u32 8, %s19
        %p307 = scmp.lt.s32.totalorder %s306, 7
        %s308 = scalar_select %p307, %s306, 7
        %s309 = smul.addr %s308, 2
        %s310 = smul.addr %s309, 4
        %s311 = scalar_lea.vmem %s2, %s310
        %s312 = smul.u32 8, %s19
        %s313 = smul.u32 8, %s19
        %p314 = scmp.lt.s32.totalorder %s313, 7
        %s315 = scalar_select %p314, %s313, 7
        %s316 = smul.addr %s315, 2
        %s317 = smul.addr %s316, 4
        %s318 = scalar_lea.vmem %s4, %s317
        %s319 = smul.u32 8, %s19
        %p320 = scmp.eq.s32.totalorder %s20, 0
        // Predicated region
        $region60: #{ngpt_forward.18} parent=54 // pred_check
          %p321 = pneg %p320
        $region61: #{ngpt_forward.18} parent=54 // pred_check_branch
          %323 = sbr.rel (%p321) target = $region63
        $region62: #{ngpt_forward.18} parent=54 // pred_region
          %324 = vst [vmem:[#allocation2] sm:$0xff] 0.0
          %325 = vst [vmem:[#allocation2 + $0x8] sm:$0xff] 0.0
          %326 = vst [vmem:[#allocation2 + $0x10] sm:$0xff] 0.0
          %327 = vst [vmem:[#allocation2 + $0x18] sm:$0xff] 0.0
          %328 = vst [vmem:[#allocation2 + $0x20] sm:$0xff] 0.0
          %329 = vst [vmem:[#allocation2 + $0x28] sm:$0xff] 0.0
          %330 = vst [vmem:[#allocation2 + $0x30] sm:$0xff] 0.0
          %331 = vst [vmem:[#allocation2 + $0x38] sm:$0xff] 0.0
          %332 = vst [vmem:[#allocation2 + $0x40] sm:$0xff] 0.0
          %333 = vst [vmem:[#allocation2 + $0x48] sm:$0xff] 0.0
          %334 = vst [vmem:[#allocation2 + $0x50] sm:$0xff] 0.0
          %335 = vst [vmem:[#allocation2 + $0x58] sm:$0xff] 0.0
          %336 = vst [vmem:[#allocation2 + $0x60] sm:$0xff] 0.0
          %337 = vst [vmem:[#allocation2 + $0x68] sm:$0xff] 0.0
          %338 = vst [vmem:[#allocation2 + $0x70] sm:$0xff] 0.0
          %339 = vst [vmem:[#allocation2 + $0x78] sm:$0xff] 0.0
        $region63: #{ngpt_forward.18} parent=54 // pred_fallthru
          _
        %v340 = vld [vmem:[#allocation2] sm:$0xff]
        %v341 = vld [vmem:[#allocation2 + $0x8] sm:$0xff]
        %v342 = vld [vmem:[#allocation2 + $0x10] sm:$0xff]
        %v343 = vld [vmem:[#allocation2 + $0x18] sm:$0xff]
        %v344 = vld [vmem:[#allocation2 + $0x20] sm:$0xff]
        %v345 = vld [vmem:[#allocation2 + $0x28] sm:$0xff]
        %v346 = vld [vmem:[#allocation2 + $0x30] sm:$0xff]
        %v347 = vld [vmem:[#allocation2 + $0x38] sm:$0xff]
        %v348 = vld [vmem:[#allocation2 + $0x40] sm:$0xff]
        %v349 = vld [vmem:[#allocation2 + $0x48] sm:$0xff]
        %v350 = vld [vmem:[#allocation2 + $0x50] sm:$0xff]
        %v351 = vld [vmem:[#allocation2 + $0x58] sm:$0xff]
        %v352 = vld [vmem:[#allocation2 + $0x60] sm:$0xff]
        %v353 = vld [vmem:[#allocation2 + $0x68] sm:$0xff]
        %v354 = vld [vmem:[#allocation2 + $0x70] sm:$0xff]
        %v355 = vld [vmem:[#allocation2 + $0x78] sm:$0xff]
        %v356 = vld [vmem:[%s261] sm:$0xff]
        %v357 = vld [vmem:[%s261 + $0x8] sm:$0xff]
        %v358 = vld [vmem:[%s261 + $0x10] sm:$0xff]
        %v359 = vld [vmem:[%s261 + $0x18] sm:$0xff]
        %v360 = vld [vmem:[%s261 + $0x20] sm:$0xff]
        %v361 = vld [vmem:[%s261 + $0x28] sm:$0xff]
        %v362 = vld [vmem:[%s261 + $0x30] sm:$0xff]
        %v363 = vld [vmem:[%s261 + $0x38] sm:$0xff]
        %v364 = vld [vmem:[%s261 + $0x40] sm:$0xff]
        %v365 = vld [vmem:[%s261 + $0x48] sm:$0xff]
        %v366 = vld [vmem:[%s261 + $0x50] sm:$0xff]
        %v367 = vld [vmem:[%s261 + $0x58] sm:$0xff]
        %v368 = vld [vmem:[%s261 + $0x60] sm:$0xff]
        %v369 = vld [vmem:[%s261 + $0x68] sm:$0xff]
        %v370 = vld [vmem:[%s261 + $0x70] sm:$0xff]
        %v371 = vld [vmem:[%s261 + $0x78] sm:$0xff]
        %v372 = vld [vmem:[%s304] sm:$0xff]
        %v373 = vld [vmem:[%s304 + $0x8] sm:$0xff]
        %v374 = vld [vmem:[%s304 + $0x10] sm:$0xff]
        %v375 = vld [vmem:[%s304 + $0x18] sm:$0xff]
        %v376 = vld [vmem:[%s304 + $0x20] sm:$0xff]
        %v377 = vld [vmem:[%s304 + $0x28] sm:$0xff]
        %v378 = vld [vmem:[%s304 + $0x30] sm:$0xff]
        %v379 = vld [vmem:[%s304 + $0x38] sm:$0xff]
        %v380 = vld [vmem:[%s304 + $0x40] sm:$0xff]
        %v381 = vld [vmem:[%s304 + $0x48] sm:$0xff]
        %v382 = vld [vmem:[%s304 + $0x50] sm:$0xff]
        %v383 = vld [vmem:[%s304 + $0x58] sm:$0xff]
        %v384 = vld [vmem:[%s304 + $0x60] sm:$0xff]
        %v385 = vld [vmem:[%s304 + $0x68] sm:$0xff]
        %v386 = vld [vmem:[%s304 + $0x70] sm:$0xff]
        %v387 = vld [vmem:[%s304 + $0x78] sm:$0xff]
        %v388 = vld [vmem:[%s304 + $0x80] sm:$0xff]
        %v389 = vld [vmem:[%s304 + $0x88] sm:$0xff]
        %v390 = vld [vmem:[%s304 + $0x90] sm:$0xff]
        %v391 = vld [vmem:[%s304 + $0x98] sm:$0xff]
        %v392 = vld [vmem:[%s304 + $0xa0] sm:$0xff]
        %v393 = vld [vmem:[%s304 + $0xa8] sm:$0xff]
        %v394 = vld [vmem:[%s304 + $0xb0] sm:$0xff]
        %v395 = vld [vmem:[%s304 + $0xb8] sm:$0xff]
        %v396 = vld [vmem:[%s304 + $0xc0] sm:$0xff]
        %v397 = vld [vmem:[%s304 + $0xc8] sm:$0xff]
        %v398 = vld [vmem:[%s304 + $0xd0] sm:$0xff]
        %v399 = vld [vmem:[%s304 + $0xd8] sm:$0xff]
        %v400 = vld [vmem:[%s304 + $0xe0] sm:$0xff]
        %v401 = vld [vmem:[%s304 + $0xe8] sm:$0xff]
        %v402 = vld [vmem:[%s304 + $0xf0] sm:$0xff]
        %v403 = vld [vmem:[%s304 + $0xf8] sm:$0xff]
        %v404 = vld [vmem:[%s304 + $0x100] sm:$0xff]
        %v405 = vld [vmem:[%s304 + $0x108] sm:$0xff]
        %v406 = vld [vmem:[%s304 + $0x110] sm:$0xff]
        %v407 = vld [vmem:[%s304 + $0x118] sm:$0xff]
        %v408 = vld [vmem:[%s304 + $0x120] sm:$0xff]
        %v409 = vld [vmem:[%s304 + $0x128] sm:$0xff]
        %v410 = vld [vmem:[%s304 + $0x130] sm:$0xff]
        %v411 = vld [vmem:[%s304 + $0x138] sm:$0xff]
        %v412 = vld [vmem:[%s304 + $0x140] sm:$0xff]
        %v413 = vld [vmem:[%s304 + $0x148] sm:$0xff]
        %v414 = vld [vmem:[%s304 + $0x150] sm:$0xff]
        %v415 = vld [vmem:[%s304 + $0x158] sm:$0xff]
        %v416 = vld [vmem:[%s304 + $0x160] sm:$0xff]
        %v417 = vld [vmem:[%s304 + $0x168] sm:$0xff]
        %v418 = vld [vmem:[%s304 + $0x170] sm:$0xff]
        %v419 = vld [vmem:[%s304 + $0x178] sm:$0xff]
        %v420 = vld [vmem:[%s304 + $0x180] sm:$0xff]
        %v421 = vld [vmem:[%s304 + $0x188] sm:$0xff]
        %v422 = vld [vmem:[%s304 + $0x190] sm:$0xff]
        %v423 = vld [vmem:[%s304 + $0x198] sm:$0xff]
        %v424 = vld [vmem:[%s304 + $0x1a0] sm:$0xff]
        %v425 = vld [vmem:[%s304 + $0x1a8] sm:$0xff]
        %v426 = vld [vmem:[%s304 + $0x1b0] sm:$0xff]
        %v427 = vld [vmem:[%s304 + $0x1b8] sm:$0xff]
        %v428 = vld [vmem:[%s304 + $0x1c0] sm:$0xff]
        %v429 = vld [vmem:[%s304 + $0x1c8] sm:$0xff]
        %v430 = vld [vmem:[%s304 + $0x1d0] sm:$0xff]
        %v431 = vld [vmem:[%s304 + $0x1d8] sm:$0xff]
        %v432 = vld [vmem:[%s304 + $0x1e0] sm:$0xff]
        %v433 = vld [vmem:[%s304 + $0x1e8] sm:$0xff]
        %v434 = vld [vmem:[%s304 + $0x1f0] sm:$0xff]
        %v435 = vld [vmem:[%s304 + $0x1f8] sm:$0xff]
        %v452 = vunpack.c.l.b16 %v356
        %v453 = vunpack.c.h.b16 %v356
        %v454 = vunpack.c.l.b16 %v357
        %v455 = vunpack.c.h.b16 %v357
        %v456 = vunpack.c.l.b16 %v358
        %v457 = vunpack.c.h.b16 %v358
        %v458 = vunpack.c.l.b16 %v359
        %v459 = vunpack.c.h.b16 %v359
        %v460 = vunpack.c.l.b16 %v360
        %v461 = vunpack.c.h.b16 %v360
        %v462 = vunpack.c.l.b16 %v361
        %v463 = vunpack.c.h.b16 %v361
        %v464 = vunpack.c.l.b16 %v362
        %v465 = vunpack.c.h.b16 %v362
        %v466 = vunpack.c.l.b16 %v363
        %v467 = vunpack.c.h.b16 %v363
        %v468 = vunpack.c.l.b16 %v364
        %v469 = vunpack.c.h.b16 %v364
        %v470 = vunpack.c.l.b16 %v365
        %v471 = vunpack.c.h.b16 %v365
        %v472 = vunpack.c.l.b16 %v366
        %v473 = vunpack.c.h.b16 %v366
        %v474 = vunpack.c.l.b16 %v367
        %v475 = vunpack.c.h.b16 %v367
        %v476 = vunpack.c.l.b16 %v368
        %v477 = vunpack.c.h.b16 %v368
        %v478 = vunpack.c.l.b16 %v369
        %v479 = vunpack.c.h.b16 %v369
        %v480 = vunpack.c.l.b16 %v370
        %v481 = vunpack.c.h.b16 %v370
        %v482 = vunpack.c.l.b16 %v371
        %v483 = vunpack.c.h.b16 %v371
        %v484 = vpack.c.b16 %v456, %v452
        %v485 = vpack.c.b16 %v457, %v453
        %v486 = vpack.c.b16 %v458, %v454
        %v487 = vpack.c.b16 %v459, %v455
        %v488 = vpack.c.b16 %v464, %v460
        %v489 = vpack.c.b16 %v465, %v461
        %v490 = vpack.c.b16 %v466, %v462
        %v491 = vpack.c.b16 %v467, %v463
        %v492 = vpack.c.b16 %v472, %v468
        %v493 = vpack.c.b16 %v473, %v469
        %v494 = vpack.c.b16 %v474, %v470
        %v495 = vpack.c.b16 %v475, %v471
        %v496 = vpack.c.b16 %v480, %v476
        %v497 = vpack.c.b16 %v481, %v477
        %v498 = vpack.c.b16 %v482, %v478
        %v499 = vpack.c.b16 %v483, %v479
        %v580 = vunpack.c.l.b16 %v372
        %v581 = vunpack.c.h.b16 %v372
        %v582 = vunpack.c.l.b16 %v373
        %v583 = vunpack.c.h.b16 %v373
        %v584 = vunpack.c.l.b16 %v374
        %v585 = vunpack.c.h.b16 %v374
        %v586 = vunpack.c.l.b16 %v375
        %v587 = vunpack.c.h.b16 %v375
        %v588 = vunpack.c.l.b16 %v376
        %v589 = vunpack.c.h.b16 %v376
        %v590 = vunpack.c.l.b16 %v377
        %v591 = vunpack.c.h.b16 %v377
        %v592 = vunpack.c.l.b16 %v378
        %v593 = vunpack.c.h.b16 %v378
        %v594 = vunpack.c.l.b16 %v379
        %v595 = vunpack.c.h.b16 %v379
        %v596 = vunpack.c.l.b16 %v380
        %v597 = vunpack.c.h.b16 %v380
        %v598 = vunpack.c.l.b16 %v381
        %v599 = vunpack.c.h.b16 %v381
        %v600 = vunpack.c.l.b16 %v382
        %v601 = vunpack.c.h.b16 %v382
        %v602 = vunpack.c.l.b16 %v383
        %v603 = vunpack.c.h.b16 %v383
        %v604 = vunpack.c.l.b16 %v384
        %v605 = vunpack.c.h.b16 %v384
        %v606 = vunpack.c.l.b16 %v385
        %v607 = vunpack.c.h.b16 %v385
        %v608 = vunpack.c.l.b16 %v386
        %v609 = vunpack.c.h.b16 %v386
        %v610 = vunpack.c.l.b16 %v387
        %v611 = vunpack.c.h.b16 %v387
        %v612 = vunpack.c.l.b16 %v388
        %v613 = vunpack.c.h.b16 %v388
        %v614 = vunpack.c.l.b16 %v389
        %v615 = vunpack.c.h.b16 %v389
        %v616 = vunpack.c.l.b16 %v390
        %v617 = vunpack.c.h.b16 %v390
        %v618 = vunpack.c.l.b16 %v391
        %v619 = vunpack.c.h.b16 %v391
        %v620 = vunpack.c.l.b16 %v392
        %v621 = vunpack.c.h.b16 %v392
        %v622 = vunpack.c.l.b16 %v393
        %v623 = vunpack.c.h.b16 %v393
        %v624 = vunpack.c.l.b16 %v394
        %v625 = vunpack.c.h.b16 %v394
        %v626 = vunpack.c.l.b16 %v395
        %v627 = vunpack.c.h.b16 %v395
        %v628 = vunpack.c.l.b16 %v396
        %v629 = vunpack.c.h.b16 %v396
        %v630 = vunpack.c.l.b16 %v397
        %v631 = vunpack.c.h.b16 %v397
        %v632 = vunpack.c.l.b16 %v398
        %v633 = vunpack.c.h.b16 %v398
        %v634 = vunpack.c.l.b16 %v399
        %v635 = vunpack.c.h.b16 %v399
        %v636 = vunpack.c.l.b16 %v400
        %v637 = vunpack.c.h.b16 %v400
        %v638 = vunpack.c.l.b16 %v401
        %v639 = vunpack.c.h.b16 %v401
        %v640 = vunpack.c.l.b16 %v402
        %v641 = vunpack.c.h.b16 %v402
        %v642 = vunpack.c.l.b16 %v403
        %v643 = vunpack.c.h.b16 %v403
        %v644 = vunpack.c.l.b16 %v404
        %v645 = vunpack.c.h.b16 %v404
        %v646 = vunpack.c.l.b16 %v405
        %v647 = vunpack.c.h.b16 %v405
        %v648 = vunpack.c.l.b16 %v406
        %v649 = vunpack.c.h.b16 %v406
        %v650 = vunpack.c.l.b16 %v407
        %v651 = vunpack.c.h.b16 %v407
        %v652 = vunpack.c.l.b16 %v408
        %v653 = vunpack.c.h.b16 %v408
        %v654 = vunpack.c.l.b16 %v409
        %v655 = vunpack.c.h.b16 %v409
        %v656 = vunpack.c.l.b16 %v410
        %v657 = vunpack.c.h.b16 %v410
        %v658 = vunpack.c.l.b16 %v411
        %v659 = vunpack.c.h.b16 %v411
        %v660 = vunpack.c.l.b16 %v412
        %v661 = vunpack.c.h.b16 %v412
        %v662 = vunpack.c.l.b16 %v413
        %v663 = vunpack.c.h.b16 %v413
        %v664 = vunpack.c.l.b16 %v414
        %v665 = vunpack.c.h.b16 %v414
        %v666 = vunpack.c.l.b16 %v415
        %v667 = vunpack.c.h.b16 %v415
        %v668 = vunpack.c.l.b16 %v416
        %v669 = vunpack.c.h.b16 %v416
        %v670 = vunpack.c.l.b16 %v417
        %v671 = vunpack.c.h.b16 %v417
        %v672 = vunpack.c.l.b16 %v418
        %v673 = vunpack.c.h.b16 %v418
        %v674 = vunpack.c.l.b16 %v419
        %v675 = vunpack.c.h.b16 %v419
        %v676 = vunpack.c.l.b16 %v420
        %v677 = vunpack.c.h.b16 %v420
        %v678 = vunpack.c.l.b16 %v421
        %v679 = vunpack.c.h.b16 %v421
        %v680 = vunpack.c.l.b16 %v422
        %v681 = vunpack.c.h.b16 %v422
        %v682 = vunpack.c.l.b16 %v423
        %v683 = vunpack.c.h.b16 %v423
        %v684 = vunpack.c.l.b16 %v424
        %v685 = vunpack.c.h.b16 %v424
        %v686 = vunpack.c.l.b16 %v425
        %v687 = vunpack.c.h.b16 %v425
        %v688 = vunpack.c.l.b16 %v426
        %v689 = vunpack.c.h.b16 %v426
        %v690 = vunpack.c.l.b16 %v427
        %v691 = vunpack.c.h.b16 %v427
        %v692 = vunpack.c.l.b16 %v428
        %v693 = vunpack.c.h.b16 %v428
        %v694 = vunpack.c.l.b16 %v429
        %v695 = vunpack.c.h.b16 %v429
        %v696 = vunpack.c.l.b16 %v430
        %v697 = vunpack.c.h.b16 %v430
        %v698 = vunpack.c.l.b16 %v431
        %v699 = vunpack.c.h.b16 %v431
        %v700 = vunpack.c.l.b16 %v432
        %v701 = vunpack.c.h.b16 %v432
        %v702 = vunpack.c.l.b16 %v433
        %v703 = vunpack.c.h.b16 %v433
        %v704 = vunpack.c.l.b16 %v434
        %v705 = vunpack.c.h.b16 %v434
        %v706 = vunpack.c.l.b16 %v435
        %v707 = vunpack.c.h.b16 %v435
        %v708 = vpack.c.b16 %v582, %v580
        %v709 = vpack.c.b16 %v583, %v581
        %v710 = vpack.c.b16 %v586, %v584
        %v711 = vpack.c.b16 %v587, %v585
        %v712 = vpack.c.b16 %v590, %v588
        %v713 = vpack.c.b16 %v591, %v589
        %v714 = vpack.c.b16 %v594, %v592
        %v715 = vpack.c.b16 %v595, %v593
        %v716 = vpack.c.b16 %v598, %v596
        %v717 = vpack.c.b16 %v599, %v597
        %v718 = vpack.c.b16 %v602, %v600
        %v719 = vpack.c.b16 %v603, %v601
        %v720 = vpack.c.b16 %v606, %v604
        %v721 = vpack.c.b16 %v607, %v605
        %v722 = vpack.c.b16 %v610, %v608
        %v723 = vpack.c.b16 %v611, %v609
        %v724 = vpack.c.b16 %v614, %v612
        %v725 = vpack.c.b16 %v615, %v613
        %v726 = vpack.c.b16 %v618, %v616
        %v727 = vpack.c.b16 %v619, %v617
        %v728 = vpack.c.b16 %v622, %v620
        %v729 = vpack.c.b16 %v623, %v621
        %v730 = vpack.c.b16 %v626, %v624
        %v731 = vpack.c.b16 %v627, %v625
        %v732 = vpack.c.b16 %v630, %v628
        %v733 = vpack.c.b16 %v631, %v629
        %v734 = vpack.c.b16 %v634, %v632
        %v735 = vpack.c.b16 %v635, %v633
        %v736 = vpack.c.b16 %v638, %v636
        %v737 = vpack.c.b16 %v639, %v637
        %v738 = vpack.c.b16 %v642, %v640
        %v739 = vpack.c.b16 %v643, %v641
        %v740 = vpack.c.b16 %v646, %v644
        %v741 = vpack.c.b16 %v647, %v645
        %v742 = vpack.c.b16 %v650, %v648
        %v743 = vpack.c.b16 %v651, %v649
        %v744 = vpack.c.b16 %v654, %v652
        %v745 = vpack.c.b16 %v655, %v653
        %v746 = vpack.c.b16 %v658, %v656
        %v747 = vpack.c.b16 %v659, %v657
        %v748 = vpack.c.b16 %v662, %v660
        %v749 = vpack.c.b16 %v663, %v661
        %v750 = vpack.c.b16 %v666, %v664
        %v751 = vpack.c.b16 %v667, %v665
        %v752 = vpack.c.b16 %v670, %v668
        %v753 = vpack.c.b16 %v671, %v669
        %v754 = vpack.c.b16 %v674, %v672
        %v755 = vpack.c.b16 %v675, %v673
        %v756 = vpack.c.b16 %v678, %v676
        %v757 = vpack.c.b16 %v679, %v677
        %v758 = vpack.c.b16 %v682, %v680
        %v759 = vpack.c.b16 %v683, %v681
        %v760 = vpack.c.b16 %v686, %v684
        %v761 = vpack.c.b16 %v687, %v685
        %v762 = vpack.c.b16 %v690, %v688
        %v763 = vpack.c.b16 %v691, %v689
        %v764 = vpack.c.b16 %v694, %v692
        %v765 = vpack.c.b16 %v695, %v693
        %v766 = vpack.c.b16 %v698, %v696
        %v767 = vpack.c.b16 %v699, %v697
        %v768 = vpack.c.b16 %v702, %v700
        %v769 = vpack.c.b16 %v703, %v701
        %v770 = vpack.c.b16 %v706, %v704
        %v771 = vpack.c.b16 %v707, %v705
        %836 = vmatprep.subr.bf16.mxu0 %v723
        %837 = vmatpush1.bf16.msra.mxu0 %v722
        %838 = vmatprep.subr.bf16.mxu0 %v721
        %839 = vmatpush1.bf16.msra.mxu0 %v720
        %840 = vmatprep.subr.bf16.mxu0 %v719
        %841 = vmatpush1.bf16.msra.mxu0 %v718
        %842 = vmatprep.subr.bf16.mxu0 %v717
        %843 = vmatpush1.bf16.msra.mxu0 %v716
        %844 = vmatprep.subr.bf16.mxu0 %v715
        %845 = vmatpush1.bf16.msra.mxu0 %v714
        %846 = vmatprep.subr.bf16.mxu0 %v713
        %847 = vmatpush1.bf16.msra.mxu0 %v712
        %848 = vmatprep.subr.bf16.mxu0 %v711
        %849 = vmatpush1.bf16.msra.mxu0 %v710
        %850 = vmatprep.subr.bf16.mxu0 %v709
        %851 = vmatpush1.bf16.msra.mxu0 %v708
        %852 = vmatprep.subr.bf16.mxu0 %v739
        %853 = vmatpush2.bf16.msra.mxu0 %v738
        %854 = vmatprep.subr.bf16.mxu0 %v737
        %855 = vmatpush2.bf16.msra.mxu0 %v736
        %856 = vmatprep.subr.bf16.mxu0 %v735
        %857 = vmatpush2.bf16.msra.mxu0 %v734
        %858 = vmatprep.subr.bf16.mxu0 %v733
        %859 = vmatpush2.bf16.msra.mxu0 %v732
        %860 = vmatprep.subr.bf16.mxu0 %v731
        %861 = vmatpush2.bf16.msra.mxu0 %v730
        %862 = vmatprep.subr.bf16.mxu0 %v729
        %863 = vmatpush2.bf16.msra.mxu0 %v728
        %864 = vmatprep.subr.bf16.mxu0 %v727
        %865 = vmatpush2.bf16.msra.mxu0 %v726
        %866 = vmatprep.subr.bf16.mxu0 %v725
        %867 = vmatpush2.bf16.msra.mxu0 %v724
        %868 = vmatprep.mubr.bf16.mxu0 %v485
        %869 = vmatmul.mubr.bf16.gmra.mxu0 %v484
        %v870 = vpop.f32.mrf.mxu0
        %v871 = vadd.f32 0.0, %v870
        %v872 = vpop.f32.mrf.mxu0
        %v873 = vadd.f32 0.0, %v872
        %v874 = vpop.f32.mrf.mxu0
        %v875 = vadd.f32 0.0, %v874
        %v876 = vpop.f32.mrf.mxu0
        %v877 = vadd.f32 0.0, %v876
        %878 = vmatprep.mubr.bf16.mxu0 %v489
        %879 = vmatmul.mubr.bf16.gmra.mxu0 %v488
        %v880 = vpop.f32.mrf.mxu0
        %v881 = vadd.f32 0.0, %v880
        %v882 = vpop.f32.mrf.mxu0
        %v883 = vadd.f32 0.0, %v882
        %v884 = vpop.f32.mrf.mxu0
        %v885 = vadd.f32 0.0, %v884
        %v886 = vpop.f32.mrf.mxu0
        %v887 = vadd.f32 0.0, %v886
        %888 = vmatprep.mubr.bf16.mxu0 %v493
        %889 = vmatmul.mubr.bf16.gmra.mxu0 %v492
        %v890 = vpop.f32.mrf.mxu0
        %v891 = vadd.f32 0.0, %v890
        %v892 = vpop.f32.mrf.mxu0
        %v893 = vadd.f32 0.0, %v892
        %v894 = vpop.f32.mrf.mxu0
        %v895 = vadd.f32 0.0, %v894
        %v896 = vpop.f32.mrf.mxu0
        %v897 = vadd.f32 0.0, %v896
        %898 = vmatprep.mubr.bf16.mxu0 %v497
        %899 = vmatmul.mubr.bf16.gmra.mxu0 %v496
        %v900 = vpop.f32.mrf.mxu0
        %v901 = vadd.f32 0.0, %v900
        %v902 = vpop.f32.mrf.mxu0
        %v903 = vadd.f32 0.0, %v902
        %v904 = vpop.f32.mrf.mxu0
        %v905 = vadd.f32 0.0, %v904
        %v906 = vpop.f32.mrf.mxu0
        %v907 = vadd.f32 0.0, %v906
        %908 = vdwg.mxu0
        %909 = vmatprep.subr.bf16.mxu0 %v755
        %910 = vmatpush1.bf16.msra.mxu0 %v754
        %911 = vmatprep.subr.bf16.mxu0 %v753
        %912 = vmatpush1.bf16.msra.mxu0 %v752
        %913 = vmatprep.subr.bf16.mxu0 %v751
        %914 = vmatpush1.bf16.msra.mxu0 %v750
        %915 = vmatprep.subr.bf16.mxu0 %v749
        %916 = vmatpush1.bf16.msra.mxu0 %v748
        %917 = vmatprep.subr.bf16.mxu0 %v747
        %918 = vmatpush1.bf16.msra.mxu0 %v746
        %919 = vmatprep.subr.bf16.mxu0 %v745
        %920 = vmatpush1.bf16.msra.mxu0 %v744
        %921 = vmatprep.subr.bf16.mxu0 %v743
        %922 = vmatpush1.bf16.msra.mxu0 %v742
        %923 = vmatprep.subr.bf16.mxu0 %v741
        %924 = vmatpush1.bf16.msra.mxu0 %v740
        %925 = vmatprep.subr.bf16.mxu0 %v771
        %926 = vmatpush2.bf16.msra.mxu0 %v770
        %927 = vmatprep.subr.bf16.mxu0 %v769
        %928 = vmatpush2.bf16.msra.mxu0 %v768
        %929 = vmatprep.subr.bf16.mxu0 %v767
        %930 = vmatpush2.bf16.msra.mxu0 %v766
        %931 = vmatprep.subr.bf16.mxu0 %v765
        %932 = vmatpush2.bf16.msra.mxu0 %v764
        %933 = vmatprep.subr.bf16.mxu0 %v763
        %934 = vmatpush2.bf16.msra.mxu0 %v762
        %935 = vmatprep.subr.bf16.mxu0 %v761
        %936 = vmatpush2.bf16.msra.mxu0 %v760
        %937 = vmatprep.subr.bf16.mxu0 %v759
        %938 = vmatpush2.bf16.msra.mxu0 %v758
        %939 = vmatprep.subr.bf16.mxu0 %v757
        %940 = vmatpush2.bf16.msra.mxu0 %v756
        %941 = vmatprep.mubr.bf16.mxu0 %v487
        %942 = vmatmul.mubr.bf16.gmra.mxu0 %v486
        %v943 = vpop.f32.mrf.mxu0
        %v944 = vadd.f32 %v871, %v943
        %v945 = vpop.f32.mrf.mxu0
        %v946 = vadd.f32 %v873, %v945
        %v947 = vpop.f32.mrf.mxu0
        %v948 = vadd.f32 %v875, %v947
        %v949 = vpop.f32.mrf.mxu0
        %v950 = vadd.f32 %v877, %v949
        %951 = vmatprep.mubr.bf16.mxu0 %v491
        %952 = vmatmul.mubr.bf16.gmra.mxu0 %v490
        %v953 = vpop.f32.mrf.mxu0
        %v954 = vadd.f32 %v881, %v953
        %v955 = vpop.f32.mrf.mxu0
        %v956 = vadd.f32 %v883, %v955
        %v957 = vpop.f32.mrf.mxu0
        %v958 = vadd.f32 %v885, %v957
        %v959 = vpop.f32.mrf.mxu0
        %v960 = vadd.f32 %v887, %v959
        %961 = vmatprep.mubr.bf16.mxu0 %v495
        %962 = vmatmul.mubr.bf16.gmra.mxu0 %v494
        %v963 = vpop.f32.mrf.mxu0
        %v964 = vadd.f32 %v891, %v963
        %v965 = vpop.f32.mrf.mxu0
        %v966 = vadd.f32 %v893, %v965
        %v967 = vpop.f32.mrf.mxu0
        %v968 = vadd.f32 %v895, %v967
        %v969 = vpop.f32.mrf.mxu0
        %v970 = vadd.f32 %v897, %v969
        %971 = vmatprep.mubr.bf16.mxu0 %v499
        %972 = vmatmul.mubr.bf16.gmra.mxu0 %v498
        %v973 = vpop.f32.mrf.mxu0
        %v974 = vadd.f32 %v901, %v973
        %v975 = vpop.f32.mrf.mxu0
        %v976 = vadd.f32 %v903, %v975
        %v977 = vpop.f32.mrf.mxu0
        %v978 = vadd.f32 %v905, %v977
        %v979 = vpop.f32.mrf.mxu0
        %v980 = vadd.f32 %v907, %v979
        %981 = vdwg.mxu0
        %v982 = vadd.f32 %v340, %v944
        %v983 = vadd.f32 %v341, %v946
        %v984 = vadd.f32 %v342, %v948
        %v985 = vadd.f32 %v343, %v950
        %v986 = vadd.f32 %v344, %v954
        %v987 = vadd.f32 %v345, %v956
        %v988 = vadd.f32 %v346, %v958
        %v989 = vadd.f32 %v347, %v960
        %v990 = vadd.f32 %v348, %v964
        %v991 = vadd.f32 %v349, %v966
        %v992 = vadd.f32 %v350, %v968
        %v993 = vadd.f32 %v351, %v970
        %v994 = vadd.f32 %v352, %v974
        %v995 = vadd.f32 %v353, %v976
        %v996 = vadd.f32 %v354, %v978
        %v997 = vadd.f32 %v355, %v980
        %998 = vst [vmem:[#allocation2] sm:$0xff] %v982
        %999 = vst [vmem:[#allocation2 + $0x8] sm:$0xff] %v983
        %1000 = vst [vmem:[#allocation2 + $0x10] sm:$0xff] %v984
        %1001 = vst [vmem:[#allocation2 + $0x18] sm:$0xff] %v985
        %1002 = vst [vmem:[#allocation2 + $0x20] sm:$0xff] %v986
        %1003 = vst [vmem:[#allocation2 + $0x28] sm:$0xff] %v987
        %1004 = vst [vmem:[#allocation2 + $0x30] sm:$0xff] %v988
        %1005 = vst [vmem:[#allocation2 + $0x38] sm:$0xff] %v989
        %1006 = vst [vmem:[#allocation2 + $0x40] sm:$0xff] %v990
        %1007 = vst [vmem:[#allocation2 + $0x48] sm:$0xff] %v991
        %1008 = vst [vmem:[#allocation2 + $0x50] sm:$0xff] %v992
        %1009 = vst [vmem:[#allocation2 + $0x58] sm:$0xff] %v993
        %1010 = vst [vmem:[#allocation2 + $0x60] sm:$0xff] %v994
        %1011 = vst [vmem:[#allocation2 + $0x68] sm:$0xff] %v995
        %1012 = vst [vmem:[#allocation2 + $0x70] sm:$0xff] %v996
        %1013 = vst [vmem:[#allocation2 + $0x78] sm:$0xff] %v997
        %p1014 = scmp.eq.s32.totalorder %s20, 1
        // Predicated region
        $region64: #{ngpt_forward.18} parent=54 // pred_check
          %p1015 = pneg %p1014
        $region65: #{ngpt_forward.18} parent=54 // pred_check_branch
          %1017 = sbr.rel (%p1015) target = $region67
        $region66: #{ngpt_forward.18} parent=54 // pred_region
          %v1018 = vld [vmem:[#allocation2] sm:$0xff]
          %v1019 = vld [vmem:[#allocation2 + $0x8] sm:$0xff]
          %v1020 = vld [vmem:[#allocation2 + $0x10] sm:$0xff]
          %v1021 = vld [vmem:[#allocation2 + $0x18] sm:$0xff]
          %v1022 = vld [vmem:[#allocation2 + $0x20] sm:$0xff]
          %v1023 = vld [vmem:[#allocation2 + $0x28] sm:$0xff]
          %v1024 = vld [vmem:[#allocation2 + $0x30] sm:$0xff]
          %v1025 = vld [vmem:[#allocation2 + $0x38] sm:$0xff]
          %v1026 = vld [vmem:[#allocation2 + $0x40] sm:$0xff]
          %v1027 = vld [vmem:[#allocation2 + $0x48] sm:$0xff]
          %v1028 = vld [vmem:[#allocation2 + $0x50] sm:$0xff]
          %v1029 = vld [vmem:[#allocation2 + $0x58] sm:$0xff]
          %v1030 = vld [vmem:[#allocation2 + $0x60] sm:$0xff]
          %v1031 = vld [vmem:[#allocation2 + $0x68] sm:$0xff]
          %v1032 = vld [vmem:[#allocation2 + $0x70] sm:$0xff]
          %v1033 = vld [vmem:[#allocation2 + $0x78] sm:$0xff]
          %v1034 = vmul.f32 %v1018, %v1018
          %v1035 = vmul.f32 %v1019, %v1019
          %v1036 = vmul.f32 %v1020, %v1020
          %v1037 = vmul.f32 %v1021, %v1021
          %v1038 = vmul.f32 %v1022, %v1022
          %v1039 = vmul.f32 %v1023, %v1023
          %v1040 = vmul.f32 %v1024, %v1024
          %v1041 = vmul.f32 %v1025, %v1025
          %v1042 = vmul.f32 %v1026, %v1026
          %v1043 = vmul.f32 %v1027, %v1027
          %v1044 = vmul.f32 %v1028, %v1028
          %v1045 = vmul.f32 %v1029, %v1029
          %v1046 = vmul.f32 %v1030, %v1030
          %v1047 = vmul.f32 %v1031, %v1031
          %v1048 = vmul.f32 %v1032, %v1032
          %v1049 = vmul.f32 %v1033, %v1033
          %v1050 = vadd.f32 %v1034, %v1035
          %1051 = vadd.xlane.f32.xlu0 %v1050
          %v1052 = vpop.xlane.xlu0 %1051
          %v1053 = vadd.f32 %v1036, %v1037
          %1054 = vadd.xlane.f32.xlu0 %v1053
          %v1055 = vpop.xlane.xlu0 %1054
          %v1056 = vadd.f32 %v1038, %v1039
          %1057 = vadd.xlane.f32.xlu0 %v1056
          %v1058 = vpop.xlane.xlu0 %1057
          %v1059 = vadd.f32 %v1040, %v1041
          %1060 = vadd.xlane.f32.xlu0 %v1059
          %v1061 = vpop.xlane.xlu0 %1060
          %v1062 = vadd.f32 %v1042, %v1043
          %1063 = vadd.xlane.f32.xlu0 %v1062
          %v1064 = vpop.xlane.xlu0 %1063
          %v1065 = vadd.f32 %v1044, %v1045
          %1066 = vadd.xlane.f32.xlu0 %v1065
          %v1067 = vpop.xlane.xlu0 %1066
          %v1068 = vadd.f32 %v1046, %v1047
          %1069 = vadd.xlane.f32.xlu0 %v1068
          %v1070 = vpop.xlane.xlu0 %1069
          %v1071 = vadd.f32 %v1048, %v1049
          %1072 = vadd.xlane.f32.xlu0 %v1071
          %v1073 = vpop.xlane.xlu0 %1072
          %v1074 = vmax.f32 %v1052, 1e-24
          %v1075 = vmax.f32 %v1055, 1e-24
          %v1076 = vmax.f32 %v1058, 1e-24
          %v1077 = vmax.f32 %v1061, 1e-24
          %v1078 = vmax.f32 %v1064, 1e-24
          %v1079 = vmax.f32 %v1067, 1e-24
          %v1080 = vmax.f32 %v1070, 1e-24
          %v1081 = vmax.f32 %v1073, 1e-24
          %v1082 = vrsqrt.pop %v1074
          %v1083 = vrsqrt.pop %v1075
          %v1084 = vrsqrt.pop %v1076
          %v1085 = vrsqrt.pop %v1077
          %v1086 = vrsqrt.pop %v1078
          %v1087 = vrsqrt.pop %v1079
          %v1088 = vrsqrt.pop %v1080
          %v1089 = vrsqrt.pop %v1081
          %v1090 = vmul.f32 %v1018, %v1082
          %v1091 = vmul.f32 %v1019, %v1082
          %v1092 = vmul.f32 %v1020, %v1083
          %v1093 = vmul.f32 %v1021, %v1083
          %v1094 = vmul.f32 %v1022, %v1084
          %v1095 = vmul.f32 %v1023, %v1084
          %v1096 = vmul.f32 %v1024, %v1085
          %v1097 = vmul.f32 %v1025, %v1085
          %v1098 = vmul.f32 %v1026, %v1086
          %v1099 = vmul.f32 %v1027, %v1086
          %v1100 = vmul.f32 %v1028, %v1087
          %v1101 = vmul.f32 %v1029, %v1087
          %v1102 = vmul.f32 %v1030, %v1088
          %v1103 = vmul.f32 %v1031, %v1088
          %v1104 = vmul.f32 %v1032, %v1089
          %v1105 = vmul.f32 %v1033, %v1089
          %v1106 = vld [vmem:[%s311] sm:$0xff]
          %v1107 = vld [vmem:[%s311 + $0x8] sm:$0xff]
          %v1108 = vld [vmem:[%s311 + $0x10] sm:$0xff]
          %v1109 = vld [vmem:[%s311 + $0x18] sm:$0xff]
          %v1110 = vld [vmem:[%s311 + $0x20] sm:$0xff]
          %v1111 = vld [vmem:[%s311 + $0x28] sm:$0xff]
          %v1112 = vld [vmem:[%s311 + $0x30] sm:$0xff]
          %v1113 = vld [vmem:[%s311 + $0x38] sm:$0xff]
          %v1114 = vunpack.c.l.bf16 %v1106
          %v1115 = vunpack.c.h.bf16 %v1106
          %v1116 = vunpack.c.l.bf16 %v1107
          %v1117 = vunpack.c.h.bf16 %v1107
          %v1118 = vunpack.c.l.bf16 %v1108
          %v1119 = vunpack.c.h.bf16 %v1108
          %v1120 = vunpack.c.l.bf16 %v1109
          %v1121 = vunpack.c.h.bf16 %v1109
          %v1122 = vunpack.c.l.bf16 %v1110
          %v1123 = vunpack.c.h.bf16 %v1110
          %v1124 = vunpack.c.l.bf16 %v1111
          %v1125 = vunpack.c.h.bf16 %v1111
          %v1126 = vunpack.c.l.bf16 %v1112
          %v1127 = vunpack.c.h.bf16 %v1112
          %v1128 = vunpack.c.l.bf16 %v1113
          %v1129 = vunpack.c.h.bf16 %v1113
          %v1130 = vsub.f32 %v1090, %v1114
          %v1131 = vsub.f32 %v1091, %v1115
          %v1132 = vsub.f32 %v1092, %v1116
          %v1133 = vsub.f32 %v1093, %v1117
          %v1134 = vsub.f32 %v1094, %v1118
          %v1135 = vsub.f32 %v1095, %v1119
          %v1136 = vsub.f32 %v1096, %v1120
          %v1137 = vsub.f32 %v1097, %v1121
          %v1138 = vsub.f32 %v1098, %v1122
          %v1139 = vsub.f32 %v1099, %v1123
          %v1140 = vsub.f32 %v1100, %v1124
          %v1141 = vsub.f32 %v1101, %v1125
          %v1142 = vsub.f32 %v1102, %v1126
          %v1143 = vsub.f32 %v1103, %v1127
          %v1144 = vsub.f32 %v1104, %v1128
          %v1145 = vsub.f32 %v1105, %v1129
          %v1146 = vld [vmem:[%s3] sm:$0x3]
          %v1148 = vlaneseq
          %v1149 = vshrl.u32 %v1148, 7
          %v1150 = vsub.s32 0, %v1149
          %v1151 = vrot.slane %v1146, %v1150
          %v1152 = vlaneseq
          %v1153 = vshrl.u32 %v1152, 7
          %v1154 = vsub.s32 1, %v1153
          %v1155 = vrot.slane %v1146, %v1154
          %v1158 = vmul.f32 %v1130, %v1151
          %v1159 = vmul.f32 %v1131, %v1155
          %v1160 = vmul.f32 %v1132, %v1151
          %v1161 = vmul.f32 %v1133, %v1155
          %v1162 = vmul.f32 %v1134, %v1151
          %v1163 = vmul.f32 %v1135, %v1155
          %v1164 = vmul.f32 %v1136, %v1151
          %v1165 = vmul.f32 %v1137, %v1155
          %v1166 = vmul.f32 %v1138, %v1151
          %v1167 = vmul.f32 %v1139, %v1155
          %v1168 = vmul.f32 %v1140, %v1151
          %v1169 = vmul.f32 %v1141, %v1155
          %v1170 = vmul.f32 %v1142, %v1151
          %v1171 = vmul.f32 %v1143, %v1155
          %v1172 = vmul.f32 %v1144, %v1151
          %v1173 = vmul.f32 %v1145, %v1155
          %v1174 = vadd.f32 %v1114, %v1158
          %v1175 = vadd.f32 %v1115, %v1159
          %v1176 = vadd.f32 %v1116, %v1160
          %v1177 = vadd.f32 %v1117, %v1161
          %v1178 = vadd.f32 %v1118, %v1162
          %v1179 = vadd.f32 %v1119, %v1163
          %v1180 = vadd.f32 %v1120, %v1164
          %v1181 = vadd.f32 %v1121, %v1165
          %v1182 = vadd.f32 %v1122, %v1166
          %v1183 = vadd.f32 %v1123, %v1167
          %v1184 = vadd.f32 %v1124, %v1168
          %v1185 = vadd.f32 %v1125, %v1169
          %v1186 = vadd.f32 %v1126, %v1170
          %v1187 = vadd.f32 %v1127, %v1171
          %v1188 = vadd.f32 %v1128, %v1172
          %v1189 = vadd.f32 %v1129, %v1173
          %v1190 = vmul.f32 %v1174, %v1174
          %v1191 = vmul.f32 %v1175, %v1175
          %v1192 = vmul.f32 %v1176, %v1176
          %v1193 = vmul.f32 %v1177, %v1177
          %v1194 = vmul.f32 %v1178, %v1178
          %v1195 = vmul.f32 %v1179, %v1179
          %v1196 = vmul.f32 %v1180, %v1180
          %v1197 = vmul.f32 %v1181, %v1181
          %v1198 = vmul.f32 %v1182, %v1182
          %v1199 = vmul.f32 %v1183, %v1183
          %v1200 = vmul.f32 %v1184, %v1184
          %v1201 = vmul.f32 %v1185, %v1185
          %v1202 = vmul.f32 %v1186, %v1186
          %v1203 = vmul.f32 %v1187, %v1187
          %v1204 = vmul.f32 %v1188, %v1188
          %v1205 = vmul.f32 %v1189, %v1189
          %v1206 = vadd.f32 %v1190, %v1191
          %1207 = vadd.xlane.f32.xlu0 %v1206
          %v1208 = vpop.xlane.xlu0 %1207
          %v1209 = vadd.f32 %v1192, %v1193
          %1210 = vadd.xlane.f32.xlu0 %v1209
          %v1211 = vpop.xlane.xlu0 %1210
          %v1212 = vadd.f32 %v1194, %v1195
          %1213 = vadd.xlane.f32.xlu0 %v1212
          %v1214 = vpop.xlane.xlu0 %1213
          %v1215 = vadd.f32 %v1196, %v1197
          %1216 = vadd.xlane.f32.xlu0 %v1215
          %v1217 = vpop.xlane.xlu0 %1216
          %v1218 = vadd.f32 %v1198, %v1199
          %1219 = vadd.xlane.f32.xlu0 %v1218
          %v1220 = vpop.xlane.xlu0 %1219
          %v1221 = vadd.f32 %v1200, %v1201
          %1222 = vadd.xlane.f32.xlu0 %v1221
          %v1223 = vpop.xlane.xlu0 %1222
          %v1224 = vadd.f32 %v1202, %v1203
          %1225 = vadd.xlane.f32.xlu0 %v1224
          %v1226 = vpop.xlane.xlu0 %1225
          %v1227 = vadd.f32 %v1204, %v1205
          %1228 = vadd.xlane.f32.xlu0 %v1227
          %v1229 = vpop.xlane.xlu0 %1228
          %v1230 = vmax.f32 %v1208, 1e-24
          %v1231 = vmax.f32 %v1211, 1e-24
          %v1232 = vmax.f32 %v1214, 1e-24
          %v1233 = vmax.f32 %v1217, 1e-24
          %v1234 = vmax.f32 %v1220, 1e-24
          %v1235 = vmax.f32 %v1223, 1e-24
          %v1236 = vmax.f32 %v1226, 1e-24
          %v1237 = vmax.f32 %v1229, 1e-24
          %v1238 = vrsqrt.pop %v1230
          %v1239 = vrsqrt.pop %v1231
          %v1240 = vrsqrt.pop %v1232
          %v1241 = vrsqrt.pop %v1233
          %v1242 = vrsqrt.pop %v1234
          %v1243 = vrsqrt.pop %v1235
          %v1244 = vrsqrt.pop %v1236
          %v1245 = vrsqrt.pop %v1237
          %v1246 = vmul.f32 %v1174, %v1238
          %v1247 = vmul.f32 %v1175, %v1238
          %v1248 = vmul.f32 %v1176, %v1239
          %v1249 = vmul.f32 %v1177, %v1239
          %v1250 = vmul.f32 %v1178, %v1240
          %v1251 = vmul.f32 %v1179, %v1240
          %v1252 = vmul.f32 %v1180, %v1241
          %v1253 = vmul.f32 %v1181, %v1241
          %v1254 = vmul.f32 %v1182, %v1242
          %v1255 = vmul.f32 %v1183, %v1242
          %v1256 = vmul.f32 %v1184, %v1243
          %v1257 = vmul.f32 %v1185, %v1243
          %v1258 = vmul.f32 %v1186, %v1244
          %v1259 = vmul.f32 %v1187, %v1244
          %v1260 = vmul.f32 %v1188, %v1245
          %v1261 = vmul.f32 %v1189, %v1245
          %v1262 = vpack.c.bf16 %v1248, %v1246
          %v1263 = vpack.c.bf16 %v1249, %v1247
          %v1264 = vpack.c.bf16 %v1252, %v1250
          %v1265 = vpack.c.bf16 %v1253, %v1251
          %v1266 = vpack.c.bf16 %v1256, %v1254
          %v1267 = vpack.c.bf16 %v1257, %v1255
          %v1268 = vpack.c.bf16 %v1260, %v1258
          %v1269 = vpack.c.bf16 %v1261, %v1259
          %v1278 = vunpack.c.l.b16 %v1262
          %v1279 = vunpack.c.l.b16 %v1263
          %v1280 = vunpack.c.h.b16 %v1262
          %v1281 = vunpack.c.h.b16 %v1263
          %v1282 = vunpack.c.l.b16 %v1264
          %v1283 = vunpack.c.l.b16 %v1265
          %v1284 = vunpack.c.h.b16 %v1264
          %v1285 = vunpack.c.h.b16 %v1265
          %v1286 = vunpack.c.l.b16 %v1266
          %v1287 = vunpack.c.l.b16 %v1267
          %v1288 = vunpack.c.h.b16 %v1266
          %v1289 = vunpack.c.h.b16 %v1267
          %v1290 = vunpack.c.l.b16 %v1268
          %v1291 = vunpack.c.l.b16 %v1269
          %v1292 = vunpack.c.h.b16 %v1268
          %v1293 = vunpack.c.h.b16 %v1269
          %v1294 = vpack.c.b16 %v1279, %v1278
          %v1295 = vpack.c.b16 %v1281, %v1280
          %v1296 = vpack.c.b16 %v1283, %v1282
          %v1297 = vpack.c.b16 %v1285, %v1284
          %v1298 = vpack.c.b16 %v1287, %v1286
          %v1299 = vpack.c.b16 %v1289, %v1288
          %v1300 = vpack.c.b16 %v1291, %v1290
          %v1301 = vpack.c.b16 %v1293, %v1292
          %1310 = vst [vmem:[%s318] sm:$0xff] %v1294
          %1311 = vst [vmem:[%s318 + $0x8] sm:$0xff] %v1295
          %1312 = vst [vmem:[%s318 + $0x10] sm:$0xff] %v1296
          %1313 = vst [vmem:[%s318 + $0x18] sm:$0xff] %v1297
          %1314 = vst [vmem:[%s318 + $0x20] sm:$0xff] %v1298
          %1315 = vst [vmem:[%s318 + $0x28] sm:$0xff] %v1299
          %1316 = vst [vmem:[%s318 + $0x30] sm:$0xff] %v1300
          %1317 = vst [vmem:[%s318 + $0x38] sm:$0xff] %v1301
        $region67: #{ngpt_forward.18} parent=54 // pred_fallthru
          _
        %s1318 = smul.u32 8, %s19
        %p1319 = scmp.lt.s32.totalorder %s1318, 7
        %s1320 = scalar_select %p1319, %s1318, 7
        %s1321 = smul.addr %s1320, 2
        %s1322 = smul.addr %s1321, 4
        %s1323 = scalar_lea.vmem %s4, %s1322
        // Predicated region
        $region68: #{ngpt_forward.18} parent=54 // pred_check
          %p1324 = pneg %p146
        $region69: #{ngpt_forward.18} parent=54 // pred_check_branch
          %1326 = sbr.rel (%p1324) target = $region71
        $region70: #{ngpt_forward.18} parent=54 // pred_region
          %s1327 = smul.u32 8, %s19
        $region71: #{ngpt_forward.18} parent=54 // pred_fallthru
          _
        // Predicated region
        $region72: #{ngpt_forward.18} parent=54 // pred_check
          %p1328 = pneg %p146
        $region73: #{ngpt_forward.18} parent=54 // pred_check_branch
          %1330 = sbr.rel (%p1328) target = $region75
        $region74: #{ngpt_forward.18} parent=54 // pred_region
          %s1331 = smul.u32 8, %s19
          %p1332 = scmp.lt.s32.totalorder %s1331, 7
          %s1333 = scalar_select %p1332, %s1331, 7
          %s1334 = smul.addr %s1333, 2
          %s1335 = smul.addr %s1334, 4
          %s1336 = scalar_lea.vmem %s4, %s1335
        $region75: #{ngpt_forward.18} parent=54 // pred_fallthru
          _
      $region55: #{ngpt_forward.18} parent=5 // pred_fallthru
        _
      %p1337 = scmp.le.s32.totalorder 2, %s10
      // Predicated region
      $region76: #{ngpt_forward.18} parent=5 // pred_check
        %p1338 = pneg %p1337
      $region77: #{ngpt_forward.18} parent=5 // pred_check_branch
        %1340 = sbr.rel (%p1338) target = $region79
      $region78: #{ngpt_forward.18} parent=5 // pred_region
        %s1341 = ssub.s32 %s10, 2
      $region79: #{ngpt_forward.18} parent=5 // pred_fallthru
        _
    $region6: #{ngpt_forward.18} parent=1 // loop_footer
      %s14 = sadd.s32 1, %s10
    $region7: #{ngpt_forward.18} parent=1 // loop_footer_branch
      %9 = sbr.rel target = $region3
    $region8: #{ngpt_forward.18} parent=1 // loop_exit
      _

// kernel: ngpt_forward.19
$region0: #{ngpt_forward.19}
  #allocation0 [shape = 'u32[]', space=smem, size = 0x4, offset = 0x4, fixed_abs, tag = 'smem constant byte address 0x4 - core index']
  #allocation1 [shape = 'u32[144,128]{1,0:T(1,128)}', space=vmem, size = 0x12000, scoped, tag = 'internal scratch']
  #allocation2 [shape = 'f32[64,256]{1,0:T(8,128)}', space=vmem, size = 0x10000, scoped, tag = 'scratch operand']
  %s0 = inlined_call_operand.vmem [shape: bf16[64,256], index: 0, kind: input, shape index: {}]
  %s1 = inlined_call_operand.vmem [shape: bf16[256,768], index: 1, kind: input, shape index: {}]
  %s2 = inlined_call_operand.vmem [shape: bf16[64,768], index: 2, kind: output, shape index: {}]
  %s3 = sld [smem:[#allocation0]]
  $region121: #{ngpt_forward.19} parent=0
    _
  %s5 = ssub.s32 1, %s3
  %s6 = scalar_select 0, %s5, %s3
  $region1: #{ngpt_forward.19} parent=0
    #allocation3 [shape = 'u8[262144]{0}', space=vmem, size = 0x40000, scoped, tag = 'input window, operand 1']
    #allocation4 [shape = 'u8[65536]{0}', space=vmem, size = 0x10000, scoped, tag = 'output window, operand 0']
    loop: start=0, step=1, limit=5
    $region2: #{ngpt_forward.19} parent=1 // loop_pre_header
      _
    $region3: #{ngpt_forward.19} parent=1 // loop_header
      %s8 = sphi 0, %s12
      %p9 = scmp.ge.s32.totalorder %s8, 5
      %s15 = sphi 0, %s34
      %s16 = sphi 0, %s30
      %s17 = sphi 0, %s26
      %s18 = sphi 0, %s15
      %s19 = sphi 0, %s16
      %s20 = sphi 0, %s17
      %s21 = sphi 0, %s18
      %s22 = sphi 0, %s19
      %s23 = sphi 0, %s20
      %s39 = sphi 0, %s41
      %s42 = sphi 0, %s39
      %s43 = sphi 0, %s42
      %s59 = sphi 0, %s43
      %s67 = sphi 0, %s69
      %s70 = sphi 0, %s67
      %s71 = sphi 0, %s70
      %s87 = sphi 0, %s71
      %s95 = sphi 0, %s97
      %s98 = sphi 0, %s95
      %s99 = sphi 0, %s98
      %s115 = sphi 0, %s99
    $region4: #{ngpt_forward.19} parent=1 // loop_header_branch
      %11 = sbr.rel (%p9) target = $region8
    $region5: #{ngpt_forward.19} parent=1 // loop_body
      %s13 = ssub.s32 %s8, 1
      %s14 = ssub.s32 %s8, 2
      %s24 = sadd.s32 1, %s17
      %p25 = scmp.ge.s32.totalorder %s24, 1
      %s26 = scalar_select %p25, 0, %s24
      %s27 = sadd.s32 1, %s16
      %s28 = scalar_select %p25, %s27, %s16
      %p29 = scmp.ge.s32.totalorder %s28, 3
      %s30 = scalar_select %p29, 0, %s28
      %s31 = sadd.s32 1, %s15
      %s32 = scalar_select %p29, %s31, %s15
      %p33 = scmp.ge.s32.totalorder %s32, 1
      %s34 = scalar_select %p33, 0, %s32
      %s35 = ssub.s32 %s15, %s34
      %s36 = ssub.s32 %s17, %s26
      %s37 = sor.u32 %s35, %s36
      %p38 = scmp.eq.s32.totalorder %s37, 0
      %s40 = sadd.s32 %s39, 1
      %s41 = scalar_select %p38, %s39, %s40
      %p44 = pneg %p38
      %p45 = scmp.eq.s32.totalorder %s8, 2
      %p46 = por %p44, %p45
      %p47 = scmp.ne.s32.totalorder %s39, %s42
      %p48 = scmp.eq.s32.totalorder %s8, 0
      %p49 = por %p47, %p48
      %p50 = scmp.ne.s32.totalorder %s39, %s42
      %p51 = scmp.eq.s32.totalorder %s13, 2
      %p52 = por %p50, %p51
      %p53 = scmp.ne.s32.totalorder %s42, %s43
      %p54 = scmp.eq.s32.totalorder %s13, 0
      %p55 = por %p53, %p54
      %p56 = scmp.ne.s32.totalorder %s42, %s43
      %p57 = scmp.eq.s32.totalorder %s14, 2
      %p58 = por %p56, %p57
      %p60 = scmp.ne.s32.totalorder %s43, %s59
      %p61 = scmp.eq.s32.totalorder %s14, 0
      %p62 = por %p60, %p61
      %s63 = ssub.s32 %s17, %s26
      %s64 = ssub.s32 %s16, %s30
      %s65 = sor.u32 %s63, %s64
      %p66 = scmp.eq.s32.totalorder %s65, 0
      %s68 = sadd.s32 %s67, 1
      %s69 = scalar_select %p66, %s67, %s68
      %p72 = pneg %p66
      %p73 = scmp.eq.s32.totalorder %s8, 2
      %p74 = por %p72, %p73
      %p75 = scmp.ne.s32.totalorder %s67, %s70
      %p76 = scmp.eq.s32.totalorder %s8, 0
      %p77 = por %p75, %p76
      %p78 = scmp.ne.s32.totalorder %s67, %s70
      %p79 = scmp.eq.s32.totalorder %s13, 2
      %p80 = por %p78, %p79
      %p81 = scmp.ne.s32.totalorder %s70, %s71
      %p82 = scmp.eq.s32.totalorder %s13, 0
      %p83 = por %p81, %p82
      %p84 = scmp.ne.s32.totalorder %s70, %s71
      %p85 = scmp.eq.s32.totalorder %s14, 2
      %p86 = por %p84, %p85
      %p88 = scmp.ne.s32.totalorder %s71, %s87
      %p89 = scmp.eq.s32.totalorder %s14, 0
      %p90 = por %p88, %p89
      %s91 = ssub.s32 %s15, %s34
      %s92 = ssub.s32 %s16, %s30
      %s93 = sor.u32 %s91, %s92
      %p94 = scmp.eq.s32.totalorder %s93, 0
      %s96 = sadd.s32 %s95, 1
      %s97 = scalar_select %p94, %s95, %s96
      %p100 = pneg %p94
      %p101 = scmp.eq.s32.totalorder %s8, 2
      %p102 = por %p100, %p101
      %p103 = scmp.ne.s32.totalorder %s95, %s98
      %p104 = scmp.eq.s32.totalorder %s8, 0
      %p105 = por %p103, %p104
      %p106 = scmp.ne.s32.totalorder %s95, %s98
      %p107 = scmp.eq.s32.totalorder %s13, 2
      %p108 = por %p106, %p107
      %p109 = scmp.ne.s32.totalorder %s98, %s99
      %p110 = scmp.eq.s32.totalorder %s13, 0
      %p111 = por %p109, %p110
      %p112 = scmp.ne.s32.totalorder %s98, %s99
      %p113 = scmp.eq.s32.totalorder %s14, 2
      %p114 = por %p112, %p113
      %p116 = scmp.ne.s32.totalorder %s99, %s115
      %p117 = scmp.eq.s32.totalorder %s14, 0
      %p118 = por %p116, %p117
      %p119 = scmp.le.s32.totalorder 1, %s8
      %p120 = scmp.lt.s32.totalorder %s8, 4
      %p121 = pnand %p119, %p120
      %p122 = pneg %p121
      // Predicated region
      $region9: #{ngpt_forward.19} parent=5 // pred_check
        _
      $region10: #{ngpt_forward.19} parent=5 // pred_check_branch
        %124 = sbr.rel (%p121) target = $region12
      $region11: #{ngpt_forward.19} parent=5 // pred_region
        %s125 = ssub.s32 %s8, 1
        // Predicated region
        $region13: #{ngpt_forward.19} parent=11 // pred_check
          %p126 = pneg %p55
        $region14: #{ngpt_forward.19} parent=11 // pred_check_branch
          %128 = sbr.rel (%p126) target = $region16
        $region15: #{ngpt_forward.19} parent=11 // pred_region
          %s129 = smul.u32 8, %s18
          %s130 = smul.u32 2, %s20
          %p131 = scmp.lt.s32.totalorder %s129, 7
          %s132 = scalar_select %p131, %s129, 7
          %p133 = scmp.lt.s32.totalorder %s130, 1
          %s134 = scalar_select %p133, %s130, 1
          %s135 = smul.addr %s132, 2
          %s136 = sadd.s32 %s134, %s135
          %s137 = smul.addr %s136, 4
          %s138 = scalar_lea.vmem %s0, %s137
          %s139 = smul.u32 8, %s18
          %s140 = smul.u32 2, %s20
        $region16: #{ngpt_forward.19} parent=11 // pred_fallthru
          _
      $region12: #{ngpt_forward.19} parent=5 // pred_fallthru
        _
      %p141 = scmp.lt.s32.totalorder %s8, 3
      // Predicated region
      $region17: #{ngpt_forward.19} parent=5 // pred_check
        %p142 = pneg %p141
      $region18: #{ngpt_forward.19} parent=5 // pred_check_branch
        %144 = sbr.rel (%p142) target = $region20
      $region19: #{ngpt_forward.19} parent=5 // pred_region
        // Predicated region
        $region21: #{ngpt_forward.19} parent=19 // pred_check
          %p145 = pneg %p77
        $region22: #{ngpt_forward.19} parent=19 // pred_check_branch
          %147 = sbr.rel (%p145) target = $region24
        $region23: #{ngpt_forward.19} parent=19 // pred_region
          %s148 = sand.u32 %s67, 1
          %s149 = sand.u32 %s67, 1
          %s150 = smul.addr %s149, 256
          %s151 = scalar_lea.vmem [#allocation3], %s150
          %s152 = smul.u32 32, %s17
          %s153 = smul.u32 2, %s16
          %s154 = smul.addr %s152, 6
          %s155 = sadd.s32 %s153, %s154
          %s156 = smul.addr %s155, 4
          %s157 = scalar_lea.vmem %s1, %s156
          // Predicated region
          $region25: #{ngpt_forward.19} parent=23 // pred_check
            _
          $region26: #{ngpt_forward.19} parent=23 // pred_check_branch
            %159 = sbr.rel (0) target = $region28
          $region27: #{ngpt_forward.19} parent=23 // pred_region
            // Predicated region
            $region29: #{ngpt_forward.19} parent=27 // pred_check
              _
            $region30: #{ngpt_forward.19} parent=27 // pred_check_branch
              %161 = sbr.rel (0) target = $region32
            $region31: #{ngpt_forward.19} parent=27 // pred_region
              // Predicated region
              $region44: #{ngpt_forward.19} parent=31 // pred_check
                _
              $region45: #{ngpt_forward.19} parent=31 // pred_check_branch
                %239 = sbr.rel (0) target = $region47
              $region46: #{ngpt_forward.19} parent=31 // pred_region
                loop: start=0, step=1, limit=1
                $region48: #{ngpt_forward.19} parent=46 // loop_pre_header
                  _
                $region49: #{ngpt_forward.19} parent=46 // loop_header
                  %s241 = sphi 0, %s245
                  %p242 = scmp.ge.s32.totalorder %s241, 1
                  %s246 = sphi %s157, %s157
                  %s247 = sphi %s151, %s151
                $region50: #{ngpt_forward.19} parent=46 // loop_header_branch
                  %244 = sbr.rel (%p242) target = $region54
                $region51: #{ngpt_forward.19} parent=46 // loop_body
                  %v248 = vld [vmem:[%s246] sm:$0xff]
                  %249 = vst [vmem:[%s247] sm:$0xff] %v248
                  %v250 = vld [vmem:[%s246 + $0x18] sm:$0xff]
                  %251 = vst [vmem:[%s247 + $0x8] sm:$0xff] %v250
                  %v252 = vld [vmem:[%s246 + $0x30] sm:$0xff]
                  %253 = vst [vmem:[%s247 + $0x10] sm:$0xff] %v252
                  %v254 = vld [vmem:[%s246 + $0x48] sm:$0xff]
                  %255 = vst [vmem:[%s247 + $0x18] sm:$0xff] %v254
                  %v256 = vld [vmem:[%s246 + $0x60] sm:$0xff]
                  %257 = vst [vmem:[%s247 + $0x20] sm:$0xff] %v256
                  %v258 = vld [vmem:[%s246 + $0x78] sm:$0xff]
                  %259 = vst [vmem:[%s247 + $0x28] sm:$0xff] %v258
                  %v260 = vld [vmem:[%s246 + $0x90] sm:$0xff]
                  %261 = vst [vmem:[%s247 + $0x30] sm:$0xff] %v260
                  %v262 = vld [vmem:[%s246 + $0xa8] sm:$0xff]
                  %263 = vst [vmem:[%s247 + $0x38] sm:$0xff] %v262
                  %v264 = vld [vmem:[%s246 + $0xc0] sm:$0xff]
                  %265 = vst [vmem:[%s247 + $0x40] sm:$0xff] %v264
                  %v266 = vld [vmem:[%s246 + $0xd8] sm:$0xff]
                  %267 = vst [vmem:[%s247 + $0x48] sm:$0xff] %v266
                  %v268 = vld [vmem:[%s246 + $0xf0] sm:$0xff]
                  %269 = vst [vmem:[%s247 + $0x50] sm:$0xff] %v268
                  %v270 = vld [vmem:[%s246 + $0x108] sm:$0xff]
                  %271 = vst [vmem:[%s247 + $0x58] sm:$0xff] %v270
                  %v272 = vld [vmem:[%s246 + $0x120] sm:$0xff]
                  %273 = vst [vmem:[%s247 + $0x60] sm:$0xff] %v272
                  %v274 = vld [vmem:[%s246 + $0x138] sm:$0xff]
                  %275 = vst [vmem:[%s247 + $0x68] sm:$0xff] %v274
                  %v276 = vld [vmem:[%s246 + $0x150] sm:$0xff]
                  %277 = vst [vmem:[%s247 + $0x70] sm:$0xff] %v276
                  %v278 = vld [vmem:[%s246 + $0x168] sm:$0xff]
                  %279 = vst [vmem:[%s247 + $0x78] sm:$0xff] %v278
                  %v280 = vld [vmem:[%s246 + $0x180] sm:$0xff]
                  %281 = vst [vmem:[%s247 + $0x80] sm:$0xff] %v280
                  %v282 = vld [vmem:[%s246 + $0x198] sm:$0xff]
                  %283 = vst [vmem:[%s247 + $0x88] sm:$0xff] %v282
                  %v284 = vld [vmem:[%s246 + $0x1b0] sm:$0xff]
                  %285 = vst [vmem:[%s247 + $0x90] sm:$0xff] %v284
                  %v286 = vld [vmem:[%s246 + $0x1c8] sm:$0xff]
                  %287 = vst [vmem:[%s247 + $0x98] sm:$0xff] %v286
                  %v288 = vld [vmem:[%s246 + $0x1e0] sm:$0xff]
                  %289 = vst [vmem:[%s247 + $0xa0] sm:$0xff] %v288
                  %v290 = vld [vmem:[%s246 + $0x1f8] sm:$0xff]
                  %291 = vst [vmem:[%s247 + $0xa8] sm:$0xff] %v290
                  %v292 = vld [vmem:[%s246 + $0x210] sm:$0xff]
                  %293 = vst [vmem:[%s247 + $0xb0] sm:$0xff] %v292
                  %v294 = vld [vmem:[%s246 + $0x228] sm:$0xff]
                  %295 = vst [vmem:[%s247 + $0xb8] sm:$0xff] %v294
                  %v296 = vld [vmem:[%s246 + $0x240] sm:$0xff]
                  %297 = vst [vmem:[%s247 + $0xc0] sm:$0xff] %v296
                  %v298 = vld [vmem:[%s246 + $0x258] sm:$0xff]
                  %299 = vst [vmem:[%s247 + $0xc8] sm:$0xff] %v298
                  %v300 = vld [vmem:[%s246 + $0x270] sm:$0xff]
                  %301 = vst [vmem:[%s247 + $0xd0] sm:$0xff] %v300
                  %v302 = vld [vmem:[%s246 + $0x288] sm:$0xff]
                  %303 = vst [vmem:[%s247 + $0xd8] sm:$0xff] %v302
                  %v304 = vld [vmem:[%s246 + $0x2a0] sm:$0xff]
                  %305 = vst [vmem:[%s247 + $0xe0] sm:$0xff] %v304
                  %v306 = vld [vmem:[%s246 + $0x2b8] sm:$0xff]
                  %307 = vst [vmem:[%s247 + $0xe8] sm:$0xff] %v306
                  %v308 = vld [vmem:[%s246 + $0x2d0] sm:$0xff]
                  %309 = vst [vmem:[%s247 + $0xf0] sm:$0xff] %v308
                  %v310 = vld [vmem:[%s246 + $0x2e8] sm:$0xff]
                  %311 = vst [vmem:[%s247 + $0xf8] sm:$0xff] %v310
                $region52: #{ngpt_forward.19} parent=46 // loop_footer
                  %s245 = sadd.s32 1, %s241
                $region53: #{ngpt_forward.19} parent=46 // loop_footer_branch
                  %240 = sbr.rel target = $region49
                $region54: #{ngpt_forward.19} parent=46 // loop_exit
                  _
              $region47: #{ngpt_forward.19} parent=31 // pred_fallthru
                _
              // Predicated region
              $region55: #{ngpt_forward.19} parent=31 // pred_check
                _
              $region56: #{ngpt_forward.19} parent=31 // pred_check_branch
                %313 = sbr.rel target = $region58
              $region57: #{ngpt_forward.19} parent=31 // pred_region
                _
              $region58: #{ngpt_forward.19} parent=31 // pred_fallthru
                _
            $region32: #{ngpt_forward.19} parent=27 // pred_fallthru
              _
            // Predicated region
            $region33: #{ngpt_forward.19} parent=27 // pred_check
              _
            $region34: #{ngpt_forward.19} parent=27 // pred_check_branch
              %163 = sbr.rel target = $region36
            $region35: #{ngpt_forward.19} parent=27 // pred_region
              %s165 = ssub.s32 256, 1
              loop: start=0, step=1, limit=1
              $region37: #{ngpt_forward.19} parent=35 // loop_pre_header
                _
              $region38: #{ngpt_forward.19} parent=35 // loop_header
                %s167 = sphi 0, %s171
                %p168 = scmp.ge.s32.totalorder %s167, 1
                %s172 = sphi %s157, %s157
                %s173 = sphi %s151, %s151
              $region39: #{ngpt_forward.19} parent=35 // loop_header_branch
                %170 = sbr.rel (%p168) target = $region43
              $region40: #{ngpt_forward.19} parent=35 // loop_body
                %v174 = vld [vmem:[%s172] sm:%s165]
                %175 = vst [vmem:[%s173] sm:%s165] %v174
                %v176 = vld [vmem:[%s172 + $0x18] sm:%s165]
                %177 = vst [vmem:[%s173 + $0x8] sm:%s165] %v176
                %v178 = vld [vmem:[%s172 + $0x30] sm:%s165]
                %179 = vst [vmem:[%s173 + $0x10] sm:%s165] %v178
                %v180 = vld [vmem:[%s172 + $0x48] sm:%s165]
                %181 = vst [vmem:[%s173 + $0x18] sm:%s165] %v180
                %v182 = vld [vmem:[%s172 + $0x60] sm:%s165]
                %183 = vst [vmem:[%s173 + $0x20] sm:%s165] %v182
                %v184 = vld [vmem:[%s172 + $0x78] sm:%s165]
                %185 = vst [vmem:[%s173 + $0x28] sm:%s165] %v184
                %v186 = vld [vmem:[%s172 + $0x90] sm:%s165]
                %187 = vst [vmem:[%s173 + $0x30] sm:%s165] %v186
                %v188 = vld [vmem:[%s172 + $0xa8] sm:%s165]
                %189 = vst [vmem:[%s173 + $0x38] sm:%s165] %v188
                %v190 = vld [vmem:[%s172 + $0xc0] sm:%s165]
                %191 = vst [vmem:[%s173 + $0x40] sm:%s165] %v190
                %v192 = vld [vmem:[%s172 + $0xd8] sm:%s165]
                %193 = vst [vmem:[%s173 + $0x48] sm:%s165] %v192
                %v194 = vld [vmem:[%s172 + $0xf0] sm:%s165]
                %195 = vst [vmem:[%s173 + $0x50] sm:%s165] %v194
                %v196 = vld [vmem:[%s172 + $0x108] sm:%s165]
                %197 = vst [vmem:[%s173 + $0x58] sm:%s165] %v196
                %v198 = vld [vmem:[%s172 + $0x120] sm:%s165]
                %199 = vst [vmem:[%s173 + $0x60] sm:%s165] %v198
                %v200 = vld [vmem:[%s172 + $0x138] sm:%s165]
                %201 = vst [vmem:[%s173 + $0x68] sm:%s165] %v200
                %v202 = vld [vmem:[%s172 + $0x150] sm:%s165]
                %203 = vst [vmem:[%s173 + $0x70] sm:%s165] %v202
                %v204 = vld [vmem:[%s172 + $0x168] sm:%s165]
                %205 = vst [vmem:[%s173 + $0x78] sm:%s165] %v204
                %v206 = vld [vmem:[%s172 + $0x180] sm:%s165]
                %207 = vst [vmem:[%s173 + $0x80] sm:%s165] %v206
                %v208 = vld [vmem:[%s172 + $0x198] sm:%s165]
                %209 = vst [vmem:[%s173 + $0x88] sm:%s165] %v208
                %v210 = vld [vmem:[%s172 + $0x1b0] sm:%s165]
                %211 = vst [vmem:[%s173 + $0x90] sm:%s165] %v210
                %v212 = vld [vmem:[%s172 + $0x1c8] sm:%s165]
                %213 = vst [vmem:[%s173 + $0x98] sm:%s165] %v212
                %v214 = vld [vmem:[%s172 + $0x1e0] sm:%s165]
                %215 = vst [vmem:[%s173 + $0xa0] sm:%s165] %v214
                %v216 = vld [vmem:[%s172 + $0x1f8] sm:%s165]
                %217 = vst [vmem:[%s173 + $0xa8] sm:%s165] %v216
                %v218 = vld [vmem:[%s172 + $0x210] sm:%s165]
                %219 = vst [vmem:[%s173 + $0xb0] sm:%s165] %v218
                %v220 = vld [vmem:[%s172 + $0x228] sm:%s165]
                %221 = vst [vmem:[%s173 + $0xb8] sm:%s165] %v220
                %v222 = vld [vmem:[%s172 + $0x240] sm:%s165]
                %223 = vst [vmem:[%s173 + $0xc0] sm:%s165] %v222
                %v224 = vld [vmem:[%s172 + $0x258] sm:%s165]
                %225 = vst [vmem:[%s173 + $0xc8] sm:%s165] %v224
                %v226 = vld [vmem:[%s172 + $0x270] sm:%s165]
                %227 = vst [vmem:[%s173 + $0xd0] sm:%s165] %v226
                %v228 = vld [vmem:[%s172 + $0x288] sm:%s165]
                %229 = vst [vmem:[%s173 + $0xd8] sm:%s165] %v228
                %v230 = vld [vmem:[%s172 + $0x2a0] sm:%s165]
                %231 = vst [vmem:[%s173 + $0xe0] sm:%s165] %v230
                %v232 = vld [vmem:[%s172 + $0x2b8] sm:%s165]
                %233 = vst [vmem:[%s173 + $0xe8] sm:%s165] %v232
                %v234 = vld [vmem:[%s172 + $0x2d0] sm:%s165]
                %235 = vst [vmem:[%s173 + $0xf0] sm:%s165] %v234
                %v236 = vld [vmem:[%s172 + $0x2e8] sm:%s165]
                %237 = vst [vmem:[%s173 + $0xf8] sm:%s165] %v236
              $region41: #{ngpt_forward.19} parent=35 // loop_footer
                %s171 = sadd.s32 1, %s167
              $region42: #{ngpt_forward.19} parent=35 // loop_footer_branch
                %166 = sbr.rel target = $region38
              $region43: #{ngpt_forward.19} parent=35 // loop_exit
                _
            $region36: #{ngpt_forward.19} parent=27 // pred_fallthru
              _
          $region28: #{ngpt_forward.19} parent=23 // pred_fallthru
            _
          %314 = vnop
        $region24: #{ngpt_forward.19} parent=19 // pred_fallthru
          _
      $region20: #{ngpt_forward.19} parent=5 // pred_fallthru
        _
      %p315 = scmp.le.s32.totalorder 1, %s8
      %p316 = scmp.lt.s32.totalorder %s8, 4
      %p317 = pnand %p315, %p316
      %p318 = pneg %p317
      // Predicated region
      $region59: #{ngpt_forward.19} parent=5 // pred_check
        _
      $region60: #{ngpt_forward.19} parent=5 // pred_check_branch
        %320 = sbr.rel (%p317) target = $region62
      $region61: #{ngpt_forward.19} parent=5 // pred_region
        %s321 = ssub.s32 %s8, 1
        %s322 = sand.u32 %s70, 1
        %s323 = sand.u32 %s70, 1
        %s324 = smul.addr %s323, 256
        %s325 = scalar_lea.vmem [#allocation3], %s324
        // Predicated region
        $region63: #{ngpt_forward.19} parent=61 // pred_check
          %p326 = pneg %p83
        $region64: #{ngpt_forward.19} parent=61 // pred_check_branch
          %328 = sbr.rel (%p326) target = $region66
        $region65: #{ngpt_forward.19} parent=61 // pred_region
          _
        $region66: #{ngpt_forward.19} parent=61 // pred_fallthru
          _
        %s329 = smul.u32 8, %s18
        %s330 = smul.u32 2, %s20
        %p331 = scmp.lt.s32.totalorder %s329, 7
        %s332 = scalar_select %p331, %s329, 7
        %p333 = scmp.lt.s32.totalorder %s330, 1
        %s334 = scalar_select %p333, %s330, 1
        %s335 = smul.addr %s332, 2
        %s336 = sadd.s32 %s334, %s335
        %s337 = smul.addr %s336, 4
        %s338 = scalar_lea.vmem %s0, %s337
        %p339 = pneg %p55
        %p340 = pneg %p52
        %s341 = sand.u32 %s70, 1
        %s342 = sand.u32 %s70, 1
        %s343 = smul.addr %s342, 256
        %s344 = scalar_lea.vmem [#allocation3], %s343
        %p345 = pneg %p83
        %p346 = pneg %p80
        %p347 = pneg %p111
        %p348 = pneg %p108
        %s349 = sand.u32 %s98, 1
        %s350 = sand.u32 %s98, 1
        %s351 = smul.addr %s350, 64
        %s352 = scalar_lea.vmem [#allocation4], %s351
        %s353 = smul.u32 8, %s18
        %s354 = smul.u32 2, %s20
        %p355 = scmp.lt.s32.totalorder %s353, 7
        %s356 = scalar_select %p355, %s353, 7
        %p357 = scmp.lt.s32.totalorder %s354, 1
        %s358 = scalar_select %p357, %s354, 1
        %s359 = smul.addr %s356, 2
        %s360 = sadd.s32 %s358, %s359
        %s361 = smul.addr %s360, 4
        %s362 = scalar_lea.vmem %s0, %s361
        %s363 = smul.u32 8, %s18
        %s364 = smul.u32 2, %s20
        %s365 = smul.u32 32, %s20
        %s366 = smul.u32 2, %s19
        %s367 = smul.u32 8, %s18
        %s368 = smul.u32 2, %s19
        %p369 = scmp.eq.s32.totalorder %s20, 0
        // Predicated region
        $region67: #{ngpt_forward.19} parent=61 // pred_check
          %p370 = pneg %p369
        $region68: #{ngpt_forward.19} parent=61 // pred_check_branch
          %372 = sbr.rel (%p370) target = $region70
        $region69: #{ngpt_forward.19} parent=61 // pred_region
          %373 = vst [vmem:[#allocation2] sm:$0xff] 0.0
          %374 = vst [vmem:[#allocation2 + $0x8] sm:$0xff] 0.0
          %375 = vst [vmem:[#allocation2 + $0x10] sm:$0xff] 0.0
          %376 = vst [vmem:[#allocation2 + $0x18] sm:$0xff] 0.0
          %377 = vst [vmem:[#allocation2 + $0x20] sm:$0xff] 0.0
          %378 = vst [vmem:[#allocation2 + $0x28] sm:$0xff] 0.0
          %379 = vst [vmem:[#allocation2 + $0x30] sm:$0xff] 0.0
          %380 = vst [vmem:[#allocation2 + $0x38] sm:$0xff] 0.0
          %381 = vst [vmem:[#allocation2 + $0x40] sm:$0xff] 0.0
          %382 = vst [vmem:[#allocation2 + $0x48] sm:$0xff] 0.0
          %383 = vst [vmem:[#allocation2 + $0x50] sm:$0xff] 0.0
          %384 = vst [vmem:[#allocation2 + $0x58] sm:$0xff] 0.0
          %385 = vst [vmem:[#allocation2 + $0x60] sm:$0xff] 0.0
          %386 = vst [vmem:[#allocation2 + $0x68] sm:$0xff] 0.0
          %387 = vst [vmem:[#allocation2 + $0x70] sm:$0xff] 0.0
          %388 = vst [vmem:[#allocation2 + $0x78] sm:$0xff] 0.0
        $region70: #{ngpt_forward.19} parent=61 // pred_fallthru
          _
        %v389 = vld [vmem:[#allocation2] sm:$0xff]
        %v390 = vld [vmem:[#allocation2 + $0x8] sm:$0xff]
        %v391 = vld [vmem:[#allocation2 + $0x10] sm:$0xff]
        %v392 = vld [vmem:[#allocation2 + $0x18] sm:$0xff]
        %v393 = vld [vmem:[#allocation2 + $0x20] sm:$0xff]
        %v394 = vld [vmem:[#allocation2 + $0x28] sm:$0xff]
        %v395 = vld [vmem:[#allocation2 + $0x30] sm:$0xff]
        %v396 = vld [vmem:[#allocation2 + $0x38] sm:$0xff]
        %v397 = vld [vmem:[#allocation2 + $0x40] sm:$0xff]
        %v398 = vld [vmem:[#allocation2 + $0x48] sm:$0xff]
        %v399 = vld [vmem:[#allocation2 + $0x50] sm:$0xff]
        %v400 = vld [vmem:[#allocation2 + $0x58] sm:$0xff]
        %v401 = vld [vmem:[#allocation2 + $0x60] sm:$0xff]
        %v402 = vld [vmem:[#allocation2 + $0x68] sm:$0xff]
        %v403 = vld [vmem:[#allocation2 + $0x70] sm:$0xff]
        %v404 = vld [vmem:[#allocation2 + $0x78] sm:$0xff]
        %v405 = vld [vmem:[%s362] sm:$0xff]
        %v406 = vld [vmem:[%s362 + $0x8] sm:$0xff]
        %v407 = vld [vmem:[%s362 + $0x10] sm:$0xff]
        %v408 = vld [vmem:[%s362 + $0x18] sm:$0xff]
        %v409 = vld [vmem:[%s362 + $0x20] sm:$0xff]
        %v410 = vld [vmem:[%s362 + $0x28] sm:$0xff]
        %v411 = vld [vmem:[%s362 + $0x30] sm:$0xff]
        %v412 = vld [vmem:[%s362 + $0x38] sm:$0xff]
        %v413 = vld [vmem:[%s325] sm:$0xff]
        %v414 = vld [vmem:[%s325 + $0x8] sm:$0xff]
        %v415 = vld [vmem:[%s325 + $0x10] sm:$0xff]
        %v416 = vld [vmem:[%s325 + $0x18] sm:$0xff]
        %v417 = vld [vmem:[%s325 + $0x20] sm:$0xff]
        %v418 = vld [vmem:[%s325 + $0x28] sm:$0xff]
        %v419 = vld [vmem:[%s325 + $0x30] sm:$0xff]
        %v420 = vld [vmem:[%s325 + $0x38] sm:$0xff]
        %v421 = vld [vmem:[%s325 + $0x40] sm:$0xff]
        %v422 = vld [vmem:[%s325 + $0x48] sm:$0xff]
        %v423 = vld [vmem:[%s325 + $0x50] sm:$0xff]
        %v424 = vld [vmem:[%s325 + $0x58] sm:$0xff]
        %v425 = vld [vmem:[%s325 + $0x60] sm:$0xff]
        %v426 = vld [vmem:[%s325 + $0x68] sm:$0xff]
        %v427 = vld [vmem:[%s325 + $0x70] sm:$0xff]
        %v428 = vld [vmem:[%s325 + $0x78] sm:$0xff]
        %v429 = vld [vmem:[%s325 + $0x80] sm:$0xff]
        %v430 = vld [vmem:[%s325 + $0x88] sm:$0xff]
        %v431 = vld [vmem:[%s325 + $0x90] sm:$0xff]
        %v432 = vld [vmem:[%s325 + $0x98] sm:$0xff]
        %v433 = vld [vmem:[%s325 + $0xa0] sm:$0xff]
        %v434 = vld [vmem:[%s325 + $0xa8] sm:$0xff]
        %v435 = vld [vmem:[%s325 + $0xb0] sm:$0xff]
        %v436 = vld [vmem:[%s325 + $0xb8] sm:$0xff]
        %v437 = vld [vmem:[%s325 + $0xc0] sm:$0xff]
        %v438 = vld [vmem:[%s325 + $0xc8] sm:$0xff]
        %v439 = vld [vmem:[%s325 + $0xd0] sm:$0xff]
        %v440 = vld [vmem:[%s325 + $0xd8] sm:$0xff]
        %v441 = vld [vmem:[%s325 + $0xe0] sm:$0xff]
        %v442 = vld [vmem:[%s325 + $0xe8] sm:$0xff]
        %v443 = vld [vmem:[%s325 + $0xf0] sm:$0xff]
        %v444 = vld [vmem:[%s325 + $0xf8] sm:$0xff]
        %v453 = vunpack.c.l.b16 %v405
        %v454 = vunpack.c.h.b16 %v405
        %v455 = vunpack.c.l.b16 %v406
        %v456 = vunpack.c.h.b16 %v406
        %v457 = vunpack.c.l.b16 %v407
        %v458 = vunpack.c.h.b16 %v407
        %v459 = vunpack.c.l.b16 %v408
        %v460 = vunpack.c.h.b16 %v408
        %v461 = vunpack.c.l.b16 %v409
        %v462 = vunpack.c.h.b16 %v409
        %v463 = vunpack.c.l.b16 %v410
        %v464 = vunpack.c.h.b16 %v410
        %v465 = vunpack.c.l.b16 %v411
        %v466 = vunpack.c.h.b16 %v411
        %v467 = vunpack.c.l.b16 %v412
        %v468 = vunpack.c.h.b16 %v412
        %v469 = vpack.c.b16 %v455, %v453
        %v470 = vpack.c.b16 %v456, %v454
        %v471 = vpack.c.b16 %v459, %v457
        %v472 = vpack.c.b16 %v460, %v458
        %v473 = vpack.c.b16 %v463, %v461
        %v474 = vpack.c.b16 %v464, %v462
        %v475 = vpack.c.b16 %v467, %v465
        %v476 = vpack.c.b16 %v468, %v466
        %v517 = vunpack.c.l.b16 %v413
        %v518 = vunpack.c.h.b16 %v413
        %v519 = vunpack.c.l.b16 %v414
        %v520 = vunpack.c.h.b16 %v414
        %v521 = vunpack.c.l.b16 %v415
        %v522 = vunpack.c.h.b16 %v415
        %v523 = vunpack.c.l.b16 %v416
        %v524 = vunpack.c.h.b16 %v416
        %v525 = vunpack.c.l.b16 %v417
        %v526 = vunpack.c.h.b16 %v417
        %v527 = vunpack.c.l.b16 %v418
        %v528 = vunpack.c.h.b16 %v418
        %v529 = vunpack.c.l.b16 %v419
        %v530 = vunpack.c.h.b16 %v419
        %v531 = vunpack.c.l.b16 %v420
        %v532 = vunpack.c.h.b16 %v420
        %v533 = vunpack.c.l.b16 %v421
        %v534 = vunpack.c.h.b16 %v421
        %v535 = vunpack.c.l.b16 %v422
        %v536 = vunpack.c.h.b16 %v422
        %v537 = vunpack.c.l.b16 %v423
        %v538 = vunpack.c.h.b16 %v423
        %v539 = vunpack.c.l.b16 %v424
        %v540 = vunpack.c.h.b16 %v424
        %v541 = vunpack.c.l.b16 %v425
        %v542 = vunpack.c.h.b16 %v425
        %v543 = vunpack.c.l.b16 %v426
        %v544 = vunpack.c.h.b16 %v426
        %v545 = vunpack.c.l.b16 %v427
        %v546 = vunpack.c.h.b16 %v427
        %v547 = vunpack.c.l.b16 %v428
        %v548 = vunpack.c.h.b16 %v428
        %v549 = vunpack.c.l.b16 %v429
        %v550 = vunpack.c.h.b16 %v429
        %v551 = vunpack.c.l.b16 %v430
        %v552 = vunpack.c.h.b16 %v430
        %v553 = vunpack.c.l.b16 %v431
        %v554 = vunpack.c.h.b16 %v431
        %v555 = vunpack.c.l.b16 %v432
        %v556 = vunpack.c.h.b16 %v432
        %v557 = vunpack.c.l.b16 %v433
        %v558 = vunpack.c.h.b16 %v433
        %v559 = vunpack.c.l.b16 %v434
        %v560 = vunpack.c.h.b16 %v434
        %v561 = vunpack.c.l.b16 %v435
        %v562 = vunpack.c.h.b16 %v435
        %v563 = vunpack.c.l.b16 %v436
        %v564 = vunpack.c.h.b16 %v436
        %v565 = vunpack.c.l.b16 %v437
        %v566 = vunpack.c.h.b16 %v437
        %v567 = vunpack.c.l.b16 %v438
        %v568 = vunpack.c.h.b16 %v438
        %v569 = vunpack.c.l.b16 %v439
        %v570 = vunpack.c.h.b16 %v439
        %v571 = vunpack.c.l.b16 %v440
        %v572 = vunpack.c.h.b16 %v440
        %v573 = vunpack.c.l.b16 %v441
        %v574 = vunpack.c.h.b16 %v441
        %v575 = vunpack.c.l.b16 %v442
        %v576 = vunpack.c.h.b16 %v442
        %v577 = vunpack.c.l.b16 %v443
        %v578 = vunpack.c.h.b16 %v443
        %v579 = vunpack.c.l.b16 %v444
        %v580 = vunpack.c.h.b16 %v444
        %v581 = vpack.c.b16 %v519, %v517
        %v582 = vpack.c.b16 %v520, %v518
        %v583 = vpack.c.b16 %v523, %v521
        %v584 = vpack.c.b16 %v524, %v522
        %v585 = vpack.c.b16 %v527, %v525
        %v586 = vpack.c.b16 %v528, %v526
        %v587 = vpack.c.b16 %v531, %v529
        %v588 = vpack.c.b16 %v532, %v530
        %v589 = vpack.c.b16 %v535, %v533
        %v590 = vpack.c.b16 %v536, %v534
        %v591 = vpack.c.b16 %v539, %v537
        %v592 = vpack.c.b16 %v540, %v538
        %v593 = vpack.c.b16 %v543, %v541
        %v594 = vpack.c.b16 %v544, %v542
        %v595 = vpack.c.b16 %v547, %v545
        %v596 = vpack.c.b16 %v548, %v546
        %v597 = vpack.c.b16 %v551, %v549
        %v598 = vpack.c.b16 %v552, %v550
        %v599 = vpack.c.b16 %v555, %v553
        %v600 = vpack.c.b16 %v556, %v554
        %v601 = vpack.c.b16 %v559, %v557
        %v602 = vpack.c.b16 %v560, %v558
        %v603 = vpack.c.b16 %v563, %v561
        %v604 = vpack.c.b16 %v564, %v562
        %v605 = vpack.c.b16 %v567, %v565
        %v606 = vpack.c.b16 %v568, %v566
        %v607 = vpack.c.b16 %v571, %v569
        %v608 = vpack.c.b16 %v572, %v570
        %v609 = vpack.c.b16 %v575, %v573
        %v610 = vpack.c.b16 %v576, %v574
        %v611 = vpack.c.b16 %v579, %v577
        %v612 = vpack.c.b16 %v580, %v578
        %645 = vmatprep.subr.bf16.mxu0 %v596
        %646 = vmatpush1.bf16.msra.mxu0 %v595
        %647 = vmatprep.subr.bf16.mxu0 %v594
        %648 = vmatpush1.bf16.msra.mxu0 %v593
        %649 = vmatprep.subr.bf16.mxu0 %v592
        %650 = vmatpush1.bf16.msra.mxu0 %v591
        %651 = vmatprep.subr.bf16.mxu0 %v590
        %652 = vmatpush1.bf16.msra.mxu0 %v589
        %653 = vmatprep.subr.bf16.mxu0 %v588
        %654 = vmatpush1.bf16.msra.mxu0 %v587
        %655 = vmatprep.subr.bf16.mxu0 %v586
        %656 = vmatpush1.bf16.msra.mxu0 %v585
        %657 = vmatprep.subr.bf16.mxu0 %v584
        %658 = vmatpush1.bf16.msra.mxu0 %v583
        %659 = vmatprep.subr.bf16.mxu0 %v582
        %660 = vmatpush1.bf16.msra.mxu0 %v581
        %661 = vmatprep.subr.bf16.mxu0 %v612
        %662 = vmatpush2.bf16.msra.mxu0 %v611
        %663 = vmatprep.subr.bf16.mxu0 %v610
        %664 = vmatpush2.bf16.msra.mxu0 %v609
        %665 = vmatprep.subr.bf16.mxu0 %v608
        %666 = vmatpush2.bf16.msra.mxu0 %v607
        %667 = vmatprep.subr.bf16.mxu0 %v606
        %668 = vmatpush2.bf16.msra.mxu0 %v605
        %669 = vmatprep.subr.bf16.mxu0 %v604
        %670 = vmatpush2.bf16.msra.mxu0 %v603
        %671 = vmatprep.subr.bf16.mxu0 %v602
        %672 = vmatpush2.bf16.msra.mxu0 %v601
        %673 = vmatprep.subr.bf16.mxu0 %v600
        %674 = vmatpush2.bf16.msra.mxu0 %v599
        %675 = vmatprep.subr.bf16.mxu0 %v598
        %676 = vmatpush2.bf16.msra.mxu0 %v597
        %677 = vmatprep.mubr.bf16.mxu0 %v470
        %678 = vmatmul.mubr.bf16.gmra.mxu0 %v469
        %v679 = vpop.f32.mrf.mxu0
        %v680 = vadd.f32 0.0, %v679
        %v681 = vpop.f32.mrf.mxu0
        %v682 = vadd.f32 0.0, %v681
        %v683 = vpop.f32.mrf.mxu0
        %v684 = vadd.f32 0.0, %v683
        %v685 = vpop.f32.mrf.mxu0
        %v686 = vadd.f32 0.0, %v685
        %687 = vmatprep.mubr.bf16.mxu0 %v472
        %688 = vmatmul.mubr.bf16.gmra.mxu0 %v471
        %v689 = vpop.f32.mrf.mxu0
        %v690 = vadd.f32 0.0, %v689
        %v691 = vpop.f32.mrf.mxu0
        %v692 = vadd.f32 0.0, %v691
        %v693 = vpop.f32.mrf.mxu0
        %v694 = vadd.f32 0.0, %v693
        %v695 = vpop.f32.mrf.mxu0
        %v696 = vadd.f32 0.0, %v695
        %697 = vmatprep.mubr.bf16.mxu0 %v474
        %698 = vmatmul.mubr.bf16.gmra.mxu0 %v473
        %v699 = vpop.f32.mrf.mxu0
        %v700 = vadd.f32 0.0, %v699
        %v701 = vpop.f32.mrf.mxu0
        %v702 = vadd.f32 0.0, %v701
        %v703 = vpop.f32.mrf.mxu0
        %v704 = vadd.f32 0.0, %v703
        %v705 = vpop.f32.mrf.mxu0
        %v706 = vadd.f32 0.0, %v705
        %707 = vmatprep.mubr.bf16.mxu0 %v476
        %708 = vmatmul.mubr.bf16.gmra.mxu0 %v475
        %v709 = vpop.f32.mrf.mxu0
        %v710 = vadd.f32 0.0, %v709
        %v711 = vpop.f32.mrf.mxu0
        %v712 = vadd.f32 0.0, %v711
        %v713 = vpop.f32.mrf.mxu0
        %v714 = vadd.f32 0.0, %v713
        %v715 = vpop.f32.mrf.mxu0
        %v716 = vadd.f32 0.0, %v715
        %717 = vdwg.mxu0
        %v718 = vadd.f32 %v389, %v680
        %v719 = vadd.f32 %v390, %v682
        %v720 = vadd.f32 %v391, %v684
        %v721 = vadd.f32 %v392, %v686
        %v722 = vadd.f32 %v393, %v690
        %v723 = vadd.f32 %v394, %v692
        %v724 = vadd.f32 %v395, %v694
        %v725 = vadd.f32 %v396, %v696
        %v726 = vadd.f32 %v397, %v700
        %v727 = vadd.f32 %v398, %v702
        %v728 = vadd.f32 %v399, %v704
        %v729 = vadd.f32 %v400, %v706
        %v730 = vadd.f32 %v401, %v710
        %v731 = vadd.f32 %v402, %v712
        %v732 = vadd.f32 %v403, %v714
        %v733 = vadd.f32 %v404, %v716
        %734 = vst [vmem:[#allocation2] sm:$0xff] %v718
        %735 = vst [vmem:[#allocation2 + $0x8] sm:$0xff] %v719
        %736 = vst [vmem:[#allocation2 + $0x10] sm:$0xff] %v720
        %737 = vst [vmem:[#allocation2 + $0x18] sm:$0xff] %v721
        %738 = vst [vmem:[#allocation2 + $0x20] sm:$0xff] %v722
        %739 = vst [vmem:[#allocation2 + $0x28] sm:$0xff] %v723
        %740 = vst [vmem:[#allocation2 + $0x30] sm:$0xff] %v724
        %741 = vst [vmem:[#allocation2 + $0x38] sm:$0xff] %v725
        %742 = vst [vmem:[#allocation2 + $0x40] sm:$0xff] %v726
        %743 = vst [vmem:[#allocation2 + $0x48] sm:$0xff] %v727
        %744 = vst [vmem:[#allocation2 + $0x50] sm:$0xff] %v728
        %745 = vst [vmem:[#allocation2 + $0x58] sm:$0xff] %v729
        %746 = vst [vmem:[#allocation2 + $0x60] sm:$0xff] %v730
        %747 = vst [vmem:[#allocation2 + $0x68] sm:$0xff] %v731
        %748 = vst [vmem:[#allocation2 + $0x70] sm:$0xff] %v732
        %749 = vst [vmem:[#allocation2 + $0x78] sm:$0xff] %v733
        // Predicated region
        $region71: #{ngpt_forward.19} parent=61 // pred_check
          %p750 = pneg %p369
        $region72: #{ngpt_forward.19} parent=61 // pred_check_branch
          %752 = sbr.rel (%p750) target = $region74
        $region73: #{ngpt_forward.19} parent=61 // pred_region
          %v753 = vld [vmem:[#allocation2] sm:$0xff]
          %v754 = vld [vmem:[#allocation2 + $0x8] sm:$0xff]
          %v755 = vld [vmem:[#allocation2 + $0x10] sm:$0xff]
          %v756 = vld [vmem:[#allocation2 + $0x18] sm:$0xff]
          %v757 = vld [vmem:[#allocation2 + $0x20] sm:$0xff]
          %v758 = vld [vmem:[#allocation2 + $0x28] sm:$0xff]
          %v759 = vld [vmem:[#allocation2 + $0x30] sm:$0xff]
          %v760 = vld [vmem:[#allocation2 + $0x38] sm:$0xff]
          %v761 = vld [vmem:[#allocation2 + $0x40] sm:$0xff]
          %v762 = vld [vmem:[#allocation2 + $0x48] sm:$0xff]
          %v763 = vld [vmem:[#allocation2 + $0x50] sm:$0xff]
          %v764 = vld [vmem:[#allocation2 + $0x58] sm:$0xff]
          %v765 = vld [vmem:[#allocation2 + $0x60] sm:$0xff]
          %v766 = vld [vmem:[#allocation2 + $0x68] sm:$0xff]
          %v767 = vld [vmem:[#allocation2 + $0x70] sm:$0xff]
          %v768 = vld [vmem:[#allocation2 + $0x78] sm:$0xff]
          %v769 = vpack.c.bf16 %v755, %v753
          %v770 = vpack.c.bf16 %v756, %v754
          %v771 = vpack.c.bf16 %v759, %v757
          %v772 = vpack.c.bf16 %v760, %v758
          %v773 = vpack.c.bf16 %v763, %v761
          %v774 = vpack.c.bf16 %v764, %v762
          %v775 = vpack.c.bf16 %v767, %v765
          %v776 = vpack.c.bf16 %v768, %v766
          %v785 = vunpack.c.l.b16 %v769
          %v786 = vunpack.c.l.b16 %v770
          %v787 = vunpack.c.h.b16 %v769
          %v788 = vunpack.c.h.b16 %v770
          %v789 = vunpack.c.l.b16 %v771
          %v790 = vunpack.c.l.b16 %v772
          %v791 = vunpack.c.h.b16 %v771
          %v792 = vunpack.c.h.b16 %v772
          %v793 = vunpack.c.l.b16 %v773
          %v794 = vunpack.c.l.b16 %v774
          %v795 = vunpack.c.h.b16 %v773
          %v796 = vunpack.c.h.b16 %v774
          %v797 = vunpack.c.l.b16 %v775
          %v798 = vunpack.c.l.b16 %v776
          %v799 = vunpack.c.h.b16 %v775
          %v800 = vunpack.c.h.b16 %v776
          %v801 = vpack.c.b16 %v786, %v785
          %v802 = vpack.c.b16 %v788, %v787
          %v803 = vpack.c.b16 %v790, %v789
          %v804 = vpack.c.b16 %v792, %v791
          %v805 = vpack.c.b16 %v794, %v793
          %v806 = vpack.c.b16 %v796, %v795
          %v807 = vpack.c.b16 %v798, %v797
          %v808 = vpack.c.b16 %v800, %v799
          %817 = vst [vmem:[%s352] sm:$0xff] %v801
          %818 = vst [vmem:[%s352 + $0x8] sm:$0xff] %v802
          %819 = vst [vmem:[%s352 + $0x10] sm:$0xff] %v803
          %820 = vst [vmem:[%s352 + $0x18] sm:$0xff] %v804
          %821 = vst [vmem:[%s352 + $0x20] sm:$0xff] %v805
          %822 = vst [vmem:[%s352 + $0x28] sm:$0xff] %v806
          %823 = vst [vmem:[%s352 + $0x30] sm:$0xff] %v807
          %824 = vst [vmem:[%s352 + $0x38] sm:$0xff] %v808
        $region74: #{ngpt_forward.19} parent=61 // pred_fallthru
          _
        %s825 = sand.u32 %s98, 1
        %s826 = sand.u32 %s98, 1
        %s827 = smul.addr %s826, 64
        %s828 = scalar_lea.vmem [#allocation4], %s827
        // Predicated region
        $region75: #{ngpt_forward.19} parent=61 // pred_check
          %p829 = pneg %p108
        $region76: #{ngpt_forward.19} parent=61 // pred_check_branch
          %831 = sbr.rel (%p829) target = $region78
        $region77: #{ngpt_forward.19} parent=61 // pred_region
          %s832 = smul.u32 8, %s18
          %s833 = smul.u32 2, %s19
          %s834 = smul.addr %s832, 6
          %s835 = sadd.s32 %s833, %s834
          %s836 = smul.addr %s835, 4
          %s837 = scalar_lea.vmem %s2, %s836
          // Predicated region
          $region79: #{ngpt_forward.19} parent=77 // pred_check
            _
          $region80: #{ngpt_forward.19} parent=77 // pred_check_branch
            %839 = sbr.rel (0) target = $region82
          $region81: #{ngpt_forward.19} parent=77 // pred_region
            // Predicated region
            $region83: #{ngpt_forward.19} parent=81 // pred_check
              _
            $region84: #{ngpt_forward.19} parent=81 // pred_check_branch
              %841 = sbr.rel (0) target = $region86
            $region85: #{ngpt_forward.19} parent=81 // pred_region
              // Predicated region
              $region98: #{ngpt_forward.19} parent=85 // pred_check
                _
              $region99: #{ngpt_forward.19} parent=85 // pred_check_branch
                %871 = sbr.rel (0) target = $region101
              $region100: #{ngpt_forward.19} parent=85 // pred_region
                loop: start=0, step=1, limit=1
                $region102: #{ngpt_forward.19} parent=100 // loop_pre_header
                  _
                $region103: #{ngpt_forward.19} parent=100 // loop_header
                  %s873 = sphi 0, %s877
                  %p874 = scmp.ge.s32.totalorder %s873, 1
                  %s878 = sphi %s828, %s828
                  %s879 = sphi %s837, %s837
                $region104: #{ngpt_forward.19} parent=100 // loop_header_branch
                  %876 = sbr.rel (%p874) target = $region108
                $region105: #{ngpt_forward.19} parent=100 // loop_body
                  %v880 = vld [vmem:[%s878] sm:$0xff]
                  %881 = vst [vmem:[%s879] sm:$0xff] %v880
                  %v882 = vld [vmem:[%s878 + $0x8] sm:$0xff]
                  %883 = vst [vmem:[%s879 + $0x18] sm:$0xff] %v882
                  %v884 = vld [vmem:[%s878 + $0x10] sm:$0xff]
                  %885 = vst [vmem:[%s879 + $0x30] sm:$0xff] %v884
                  %v886 = vld [vmem:[%s878 + $0x18] sm:$0xff]
                  %887 = vst [vmem:[%s879 + $0x48] sm:$0xff] %v886
                  %v888 = vld [vmem:[%s878 + $0x20] sm:$0xff]
                  %889 = vst [vmem:[%s879 + $0x60] sm:$0xff] %v888
                  %v890 = vld [vmem:[%s878 + $0x28] sm:$0xff]
                  %891 = vst [vmem:[%s879 + $0x78] sm:$0xff] %v890
                  %v892 = vld [vmem:[%s878 + $0x30] sm:$0xff]
                  %893 = vst [vmem:[%s879 + $0x90] sm:$0xff] %v892
                  %v894 = vld [vmem:[%s878 + $0x38] sm:$0xff]
                  %895 = vst [vmem:[%s879 + $0xa8] sm:$0xff] %v894
                $region106: #{ngpt_forward.19} parent=100 // loop_footer
                  %s877 = sadd.s32 1, %s873
                $region107: #{ngpt_forward.19} parent=100 // loop_footer_branch
                  %872 = sbr.rel target = $region103
                $region108: #{ngpt_forward.19} parent=100 // loop_exit
                  _
              $region101: #{ngpt_forward.19} parent=85 // pred_fallthru
                _
              // Predicated region
              $region109: #{ngpt_forward.19} parent=85 // pred_check
                _
              $region110: #{ngpt_forward.19} parent=85 // pred_check_branch
                %897 = sbr.rel target = $region112
              $region111: #{ngpt_forward.19} parent=85 // pred_region
                _
              $region112: #{ngpt_forward.19} parent=85 // pred_fallthru
                _
            $region86: #{ngpt_forward.19} parent=81 // pred_fallthru
              _
            // Predicated region
            $region87: #{ngpt_forward.19} parent=81 // pred_check
              _
            $region88: #{ngpt_forward.19} parent=81 // pred_check_branch
              %843 = sbr.rel target = $region90
            $region89: #{ngpt_forward.19} parent=81 // pred_region
              %s845 = ssub.s32 256, 1
              loop: start=0, step=1, limit=1
              $region91: #{ngpt_forward.19} parent=89 // loop_pre_header
                _
              $region92: #{ngpt_forward.19} parent=89 // loop_header
                %s847 = sphi 0, %s851
                %p848 = scmp.ge.s32.totalorder %s847, 1
                %s852 = sphi %s828, %s828
                %s853 = sphi %s837, %s837
              $region93: #{ngpt_forward.19} parent=89 // loop_header_branch
                %850 = sbr.rel (%p848) target = $region97
              $region94: #{ngpt_forward.19} parent=89 // loop_body
                %v854 = vld [vmem:[%s852] sm:%s845]
                %855 = vst [vmem:[%s853] sm:%s845] %v854
                %v856 = vld [vmem:[%s852 + $0x8] sm:%s845]
                %857 = vst [vmem:[%s853 + $0x18] sm:%s845] %v856
                %v858 = vld [vmem:[%s852 + $0x10] sm:%s845]
                %859 = vst [vmem:[%s853 + $0x30] sm:%s845] %v858
                %v860 = vld [vmem:[%s852 + $0x18] sm:%s845]
                %861 = vst [vmem:[%s853 + $0x48] sm:%s845] %v860
                %v862 = vld [vmem:[%s852 + $0x20] sm:%s845]
                %863 = vst [vmem:[%s853 + $0x60] sm:%s845] %v862
                %v864 = vld [vmem:[%s852 + $0x28] sm:%s845]
                %865 = vst [vmem:[%s853 + $0x78] sm:%s845] %v864
                %v866 = vld [vmem:[%s852 + $0x30] sm:%s845]
                %867 = vst [vmem:[%s853 + $0x90] sm:%s845] %v866
                %v868 = vld [vmem:[%s852 + $0x38] sm:%s845]
                %869 = vst [vmem:[%s853 + $0xa8] sm:%s845] %v868
              $region95: #{ngpt_forward.19} parent=89 // loop_footer
                %s851 = sadd.s32 1, %s847
              $region96: #{ngpt_forward.19} parent=89 // loop_footer_branch
                %846 = sbr.rel target = $region92
              $region97: #{ngpt_forward.19} parent=89 // loop_exit
                _
            $region90: #{ngpt_forward.19} parent=81 // pred_fallthru
              _
          $region82: #{ngpt_forward.19} parent=77 // pred_fallthru
            _
          %898 = vnop
        $region78: #{ngpt_forward.19} parent=61 // pred_fallthru
          _
      $region62: #{ngpt_forward.19} parent=5 // pred_fallthru
        _
      %p899 = scmp.le.s32.totalorder 2, %s8
      // Predicated region
      $region113: #{ngpt_forward.19} parent=5 // pred_check
        %p900 = pneg %p899
      $region114: #{ngpt_forward.19} parent=5 // pred_check_branch
        %902 = sbr.rel (%p900) target = $region116
      $region115: #{ngpt_forward.19} parent=5 // pred_region
        %s903 = ssub.s32 %s8, 2
        // Predicated region
        $region117: #{ngpt_forward.19} parent=115 // pred_check
          %p904 = pneg %p114
        $region118: #{ngpt_forward.19} parent=115 // pred_check_branch
          %906 = sbr.rel (%p904) target = $region120
        $region119: #{ngpt_forward.19} parent=115 // pred_region
          %s907 = sand.u32 %s99, 1
          %s908 = sand.u32 %s99, 1
          %s909 = smul.addr %s908, 64
          %s910 = scalar_lea.vmem [#allocation4], %s909
        $region120: #{ngpt_forward.19} parent=115 // pred_fallthru
          _
      $region116: #{ngpt_forward.19} parent=5 // pred_fallthru
        _
    $region6: #{ngpt_forward.19} parent=1 // loop_footer
      %s12 = sadd.s32 1, %s8
    $region7: #{ngpt_forward.19} parent=1 // loop_footer_branch
      %7 = sbr.rel target = $region3
    $region8: #{ngpt_forward.19} parent=1 // loop_exit
      _

// kernel: ngpt_forward.17
$region0: #{ngpt_forward.17}
  #allocation0 [shape = 'u32[]', space=smem, size = 0x4, offset = 0x4, fixed_abs, tag = 'smem constant byte address 0x4 - core index']
  #allocation1 [shape = 'u32[144,128]{1,0:T(1,128)}', space=vmem, size = 0x12000, scoped, tag = 'internal scratch']
  #allocation2 [shape = 'f32[64,512]{1,0:T(8,128)}', space=vmem, size = 0x20000, scoped, tag = 'scratch operand']
  #allocation3 [shape = 'f32[64,512]{1,0:T(8,128)}', space=vmem, size = 0x20000, scoped, tag = 'scratch operand']
  %s0 = inlined_call_operand.vmem [shape: bf16[64,256], index: 0, kind: input, shape index: {}]
  %s1 = inlined_call_operand.vmem [shape: bf16[256,1024], index: 1, kind: input, shape index: {}]
  %s2 = inlined_call_operand.vmem [shape: bf16[256,1024], index: 2, kind: input, shape index: {}]
  %s3 = inlined_call_operand.vmem [shape: f32[1,1024], index: 3, kind: input, shape index: {}]
  %s4 = inlined_call_operand.vmem [shape: f32[1,1024], index: 4, kind: input, shape index: {}]
  %s5 = inlined_call_operand.vmem [shape: bf16[64,1024], index: 5, kind: output, shape index: {}]
  %s6 = sld [smem:[#allocation0]]
  $region126: #{ngpt_forward.17} parent=0
    _
  %s8 = ssub.s32 1, %s6
  %s9 = scalar_select 0, %s8, %s6
  $region1: #{ngpt_forward.17} parent=0
    #allocation4 [shape = 'u8[524288]{0}', space=vmem, size = 0x80000, scoped, tag = 'input window, operand 1']
    #allocation5 [shape = 'u8[524288]{0}', space=vmem, size = 0x80000, scoped, tag = 'input window, operand 2']
    #allocation6 [shape = 'u8[131072]{0}', space=vmem, size = 0x20000, scoped, tag = 'output window, operand 0']
    loop: start=0, step=1, limit=4
    $region2: #{ngpt_forward.17} parent=1 // loop_pre_header
      _
    $region3: #{ngpt_forward.17} parent=1 // loop_header
      %s11 = sphi 0, %s15
      %p12 = scmp.ge.s32.totalorder %s11, 4
      %s18 = sphi 0, %s37
      %s19 = sphi 0, %s33
      %s20 = sphi 0, %s29
      %s21 = sphi 0, %s18
      %s22 = sphi 0, %s19
      %s23 = sphi 0, %s20
      %s24 = sphi 0, %s21
      %s25 = sphi 0, %s22
      %s26 = sphi 0, %s23
      %s42 = sphi 0, %s44
      %s45 = sphi 0, %s42
      %s46 = sphi 0, %s45
      %s62 = sphi 0, %s46
      %s70 = sphi 0, %s72
      %s73 = sphi 0, %s70
      %s74 = sphi 0, %s73
      %s90 = sphi 0, %s74
      %s98 = sphi 0, %s100
      %s101 = sphi 0, %s98
      %s102 = sphi 0, %s101
      %s118 = sphi 0, %s102
      %s124 = sphi 0, %s126
      %s127 = sphi 0, %s124
      %s128 = sphi 0, %s127
      %s144 = sphi 0, %s128
      %s150 = sphi 0, %s152
      %s153 = sphi 0, %s150
      %s154 = sphi 0, %s153
      %s170 = sphi 0, %s154
      %s178 = sphi 0, %s180
      %s181 = sphi 0, %s178
      %s182 = sphi 0, %s181
      %s198 = sphi 0, %s182
    $region4: #{ngpt_forward.17} parent=1 // loop_header_branch
      %14 = sbr.rel (%p12) target = $region8
    $region5: #{ngpt_forward.17} parent=1 // loop_body
      %s16 = ssub.s32 %s11, 1
      %s17 = ssub.s32 %s11, 2
      %s27 = sadd.s32 1, %s20
      %p28 = scmp.ge.s32.totalorder %s27, 1
      %s29 = scalar_select %p28, 0, %s27
      %s30 = sadd.s32 1, %s19
      %s31 = scalar_select %p28, %s30, %s19
      %p32 = scmp.ge.s32.totalorder %s31, 2
      %s33 = scalar_select %p32, 0, %s31
      %s34 = sadd.s32 1, %s18
      %s35 = scalar_select %p32, %s34, %s18
      %p36 = scmp.ge.s32.totalorder %s35, 1
      %s37 = scalar_select %p36, 0, %s35
      %s38 = ssub.s32 %s18, %s37
      %s39 = ssub.s32 %s20, %s29
      %s40 = sor.u32 %s38, %s39
      %p41 = scmp.eq.s32.totalorder %s40, 0
      %s43 = sadd.s32 %s42, 1
      %s44 = scalar_select %p41, %s42, %s43
      %p47 = pneg %p41
      %p48 = scmp.eq.s32.totalorder %s11, 1
      %p49 = por %p47, %p48
      %p50 = scmp.ne.s32.totalorder %s42, %s45
      %p51 = scmp.eq.s32.totalorder %s11, 0
      %p52 = por %p50, %p51
      %p53 = scmp.ne.s32.totalorder %s42, %s45
      %p54 = scmp.eq.s32.totalorder %s16, 1
      %p55 = por %p53, %p54
      %p56 = scmp.ne.s32.totalorder %s45, %s46
      %p57 = scmp.eq.s32.totalorder %s16, 0
      %p58 = por %p56, %p57
      %p59 = scmp.ne.s32.totalorder %s45, %s46
      %p60 = scmp.eq.s32.totalorder %s17, 1
      %p61 = por %p59, %p60
      %p63 = scmp.ne.s32.totalorder %s46, %s62
      %p64 = scmp.eq.s32.totalorder %s17, 0
      %p65 = por %p63, %p64
      %s66 = ssub.s32 %s20, %s29
      %s67 = ssub.s32 %s19, %s33
      %s68 = sor.u32 %s66, %s67
      %p69 = scmp.eq.s32.totalorder %s68, 0
      %s71 = sadd.s32 %s70, 1
      %s72 = scalar_select %p69, %s70, %s71
      %p75 = pneg %p69
      %p76 = scmp.eq.s32.totalorder %s11, 1
      %p77 = por %p75, %p76
      %p78 = scmp.ne.s32.totalorder %s70, %s73
      %p79 = scmp.eq.s32.totalorder %s11, 0
      %p80 = por %p78, %p79
      %p81 = scmp.ne.s32.totalorder %s70, %s73
      %p82 = scmp.eq.s32.totalorder %s16, 1
      %p83 = por %p81, %p82
      %p84 = scmp.ne.s32.totalorder %s73, %s74
      %p85 = scmp.eq.s32.totalorder %s16, 0
      %p86 = por %p84, %p85
      %p87 = scmp.ne.s32.totalorder %s73, %s74
      %p88 = scmp.eq.s32.totalorder %s17, 1
      %p89 = por %p87, %p88
      %p91 = scmp.ne.s32.totalorder %s74, %s90
      %p92 = scmp.eq.s32.totalorder %s17, 0
      %p93 = por %p91, %p92
      %s94 = ssub.s32 %s20, %s29
      %s95 = ssub.s32 %s19, %s33
      %s96 = sor.u32 %s94, %s95
      %p97 = scmp.eq.s32.totalorder %s96, 0
      %s99 = sadd.s32 %s98, 1
      %s100 = scalar_select %p97, %s98, %s99
      %p103 = pneg %p97
      %p104 = scmp.eq.s32.totalorder %s11, 1
      %p105 = por %p103, %p104
      %p106 = scmp.ne.s32.totalorder %s98, %s101
      %p107 = scmp.eq.s32.totalorder %s11, 0
      %p108 = por %p106, %p107
      %p109 = scmp.ne.s32.totalorder %s98, %s101
      %p110 = scmp.eq.s32.totalorder %s16, 1
      %p111 = por %p109, %p110
      %p112 = scmp.ne.s32.totalorder %s101, %s102
      %p113 = scmp.eq.s32.totalorder %s16, 0
      %p114 = por %p112, %p113
      %p115 = scmp.ne.s32.totalorder %s101, %s102
      %p116 = scmp.eq.s32.totalorder %s17, 1
      %p117 = por %p115, %p116
      %p119 = scmp.ne.s32.totalorder %s102, %s118
      %p120 = scmp.eq.s32.totalorder %s17, 0
      %p121 = por %p119, %p120
      %s122 = ssub.s32 %s19, %s33
      %p123 = scmp.eq.s32.totalorder %s122, 0
      %s125 = sadd.s32 %s124, 1
      %s126 = scalar_select %p123, %s124, %s125
      %p129 = pneg %p123
      %p130 = scmp.eq.s32.totalorder %s11, 1
      %p131 = por %p129, %p130
      %p132 = scmp.ne.s32.totalorder %s124, %s127
      %p133 = scmp.eq.s32.totalorder %s11, 0
      %p134 = por %p132, %p133
      %p135 = scmp.ne.s32.totalorder %s124, %s127
      %p136 = scmp.eq.s32.totalorder %s16, 1
      %p137 = por %p135, %p136
      %p138 = scmp.ne.s32.totalorder %s127, %s128
      %p139 = scmp.eq.s32.totalorder %s16, 0
      %p140 = por %p138, %p139
      %p141 = scmp.ne.s32.totalorder %s127, %s128
      %p142 = scmp.eq.s32.totalorder %s17, 1
      %p143 = por %p141, %p142
      %p145 = scmp.ne.s32.totalorder %s128, %s144
      %p146 = scmp.eq.s32.totalorder %s17, 0
      %p147 = por %p145, %p146
      %s148 = ssub.s32 %s19, %s33
      %p149 = scmp.eq.s32.totalorder %s148, 0
      %s151 = sadd.s32 %s150, 1
      %s152 = scalar_select %p149, %s150, %s151
      %p155 = pneg %p149
      %p156 = scmp.eq.s32.totalorder %s11, 1
      %p157 = por %p155, %p156
      %p158 = scmp.ne.s32.totalorder %s150, %s153
      %p159 = scmp.eq.s32.totalorder %s11, 0
      %p160 = por %p158, %p159
      %p161 = scmp.ne.s32.totalorder %s150, %s153
      %p162 = scmp.eq.s32.totalorder %s16, 1
      %p163 = por %p161, %p162
      %p164 = scmp.ne.s32.totalorder %s153, %s154
      %p165 = scmp.eq.s32.totalorder %s16, 0
      %p166 = por %p164, %p165
      %p167 = scmp.ne.s32.totalorder %s153, %s154
      %p168 = scmp.eq.s32.totalorder %s17, 1
      %p169 = por %p167, %p168
      %p171 = scmp.ne.s32.totalorder %s154, %s170
      %p172 = scmp.eq.s32.totalorder %s17, 0
      %p173 = por %p171, %p172
      %s174 = ssub.s32 %s18, %s37
      %s175 = ssub.s32 %s19, %s33
      %s176 = sor.u32 %s174, %s175
      %p177 = scmp.eq.s32.totalorder %s176, 0
      %s179 = sadd.s32 %s178, 1
      %s180 = scalar_select %p177, %s178, %s179
      %p183 = pneg %p177
      %p184 = scmp.eq.s32.totalorder %s11, 1
      %p185 = por %p183, %p184
      %p186 = scmp.ne.s32.totalorder %s178, %s181
      %p187 = scmp.eq.s32.totalorder %s11, 0
      %p188 = por %p186, %p187
      %p189 = scmp.ne.s32.totalorder %s178, %s181
      %p190 = scmp.eq.s32.totalorder %s16, 1
      %p191 = por %p189, %p190
      %p192 = scmp.ne.s32.totalorder %s181, %s182
      %p193 = scmp.eq.s32.totalorder %s16, 0
      %p194 = por %p192, %p193
      %p195 = scmp.ne.s32.totalorder %s181, %s182
      %p196 = scmp.eq.s32.totalorder %s17, 1
      %p197 = por %p195, %p196
      %p199 = scmp.ne.s32.totalorder %s182, %s198
      %p200 = scmp.eq.s32.totalorder %s17, 0
      %p201 = por %p199, %p200
      %p202 = scmp.le.s32.totalorder 1, %s11
      %p203 = scmp.lt.s32.totalorder %s11, 3
      %p204 = pnand %p202, %p203
      %p205 = pneg %p204
      // Predicated region
      $region9: #{ngpt_forward.17} parent=5 // pred_check
        _
      $region10: #{ngpt_forward.17} parent=5 // pred_check_branch
        %207 = sbr.rel (%p204) target = $region12
      $region11: #{ngpt_forward.17} parent=5 // pred_region
        %s208 = ssub.s32 %s11, 1
        // Predicated region
        $region13: #{ngpt_forward.17} parent=11 // pred_check
          %p209 = pneg %p58
        $region14: #{ngpt_forward.17} parent=11 // pred_check_branch
          %211 = sbr.rel (%p209) target = $region16
        $region15: #{ngpt_forward.17} parent=11 // pred_region
          %s212 = smul.u32 8, %s21
          %s213 = smul.u32 2, %s23
          %p214 = scmp.lt.s32.totalorder %s212, 7
          %s215 = scalar_select %p214, %s212, 7
          %p216 = scmp.lt.s32.totalorder %s213, 1
          %s217 = scalar_select %p216, %s213, 1
          %s218 = smul.addr %s215, 2
          %s219 = sadd.s32 %s217, %s218
          %s220 = smul.addr %s219, 4
          %s221 = scalar_lea.vmem %s0, %s220
          %s222 = smul.u32 8, %s21
          %s223 = smul.u32 2, %s23
        $region16: #{ngpt_forward.17} parent=11 // pred_fallthru
          _
      $region12: #{ngpt_forward.17} parent=5 // pred_fallthru
        _
      %p224 = scmp.lt.s32.totalorder %s11, 2
      // Predicated region
      $region17: #{ngpt_forward.17} parent=5 // pred_check
        %p225 = pneg %p224
      $region18: #{ngpt_forward.17} parent=5 // pred_check_branch
        %227 = sbr.rel (%p225) target = $region20
      $region19: #{ngpt_forward.17} parent=5 // pred_region
        // Predicated region
        $region21: #{ngpt_forward.17} parent=19 // pred_check
          %p228 = pneg %p80
        $region22: #{ngpt_forward.17} parent=19 // pred_check_branch
          %230 = sbr.rel (%p228) target = $region24
        $region23: #{ngpt_forward.17} parent=19 // pred_region
          %s231 = sand.u32 %s70, 1
          %s232 = sand.u32 %s70, 1
          %s233 = smul.addr %s232, 512
          %s234 = scalar_lea.vmem [#allocation4], %s233
          %s235 = smul.u32 32, %s20
          %s236 = smul.u32 4, %s19
          %s237 = smul.addr %s235, 8
          %s238 = sadd.s32 %s236, %s237
          %s239 = smul.addr %s238, 4
          %s240 = scalar_lea.vmem %s1, %s239
          // Predicated region
          $region25: #{ngpt_forward.17} parent=23 // pred_check
            _
          $region26: #{ngpt_forward.17} parent=23 // pred_check_branch
            %242 = sbr.rel (0) target = $region28
          $region27: #{ngpt_forward.17} parent=23 // pred_region
            // Predicated region
            $region29: #{ngpt_forward.17} parent=27 // pred_check
              _
            $region30: #{ngpt_forward.17} parent=27 // pred_check_branch
              %244 = sbr.rel (0) target = $region32
            $region31: #{ngpt_forward.17} parent=27 // pred_region
              loop: start=0, step=1, limit=1
              $region33: #{ngpt_forward.17} parent=31 // loop_pre_header
                _
              $region34: #{ngpt_forward.17} parent=31 // loop_header
                %s246 = sphi 0, %s250
                %p247 = scmp.ge.s32.totalorder %s246, 1
                %s251 = sphi %s240, %s240
                %s252 = sphi %s234, %s234
              $region35: #{ngpt_forward.17} parent=31 // loop_header_branch
                %249 = sbr.rel (%p247) target = $region39
              $region36: #{ngpt_forward.17} parent=31 // loop_body
                %v253 = vld [vmem:[%s251] sm:$0xff]
                %254 = vst [vmem:[%s252] sm:$0xff] %v253
                %v255 = vld [vmem:[%s251 + $0x8] sm:$0xff]
                %256 = vst [vmem:[%s252 + $0x8] sm:$0xff] %v255
                %v257 = vld [vmem:[%s251 + $0x20] sm:$0xff]
                %258 = vst [vmem:[%s252 + $0x10] sm:$0xff] %v257
                %v259 = vld [vmem:[%s251 + $0x28] sm:$0xff]
                %260 = vst [vmem:[%s252 + $0x18] sm:$0xff] %v259
                %v261 = vld [vmem:[%s251 + $0x40] sm:$0xff]
                %262 = vst [vmem:[%s252 + $0x20] sm:$0xff] %v261
                %v263 = vld [vmem:[%s251 + $0x48] sm:$0xff]
                %264 = vst [vmem:[%s252 + $0x28] sm:$0xff] %v263
                %v265 = vld [vmem:[%s251 + $0x60] sm:$0xff]
                %266 = vst [vmem:[%s252 + $0x30] sm:$0xff] %v265
                %v267 = vld [vmem:[%s251 + $0x68] sm:$0xff]
                %268 = vst [vmem:[%s252 + $0x38] sm:$0xff] %v267
                %v269 = vld [vmem:[%s251 + $0x80] sm:$0xff]
                %270 = vst [vmem:[%s252 + $0x40] sm:$0xff] %v269
                %v271 = vld [vmem:[%s251 + $0x88] sm:$0xff]
                %272 = vst [vmem:[%s252 + $0x48] sm:$0xff] %v271
                %v273 = vld [vmem:[%s251 + $0xa0] sm:$0xff]
                %274 = vst [vmem:[%s252 + $0x50] sm:$0xff] %v273
                %v275 = vld [vmem:[%s251 + $0xa8] sm:$0xff]
                %276 = vst [vmem:[%s252 + $0x58] sm:$0xff] %v275
                %v277 = vld [vmem:[%s251 + $0xc0] sm:$0xff]
                %278 = vst [vmem:[%s252 + $0x60] sm:$0xff] %v277
                %v279 = vld [vmem:[%s251 + $0xc8] sm:$0xff]
                %280 = vst [vmem:[%s252 + $0x68] sm:$0xff] %v279
                %v281 = vld [vmem:[%s251 + $0xe0] sm:$0xff]
                %282 = vst [vmem:[%s252 + $0x70] sm:$0xff] %v281
                %v283 = vld [vmem:[%s251 + $0xe8] sm:$0xff]
                %284 = vst [vmem:[%s252 + $0x78] sm:$0xff] %v283
                %v285 = vld [vmem:[%s251 + $0x100] sm:$0xff]
                %286 = vst [vmem:[%s252 + $0x80] sm:$0xff] %v285
                %v287 = vld [vmem:[%s251 + $0x108] sm:$0xff]
                %288 = vst [vmem:[%s252 + $0x88] sm:$0xff] %v287
                %v289 = vld [vmem:[%s251 + $0x120] sm:$0xff]
                %290 = vst [vmem:[%s252 + $0x90] sm:$0xff] %v289
                %v291 = vld [vmem:[%s251 + $0x128] sm:$0xff]
                %292 = vst [vmem:[%s252 + $0x98] sm:$0xff] %v291
                %v293 = vld [vmem:[%s251 + $0x140] sm:$0xff]
                %294 = vst [vmem:[%s252 + $0xa0] sm:$0xff] %v293
                %v295 = vld [vmem:[%s251 + $0x148] sm:$0xff]
                %296 = vst [vmem:[%s252 + $0xa8] sm:$0xff] %v295
                %v297 = vld [vmem:[%s251 + $0x160] sm:$0xff]
                %298 = vst [vmem:[%s252 + $0xb0] sm:$0xff] %v297
                %v299 = vld [vmem:[%s251 + $0x168] sm:$0xff]
                %300 = vst [vmem:[%s252 + $0xb8] sm:$0xff] %v299
                %v301 = vld [vmem:[%s251 + $0x180] sm:$0xff]
                %302 = vst [vmem:[%s252 + $0xc0] sm:$0xff] %v301
                %v303 = vld [vmem:[%s251 + $0x188] sm:$0xff]
                %304 = vst [vmem:[%s252 + $0xc8] sm:$0xff] %v303
                %v305 = vld [vmem:[%s251 + $0x1a0] sm:$0xff]
                %306 = vst [vmem:[%s252 + $0xd0] sm:$0xff] %v305
                %v307 = vld [vmem:[%s251 + $0x1a8] sm:$0xff]
                %308 = vst [vmem:[%s252 + $0xd8] sm:$0xff] %v307
                %v309 = vld [vmem:[%s251 + $0x1c0] sm:$0xff]
                %310 = vst [vmem:[%s252 + $0xe0] sm:$0xff] %v309
                %v311 = vld [vmem:[%s251 + $0x1c8] sm:$0xff]
                %312 = vst [vmem:[%s252 + $0xe8] sm:$0xff] %v311
                %v313 = vld [vmem:[%s251 + $0x1e0] sm:$0xff]
                %314 = vst [vmem:[%s252 + $0xf0] sm:$0xff] %v313
                %v315 = vld [vmem:[%s251 + $0x1e8] sm:$0xff]
                %316 = vst [vmem:[%s252 + $0xf8] sm:$0xff] %v315
                %v317 = vld [vmem:[%s251 + $0x200] sm:$0xff]
                %318 = vst [vmem:[%s252 + $0x100] sm:$0xff] %v317
                %v319 = vld [vmem:[%s251 + $0x208] sm:$0xff]
                %320 = vst [vmem:[%s252 + $0x108] sm:$0xff] %v319
                %v321 = vld [vmem:[%s251 + $0x220] sm:$0xff]
                %322 = vst [vmem:[%s252 + $0x110] sm:$0xff] %v321
                %v323 = vld [vmem:[%s251 + $0x228] sm:$0xff]
                %324 = vst [vmem:[%s252 + $0x118] sm:$0xff] %v323
                %v325 = vld [vmem:[%s251 + $0x240] sm:$0xff]
                %326 = vst [vmem:[%s252 + $0x120] sm:$0xff] %v325
                %v327 = vld [vmem:[%s251 + $0x248] sm:$0xff]
                %328 = vst [vmem:[%s252 + $0x128] sm:$0xff] %v327
                %v329 = vld [vmem:[%s251 + $0x260] sm:$0xff]
                %330 = vst [vmem:[%s252 + $0x130] sm:$0xff] %v329
                %v331 = vld [vmem:[%s251 + $0x268] sm:$0xff]
                %332 = vst [vmem:[%s252 + $0x138] sm:$0xff] %v331
                %v333 = vld [vmem:[%s251 + $0x280] sm:$0xff]
                %334 = vst [vmem:[%s252 + $0x140] sm:$0xff] %v333
                %v335 = vld [vmem:[%s251 + $0x288] sm:$0xff]
                %336 = vst [vmem:[%s252 + $0x148] sm:$0xff] %v335
                %v337 = vld [vmem:[%s251 + $0x2a0] sm:$0xff]
                %338 = vst [vmem:[%s252 + $0x150] sm:$0xff] %v337
                %v339 = vld [vmem:[%s251 + $0x2a8] sm:$0xff]
                %340 = vst [vmem:[%s252 + $0x158] sm:$0xff] %v339
                %v341 = vld [vmem:[%s251 + $0x2c0] sm:$0xff]
                %342 = vst [vmem:[%s252 + $0x160] sm:$0xff] %v341
                %v343 = vld [vmem:[%s251 + $0x2c8] sm:$0xff]
                %344 = vst [vmem:[%s252 + $0x168] sm:$0xff] %v343
                %v345 = vld [vmem:[%s251 + $0x2e0] sm:$0xff]
                %346 = vst [vmem:[%s252 + $0x170] sm:$0xff] %v345
                %v347 = vld [vmem:[%s251 + $0x2e8] sm:$0xff]
                %348 = vst [vmem:[%s252 + $0x178] sm:$0xff] %v347
                %v349 = vld [vmem:[%s251 + $0x300] sm:$0xff]
                %350 = vst [vmem:[%s252 + $0x180] sm:$0xff] %v349
                %v351 = vld [vmem:[%s251 + $0x308] sm:$0xff]
                %352 = vst [vmem:[%s252 + $0x188] sm:$0xff] %v351
                %v353 = vld [vmem:[%s251 + $0x320] sm:$0xff]
                %354 = vst [vmem:[%s252 + $0x190] sm:$0xff] %v353
                %v355 = vld [vmem:[%s251 + $0x328] sm:$0xff]
                %356 = vst [vmem:[%s252 + $0x198] sm:$0xff] %v355
                %v357 = vld [vmem:[%s251 + $0x340] sm:$0xff]
                %358 = vst [vmem:[%s252 + $0x1a0] sm:$0xff] %v357
                %v359 = vld [vmem:[%s251 + $0x348] sm:$0xff]
                %360 = vst [vmem:[%s252 + $0x1a8] sm:$0xff] %v359
                %v361 = vld [vmem:[%s251 + $0x360] sm:$0xff]
                %362 = vst [vmem:[%s252 + $0x1b0] sm:$0xff] %v361
                %v363 = vld [vmem:[%s251 + $0x368] sm:$0xff]
                %364 = vst [vmem:[%s252 + $0x1b8] sm:$0xff] %v363
                %v365 = vld [vmem:[%s251 + $0x380] sm:$0xff]
                %366 = vst [vmem:[%s252 + $0x1c0] sm:$0xff] %v365
                %v367 = vld [vmem:[%s251 + $0x388] sm:$0xff]
                %368 = vst [vmem:[%s252 + $0x1c8] sm:$0xff] %v367
                %v369 = vld [vmem:[%s251 + $0x3a0] sm:$0xff]
                %370 = vst [vmem:[%s252 + $0x1d0] sm:$0xff] %v369
                %v371 = vld [vmem:[%s251 + $0x3a8] sm:$0xff]
                %372 = vst [vmem:[%s252 + $0x1d8] sm:$0xff] %v371
                %v373 = vld [vmem:[%s251 + $0x3c0] sm:$0xff]
                %374 = vst [vmem:[%s252 + $0x1e0] sm:$0xff] %v373
                %v375 = vld [vmem:[%s251 + $0x3c8] sm:$0xff]
                %376 = vst [vmem:[%s252 + $0x1e8] sm:$0xff] %v375
                %v377 = vld [vmem:[%s251 + $0x3e0] sm:$0xff]
                %378 = vst [vmem:[%s252 + $0x1f0] sm:$0xff] %v377
                %v379 = vld [vmem:[%s251 + $0x3e8] sm:$0xff]
                %380 = vst [vmem:[%s252 + $0x1f8] sm:$0xff] %v379
              $region37: #{ngpt_forward.17} parent=31 // loop_footer
                %s250 = sadd.s32 1, %s246
              $region38: #{ngpt_forward.17} parent=31 // loop_footer_branch
                %245 = sbr.rel target = $region34
              $region39: #{ngpt_forward.17} parent=31 // loop_exit
                _
            $region32: #{ngpt_forward.17} parent=27 // pred_fallthru
              _
            // Predicated region
            $region40: #{ngpt_forward.17} parent=27 // pred_check
              _
            $region41: #{ngpt_forward.17} parent=27 // pred_check_branch
              %382 = sbr.rel target = $region43
            $region42: #{ngpt_forward.17} parent=27 // pred_region
              _
            $region43: #{ngpt_forward.17} parent=27 // pred_fallthru
              _
          $region28: #{ngpt_forward.17} parent=23 // pred_fallthru
            _
          %383 = vnop
        $region24: #{ngpt_forward.17} parent=19 // pred_fallthru
          _
        // Predicated region
        $region44: #{ngpt_forward.17} parent=19 // pred_check
          %p384 = pneg %p108
        $region45: #{ngpt_forward.17} parent=19 // pred_check_branch
          %386 = sbr.rel (%p384) target = $region47
        $region46: #{ngpt_forward.17} parent=19 // pred_region
          %s387 = sand.u32 %s98, 1
          %s388 = sand.u32 %s98, 1
          %s389 = smul.addr %s388, 512
          %s390 = scalar_lea.vmem [#allocation5], %s389
          %s391 = smul.u32 32, %s20
          %s392 = smul.u32 4, %s19
          %s393 = smul.addr %s391, 8
          %s394 = sadd.s32 %s392, %s393
          %s395 = smul.addr %s394, 4
          %s396 = scalar_lea.vmem %s2, %s395
          // Predicated region
          $region48: #{ngpt_forward.17} parent=46 // pred_check
            _
          $region49: #{ngpt_forward.17} parent=46 // pred_check_branch
            %398 = sbr.rel (0) target = $region51
          $region50: #{ngpt_forward.17} parent=46 // pred_region
            // Predicated region
            $region52: #{ngpt_forward.17} parent=50 // pred_check
              _
            $region53: #{ngpt_forward.17} parent=50 // pred_check_branch
              %400 = sbr.rel (0) target = $region55
            $region54: #{ngpt_forward.17} parent=50 // pred_region
              loop: start=0, step=1, limit=1
              $region56: #{ngpt_forward.17} parent=54 // loop_pre_header
                _
              $region57: #{ngpt_forward.17} parent=54 // loop_header
                %s402 = sphi 0, %s406
                %p403 = scmp.ge.s32.totalorder %s402, 1
                %s407 = sphi %s396, %s396
                %s408 = sphi %s390, %s390
              $region58: #{ngpt_forward.17} parent=54 // loop_header_branch
                %405 = sbr.rel (%p403) target = $region62
              $region59: #{ngpt_forward.17} parent=54 // loop_body
                %v409 = vld [vmem:[%s407] sm:$0xff]
                %410 = vst [vmem:[%s408] sm:$0xff] %v409
                %v411 = vld [vmem:[%s407 + $0x8] sm:$0xff]
                %412 = vst [vmem:[%s408 + $0x8] sm:$0xff] %v411
                %v413 = vld [vmem:[%s407 + $0x20] sm:$0xff]
                %414 = vst [vmem:[%s408 + $0x10] sm:$0xff] %v413
                %v415 = vld [vmem:[%s407 + $0x28] sm:$0xff]
                %416 = vst [vmem:[%s408 + $0x18] sm:$0xff] %v415
                %v417 = vld [vmem:[%s407 + $0x40] sm:$0xff]
                %418 = vst [vmem:[%s408 + $0x20] sm:$0xff] %v417
                %v419 = vld [vmem:[%s407 + $0x48] sm:$0xff]
                %420 = vst [vmem:[%s408 + $0x28] sm:$0xff] %v419
                %v421 = vld [vmem:[%s407 + $0x60] sm:$0xff]
                %422 = vst [vmem:[%s408 + $0x30] sm:$0xff] %v421
                %v423 = vld [vmem:[%s407 + $0x68] sm:$0xff]
                %424 = vst [vmem:[%s408 + $0x38] sm:$0xff] %v423
                %v425 = vld [vmem:[%s407 + $0x80] sm:$0xff]
                %426 = vst [vmem:[%s408 + $0x40] sm:$0xff] %v425
                %v427 = vld [vmem:[%s407 + $0x88] sm:$0xff]
                %428 = vst [vmem:[%s408 + $0x48] sm:$0xff] %v427
                %v429 = vld [vmem:[%s407 + $0xa0] sm:$0xff]
                %430 = vst [vmem:[%s408 + $0x50] sm:$0xff] %v429
                %v431 = vld [vmem:[%s407 + $0xa8] sm:$0xff]
                %432 = vst [vmem:[%s408 + $0x58] sm:$0xff] %v431
                %v433 = vld [vmem:[%s407 + $0xc0] sm:$0xff]
                %434 = vst [vmem:[%s408 + $0x60] sm:$0xff] %v433
                %v435 = vld [vmem:[%s407 + $0xc8] sm:$0xff]
                %436 = vst [vmem:[%s408 + $0x68] sm:$0xff] %v435
                %v437 = vld [vmem:[%s407 + $0xe0] sm:$0xff]
                %438 = vst [vmem:[%s408 + $0x70] sm:$0xff] %v437
                %v439 = vld [vmem:[%s407 + $0xe8] sm:$0xff]
                %440 = vst [vmem:[%s408 + $0x78] sm:$0xff] %v439
                %v441 = vld [vmem:[%s407 + $0x100] sm:$0xff]
                %442 = vst [vmem:[%s408 + $0x80] sm:$0xff] %v441
                %v443 = vld [vmem:[%s407 + $0x108] sm:$0xff]
                %444 = vst [vmem:[%s408 + $0x88] sm:$0xff] %v443
                %v445 = vld [vmem:[%s407 + $0x120] sm:$0xff]
                %446 = vst [vmem:[%s408 + $0x90] sm:$0xff] %v445
                %v447 = vld [vmem:[%s407 + $0x128] sm:$0xff]
                %448 = vst [vmem:[%s408 + $0x98] sm:$0xff] %v447
                %v449 = vld [vmem:[%s407 + $0x140] sm:$0xff]
                %450 = vst [vmem:[%s408 + $0xa0] sm:$0xff] %v449
                %v451 = vld [vmem:[%s407 + $0x148] sm:$0xff]
                %452 = vst [vmem:[%s408 + $0xa8] sm:$0xff] %v451
                %v453 = vld [vmem:[%s407 + $0x160] sm:$0xff]
                %454 = vst [vmem:[%s408 + $0xb0] sm:$0xff] %v453
                %v455 = vld [vmem:[%s407 + $0x168] sm:$0xff]
                %456 = vst [vmem:[%s408 + $0xb8] sm:$0xff] %v455
                %v457 = vld [vmem:[%s407 + $0x180] sm:$0xff]
                %458 = vst [vmem:[%s408 + $0xc0] sm:$0xff] %v457
                %v459 = vld [vmem:[%s407 + $0x188] sm:$0xff]
                %460 = vst [vmem:[%s408 + $0xc8] sm:$0xff] %v459
                %v461 = vld [vmem:[%s407 + $0x1a0] sm:$0xff]
                %462 = vst [vmem:[%s408 + $0xd0] sm:$0xff] %v461
                %v463 = vld [vmem:[%s407 + $0x1a8] sm:$0xff]
                %464 = vst [vmem:[%s408 + $0xd8] sm:$0xff] %v463
                %v465 = vld [vmem:[%s407 + $0x1c0] sm:$0xff]
                %466 = vst [vmem:[%s408 + $0xe0] sm:$0xff] %v465
                %v467 = vld [vmem:[%s407 + $0x1c8] sm:$0xff]
                %468 = vst [vmem:[%s408 + $0xe8] sm:$0xff] %v467
                %v469 = vld [vmem:[%s407 + $0x1e0] sm:$0xff]
                %470 = vst [vmem:[%s408 + $0xf0] sm:$0xff] %v469
                %v471 = vld [vmem:[%s407 + $0x1e8] sm:$0xff]
                %472 = vst [vmem:[%s408 + $0xf8] sm:$0xff] %v471
                %v473 = vld [vmem:[%s407 + $0x200] sm:$0xff]
                %474 = vst [vmem:[%s408 + $0x100] sm:$0xff] %v473
                %v475 = vld [vmem:[%s407 + $0x208] sm:$0xff]
                %476 = vst [vmem:[%s408 + $0x108] sm:$0xff] %v475
                %v477 = vld [vmem:[%s407 + $0x220] sm:$0xff]
                %478 = vst [vmem:[%s408 + $0x110] sm:$0xff] %v477
                %v479 = vld [vmem:[%s407 + $0x228] sm:$0xff]
                %480 = vst [vmem:[%s408 + $0x118] sm:$0xff] %v479
                %v481 = vld [vmem:[%s407 + $0x240] sm:$0xff]
                %482 = vst [vmem:[%s408 + $0x120] sm:$0xff] %v481
                %v483 = vld [vmem:[%s407 + $0x248] sm:$0xff]
                %484 = vst [vmem:[%s408 + $0x128] sm:$0xff] %v483
                %v485 = vld [vmem:[%s407 + $0x260] sm:$0xff]
                %486 = vst [vmem:[%s408 + $0x130] sm:$0xff] %v485
                %v487 = vld [vmem:[%s407 + $0x268] sm:$0xff]
                %488 = vst [vmem:[%s408 + $0x138] sm:$0xff] %v487
                %v489 = vld [vmem:[%s407 + $0x280] sm:$0xff]
                %490 = vst [vmem:[%s408 + $0x140] sm:$0xff] %v489
                %v491 = vld [vmem:[%s407 + $0x288] sm:$0xff]
                %492 = vst [vmem:[%s408 + $0x148] sm:$0xff] %v491
                %v493 = vld [vmem:[%s407 + $0x2a0] sm:$0xff]
                %494 = vst [vmem:[%s408 + $0x150] sm:$0xff] %v493
                %v495 = vld [vmem:[%s407 + $0x2a8] sm:$0xff]
                %496 = vst [vmem:[%s408 + $0x158] sm:$0xff] %v495
                %v497 = vld [vmem:[%s407 + $0x2c0] sm:$0xff]
                %498 = vst [vmem:[%s408 + $0x160] sm:$0xff] %v497
                %v499 = vld [vmem:[%s407 + $0x2c8] sm:$0xff]
                %500 = vst [vmem:[%s408 + $0x168] sm:$0xff] %v499
                %v501 = vld [vmem:[%s407 + $0x2e0] sm:$0xff]
                %502 = vst [vmem:[%s408 + $0x170] sm:$0xff] %v501
                %v503 = vld [vmem:[%s407 + $0x2e8] sm:$0xff]
                %504 = vst [vmem:[%s408 + $0x178] sm:$0xff] %v503
                %v505 = vld [vmem:[%s407 + $0x300] sm:$0xff]
                %506 = vst [vmem:[%s408 + $0x180] sm:$0xff] %v505
                %v507 = vld [vmem:[%s407 + $0x308] sm:$0xff]
                %508 = vst [vmem:[%s408 + $0x188] sm:$0xff] %v507
                %v509 = vld [vmem:[%s407 + $0x320] sm:$0xff]
                %510 = vst [vmem:[%s408 + $0x190] sm:$0xff] %v509
                %v511 = vld [vmem:[%s407 + $0x328] sm:$0xff]
                %512 = vst [vmem:[%s408 + $0x198] sm:$0xff] %v511
                %v513 = vld [vmem:[%s407 + $0x340] sm:$0xff]
                %514 = vst [vmem:[%s408 + $0x1a0] sm:$0xff] %v513
                %v515 = vld [vmem:[%s407 + $0x348] sm:$0xff]
                %516 = vst [vmem:[%s408 + $0x1a8] sm:$0xff] %v515
                %v517 = vld [vmem:[%s407 + $0x360] sm:$0xff]
                %518 = vst [vmem:[%s408 + $0x1b0] sm:$0xff] %v517
                %v519 = vld [vmem:[%s407 + $0x368] sm:$0xff]
                %520 = vst [vmem:[%s408 + $0x1b8] sm:$0xff] %v519
                %v521 = vld [vmem:[%s407 + $0x380] sm:$0xff]
                %522 = vst [vmem:[%s408 + $0x1c0] sm:$0xff] %v521
                %v523 = vld [vmem:[%s407 + $0x388] sm:$0xff]
                %524 = vst [vmem:[%s408 + $0x1c8] sm:$0xff] %v523
                %v525 = vld [vmem:[%s407 + $0x3a0] sm:$0xff]
                %526 = vst [vmem:[%s408 + $0x1d0] sm:$0xff] %v525
                %v527 = vld [vmem:[%s407 + $0x3a8] sm:$0xff]
                %528 = vst [vmem:[%s408 + $0x1d8] sm:$0xff] %v527
                %v529 = vld [vmem:[%s407 + $0x3c0] sm:$0xff]
                %530 = vst [vmem:[%s408 + $0x1e0] sm:$0xff] %v529
                %v531 = vld [vmem:[%s407 + $0x3c8] sm:$0xff]
                %532 = vst [vmem:[%s408 + $0x1e8] sm:$0xff] %v531
                %v533 = vld [vmem:[%s407 + $0x3e0] sm:$0xff]
                %534 = vst [vmem:[%s408 + $0x1f0] sm:$0xff] %v533
                %v535 = vld [vmem:[%s407 + $0x3e8] sm:$0xff]
                %536 = vst [vmem:[%s408 + $0x1f8] sm:$0xff] %v535
              $region60: #{ngpt_forward.17} parent=54 // loop_footer
                %s406 = sadd.s32 1, %s402
              $region61: #{ngpt_forward.17} parent=54 // loop_footer_branch
                %401 = sbr.rel target = $region57
              $region62: #{ngpt_forward.17} parent=54 // loop_exit
                _
            $region55: #{ngpt_forward.17} parent=50 // pred_fallthru
              _
            // Predicated region
            $region63: #{ngpt_forward.17} parent=50 // pred_check
              _
            $region64: #{ngpt_forward.17} parent=50 // pred_check_branch
              %538 = sbr.rel target = $region66
            $region65: #{ngpt_forward.17} parent=50 // pred_region
              _
            $region66: #{ngpt_forward.17} parent=50 // pred_fallthru
              _
          $region51: #{ngpt_forward.17} parent=46 // pred_fallthru
            _
          %539 = vnop
        $region47: #{ngpt_forward.17} parent=19 // pred_fallthru
          _
        // Predicated region
        $region67: #{ngpt_forward.17} parent=19 // pred_check
          %p540 = pneg %p134
        $region68: #{ngpt_forward.17} parent=19 // pred_check_branch
          %542 = sbr.rel (%p540) target = $region70
        $region69: #{ngpt_forward.17} parent=19 // pred_region
          %s543 = smul.u32 4, %s19
          %p544 = scmp.lt.s32.totalorder %s543, 7
          %s545 = scalar_select %p544, %s543, 7
          %s546 = scalar_lea.vmem %s3, %s545
          %s547 = smul.u32 4, %s19
        $region70: #{ngpt_forward.17} parent=19 // pred_fallthru
          _
        // Predicated region
        $region71: #{ngpt_forward.17} parent=19 // pred_check
          %p548 = pneg %p160
        $region72: #{ngpt_forward.17} parent=19 // pred_check_branch
          %550 = sbr.rel (%p548) target = $region74
        $region73: #{ngpt_forward.17} parent=19 // pred_region
          %s551 = smul.u32 4, %s19
          %p552 = scmp.lt.s32.totalorder %s551, 7
          %s553 = scalar_select %p552, %s551, 7
          %s554 = scalar_lea.vmem %s4, %s553
          %s555 = smul.u32 4, %s19
        $region74: #{ngpt_forward.17} parent=19 // pred_fallthru
          _
      $region20: #{ngpt_forward.17} parent=5 // pred_fallthru
        _
      %p556 = scmp.le.s32.totalorder 1, %s11
      %p557 = scmp.lt.s32.totalorder %s11, 3
      %p558 = pnand %p556, %p557
      %p559 = pneg %p558
      // Predicated region
      $region75: #{ngpt_forward.17} parent=5 // pred_check
        _
      $region76: #{ngpt_forward.17} parent=5 // pred_check_branch
        %561 = sbr.rel (%p558) target = $region78
      $region77: #{ngpt_forward.17} parent=5 // pred_region
        %s562 = ssub.s32 %s11, 1
        %s563 = sand.u32 %s73, 1
        %s564 = sand.u32 %s73, 1
        %s565 = smul.addr %s564, 512
        %s566 = scalar_lea.vmem [#allocation4], %s565
        // Predicated region
        $region79: #{ngpt_forward.17} parent=77 // pred_check
          %p567 = pneg %p86
        $region80: #{ngpt_forward.17} parent=77 // pred_check_branch
          %569 = sbr.rel (%p567) target = $region82
        $region81: #{ngpt_forward.17} parent=77 // pred_region
          _
        $region82: #{ngpt_forward.17} parent=77 // pred_fallthru
          _
        %s570 = sand.u32 %s101, 1
        %s571 = sand.u32 %s101, 1
        %s572 = smul.addr %s571, 512
        %s573 = scalar_lea.vmem [#allocation5], %s572
        // Predicated region
        $region83: #{ngpt_forward.17} parent=77 // pred_check
          %p574 = pneg %p114
        $region84: #{ngpt_forward.17} parent=77 // pred_check_branch
          %576 = sbr.rel (%p574) target = $region86
        $region85: #{ngpt_forward.17} parent=77 // pred_region
          _
        $region86: #{ngpt_forward.17} parent=77 // pred_fallthru
          _
        %s577 = smul.u32 8, %s21
        %s578 = smul.u32 2, %s23
        %p579 = scmp.lt.s32.totalorder %s577, 7
        %s580 = scalar_select %p579, %s577, 7
        %p581 = scmp.lt.s32.totalorder %s578, 1
        %s582 = scalar_select %p581, %s578, 1
        %s583 = smul.addr %s580, 2
        %s584 = sadd.s32 %s582, %s583
        %s585 = smul.addr %s584, 4
        %s586 = scalar_lea.vmem %s0, %s585
        %p587 = pneg %p58
        %p588 = pneg %p55
        %s589 = sand.u32 %s73, 1
        %s590 = sand.u32 %s73, 1
        %s591 = smul.addr %s590, 512
        %s592 = scalar_lea.vmem [#allocation4], %s591
        %p593 = pneg %p86
        %p594 = pneg %p83
        %s595 = sand.u32 %s101, 1
        %s596 = sand.u32 %s101, 1
        %s597 = smul.addr %s596, 512
        %s598 = scalar_lea.vmem [#allocation5], %s597
        %p599 = pneg %p114
        %p600 = pneg %p111
        %s601 = smul.u32 4, %s22
        %p602 = scmp.lt.s32.totalorder %s601, 7
        %s603 = scalar_select %p602, %s601, 7
        %s604 = scalar_lea.vmem %s3, %s603
        %p605 = pneg %p140
        %p606 = pneg %p137
        %s607 = smul.u32 4, %s22
        %p608 = scmp.lt.s32.totalorder %s607, 7
        %s609 = scalar_select %p608, %s607, 7
        %s610 = scalar_lea.vmem %s4, %s609
        %p611 = pneg %p166
        %p612 = pneg %p163
        %p613 = pneg %p194
        %p614 = pneg %p191
        %s615 = sand.u32 %s181, 1
        %s616 = sand.u32 %s181, 1
        %s617 = smul.addr %s616, 128
        %s618 = scalar_lea.vmem [#allocation6], %s617
        %s619 = smul.u32 8, %s21
        %s620 = smul.u32 2, %s23
        %p621 = scmp.lt.s32.totalorder %s619, 7
        %s622 = scalar_select %p621, %s619, 7
        %p623 = scmp.lt.s32.totalorder %s620, 1
        %s624 = scalar_select %p623, %s620, 1
        %s625 = smul.addr %s622, 2
        %s626 = sadd.s32 %s624, %s625
        %s627 = smul.addr %s626, 4
        %s628 = scalar_lea.vmem %s0, %s627
        %s629 = smul.u32 8, %s21
        %s630 = smul.u32 2, %s23
        %s631 = smul.u32 32, %s23
        %s632 = smul.u32 4, %s22
        %s633 = smul.u32 32, %s23
        %s634 = smul.u32 4, %s22
        %s635 = smul.u32 4, %s22
        %p636 = scmp.lt.s32.totalorder %s635, 7
        %s637 = scalar_select %p636, %s635, 7
        %s638 = scalar_lea.vmem %s3, %s637
        %s639 = smul.u32 4, %s22
        %s640 = smul.u32 4, %s22
        %p641 = scmp.lt.s32.totalorder %s640, 7
        %s642 = scalar_select %p641, %s640, 7
        %s643 = scalar_lea.vmem %s4, %s642
        %s644 = smul.u32 4, %s22
        %s645 = smul.u32 8, %s21
        %s646 = smul.u32 4, %s22
        %p647 = scmp.eq.s32.totalorder %s23, 0
        // Predicated region
        $region87: #{ngpt_forward.17} parent=77 // pred_check
          %p648 = pneg %p647
        $region88: #{ngpt_forward.17} parent=77 // pred_check_branch
          %650 = sbr.rel (%p648) target = $region90
        $region89: #{ngpt_forward.17} parent=77 // pred_region
          %651 = vst [vmem:[#allocation2] sm:$0xff] 0.0
          %652 = vst [vmem:[#allocation2 + $0x8] sm:$0xff] 0.0
          %653 = vst [vmem:[#allocation2 + $0x10] sm:$0xff] 0.0
          %654 = vst [vmem:[#allocation2 + $0x18] sm:$0xff] 0.0
          %655 = vst [vmem:[#allocation2 + $0x20] sm:$0xff] 0.0
          %656 = vst [vmem:[#allocation2 + $0x28] sm:$0xff] 0.0
          %657 = vst [vmem:[#allocation2 + $0x30] sm:$0xff] 0.0
          %658 = vst [vmem:[#allocation2 + $0x38] sm:$0xff] 0.0
          %659 = vst [vmem:[#allocation2 + $0x40] sm:$0xff] 0.0
          %660 = vst [vmem:[#allocation2 + $0x48] sm:$0xff] 0.0
          %661 = vst [vmem:[#allocation2 + $0x50] sm:$0xff] 0.0
          %662 = vst [vmem:[#allocation2 + $0x58] sm:$0xff] 0.0
          %663 = vst [vmem:[#allocation2 + $0x60] sm:$0xff] 0.0
          %664 = vst [vmem:[#allocation2 + $0x68] sm:$0xff] 0.0
          %665 = vst [vmem:[#allocation2 + $0x70] sm:$0xff] 0.0
          %666 = vst [vmem:[#allocation2 + $0x78] sm:$0xff] 0.0
          %667 = vst [vmem:[#allocation2 + $0x80] sm:$0xff] 0.0
          %668 = vst [vmem:[#allocation2 + $0x88] sm:$0xff] 0.0
          %669 = vst [vmem:[#allocation2 + $0x90] sm:$0xff] 0.0
          %670 = vst [vmem:[#allocation2 + $0x98] sm:$0xff] 0.0
          %671 = vst [vmem:[#allocation2 + $0xa0] sm:$0xff] 0.0
          %672 = vst [vmem:[#allocation2 + $0xa8] sm:$0xff] 0.0
          %673 = vst [vmem:[#allocation2 + $0xb0] sm:$0xff] 0.0
          %674 = vst [vmem:[#allocation2 + $0xb8] sm:$0xff] 0.0
          %675 = vst [vmem:[#allocation2 + $0xc0] sm:$0xff] 0.0
          %676 = vst [vmem:[#allocation2 + $0xc8] sm:$0xff] 0.0
          %677 = vst [vmem:[#allocation2 + $0xd0] sm:$0xff] 0.0
          %678 = vst [vmem:[#allocation2 + $0xd8] sm:$0xff] 0.0
          %679 = vst [vmem:[#allocation2 + $0xe0] sm:$0xff] 0.0
          %680 = vst [vmem:[#allocation2 + $0xe8] sm:$0xff] 0.0
          %681 = vst [vmem:[#allocation2 + $0xf0] sm:$0xff] 0.0
          %682 = vst [vmem:[#allocation2 + $0xf8] sm:$0xff] 0.0
          %683 = vst [vmem:[#allocation3] sm:$0xff] 0.0
          %684 = vst [vmem:[#allocation3 + $0x8] sm:$0xff] 0.0
          %685 = vst [vmem:[#allocation3 + $0x10] sm:$0xff] 0.0
          %686 = vst [vmem:[#allocation3 + $0x18] sm:$0xff] 0.0
          %687 = vst [vmem:[#allocation3 + $0x20] sm:$0xff] 0.0
          %688 = vst [vmem:[#allocation3 + $0x28] sm:$0xff] 0.0
          %689 = vst [vmem:[#allocation3 + $0x30] sm:$0xff] 0.0
          %690 = vst [vmem:[#allocation3 + $0x38] sm:$0xff] 0.0
          %691 = vst [vmem:[#allocation3 + $0x40] sm:$0xff] 0.0
          %692 = vst [vmem:[#allocation3 + $0x48] sm:$0xff] 0.0
          %693 = vst [vmem:[#allocation3 + $0x50] sm:$0xff] 0.0
          %694 = vst [vmem:[#allocation3 + $0x58] sm:$0xff] 0.0
          %695 = vst [vmem:[#allocation3 + $0x60] sm:$0xff] 0.0
          %696 = vst [vmem:[#allocation3 + $0x68] sm:$0xff] 0.0
          %697 = vst [vmem:[#allocation3 + $0x70] sm:$0xff] 0.0
          %698 = vst [vmem:[#allocation3 + $0x78] sm:$0xff] 0.0
          %699 = vst [vmem:[#allocation3 + $0x80] sm:$0xff] 0.0
          %700 = vst [vmem:[#allocation3 + $0x88] sm:$0xff] 0.0
          %701 = vst [vmem:[#allocation3 + $0x90] sm:$0xff] 0.0
          %702 = vst [vmem:[#allocation3 + $0x98] sm:$0xff] 0.0
          %703 = vst [vmem:[#allocation3 + $0xa0] sm:$0xff] 0.0
          %704 = vst [vmem:[#allocation3 + $0xa8] sm:$0xff] 0.0
          %705 = vst [vmem:[#allocation3 + $0xb0] sm:$0xff] 0.0
          %706 = vst [vmem:[#allocation3 + $0xb8] sm:$0xff] 0.0
          %707 = vst [vmem:[#allocation3 + $0xc0] sm:$0xff] 0.0
          %708 = vst [vmem:[#allocation3 + $0xc8] sm:$0xff] 0.0
          %709 = vst [vmem:[#allocation3 + $0xd0] sm:$0xff] 0.0
          %710 = vst [vmem:[#allocation3 + $0xd8] sm:$0xff] 0.0
          %711 = vst [vmem:[#allocation3 + $0xe0] sm:$0xff] 0.0
          %712 = vst [vmem:[#allocation3 + $0xe8] sm:$0xff] 0.0
          %713 = vst [vmem:[#allocation3 + $0xf0] sm:$0xff] 0.0
          %714 = vst [vmem:[#allocation3 + $0xf8] sm:$0xff] 0.0
        $region90: #{ngpt_forward.17} parent=77 // pred_fallthru
          _
        %v715 = vld [vmem:[%s628] sm:$0xff]
        %v716 = vld [vmem:[%s628 + $0x8] sm:$0xff]
        %v717 = vld [vmem:[%s628 + $0x10] sm:$0xff]
        %v718 = vld [vmem:[%s628 + $0x18] sm:$0xff]
        %v719 = vld [vmem:[%s628 + $0x20] sm:$0xff]
        %v720 = vld [vmem:[%s628 + $0x28] sm:$0xff]
        %v721 = vld [vmem:[%s628 + $0x30] sm:$0xff]
        %v722 = vld [vmem:[%s628 + $0x38] sm:$0xff]
        %v723 = vld [vmem:[#allocation2] sm:$0xff]
        %v724 = vld [vmem:[#allocation2 + $0x8] sm:$0xff]
        %v725 = vld [vmem:[#allocation2 + $0x10] sm:$0xff]
        %v726 = vld [vmem:[#allocation2 + $0x18] sm:$0xff]
        %v727 = vld [vmem:[#allocation2 + $0x20] sm:$0xff]
        %v728 = vld [vmem:[#allocation2 + $0x28] sm:$0xff]
        %v729 = vld [vmem:[#allocation2 + $0x30] sm:$0xff]
        %v730 = vld [vmem:[#allocation2 + $0x38] sm:$0xff]
        %v731 = vld [vmem:[#allocation2 + $0x40] sm:$0xff]
        %v732 = vld [vmem:[#allocation2 + $0x48] sm:$0xff]
        %v733 = vld [vmem:[#allocation2 + $0x50] sm:$0xff]
        %v734 = vld [vmem:[#allocation2 + $0x58] sm:$0xff]
        %v735 = vld [vmem:[#allocation2 + $0x60] sm:$0xff]
        %v736 = vld [vmem:[#allocation2 + $0x68] sm:$0xff]
        %v737 = vld [vmem:[#allocation2 + $0x70] sm:$0xff]
        %v738 = vld [vmem:[#allocation2 + $0x78] sm:$0xff]
        %v739 = vld [vmem:[#allocation2 + $0x80] sm:$0xff]
        %v740 = vld [vmem:[#allocation2 + $0x88] sm:$0xff]
        %v741 = vld [vmem:[#allocation2 + $0x90] sm:$0xff]
        %v742 = vld [vmem:[#allocation2 + $0x98] sm:$0xff]
        %v743 = vld [vmem:[#allocation2 + $0xa0] sm:$0xff]
        %v744 = vld [vmem:[#allocation2 + $0xa8] sm:$0xff]
        %v745 = vld [vmem:[#allocation2 + $0xb0] sm:$0xff]
        %v746 = vld [vmem:[#allocation2 + $0xb8] sm:$0xff]
        %v747 = vld [vmem:[#allocation2 + $0xc0] sm:$0xff]
        %v748 = vld [vmem:[#allocation2 + $0xc8] sm:$0xff]
        %v749 = vld [vmem:[#allocation2 + $0xd0] sm:$0xff]
        %v750 = vld [vmem:[#allocation2 + $0xd8] sm:$0xff]
        %v751 = vld [vmem:[#allocation2 + $0xe0] sm:$0xff]
        %v752 = vld [vmem:[#allocation2 + $0xe8] sm:$0xff]
        %v753 = vld [vmem:[#allocation2 + $0xf0] sm:$0xff]
        %v754 = vld [vmem:[#allocation2 + $0xf8] sm:$0xff]
        %v755 = vld [vmem:[%s566] sm:$0xff]
        %v756 = vld [vmem:[%s566 + $0x8] sm:$0xff]
        %v757 = vld [vmem:[%s566 + $0x10] sm:$0xff]
        %v758 = vld [vmem:[%s566 + $0x18] sm:$0xff]
        %v759 = vld [vmem:[%s566 + $0x20] sm:$0xff]
        %v760 = vld [vmem:[%s566 + $0x28] sm:$0xff]
        %v761 = vld [vmem:[%s566 + $0x30] sm:$0xff]
        %v762 = vld [vmem:[%s566 + $0x38] sm:$0xff]
        %v763 = vld [vmem:[%s566 + $0x40] sm:$0xff]
        %v764 = vld [vmem:[%s566 + $0x48] sm:$0xff]
        %v765 = vld [vmem:[%s566 + $0x50] sm:$0xff]
        %v766 = vld [vmem:[%s566 + $0x58] sm:$0xff]
        %v767 = vld [vmem:[%s566 + $0x60] sm:$0xff]
        %v768 = vld [vmem:[%s566 + $0x68] sm:$0xff]
        %v769 = vld [vmem:[%s566 + $0x70] sm:$0xff]
        %v770 = vld [vmem:[%s566 + $0x78] sm:$0xff]
        %v771 = vld [vmem:[%s566 + $0x80] sm:$0xff]
        %v772 = vld [vmem:[%s566 + $0x88] sm:$0xff]
        %v773 = vld [vmem:[%s566 + $0x90] sm:$0xff]
        %v774 = vld [vmem:[%s566 + $0x98] sm:$0xff]
        %v775 = vld [vmem:[%s566 + $0xa0] sm:$0xff]
        %v776 = vld [vmem:[%s566 + $0xa8] sm:$0xff]
        %v777 = vld [vmem:[%s566 + $0xb0] sm:$0xff]
        %v778 = vld [vmem:[%s566 + $0xb8] sm:$0xff]
        %v779 = vld [vmem:[%s566 + $0xc0] sm:$0xff]
        %v780 = vld [vmem:[%s566 + $0xc8] sm:$0xff]
        %v781 = vld [vmem:[%s566 + $0xd0] sm:$0xff]
        %v782 = vld [vmem:[%s566 + $0xd8] sm:$0xff]
        %v783 = vld [vmem:[%s566 + $0xe0] sm:$0xff]
        %v784 = vld [vmem:[%s566 + $0xe8] sm:$0xff]
        %v785 = vld [vmem:[%s566 + $0xf0] sm:$0xff]
        %v786 = vld [vmem:[%s566 + $0xf8] sm:$0xff]
        %v787 = vld [vmem:[%s566 + $0x100] sm:$0xff]
        %v788 = vld [vmem:[%s566 + $0x108] sm:$0xff]
        %v789 = vld [vmem:[%s566 + $0x110] sm:$0xff]
        %v790 = vld [vmem:[%s566 + $0x118] sm:$0xff]
        %v791 = vld [vmem:[%s566 + $0x120] sm:$0xff]
        %v792 = vld [vmem:[%s566 + $0x128] sm:$0xff]
        %v793 = vld [vmem:[%s566 + $0x130] sm:$0xff]
        %v794 = vld [vmem:[%s566 + $0x138] sm:$0xff]
        %v795 = vld [vmem:[%s566 + $0x140] sm:$0xff]
        %v796 = vld [vmem:[%s566 + $0x148] sm:$0xff]
        %v797 = vld [vmem:[%s566 + $0x150] sm:$0xff]
        %v798 = vld [vmem:[%s566 + $0x158] sm:$0xff]
        %v799 = vld [vmem:[%s566 + $0x160] sm:$0xff]
        %v800 = vld [vmem:[%s566 + $0x168] sm:$0xff]
        %v801 = vld [vmem:[%s566 + $0x170] sm:$0xff]
        %v802 = vld [vmem:[%s566 + $0x178] sm:$0xff]
        %v803 = vld [vmem:[%s566 + $0x180] sm:$0xff]
        %v804 = vld [vmem:[%s566 + $0x188] sm:$0xff]
        %v805 = vld [vmem:[%s566 + $0x190] sm:$0xff]
        %v806 = vld [vmem:[%s566 + $0x198] sm:$0xff]
        %v807 = vld [vmem:[%s566 + $0x1a0] sm:$0xff]
        %v808 = vld [vmem:[%s566 + $0x1a8] sm:$0xff]
        %v809 = vld [vmem:[%s566 + $0x1b0] sm:$0xff]
        %v810 = vld [vmem:[%s566 + $0x1b8] sm:$0xff]
        %v811 = vld [vmem:[%s566 + $0x1c0] sm:$0xff]
        %v812 = vld [vmem:[%s566 + $0x1c8] sm:$0xff]
        %v813 = vld [vmem:[%s566 + $0x1d0] sm:$0xff]
        %v814 = vld [vmem:[%s566 + $0x1d8] sm:$0xff]
        %v815 = vld [vmem:[%s566 + $0x1e0] sm:$0xff]
        %v816 = vld [vmem:[%s566 + $0x1e8] sm:$0xff]
        %v817 = vld [vmem:[%s566 + $0x1f0] sm:$0xff]
        %v818 = vld [vmem:[%s566 + $0x1f8] sm:$0xff]
        %v827 = vunpack.c.l.b16 %v715
        %v828 = vunpack.c.h.b16 %v715
        %v829 = vunpack.c.l.b16 %v716
        %v830 = vunpack.c.h.b16 %v716
        %v831 = vunpack.c.l.b16 %v717
        %v832 = vunpack.c.h.b16 %v717
        %v833 = vunpack.c.l.b16 %v718
        %v834 = vunpack.c.h.b16 %v718
        %v835 = vunpack.c.l.b16 %v719
        %v836 = vunpack.c.h.b16 %v719
        %v837 = vunpack.c.l.b16 %v720
        %v838 = vunpack.c.h.b16 %v720
        %v839 = vunpack.c.l.b16 %v721
        %v840 = vunpack.c.h.b16 %v721
        %v841 = vunpack.c.l.b16 %v722
        %v842 = vunpack.c.h.b16 %v722
        %v843 = vpack.c.b16 %v829, %v827
        %v844 = vpack.c.b16 %v830, %v828
        %v845 = vpack.c.b16 %v833, %v831
        %v846 = vpack.c.b16 %v834, %v832
        %v847 = vpack.c.b16 %v837, %v835
        %v848 = vpack.c.b16 %v838, %v836
        %v849 = vpack.c.b16 %v841, %v839
        %v850 = vpack.c.b16 %v842, %v840
        %v923 = vunpack.c.l.b16 %v755
        %v924 = vunpack.c.h.b16 %v755
        %v925 = vunpack.c.l.b16 %v756
        %v926 = vunpack.c.h.b16 %v756
        %v927 = vunpack.c.l.b16 %v757
        %v928 = vunpack.c.h.b16 %v757
        %v929 = vunpack.c.l.b16 %v758
        %v930 = vunpack.c.h.b16 %v758
        %v931 = vunpack.c.l.b16 %v759
        %v932 = vunpack.c.h.b16 %v759
        %v933 = vunpack.c.l.b16 %v760
        %v934 = vunpack.c.h.b16 %v760
        %v935 = vunpack.c.l.b16 %v761
        %v936 = vunpack.c.h.b16 %v761
        %v937 = vunpack.c.l.b16 %v762
        %v938 = vunpack.c.h.b16 %v762
        %v939 = vunpack.c.l.b16 %v763
        %v940 = vunpack.c.h.b16 %v763
        %v941 = vunpack.c.l.b16 %v764
        %v942 = vunpack.c.h.b16 %v764
        %v943 = vunpack.c.l.b16 %v765
        %v944 = vunpack.c.h.b16 %v765
        %v945 = vunpack.c.l.b16 %v766
        %v946 = vunpack.c.h.b16 %v766
        %v947 = vunpack.c.l.b16 %v767
        %v948 = vunpack.c.h.b16 %v767
        %v949 = vunpack.c.l.b16 %v768
        %v950 = vunpack.c.h.b16 %v768
        %v951 = vunpack.c.l.b16 %v769
        %v952 = vunpack.c.h.b16 %v769
        %v953 = vunpack.c.l.b16 %v770
        %v954 = vunpack.c.h.b16 %v770
        %v955 = vunpack.c.l.b16 %v771
        %v956 = vunpack.c.h.b16 %v771
        %v957 = vunpack.c.l.b16 %v772
        %v958 = vunpack.c.h.b16 %v772
        %v959 = vunpack.c.l.b16 %v773
        %v960 = vunpack.c.h.b16 %v773
        %v961 = vunpack.c.l.b16 %v774
        %v962 = vunpack.c.h.b16 %v774
        %v963 = vunpack.c.l.b16 %v775
        %v964 = vunpack.c.h.b16 %v775
        %v965 = vunpack.c.l.b16 %v776
        %v966 = vunpack.c.h.b16 %v776
        %v967 = vunpack.c.l.b16 %v777
        %v968 = vunpack.c.h.b16 %v777
        %v969 = vunpack.c.l.b16 %v778
        %v970 = vunpack.c.h.b16 %v778
        %v971 = vunpack.c.l.b16 %v779
        %v972 = vunpack.c.h.b16 %v779
        %v973 = vunpack.c.l.b16 %v780
        %v974 = vunpack.c.h.b16 %v780
        %v975 = vunpack.c.l.b16 %v781
        %v976 = vunpack.c.h.b16 %v781
        %v977 = vunpack.c.l.b16 %v782
        %v978 = vunpack.c.h.b16 %v782
        %v979 = vunpack.c.l.b16 %v783
        %v980 = vunpack.c.h.b16 %v783
        %v981 = vunpack.c.l.b16 %v784
        %v982 = vunpack.c.h.b16 %v784
        %v983 = vunpack.c.l.b16 %v785
        %v984 = vunpack.c.h.b16 %v785
        %v985 = vunpack.c.l.b16 %v786
        %v986 = vunpack.c.h.b16 %v786
        %v987 = vunpack.c.l.b16 %v787
        %v988 = vunpack.c.h.b16 %v787
        %v989 = vunpack.c.l.b16 %v788
        %v990 = vunpack.c.h.b16 %v788
        %v991 = vunpack.c.l.b16 %v789
        %v992 = vunpack.c.h.b16 %v789
        %v993 = vunpack.c.l.b16 %v790
        %v994 = vunpack.c.h.b16 %v790
        %v995 = vunpack.c.l.b16 %v791
        %v996 = vunpack.c.h.b16 %v791
        %v997 = vunpack.c.l.b16 %v792
        %v998 = vunpack.c.h.b16 %v792
        %v999 = vunpack.c.l.b16 %v793
        %v1000 = vunpack.c.h.b16 %v793
        %v1001 = vunpack.c.l.b16 %v794
        %v1002 = vunpack.c.h.b16 %v794
        %v1003 = vunpack.c.l.b16 %v795
        %v1004 = vunpack.c.h.b16 %v795
        %v1005 = vunpack.c.l.b16 %v796
        %v1006 = vunpack.c.h.b16 %v796
        %v1007 = vunpack.c.l.b16 %v797
        %v1008 = vunpack.c.h.b16 %v797
        %v1009 = vunpack.c.l.b16 %v798
        %v1010 = vunpack.c.h.b16 %v798
        %v1011 = vunpack.c.l.b16 %v799
        %v1012 = vunpack.c.h.b16 %v799
        %v1013 = vunpack.c.l.b16 %v800
        %v1014 = vunpack.c.h.b16 %v800
        %v1015 = vunpack.c.l.b16 %v801
        %v1016 = vunpack.c.h.b16 %v801
        %v1017 = vunpack.c.l.b16 %v802
        %v1018 = vunpack.c.h.b16 %v802
        %v1019 = vunpack.c.l.b16 %v803
        %v1020 = vunpack.c.h.b16 %v803
        %v1021 = vunpack.c.l.b16 %v804
        %v1022 = vunpack.c.h.b16 %v804
        %v1023 = vunpack.c.l.b16 %v805
        %v1024 = vunpack.c.h.b16 %v805
        %v1025 = vunpack.c.l.b16 %v806
        %v1026 = vunpack.c.h.b16 %v806
        %v1027 = vunpack.c.l.b16 %v807
        %v1028 = vunpack.c.h.b16 %v807
        %v1029 = vunpack.c.l.b16 %v808
        %v1030 = vunpack.c.h.b16 %v808
        %v1031 = vunpack.c.l.b16 %v809
        %v1032 = vunpack.c.h.b16 %v809
        %v1033 = vunpack.c.l.b16 %v810
        %v1034 = vunpack.c.h.b16 %v810
        %v1035 = vunpack.c.l.b16 %v811
        %v1036 = vunpack.c.h.b16 %v811
        %v1037 = vunpack.c.l.b16 %v812
        %v1038 = vunpack.c.h.b16 %v812
        %v1039 = vunpack.c.l.b16 %v813
        %v1040 = vunpack.c.h.b16 %v813
        %v1041 = vunpack.c.l.b16 %v814
        %v1042 = vunpack.c.h.b16 %v814
        %v1043 = vunpack.c.l.b16 %v815
        %v1044 = vunpack.c.h.b16 %v815
        %v1045 = vunpack.c.l.b16 %v816
        %v1046 = vunpack.c.h.b16 %v816
        %v1047 = vunpack.c.l.b16 %v817
        %v1048 = vunpack.c.h.b16 %v817
        %v1049 = vunpack.c.l.b16 %v818
        %v1050 = vunpack.c.h.b16 %v818
        %v1051 = vpack.c.b16 %v927, %v923
        %v1052 = vpack.c.b16 %v928, %v924
        %v1053 = vpack.c.b16 %v929, %v925
        %v1054 = vpack.c.b16 %v930, %v926
        %v1055 = vpack.c.b16 %v935, %v931
        %v1056 = vpack.c.b16 %v936, %v932
        %v1057 = vpack.c.b16 %v937, %v933
        %v1058 = vpack.c.b16 %v938, %v934
        %v1059 = vpack.c.b16 %v943, %v939
        %v1060 = vpack.c.b16 %v944, %v940
        %v1061 = vpack.c.b16 %v945, %v941
        %v1062 = vpack.c.b16 %v946, %v942
        %v1063 = vpack.c.b16 %v951, %v947
        %v1064 = vpack.c.b16 %v952, %v948
        %v1065 = vpack.c.b16 %v953, %v949
        %v1066 = vpack.c.b16 %v954, %v950
        %v1067 = vpack.c.b16 %v959, %v955
        %v1068 = vpack.c.b16 %v960, %v956
        %v1069 = vpack.c.b16 %v961, %v957
        %v1070 = vpack.c.b16 %v962, %v958
        %v1071 = vpack.c.b16 %v967, %v963
        %v1072 = vpack.c.b16 %v968, %v964
        %v1073 = vpack.c.b16 %v969, %v965
        %v1074 = vpack.c.b16 %v970, %v966
        %v1075 = vpack.c.b16 %v975, %v971
        %v1076 = vpack.c.b16 %v976, %v972
        %v1077 = vpack.c.b16 %v977, %v973
        %v1078 = vpack.c.b16 %v978, %v974
        %v1079 = vpack.c.b16 %v983, %v979
        %v1080 = vpack.c.b16 %v984, %v980
        %v1081 = vpack.c.b16 %v985, %v981
        %v1082 = vpack.c.b16 %v986, %v982
        %v1083 = vpack.c.b16 %v991, %v987
        %v1084 = vpack.c.b16 %v992, %v988
        %v1085 = vpack.c.b16 %v993, %v989
        %v1086 = vpack.c.b16 %v994, %v990
        %v1087 = vpack.c.b16 %v999, %v995
        %v1088 = vpack.c.b16 %v1000, %v996
        %v1089 = vpack.c.b16 %v1001, %v997
        %v1090 = vpack.c.b16 %v1002, %v998
        %v1091 = vpack.c.b16 %v1007, %v1003
        %v1092 = vpack.c.b16 %v1008, %v1004
        %v1093 = vpack.c.b16 %v1009, %v1005
        %v1094 = vpack.c.b16 %v1010, %v1006
        %v1095 = vpack.c.b16 %v1015, %v1011
        %v1096 = vpack.c.b16 %v1016, %v1012
        %v1097 = vpack.c.b16 %v1017, %v1013
        %v1098 = vpack.c.b16 %v1018, %v1014
        %v1099 = vpack.c.b16 %v1023, %v1019
        %v1100 = vpack.c.b16 %v1024, %v1020
        %v1101 = vpack.c.b16 %v1025, %v1021
        %v1102 = vpack.c.b16 %v1026, %v1022
        %v1103 = vpack.c.b16 %v1031, %v1027
        %v1104 = vpack.c.b16 %v1032, %v1028
        %v1105 = vpack.c.b16 %v1033, %v1029
        %v1106 = vpack.c.b16 %v1034, %v1030
        %v1107 = vpack.c.b16 %v1039, %v1035
        %v1108 = vpack.c.b16 %v1040, %v1036
        %v1109 = vpack.c.b16 %v1041, %v1037
        %v1110 = vpack.c.b16 %v1042, %v1038
        %v1111 = vpack.c.b16 %v1047, %v1043
        %v1112 = vpack.c.b16 %v1048, %v1044
        %v1113 = vpack.c.b16 %v1049, %v1045
        %v1114 = vpack.c.b16 %v1050, %v1046
        %1179 = vmatprep.subr.bf16.mxu0 %v1080
        %1180 = vmatpush1.bf16.msra.mxu0 %v1079
        %1181 = vmatprep.subr.bf16.mxu0 %v1076
        %1182 = vmatpush1.bf16.msra.mxu0 %v1075
        %1183 = vmatprep.subr.bf16.mxu0 %v1072
        %1184 = vmatpush1.bf16.msra.mxu0 %v1071
        %1185 = vmatprep.subr.bf16.mxu0 %v1068
        %1186 = vmatpush1.bf16.msra.mxu0 %v1067
        %1187 = vmatprep.subr.bf16.mxu0 %v1064
        %1188 = vmatpush1.bf16.msra.mxu0 %v1063
        %1189 = vmatprep.subr.bf16.mxu0 %v1060
        %1190 = vmatpush1.bf16.msra.mxu0 %v1059
        %1191 = vmatprep.subr.bf16.mxu0 %v1056
        %1192 = vmatpush1.bf16.msra.mxu0 %v1055
        %1193 = vmatprep.subr.bf16.mxu0 %v1052
        %1194 = vmatpush1.bf16.msra.mxu0 %v1051
        %1195 = vmatprep.subr.bf16.mxu0 %v1112
        %1196 = vmatpush2.bf16.msra.mxu0 %v1111
        %1197 = vmatprep.subr.bf16.mxu0 %v1108
        %1198 = vmatpush2.bf16.msra.mxu0 %v1107
        %1199 = vmatprep.subr.bf16.mxu0 %v1104
        %1200 = vmatpush2.bf16.msra.mxu0 %v1103
        %1201 = vmatprep.subr.bf16.mxu0 %v1100
        %1202 = vmatpush2.bf16.msra.mxu0 %v1099
        %1203 = vmatprep.subr.bf16.mxu0 %v1096
        %1204 = vmatpush2.bf16.msra.mxu0 %v1095
        %1205 = vmatprep.subr.bf16.mxu0 %v1092
        %1206 = vmatpush2.bf16.msra.mxu0 %v1091
        %1207 = vmatprep.subr.bf16.mxu0 %v1088
        %1208 = vmatpush2.bf16.msra.mxu0 %v1087
        %1209 = vmatprep.subr.bf16.mxu0 %v1084
        %1210 = vmatpush2.bf16.msra.mxu0 %v1083
        %1211 = vmatprep.mubr.bf16.mxu0 %v844
        %1212 = vmatmul.mubr.bf16.gmra.mxu0 %v843
        %v1213 = vpop.f32.mrf.mxu0
        %v1214 = vadd.f32 0.0, %v1213
        %v1215 = vpop.f32.mrf.mxu0
        %v1216 = vadd.f32 0.0, %v1215
        %v1217 = vpop.f32.mrf.mxu0
        %v1218 = vadd.f32 0.0, %v1217
        %v1219 = vpop.f32.mrf.mxu0
        %v1220 = vadd.f32 0.0, %v1219
        %1221 = vmatprep.mubr.bf16.mxu0 %v846
        %1222 = vmatmul.mubr.bf16.gmra.mxu0 %v845
        %v1223 = vpop.f32.mrf.mxu0
        %v1224 = vadd.f32 0.0, %v1223
        %v1225 = vpop.f32.mrf.mxu0
        %v1226 = vadd.f32 0.0, %v1225
        %v1227 = vpop.f32.mrf.mxu0
        %v1228 = vadd.f32 0.0, %v1227
        %v1229 = vpop.f32.mrf.mxu0
        %v1230 = vadd.f32 0.0, %v1229
        %1231 = vmatprep.mubr.bf16.mxu0 %v848
        %1232 = vmatmul.mubr.bf16.gmra.mxu0 %v847
        %v1233 = vpop.f32.mrf.mxu0
        %v1234 = vadd.f32 0.0, %v1233
        %v1235 = vpop.f32.mrf.mxu0
        %v1236 = vadd.f32 0.0, %v1235
        %v1237 = vpop.f32.mrf.mxu0
        %v1238 = vadd.f32 0.0, %v1237
        %v1239 = vpop.f32.mrf.mxu0
        %v1240 = vadd.f32 0.0, %v1239
        %1241 = vmatprep.mubr.bf16.mxu0 %v850
        %1242 = vmatmul.mubr.bf16.gmra.mxu0 %v849
        %v1243 = vpop.f32.mrf.mxu0
        %v1244 = vadd.f32 0.0, %v1243
        %v1245 = vpop.f32.mrf.mxu0
        %v1246 = vadd.f32 0.0, %v1245
        %v1247 = vpop.f32.mrf.mxu0
        %v1248 = vadd.f32 0.0, %v1247
        %v1249 = vpop.f32.mrf.mxu0
        %v1250 = vadd.f32 0.0, %v1249
        %1251 = vdwg.mxu0
        %1252 = vmatprep.subr.bf16.mxu0 %v1082
        %1253 = vmatpush1.bf16.msra.mxu0 %v1081
        %1254 = vmatprep.subr.bf16.mxu0 %v1078
        %1255 = vmatpush1.bf16.msra.mxu0 %v1077
        %1256 = vmatprep.subr.bf16.mxu0 %v1074
        %1257 = vmatpush1.bf16.msra.mxu0 %v1073
        %1258 = vmatprep.subr.bf16.mxu0 %v1070
        %1259 = vmatpush1.bf16.msra.mxu0 %v1069
        %1260 = vmatprep.subr.bf16.mxu0 %v1066
        %1261 = vmatpush1.bf16.msra.mxu0 %v1065
        %1262 = vmatprep.subr.bf16.mxu0 %v1062
        %1263 = vmatpush1.bf16.msra.mxu0 %v1061
        %1264 = vmatprep.subr.bf16.mxu0 %v1058
        %1265 = vmatpush1.bf16.msra.mxu0 %v1057
        %1266 = vmatprep.subr.bf16.mxu0 %v1054
        %1267 = vmatpush1.bf16.msra.mxu0 %v1053
        %1268 = vmatprep.subr.bf16.mxu0 %v1114
        %1269 = vmatpush2.bf16.msra.mxu0 %v1113
        %1270 = vmatprep.subr.bf16.mxu0 %v1110
        %1271 = vmatpush2.bf16.msra.mxu0 %v1109
        %1272 = vmatprep.subr.bf16.mxu0 %v1106
        %1273 = vmatpush2.bf16.msra.mxu0 %v1105
        %1274 = vmatprep.subr.bf16.mxu0 %v1102
        %1275 = vmatpush2.bf16.msra.mxu0 %v1101
        %1276 = vmatprep.subr.bf16.mxu0 %v1098
        %1277 = vmatpush2.bf16.msra.mxu0 %v1097
        %1278 = vmatprep.subr.bf16.mxu0 %v1094
        %1279 = vmatpush2.bf16.msra.mxu0 %v1093
        %1280 = vmatprep.subr.bf16.mxu0 %v1090
        %1281 = vmatpush2.bf16.msra.mxu0 %v1089
        %1282 = vmatprep.subr.bf16.mxu0 %v1086
        %1283 = vmatpush2.bf16.msra.mxu0 %v1085
        %1284 = vmatprep.mubr.bf16.mxu0 %v844
        %1285 = vmatmul.mubr.bf16.gmra.mxu0 %v843
        %v1286 = vpop.f32.mrf.mxu0
        %v1287 = vadd.f32 0.0, %v1286
        %v1288 = vpop.f32.mrf.mxu0
        %v1289 = vadd.f32 0.0, %v1288
        %v1290 = vpop.f32.mrf.mxu0
        %v1291 = vadd.f32 0.0, %v1290
        %v1292 = vpop.f32.mrf.mxu0
        %v1293 = vadd.f32 0.0, %v1292
        %1294 = vmatprep.mubr.bf16.mxu0 %v846
        %1295 = vmatmul.mubr.bf16.gmra.mxu0 %v845
        %v1296 = vpop.f32.mrf.mxu0
        %v1297 = vadd.f32 0.0, %v1296
        %v1298 = vpop.f32.mrf.mxu0
        %v1299 = vadd.f32 0.0, %v1298
        %v1300 = vpop.f32.mrf.mxu0
        %v1301 = vadd.f32 0.0, %v1300
        %v1302 = vpop.f32.mrf.mxu0
        %v1303 = vadd.f32 0.0, %v1302
        %1304 = vmatprep.mubr.bf16.mxu0 %v848
        %1305 = vmatmul.mubr.bf16.gmra.mxu0 %v847
        %v1306 = vpop.f32.mrf.mxu0
        %v1307 = vadd.f32 0.0, %v1306
        %v1308 = vpop.f32.mrf.mxu0
        %v1309 = vadd.f32 0.0, %v1308
        %v1310 = vpop.f32.mrf.mxu0
        %v1311 = vadd.f32 0.0, %v1310
        %v1312 = vpop.f32.mrf.mxu0
        %v1313 = vadd.f32 0.0, %v1312
        %1314 = vmatprep.mubr.bf16.mxu0 %v850
        %1315 = vmatmul.mubr.bf16.gmra.mxu0 %v849
        %v1316 = vpop.f32.mrf.mxu0
        %v1317 = vadd.f32 0.0, %v1316
        %v1318 = vpop.f32.mrf.mxu0
        %v1319 = vadd.f32 0.0, %v1318
        %v1320 = vpop.f32.mrf.mxu0
        %v1321 = vadd.f32 0.0, %v1320
        %v1322 = vpop.f32.mrf.mxu0
        %v1323 = vadd.f32 0.0, %v1322
        %1324 = vdwg.mxu0
        %v1325 = vadd.f32 %v723, %v1214
        %v1326 = vadd.f32 %v724, %v1216
        %v1327 = vadd.f32 %v725, %v1287
        %v1328 = vadd.f32 %v726, %v1289
        %v1329 = vadd.f32 %v727, %v1218
        %v1330 = vadd.f32 %v728, %v1220
        %v1331 = vadd.f32 %v729, %v1291
        %v1332 = vadd.f32 %v730, %v1293
        %v1333 = vadd.f32 %v731, %v1224
        %v1334 = vadd.f32 %v732, %v1226
        %v1335 = vadd.f32 %v733, %v1297
        %v1336 = vadd.f32 %v734, %v1299
        %v1337 = vadd.f32 %v735, %v1228
        %v1338 = vadd.f32 %v736, %v1230
        %v1339 = vadd.f32 %v737, %v1301
        %v1340 = vadd.f32 %v738, %v1303
        %v1341 = vadd.f32 %v739, %v1234
        %v1342 = vadd.f32 %v740, %v1236
        %v1343 = vadd.f32 %v741, %v1307
        %v1344 = vadd.f32 %v742, %v1309
        %v1345 = vadd.f32 %v743, %v1238
        %v1346 = vadd.f32 %v744, %v1240
        %v1347 = vadd.f32 %v745, %v1311
        %v1348 = vadd.f32 %v746, %v1313
        %v1349 = vadd.f32 %v747, %v1244
        %v1350 = vadd.f32 %v748, %v1246
        %v1351 = vadd.f32 %v749, %v1317
        %v1352 = vadd.f32 %v750, %v1319
        %v1353 = vadd.f32 %v751, %v1248
        %v1354 = vadd.f32 %v752, %v1250
        %v1355 = vadd.f32 %v753, %v1321
        %v1356 = vadd.f32 %v754, %v1323
        %1357 = vst [vmem:[#allocation2] sm:$0xff] %v1325
        %1358 = vst [vmem:[#allocation2 + $0x8] sm:$0xff] %v1326
        %1359 = vst [vmem:[#allocation2 + $0x10] sm:$0xff] %v1327
        %1360 = vst [vmem:[#allocation2 + $0x18] sm:$0xff] %v1328
        %1361 = vst [vmem:[#allocation2 + $0x20] sm:$0xff] %v1329
        %1362 = vst [vmem:[#allocation2 + $0x28] sm:$0xff] %v1330
        %1363 = vst [vmem:[#allocation2 + $0x30] sm:$0xff] %v1331
        %1364 = vst [vmem:[#allocation2 + $0x38] sm:$0xff] %v1332
        %1365 = vst [vmem:[#allocation2 + $0x40] sm:$0xff] %v1333
        %1366 = vst [vmem:[#allocation2 + $0x48] sm:$0xff] %v1334
        %1367 = vst [vmem:[#allocation2 + $0x50] sm:$0xff] %v1335
        %1368 = vst [vmem:[#allocation2 + $0x58] sm:$0xff] %v1336
        %1369 = vst [vmem:[#allocation2 + $0x60] sm:$0xff] %v1337
        %1370 = vst [vmem:[#allocation2 + $0x68] sm:$0xff] %v1338
        %1371 = vst [vmem:[#allocation2 + $0x70] sm:$0xff] %v1339
        %1372 = vst [vmem:[#allocation2 + $0x78] sm:$0xff] %v1340
        %1373 = vst [vmem:[#allocation2 + $0x80] sm:$0xff] %v1341
        %1374 = vst [vmem:[#allocation2 + $0x88] sm:$0xff] %v1342
        %1375 = vst [vmem:[#allocation2 + $0x90] sm:$0xff] %v1343
        %1376 = vst [vmem:[#allocation2 + $0x98] sm:$0xff] %v1344
        %1377 = vst [vmem:[#allocation2 + $0xa0] sm:$0xff] %v1345
        %1378 = vst [vmem:[#allocation2 + $0xa8] sm:$0xff] %v1346
        %1379 = vst [vmem:[#allocation2 + $0xb0] sm:$0xff] %v1347
        %1380 = vst [vmem:[#allocation2 + $0xb8] sm:$0xff] %v1348
        %1381 = vst [vmem:[#allocation2 + $0xc0] sm:$0xff] %v1349
        %1382 = vst [vmem:[#allocation2 + $0xc8] sm:$0xff] %v1350
        %1383 = vst [vmem:[#allocation2 + $0xd0] sm:$0xff] %v1351
        %1384 = vst [vmem:[#allocation2 + $0xd8] sm:$0xff] %v1352
        %1385 = vst [vmem:[#allocation2 + $0xe0] sm:$0xff] %v1353
        %1386 = vst [vmem:[#allocation2 + $0xe8] sm:$0xff] %v1354
        %1387 = vst [vmem:[#allocation2 + $0xf0] sm:$0xff] %v1355
        %1388 = vst [vmem:[#allocation2 + $0xf8] sm:$0xff] %v1356
        %v1389 = vld [vmem:[#allocation3] sm:$0xff]
        %v1390 = vld [vmem:[#allocation3 + $0x8] sm:$0xff]
        %v1391 = vld [vmem:[#allocation3 + $0x10] sm:$0xff]
        %v1392 = vld [vmem:[#allocation3 + $0x18] sm:$0xff]
        %v1393 = vld [vmem:[#allocation3 + $0x20] sm:$0xff]
        %v1394 = vld [vmem:[#allocation3 + $0x28] sm:$0xff]
        %v1395 = vld [vmem:[#allocation3 + $0x30] sm:$0xff]
        %v1396 = vld [vmem:[#allocation3 + $0x38] sm:$0xff]
        %v1397 = vld [vmem:[#allocation3 + $0x40] sm:$0xff]
        %v1398 = vld [vmem:[#allocation3 + $0x48] sm:$0xff]
        %v1399 = vld [vmem:[#allocation3 + $0x50] sm:$0xff]
        %v1400 = vld [vmem:[#allocation3 + $0x58] sm:$0xff]
        %v1401 = vld [vmem:[#allocation3 + $0x60] sm:$0xff]
        %v1402 = vld [vmem:[#allocation3 + $0x68] sm:$0xff]
        %v1403 = vld [vmem:[#allocation3 + $0x70] sm:$0xff]
        %v1404 = vld [vmem:[#allocation3 + $0x78] sm:$0xff]
        %v1405 = vld [vmem:[#allocation3 + $0x80] sm:$0xff]
        %v1406 = vld [vmem:[#allocation3 + $0x88] sm:$0xff]
        %v1407 = vld [vmem:[#allocation3 + $0x90] sm:$0xff]
        %v1408 = vld [vmem:[#allocation3 + $0x98] sm:$0xff]
        %v1409 = vld [vmem:[#allocation3 + $0xa0] sm:$0xff]
        %v1410 = vld [vmem:[#allocation3 + $0xa8] sm:$0xff]
        %v1411 = vld [vmem:[#allocation3 + $0xb0] sm:$0xff]
        %v1412 = vld [vmem:[#allocation3 + $0xb8] sm:$0xff]
        %v1413 = vld [vmem:[#allocation3 + $0xc0] sm:$0xff]
        %v1414 = vld [vmem:[#allocation3 + $0xc8] sm:$0xff]
        %v1415 = vld [vmem:[#allocation3 + $0xd0] sm:$0xff]
        %v1416 = vld [vmem:[#allocation3 + $0xd8] sm:$0xff]
        %v1417 = vld [vmem:[#allocation3 + $0xe0] sm:$0xff]
        %v1418 = vld [vmem:[#allocation3 + $0xe8] sm:$0xff]
        %v1419 = vld [vmem:[#allocation3 + $0xf0] sm:$0xff]
        %v1420 = vld [vmem:[#allocation3 + $0xf8] sm:$0xff]
        %v1421 = vld [vmem:[%s573] sm:$0xff]
        %v1422 = vld [vmem:[%s573 + $0x8] sm:$0xff]
        %v1423 = vld [vmem:[%s573 + $0x10] sm:$0xff]
        %v1424 = vld [vmem:[%s573 + $0x18] sm:$0xff]
        %v1425 = vld [vmem:[%s573 + $0x20] sm:$0xff]
        %v1426 = vld [vmem:[%s573 + $0x28] sm:$0xff]
        %v1427 = vld [vmem:[%s573 + $0x30] sm:$0xff]
        %v1428 = vld [vmem:[%s573 + $0x38] sm:$0xff]
        %v1429 = vld [vmem:[%s573 + $0x40] sm:$0xff]
        %v1430 = vld [vmem:[%s573 + $0x48] sm:$0xff]
        %v1431 = vld [vmem:[%s573 + $0x50] sm:$0xff]
        %v1432 = vld [vmem:[%s573 + $0x58] sm:$0xff]
        %v1433 = vld [vmem:[%s573 + $0x60] sm:$0xff]
        %v1434 = vld [vmem:[%s573 + $0x68] sm:$0xff]
        %v1435 = vld [vmem:[%s573 + $0x70] sm:$0xff]
        %v1436 = vld [vmem:[%s573 + $0x78] sm:$0xff]
        %v1437 = vld [vmem:[%s573 + $0x80] sm:$0xff]
        %v1438 = vld [vmem:[%s573 + $0x88] sm:$0xff]
        %v1439 = vld [vmem:[%s573 + $0x90] sm:$0xff]
        %v1440 = vld [vmem:[%s573 + $0x98] sm:$0xff]
        %v1441 = vld [vmem:[%s573 + $0xa0] sm:$0xff]
        %v1442 = vld [vmem:[%s573 + $0xa8] sm:$0xff]
        %v1443 = vld [vmem:[%s573 + $0xb0] sm:$0xff]
        %v1444 = vld [vmem:[%s573 + $0xb8] sm:$0xff]
        %v1445 = vld [vmem:[%s573 + $0xc0] sm:$0xff]
        %v1446 = vld [vmem:[%s573 + $0xc8] sm:$0xff]
        %v1447 = vld [vmem:[%s573 + $0xd0] sm:$0xff]
        %v1448 = vld [vmem:[%s573 + $0xd8] sm:$0xff]
        %v1449 = vld [vmem:[%s573 + $0xe0] sm:$0xff]
        %v1450 = vld [vmem:[%s573 + $0xe8] sm:$0xff]
        %v1451 = vld [vmem:[%s573 + $0xf0] sm:$0xff]
        %v1452 = vld [vmem:[%s573 + $0xf8] sm:$0xff]
        %v1453 = vld [vmem:[%s573 + $0x100] sm:$0xff]
        %v1454 = vld [vmem:[%s573 + $0x108] sm:$0xff]
        %v1455 = vld [vmem:[%s573 + $0x110] sm:$0xff]
        %v1456 = vld [vmem:[%s573 + $0x118] sm:$0xff]
        %v1457 = vld [vmem:[%s573 + $0x120] sm:$0xff]
        %v1458 = vld [vmem:[%s573 + $0x128] sm:$0xff]
        %v1459 = vld [vmem:[%s573 + $0x130] sm:$0xff]
        %v1460 = vld [vmem:[%s573 + $0x138] sm:$0xff]
        %v1461 = vld [vmem:[%s573 + $0x140] sm:$0xff]
        %v1462 = vld [vmem:[%s573 + $0x148] sm:$0xff]
        %v1463 = vld [vmem:[%s573 + $0x150] sm:$0xff]
        %v1464 = vld [vmem:[%s573 + $0x158] sm:$0xff]
        %v1465 = vld [vmem:[%s573 + $0x160] sm:$0xff]
        %v1466 = vld [vmem:[%s573 + $0x168] sm:$0xff]
        %v1467 = vld [vmem:[%s573 + $0x170] sm:$0xff]
        %v1468 = vld [vmem:[%s573 + $0x178] sm:$0xff]
        %v1469 = vld [vmem:[%s573 + $0x180] sm:$0xff]
        %v1470 = vld [vmem:[%s573 + $0x188] sm:$0xff]
        %v1471 = vld [vmem:[%s573 + $0x190] sm:$0xff]
        %v1472 = vld [vmem:[%s573 + $0x198] sm:$0xff]
        %v1473 = vld [vmem:[%s573 + $0x1a0] sm:$0xff]
        %v1474 = vld [vmem:[%s573 + $0x1a8] sm:$0xff]
        %v1475 = vld [vmem:[%s573 + $0x1b0] sm:$0xff]
        %v1476 = vld [vmem:[%s573 + $0x1b8] sm:$0xff]
        %v1477 = vld [vmem:[%s573 + $0x1c0] sm:$0xff]
        %v1478 = vld [vmem:[%s573 + $0x1c8] sm:$0xff]
        %v1479 = vld [vmem:[%s573 + $0x1d0] sm:$0xff]
        %v1480 = vld [vmem:[%s573 + $0x1d8] sm:$0xff]
        %v1481 = vld [vmem:[%s573 + $0x1e0] sm:$0xff]
        %v1482 = vld [vmem:[%s573 + $0x1e8] sm:$0xff]
        %v1483 = vld [vmem:[%s573 + $0x1f0] sm:$0xff]
        %v1484 = vld [vmem:[%s573 + $0x1f8] sm:$0xff]
        %v1549 = vunpack.c.l.b16 %v1421
        %v1550 = vunpack.c.h.b16 %v1421
        %v1551 = vunpack.c.l.b16 %v1422
        %v1552 = vunpack.c.h.b16 %v1422
        %v1553 = vunpack.c.l.b16 %v1423
        %v1554 = vunpack.c.h.b16 %v1423
        %v1555 = vunpack.c.l.b16 %v1424
        %v1556 = vunpack.c.h.b16 %v1424
        %v1557 = vunpack.c.l.b16 %v1425
        %v1558 = vunpack.c.h.b16 %v1425
        %v1559 = vunpack.c.l.b16 %v1426
        %v1560 = vunpack.c.h.b16 %v1426
        %v1561 = vunpack.c.l.b16 %v1427
        %v1562 = vunpack.c.h.b16 %v1427
        %v1563 = vunpack.c.l.b16 %v1428
        %v1564 = vunpack.c.h.b16 %v1428
        %v1565 = vunpack.c.l.b16 %v1429
        %v1566 = vunpack.c.h.b16 %v1429
        %v1567 = vunpack.c.l.b16 %v1430
        %v1568 = vunpack.c.h.b16 %v1430
        %v1569 = vunpack.c.l.b16 %v1431
        %v1570 = vunpack.c.h.b16 %v1431
        %v1571 = vunpack.c.l.b16 %v1432
        %v1572 = vunpack.c.h.b16 %v1432
        %v1573 = vunpack.c.l.b16 %v1433
        %v1574 = vunpack.c.h.b16 %v1433
        %v1575 = vunpack.c.l.b16 %v1434
        %v1576 = vunpack.c.h.b16 %v1434
        %v1577 = vunpack.c.l.b16 %v1435
        %v1578 = vunpack.c.h.b16 %v1435
        %v1579 = vunpack.c.l.b16 %v1436
        %v1580 = vunpack.c.h.b16 %v1436
        %v1581 = vunpack.c.l.b16 %v1437
        %v1582 = vunpack.c.h.b16 %v1437
        %v1583 = vunpack.c.l.b16 %v1438
        %v1584 = vunpack.c.h.b16 %v1438
        %v1585 = vunpack.c.l.b16 %v1439
        %v1586 = vunpack.c.h.b16 %v1439
        %v1587 = vunpack.c.l.b16 %v1440
        %v1588 = vunpack.c.h.b16 %v1440
        %v1589 = vunpack.c.l.b16 %v1441
        %v1590 = vunpack.c.h.b16 %v1441
        %v1591 = vunpack.c.l.b16 %v1442
        %v1592 = vunpack.c.h.b16 %v1442
        %v1593 = vunpack.c.l.b16 %v1443
        %v1594 = vunpack.c.h.b16 %v1443
        %v1595 = vunpack.c.l.b16 %v1444
        %v1596 = vunpack.c.h.b16 %v1444
        %v1597 = vunpack.c.l.b16 %v1445
        %v1598 = vunpack.c.h.b16 %v1445
        %v1599 = vunpack.c.l.b16 %v1446
        %v1600 = vunpack.c.h.b16 %v1446
        %v1601 = vunpack.c.l.b16 %v1447
        %v1602 = vunpack.c.h.b16 %v1447
        %v1603 = vunpack.c.l.b16 %v1448
        %v1604 = vunpack.c.h.b16 %v1448
        %v1605 = vunpack.c.l.b16 %v1449
        %v1606 = vunpack.c.h.b16 %v1449
        %v1607 = vunpack.c.l.b16 %v1450
        %v1608 = vunpack.c.h.b16 %v1450
        %v1609 = vunpack.c.l.b16 %v1451
        %v1610 = vunpack.c.h.b16 %v1451
        %v1611 = vunpack.c.l.b16 %v1452
        %v1612 = vunpack.c.h.b16 %v1452
        %v1613 = vunpack.c.l.b16 %v1453
        %v1614 = vunpack.c.h.b16 %v1453
        %v1615 = vunpack.c.l.b16 %v1454
        %v1616 = vunpack.c.h.b16 %v1454
        %v1617 = vunpack.c.l.b16 %v1455
        %v1618 = vunpack.c.h.b16 %v1455
        %v1619 = vunpack.c.l.b16 %v1456
        %v1620 = vunpack.c.h.b16 %v1456
        %v1621 = vunpack.c.l.b16 %v1457
        %v1622 = vunpack.c.h.b16 %v1457
        %v1623 = vunpack.c.l.b16 %v1458
        %v1624 = vunpack.c.h.b16 %v1458
        %v1625 = vunpack.c.l.b16 %v1459
        %v1626 = vunpack.c.h.b16 %v1459
        %v1627 = vunpack.c.l.b16 %v1460
        %v1628 = vunpack.c.h.b16 %v1460
        %v1629 = vunpack.c.l.b16 %v1461
        %v1630 = vunpack.c.h.b16 %v1461
        %v1631 = vunpack.c.l.b16 %v1462
        %v1632 = vunpack.c.h.b16 %v1462
        %v1633 = vunpack.c.l.b16 %v1463
        %v1634 = vunpack.c.h.b16 %v1463
        %v1635 = vunpack.c.l.b16 %v1464
        %v1636 = vunpack.c.h.b16 %v1464
        %v1637 = vunpack.c.l.b16 %v1465
        %v1638 = vunpack.c.h.b16 %v1465
        %v1639 = vunpack.c.l.b16 %v1466
        %v1640 = vunpack.c.h.b16 %v1466
        %v1641 = vunpack.c.l.b16 %v1467
        %v1642 = vunpack.c.h.b16 %v1467
        %v1643 = vunpack.c.l.b16 %v1468
        %v1644 = vunpack.c.h.b16 %v1468
        %v1645 = vunpack.c.l.b16 %v1469
        %v1646 = vunpack.c.h.b16 %v1469
        %v1647 = vunpack.c.l.b16 %v1470
        %v1648 = vunpack.c.h.b16 %v1470
        %v1649 = vunpack.c.l.b16 %v1471
        %v1650 = vunpack.c.h.b16 %v1471
        %v1651 = vunpack.c.l.b16 %v1472
        %v1652 = vunpack.c.h.b16 %v1472
        %v1653 = vunpack.c.l.b16 %v1473
        %v1654 = vunpack.c.h.b16 %v1473
        %v1655 = vunpack.c.l.b16 %v1474
        %v1656 = vunpack.c.h.b16 %v1474
        %v1657 = vunpack.c.l.b16 %v1475
        %v1658 = vunpack.c.h.b16 %v1475
        %v1659 = vunpack.c.l.b16 %v1476
        %v1660 = vunpack.c.h.b16 %v1476
        %v1661 = vunpack.c.l.b16 %v1477
        %v1662 = vunpack.c.h.b16 %v1477
        %v1663 = vunpack.c.l.b16 %v1478
        %v1664 = vunpack.c.h.b16 %v1478
        %v1665 = vunpack.c.l.b16 %v1479
        %v1666 = vunpack.c.h.b16 %v1479
        %v1667 = vunpack.c.l.b16 %v1480
        %v1668 = vunpack.c.h.b16 %v1480
        %v1669 = vunpack.c.l.b16 %v1481
        %v1670 = vunpack.c.h.b16 %v1481
        %v1671 = vunpack.c.l.b16 %v1482
        %v1672 = vunpack.c.h.b16 %v1482
        %v1673 = vunpack.c.l.b16 %v1483
        %v1674 = vunpack.c.h.b16 %v1483
        %v1675 = vunpack.c.l.b16 %v1484
        %v1676 = vunpack.c.h.b16 %v1484
        %v1677 = vpack.c.b16 %v1553, %v1549
        %v1678 = vpack.c.b16 %v1554, %v1550
        %v1679 = vpack.c.b16 %v1555, %v1551
        %v1680 = vpack.c.b16 %v1556, %v1552
        %v1681 = vpack.c.b16 %v1561, %v1557
        %v1682 = vpack.c.b16 %v1562, %v1558
        %v1683 = vpack.c.b16 %v1563, %v1559
        %v1684 = vpack.c.b16 %v1564, %v1560
        %v1685 = vpack.c.b16 %v1569, %v1565
        %v1686 = vpack.c.b16 %v1570, %v1566
        %v1687 = vpack.c.b16 %v1571, %v1567
        %v1688 = vpack.c.b16 %v1572, %v1568
        %v1689 = vpack.c.b16 %v1577, %v1573
        %v1690 = vpack.c.b16 %v1578, %v1574
        %v1691 = vpack.c.b16 %v1579, %v1575
        %v1692 = vpack.c.b16 %v1580, %v1576
        %v1693 = vpack.c.b16 %v1585, %v1581
        %v1694 = vpack.c.b16 %v1586, %v1582
        %v1695 = vpack.c.b16 %v1587, %v1583
        %v1696 = vpack.c.b16 %v1588, %v1584
        %v1697 = vpack.c.b16 %v1593, %v1589
        %v1698 = vpack.c.b16 %v1594, %v1590
        %v1699 = vpack.c.b16 %v1595, %v1591
        %v1700 = vpack.c.b16 %v1596, %v1592
        %v1701 = vpack.c.b16 %v1601, %v1597
        %v1702 = vpack.c.b16 %v1602, %v1598
        %v1703 = vpack.c.b16 %v1603, %v1599
        %v1704 = vpack.c.b16 %v1604, %v1600
        %v1705 = vpack.c.b16 %v1609, %v1605
        %v1706 = vpack.c.b16 %v1610, %v1606
        %v1707 = vpack.c.b16 %v1611, %v1607
        %v1708 = vpack.c.b16 %v1612, %v1608
        %v1709 = vpack.c.b16 %v1617, %v1613
        %v1710 = vpack.c.b16 %v1618, %v1614
        %v1711 = vpack.c.b16 %v1619, %v1615
        %v1712 = vpack.c.b16 %v1620, %v1616
        %v1713 = vpack.c.b16 %v1625, %v1621
        %v1714 = vpack.c.b16 %v1626, %v1622
        %v1715 = vpack.c.b16 %v1627, %v1623
        %v1716 = vpack.c.b16 %v1628, %v1624
        %v1717 = vpack.c.b16 %v1633, %v1629
        %v1718 = vpack.c.b16 %v1634, %v1630
        %v1719 = vpack.c.b16 %v1635, %v1631
        %v1720 = vpack.c.b16 %v1636, %v1632
        %v1721 = vpack.c.b16 %v1641, %v1637
        %v1722 = vpack.c.b16 %v1642, %v1638
        %v1723 = vpack.c.b16 %v1643, %v1639
        %v1724 = vpack.c.b16 %v1644, %v1640
        %v1725 = vpack.c.b16 %v1649, %v1645
        %v1726 = vpack.c.b16 %v1650, %v1646
        %v1727 = vpack.c.b16 %v1651, %v1647
        %v1728 = vpack.c.b16 %v1652, %v1648
        %v1729 = vpack.c.b16 %v1657, %v1653
        %v1730 = vpack.c.b16 %v1658, %v1654
        %v1731 = vpack.c.b16 %v1659, %v1655
        %v1732 = vpack.c.b16 %v1660, %v1656
        %v1733 = vpack.c.b16 %v1665, %v1661
        %v1734 = vpack.c.b16 %v1666, %v1662
        %v1735 = vpack.c.b16 %v1667, %v1663
        %v1736 = vpack.c.b16 %v1668, %v1664
        %v1737 = vpack.c.b16 %v1673, %v1669
        %v1738 = vpack.c.b16 %v1674, %v1670
        %v1739 = vpack.c.b16 %v1675, %v1671
        %v1740 = vpack.c.b16 %v1676, %v1672
        %1805 = vmatprep.subr.bf16.mxu0 %v1706
        %1806 = vmatpush1.bf16.msra.mxu0 %v1705
        %1807 = vmatprep.subr.bf16.mxu0 %v1702
        %1808 = vmatpush1.bf16.msra.mxu0 %v1701
        %1809 = vmatprep.subr.bf16.mxu0 %v1698
        %1810 = vmatpush1.bf16.msra.mxu0 %v1697
        %1811 = vmatprep.subr.bf16.mxu0 %v1694
        %1812 = vmatpush1.bf16.msra.mxu0 %v1693
        %1813 = vmatprep.subr.bf16.mxu0 %v1690
        %1814 = vmatpush1.bf16.msra.mxu0 %v1689
        %1815 = vmatprep.subr.bf16.mxu0 %v1686
        %1816 = vmatpush1.bf16.msra.mxu0 %v1685
        %1817 = vmatprep.subr.bf16.mxu0 %v1682
        %1818 = vmatpush1.bf16.msra.mxu0 %v1681
        %1819 = vmatprep.subr.bf16.mxu0 %v1678
        %1820 = vmatpush1.bf16.msra.mxu0 %v1677
        %1821 = vmatprep.subr.bf16.mxu0 %v1738
        %1822 = vmatpush2.bf16.msra.mxu0 %v1737
        %1823 = vmatprep.subr.bf16.mxu0 %v1734
        %1824 = vmatpush2.bf16.msra.mxu0 %v1733
        %1825 = vmatprep.subr.bf16.mxu0 %v1730
        %1826 = vmatpush2.bf16.msra.mxu0 %v1729
        %1827 = vmatprep.subr.bf16.mxu0 %v1726
        %1828 = vmatpush2.bf16.msra.mxu0 %v1725
        %1829 = vmatprep.subr.bf16.mxu0 %v1722
        %1830 = vmatpush2.bf16.msra.mxu0 %v1721
        %1831 = vmatprep.subr.bf16.mxu0 %v1718
        %1832 = vmatpush2.bf16.msra.mxu0 %v1717
        %1833 = vmatprep.subr.bf16.mxu0 %v1714
        %1834 = vmatpush2.bf16.msra.mxu0 %v1713
        %1835 = vmatprep.subr.bf16.mxu0 %v1710
        %1836 = vmatpush2.bf16.msra.mxu0 %v1709
        %1837 = vmatprep.mubr.bf16.mxu0 %v844
        %1838 = vmatmul.mubr.bf16.gmra.mxu0 %v843
        %v1839 = vpop.f32.mrf.mxu0
        %v1840 = vadd.f32 0.0, %v1839
        %v1841 = vpop.f32.mrf.mxu0
        %v1842 = vadd.f32 0.0, %v1841
        %v1843 = vpop.f32.mrf.mxu0
        %v1844 = vadd.f32 0.0, %v1843
        %v1845 = vpop.f32.mrf.mxu0
        %v1846 = vadd.f32 0.0, %v1845
        %1847 = vmatprep.mubr.bf16.mxu0 %v846
        %1848 = vmatmul.mubr.bf16.gmra.mxu0 %v845
        %v1849 = vpop.f32.mrf.mxu0
        %v1850 = vadd.f32 0.0, %v1849
        %v1851 = vpop.f32.mrf.mxu0
        %v1852 = vadd.f32 0.0, %v1851
        %v1853 = vpop.f32.mrf.mxu0
        %v1854 = vadd.f32 0.0, %v1853
        %v1855 = vpop.f32.mrf.mxu0
        %v1856 = vadd.f32 0.0, %v1855
        %1857 = vmatprep.mubr.bf16.mxu0 %v848
        %1858 = vmatmul.mubr.bf16.gmra.mxu0 %v847
        %v1859 = vpop.f32.mrf.mxu0
        %v1860 = vadd.f32 0.0, %v1859
        %v1861 = vpop.f32.mrf.mxu0
        %v1862 = vadd.f32 0.0, %v1861
        %v1863 = vpop.f32.mrf.mxu0
        %v1864 = vadd.f32 0.0, %v1863
        %v1865 = vpop.f32.mrf.mxu0
        %v1866 = vadd.f32 0.0, %v1865
        %1867 = vmatprep.mubr.bf16.mxu0 %v850
        %1868 = vmatmul.mubr.bf16.gmra.mxu0 %v849
        %v1869 = vpop.f32.mrf.mxu0
        %v1870 = vadd.f32 0.0, %v1869
        %v1871 = vpop.f32.mrf.mxu0
        %v1872 = vadd.f32 0.0, %v1871
        %v1873 = vpop.f32.mrf.mxu0
        %v1874 = vadd.f32 0.0, %v1873
        %v1875 = vpop.f32.mrf.mxu0
        %v1876 = vadd.f32 0.0, %v1875
        %1877 = vdwg.mxu0
        %1878 = vmatprep.subr.bf16.mxu0 %v1708
        %1879 = vmatpush1.bf16.msra.mxu0 %v1707
        %1880 = vmatprep.subr.bf16.mxu0 %v1704
        %1881 = vmatpush1.bf16.msra.mxu0 %v1703
        %1882 = vmatprep.subr.bf16.mxu0 %v1700
        %1883 = vmatpush1.bf16.msra.mxu0 %v1699
        %1884 = vmatprep.subr.bf16.mxu0 %v1696
        %1885 = vmatpush1.bf16.msra.mxu0 %v1695
        %1886 = vmatprep.subr.bf16.mxu0 %v1692
        %1887 = vmatpush1.bf16.msra.mxu0 %v1691
        %1888 = vmatprep.subr.bf16.mxu0 %v1688
        %1889 = vmatpush1.bf16.msra.mxu0 %v1687
        %1890 = vmatprep.subr.bf16.mxu0 %v1684
        %1891 = vmatpush1.bf16.msra.mxu0 %v1683
        %1892 = vmatprep.subr.bf16.mxu0 %v1680
        %1893 = vmatpush1.bf16.msra.mxu0 %v1679
        %1894 = vmatprep.subr.bf16.mxu0 %v1740
        %1895 = vmatpush2.bf16.msra.mxu0 %v1739
        %1896 = vmatprep.subr.bf16.mxu0 %v1736
        %1897 = vmatpush2.bf16.msra.mxu0 %v1735
        %1898 = vmatprep.subr.bf16.mxu0 %v1732
        %1899 = vmatpush2.bf16.msra.mxu0 %v1731
        %1900 = vmatprep.subr.bf16.mxu0 %v1728
        %1901 = vmatpush2.bf16.msra.mxu0 %v1727
        %1902 = vmatprep.subr.bf16.mxu0 %v1724
        %1903 = vmatpush2.bf16.msra.mxu0 %v1723
        %1904 = vmatprep.subr.bf16.mxu0 %v1720
        %1905 = vmatpush2.bf16.msra.mxu0 %v1719
        %1906 = vmatprep.subr.bf16.mxu0 %v1716
        %1907 = vmatpush2.bf16.msra.mxu0 %v1715
        %1908 = vmatprep.subr.bf16.mxu0 %v1712
        %1909 = vmatpush2.bf16.msra.mxu0 %v1711
        %1910 = vmatprep.mubr.bf16.mxu0 %v844
        %1911 = vmatmul.mubr.bf16.gmra.mxu0 %v843
        %v1912 = vpop.f32.mrf.mxu0
        %v1913 = vadd.f32 0.0, %v1912
        %v1914 = vpop.f32.mrf.mxu0
        %v1915 = vadd.f32 0.0, %v1914
        %v1916 = vpop.f32.mrf.mxu0
        %v1917 = vadd.f32 0.0, %v1916
        %v1918 = vpop.f32.mrf.mxu0
        %v1919 = vadd.f32 0.0, %v1918
        %1920 = vmatprep.mubr.bf16.mxu0 %v846
        %1921 = vmatmul.mubr.bf16.gmra.mxu0 %v845
        %v1922 = vpop.f32.mrf.mxu0
        %v1923 = vadd.f32 0.0, %v1922
        %v1924 = vpop.f32.mrf.mxu0
        %v1925 = vadd.f32 0.0, %v1924
        %v1926 = vpop.f32.mrf.mxu0
        %v1927 = vadd.f32 0.0, %v1926
        %v1928 = vpop.f32.mrf.mxu0
        %v1929 = vadd.f32 0.0, %v1928
        %1930 = vmatprep.mubr.bf16.mxu0 %v848
        %1931 = vmatmul.mubr.bf16.gmra.mxu0 %v847
        %v1932 = vpop.f32.mrf.mxu0
        %v1933 = vadd.f32 0.0, %v1932
        %v1934 = vpop.f32.mrf.mxu0
        %v1935 = vadd.f32 0.0, %v1934
        %v1936 = vpop.f32.mrf.mxu0
        %v1937 = vadd.f32 0.0, %v1936
        %v1938 = vpop.f32.mrf.mxu0
        %v1939 = vadd.f32 0.0, %v1938
        %1940 = vmatprep.mubr.bf16.mxu0 %v850
        %1941 = vmatmul.mubr.bf16.gmra.mxu0 %v849
        %v1942 = vpop.f32.mrf.mxu0
        %v1943 = vadd.f32 0.0, %v1942
        %v1944 = vpop.f32.mrf.mxu0
        %v1945 = vadd.f32 0.0, %v1944
        %v1946 = vpop.f32.mrf.mxu0
        %v1947 = vadd.f32 0.0, %v1946
        %v1948 = vpop.f32.mrf.mxu0
        %v1949 = vadd.f32 0.0, %v1948
        %1950 = vdwg.mxu0
        %v1951 = vadd.f32 %v1389, %v1840
        %v1952 = vadd.f32 %v1390, %v1842
        %v1953 = vadd.f32 %v1391, %v1913
        %v1954 = vadd.f32 %v1392, %v1915
        %v1955 = vadd.f32 %v1393, %v1844
        %v1956 = vadd.f32 %v1394, %v1846
        %v1957 = vadd.f32 %v1395, %v1917
        %v1958 = vadd.f32 %v1396, %v1919
        %v1959 = vadd.f32 %v1397, %v1850
        %v1960 = vadd.f32 %v1398, %v1852
        %v1961 = vadd.f32 %v1399, %v1923
        %v1962 = vadd.f32 %v1400, %v1925
        %v1963 = vadd.f32 %v1401, %v1854
        %v1964 = vadd.f32 %v1402, %v1856
        %v1965 = vadd.f32 %v1403, %v1927
        %v1966 = vadd.f32 %v1404, %v1929
        %v1967 = vadd.f32 %v1405, %v1860
        %v1968 = vadd.f32 %v1406, %v1862
        %v1969 = vadd.f32 %v1407, %v1933
        %v1970 = vadd.f32 %v1408, %v1935
        %v1971 = vadd.f32 %v1409, %v1864
        %v1972 = vadd.f32 %v1410, %v1866
        %v1973 = vadd.f32 %v1411, %v1937
        %v1974 = vadd.f32 %v1412, %v1939
        %v1975 = vadd.f32 %v1413, %v1870
        %v1976 = vadd.f32 %v1414, %v1872
        %v1977 = vadd.f32 %v1415, %v1943
        %v1978 = vadd.f32 %v1416, %v1945
        %v1979 = vadd.f32 %v1417, %v1874
        %v1980 = vadd.f32 %v1418, %v1876
        %v1981 = vadd.f32 %v1419, %v1947
        %v1982 = vadd.f32 %v1420, %v1949
        %1983 = vst [vmem:[#allocation3] sm:$0xff] %v1951
        %1984 = vst [vmem:[#allocation3 + $0x8] sm:$0xff] %v1952
        %1985 = vst [vmem:[#allocation3 + $0x10] sm:$0xff] %v1953
        %1986 = vst [vmem:[#allocation3 + $0x18] sm:$0xff] %v1954
        %1987 = vst [vmem:[#allocation3 + $0x20] sm:$0xff] %v1955
        %1988 = vst [vmem:[#allocation3 + $0x28] sm:$0xff] %v1956
        %1989 = vst [vmem:[#allocation3 + $0x30] sm:$0xff] %v1957
        %1990 = vst [vmem:[#allocation3 + $0x38] sm:$0xff] %v1958
        %1991 = vst [vmem:[#allocation3 + $0x40] sm:$0xff] %v1959
        %1992 = vst [vmem:[#allocation3 + $0x48] sm:$0xff] %v1960
        %1993 = vst [vmem:[#allocation3 + $0x50] sm:$0xff] %v1961
        %1994 = vst [vmem:[#allocation3 + $0x58] sm:$0xff] %v1962
        %1995 = vst [vmem:[#allocation3 + $0x60] sm:$0xff] %v1963
        %1996 = vst [vmem:[#allocation3 + $0x68] sm:$0xff] %v1964
        %1997 = vst [vmem:[#allocation3 + $0x70] sm:$0xff] %v1965
        %1998 = vst [vmem:[#allocation3 + $0x78] sm:$0xff] %v1966
        %1999 = vst [vmem:[#allocation3 + $0x80] sm:$0xff] %v1967
        %2000 = vst [vmem:[#allocation3 + $0x88] sm:$0xff] %v1968
        %2001 = vst [vmem:[#allocation3 + $0x90] sm:$0xff] %v1969
        %2002 = vst [vmem:[#allocation3 + $0x98] sm:$0xff] %v1970
        %2003 = vst [vmem:[#allocation3 + $0xa0] sm:$0xff] %v1971
        %2004 = vst [vmem:[#allocation3 + $0xa8] sm:$0xff] %v1972
        %2005 = vst [vmem:[#allocation3 + $0xb0] sm:$0xff] %v1973
        %2006 = vst [vmem:[#allocation3 + $0xb8] sm:$0xff] %v1974
        %2007 = vst [vmem:[#allocation3 + $0xc0] sm:$0xff] %v1975
        %2008 = vst [vmem:[#allocation3 + $0xc8] sm:$0xff] %v1976
        %2009 = vst [vmem:[#allocation3 + $0xd0] sm:$0xff] %v1977
        %2010 = vst [vmem:[#allocation3 + $0xd8] sm:$0xff] %v1978
        %2011 = vst [vmem:[#allocation3 + $0xe0] sm:$0xff] %v1979
        %2012 = vst [vmem:[#allocation3 + $0xe8] sm:$0xff] %v1980
        %2013 = vst [vmem:[#allocation3 + $0xf0] sm:$0xff] %v1981
        %2014 = vst [vmem:[#allocation3 + $0xf8] sm:$0xff] %v1982
        // Predicated region
        $region91: #{ngpt_forward.17} parent=77 // pred_check
          %p2015 = pneg %p647
        $region92: #{ngpt_forward.17} parent=77 // pred_check_branch
          %2017 = sbr.rel (%p2015) target = $region94
        $region93: #{ngpt_forward.17} parent=77 // pred_region
          %v2018 = vld [vmem:[#allocation2] sm:$0xff]
          %v2019 = vld [vmem:[#allocation2 + $0x8] sm:$0xff]
          %v2020 = vld [vmem:[#allocation2 + $0x10] sm:$0xff]
          %v2021 = vld [vmem:[#allocation2 + $0x18] sm:$0xff]
          %v2022 = vld [vmem:[#allocation2 + $0x20] sm:$0xff]
          %v2023 = vld [vmem:[#allocation2 + $0x28] sm:$0xff]
          %v2024 = vld [vmem:[#allocation2 + $0x30] sm:$0xff]
          %v2025 = vld [vmem:[#allocation2 + $0x38] sm:$0xff]
          %v2026 = vld [vmem:[#allocation2 + $0x40] sm:$0xff]
          %v2027 = vld [vmem:[#allocation2 + $0x48] sm:$0xff]
          %v2028 = vld [vmem:[#allocation2 + $0x50] sm:$0xff]
          %v2029 = vld [vmem:[#allocation2 + $0x58] sm:$0xff]
          %v2030 = vld [vmem:[#allocation2 + $0x60] sm:$0xff]
          %v2031 = vld [vmem:[#allocation2 + $0x68] sm:$0xff]
          %v2032 = vld [vmem:[#allocation2 + $0x70] sm:$0xff]
          %v2033 = vld [vmem:[#allocation2 + $0x78] sm:$0xff]
          %v2034 = vld [vmem:[#allocation2 + $0x80] sm:$0xff]
          %v2035 = vld [vmem:[#allocation2 + $0x88] sm:$0xff]
          %v2036 = vld [vmem:[#allocation2 + $0x90] sm:$0xff]
          %v2037 = vld [vmem:[#allocation2 + $0x98] sm:$0xff]
          %v2038 = vld [vmem:[#allocation2 + $0xa0] sm:$0xff]
          %v2039 = vld [vmem:[#allocation2 + $0xa8] sm:$0xff]
          %v2040 = vld [vmem:[#allocation2 + $0xb0] sm:$0xff]
          %v2041 = vld [vmem:[#allocation2 + $0xb8] sm:$0xff]
          %v2042 = vld [vmem:[#allocation2 + $0xc0] sm:$0xff]
          %v2043 = vld [vmem:[#allocation2 + $0xc8] sm:$0xff]
          %v2044 = vld [vmem:[#allocation2 + $0xd0] sm:$0xff]
          %v2045 = vld [vmem:[#allocation2 + $0xd8] sm:$0xff]
          %v2046 = vld [vmem:[#allocation2 + $0xe0] sm:$0xff]
          %v2047 = vld [vmem:[#allocation2 + $0xe8] sm:$0xff]
          %v2048 = vld [vmem:[#allocation2 + $0xf0] sm:$0xff]
          %v2049 = vld [vmem:[#allocation2 + $0xf8] sm:$0xff]
          %v2050 = vld [vmem:[%s638] sm:$0xf]
          %v2052 = vlaneseq
          %v2053 = vshrl.u32 %v2052, 7
          %v2054 = vsub.s32 0, %v2053
          %v2055 = vrot.slane %v2050, %v2054
          %v2056 = vlaneseq
          %v2057 = vshrl.u32 %v2056, 7
          %v2058 = vsub.s32 1, %v2057
          %v2059 = vrot.slane %v2050, %v2058
          %v2060 = vlaneseq
          %v2061 = vshrl.u32 %v2060, 7
          %v2062 = vsub.s32 2, %v2061
          %v2063 = vrot.slane %v2050, %v2062
          %v2064 = vlaneseq
          %v2065 = vshrl.u32 %v2064, 7
          %v2066 = vsub.s32 3, %v2065
          %v2067 = vrot.slane %v2050, %v2066
          %v2072 = vmul.f32 %v2018, %v2055
          %v2073 = vmul.f32 %v2019, %v2059
          %v2074 = vmul.f32 %v2020, %v2063
          %v2075 = vmul.f32 %v2021, %v2067
          %v2076 = vmul.f32 %v2022, %v2055
          %v2077 = vmul.f32 %v2023, %v2059
          %v2078 = vmul.f32 %v2024, %v2063
          %v2079 = vmul.f32 %v2025, %v2067
          %v2080 = vmul.f32 %v2026, %v2055
          %v2081 = vmul.f32 %v2027, %v2059
          %v2082 = vmul.f32 %v2028, %v2063
          %v2083 = vmul.f32 %v2029, %v2067
          %v2084 = vmul.f32 %v2030, %v2055
          %v2085 = vmul.f32 %v2031, %v2059
          %v2086 = vmul.f32 %v2032, %v2063
          %v2087 = vmul.f32 %v2033, %v2067
          %v2088 = vmul.f32 %v2034, %v2055
          %v2089 = vmul.f32 %v2035, %v2059
          %v2090 = vmul.f32 %v2036, %v2063
          %v2091 = vmul.f32 %v2037, %v2067
          %v2092 = vmul.f32 %v2038, %v2055
          %v2093 = vmul.f32 %v2039, %v2059
          %v2094 = vmul.f32 %v2040, %v2063
          %v2095 = vmul.f32 %v2041, %v2067
          %v2096 = vmul.f32 %v2042, %v2055
          %v2097 = vmul.f32 %v2043, %v2059
          %v2098 = vmul.f32 %v2044, %v2063
          %v2099 = vmul.f32 %v2045, %v2067
          %v2100 = vmul.f32 %v2046, %v2055
          %v2101 = vmul.f32 %v2047, %v2059
          %v2102 = vmul.f32 %v2048, %v2063
          %v2103 = vmul.f32 %v2049, %v2067
          %v2104 = vld [vmem:[#allocation3] sm:$0xff]
          %v2105 = vld [vmem:[#allocation3 + $0x8] sm:$0xff]
          %v2106 = vld [vmem:[#allocation3 + $0x10] sm:$0xff]
          %v2107 = vld [vmem:[#allocation3 + $0x18] sm:$0xff]
          %v2108 = vld [vmem:[#allocation3 + $0x20] sm:$0xff]
          %v2109 = vld [vmem:[#allocation3 + $0x28] sm:$0xff]
          %v2110 = vld [vmem:[#allocation3 + $0x30] sm:$0xff]
          %v2111 = vld [vmem:[#allocation3 + $0x38] sm:$0xff]
          %v2112 = vld [vmem:[#allocation3 + $0x40] sm:$0xff]
          %v2113 = vld [vmem:[#allocation3 + $0x48] sm:$0xff]
          %v2114 = vld [vmem:[#allocation3 + $0x50] sm:$0xff]
          %v2115 = vld [vmem:[#allocation3 + $0x58] sm:$0xff]
          %v2116 = vld [vmem:[#allocation3 + $0x60] sm:$0xff]
          %v2117 = vld [vmem:[#allocation3 + $0x68] sm:$0xff]
          %v2118 = vld [vmem:[#allocation3 + $0x70] sm:$0xff]
          %v2119 = vld [vmem:[#allocation3 + $0x78] sm:$0xff]
          %v2120 = vld [vmem:[#allocation3 + $0x80] sm:$0xff]
          %v2121 = vld [vmem:[#allocation3 + $0x88] sm:$0xff]
          %v2122 = vld [vmem:[#allocation3 + $0x90] sm:$0xff]
          %v2123 = vld [vmem:[#allocation3 + $0x98] sm:$0xff]
          %v2124 = vld [vmem:[#allocation3 + $0xa0] sm:$0xff]
          %v2125 = vld [vmem:[#allocation3 + $0xa8] sm:$0xff]
          %v2126 = vld [vmem:[#allocation3 + $0xb0] sm:$0xff]
          %v2127 = vld [vmem:[#allocation3 + $0xb8] sm:$0xff]
          %v2128 = vld [vmem:[#allocation3 + $0xc0] sm:$0xff]
          %v2129 = vld [vmem:[#allocation3 + $0xc8] sm:$0xff]
          %v2130 = vld [vmem:[#allocation3 + $0xd0] sm:$0xff]
          %v2131 = vld [vmem:[#allocation3 + $0xd8] sm:$0xff]
          %v2132 = vld [vmem:[#allocation3 + $0xe0] sm:$0xff]
          %v2133 = vld [vmem:[#allocation3 + $0xe8] sm:$0xff]
          %v2134 = vld [vmem:[#allocation3 + $0xf0] sm:$0xff]
          %v2135 = vld [vmem:[#allocation3 + $0xf8] sm:$0xff]
          %v2136 = vld [vmem:[%s643] sm:$0xf]
          %v2138 = vlaneseq
          %v2139 = vshrl.u32 %v2138, 7
          %v2140 = vsub.s32 0, %v2139
          %v2141 = vrot.slane %v2136, %v2140
          %v2142 = vlaneseq
          %v2143 = vshrl.u32 %v2142, 7
          %v2144 = vsub.s32 1, %v2143
          %v2145 = vrot.slane %v2136, %v2144
          %v2146 = vlaneseq
          %v2147 = vshrl.u32 %v2146, 7
          %v2148 = vsub.s32 2, %v2147
          %v2149 = vrot.slane %v2136, %v2148
          %v2150 = vlaneseq
          %v2151 = vshrl.u32 %v2150, 7
          %v2152 = vsub.s32 3, %v2151
          %v2153 = vrot.slane %v2136, %v2152
          %v2158 = vmul.f32 %v2104, %v2141
          %v2159 = vmul.f32 %v2105, %v2145
          %v2160 = vmul.f32 %v2106, %v2149
          %v2161 = vmul.f32 %v2107, %v2153
          %v2162 = vmul.f32 %v2108, %v2141
          %v2163 = vmul.f32 %v2109, %v2145
          %v2164 = vmul.f32 %v2110, %v2149
          %v2165 = vmul.f32 %v2111, %v2153
          %v2166 = vmul.f32 %v2112, %v2141
          %v2167 = vmul.f32 %v2113, %v2145
          %v2168 = vmul.f32 %v2114, %v2149
          %v2169 = vmul.f32 %v2115, %v2153
          %v2170 = vmul.f32 %v2116, %v2141
          %v2171 = vmul.f32 %v2117, %v2145
          %v2172 = vmul.f32 %v2118, %v2149
          %v2173 = vmul.f32 %v2119, %v2153
          %v2174 = vmul.f32 %v2120, %v2141
          %v2175 = vmul.f32 %v2121, %v2145
          %v2176 = vmul.f32 %v2122, %v2149
          %v2177 = vmul.f32 %v2123, %v2153
          %v2178 = vmul.f32 %v2124, %v2141
          %v2179 = vmul.f32 %v2125, %v2145
          %v2180 = vmul.f32 %v2126, %v2149
          %v2181 = vmul.f32 %v2127, %v2153
          %v2182 = vmul.f32 %v2128, %v2141
          %v2183 = vmul.f32 %v2129, %v2145
          %v2184 = vmul.f32 %v2130, %v2149
          %v2185 = vmul.f32 %v2131, %v2153
          %v2186 = vmul.f32 %v2132, %v2141
          %v2187 = vmul.f32 %v2133, %v2145
          %v2188 = vmul.f32 %v2134, %v2149
          %v2189 = vmul.f32 %v2135, %v2153
          %v2190 = vmul.f32 %v2158, 16.0
          %v2191 = vmul.f32 %v2159, 16.0
          %v2192 = vmul.f32 %v2160, 16.0
          %v2193 = vmul.f32 %v2161, 16.0
          %v2194 = vmul.f32 %v2162, 16.0
          %v2195 = vmul.f32 %v2163, 16.0
          %v2196 = vmul.f32 %v2164, 16.0
          %v2197 = vmul.f32 %v2165, 16.0
          %v2198 = vmul.f32 %v2166, 16.0
          %v2199 = vmul.f32 %v2167, 16.0
          %v2200 = vmul.f32 %v2168, 16.0
          %v2201 = vmul.f32 %v2169, 16.0
          %v2202 = vmul.f32 %v2170, 16.0
          %v2203 = vmul.f32 %v2171, 16.0
          %v2204 = vmul.f32 %v2172, 16.0
          %v2205 = vmul.f32 %v2173, 16.0
          %v2206 = vmul.f32 %v2174, 16.0
          %v2207 = vmul.f32 %v2175, 16.0
          %v2208 = vmul.f32 %v2176, 16.0
          %v2209 = vmul.f32 %v2177, 16.0
          %v2210 = vmul.f32 %v2178, 16.0
          %v2211 = vmul.f32 %v2179, 16.0
          %v2212 = vmul.f32 %v2180, 16.0
          %v2213 = vmul.f32 %v2181, 16.0
          %v2214 = vmul.f32 %v2182, 16.0
          %v2215 = vmul.f32 %v2183, 16.0
          %v2216 = vmul.f32 %v2184, 16.0
          %v2217 = vmul.f32 %v2185, 16.0
          %v2218 = vmul.f32 %v2186, 16.0
          %v2219 = vmul.f32 %v2187, 16.0
          %v2220 = vmul.f32 %v2188, 16.0
          %v2221 = vmul.f32 %v2189, 16.0
          %v2222 = vxor.u32 %v2190, 2147483648
          %v2223 = vxor.u32 %v2191, 2147483648
          %v2224 = vxor.u32 %v2192, 2147483648
          %v2225 = vxor.u32 %v2193, 2147483648
          %v2226 = vxor.u32 %v2194, 2147483648
          %v2227 = vxor.u32 %v2195, 2147483648
          %v2228 = vxor.u32 %v2196, 2147483648
          %v2229 = vxor.u32 %v2197, 2147483648
          %v2230 = vxor.u32 %v2198, 2147483648
          %v2231 = vxor.u32 %v2199, 2147483648
          %v2232 = vxor.u32 %v2200, 2147483648
          %v2233 = vxor.u32 %v2201, 2147483648
          %v2234 = vxor.u32 %v2202, 2147483648
          %v2235 = vxor.u32 %v2203, 2147483648
          %v2236 = vxor.u32 %v2204, 2147483648
          %v2237 = vxor.u32 %v2205, 2147483648
          %v2238 = vxor.u32 %v2206, 2147483648
          %v2239 = vxor.u32 %v2207, 2147483648
          %v2240 = vxor.u32 %v2208, 2147483648
          %v2241 = vxor.u32 %v2209, 2147483648
          %v2242 = vxor.u32 %v2210, 2147483648
          %v2243 = vxor.u32 %v2211, 2147483648
          %v2244 = vxor.u32 %v2212, 2147483648
          %v2245 = vxor.u32 %v2213, 2147483648
          %v2246 = vxor.u32 %v2214, 2147483648
          %v2247 = vxor.u32 %v2215, 2147483648
          %v2248 = vxor.u32 %v2216, 2147483648
          %v2249 = vxor.u32 %v2217, 2147483648
          %v2250 = vxor.u32 %v2218, 2147483648
          %v2251 = vxor.u32 %v2219, 2147483648
          %v2252 = vxor.u32 %v2220, 2147483648
          %v2253 = vxor.u32 %v2221, 2147483648
          %v2254 = vmul.f32 %v2222, 1.442695
          %v2255 = vpow.pop %v2254
          %v2256 = vmul.f32 %v2223, 1.442695
          %v2257 = vpow.pop %v2256
          %v2258 = vmul.f32 %v2224, 1.442695
          %v2259 = vpow.pop %v2258
          %v2260 = vmul.f32 %v2225, 1.442695
          %v2261 = vpow.pop %v2260
          %v2262 = vmul.f32 %v2226, 1.442695
          %v2263 = vpow.pop %v2262
          %v2264 = vmul.f32 %v2227, 1.442695
          %v2265 = vpow.pop %v2264
          %v2266 = vmul.f32 %v2228, 1.442695
          %v2267 = vpow.pop %v2266
          %v2268 = vmul.f32 %v2229, 1.442695
          %v2269 = vpow.pop %v2268
          %v2270 = vmul.f32 %v2230, 1.442695
          %v2271 = vpow.pop %v2270
          %v2272 = vmul.f32 %v2231, 1.442695
          %v2273 = vpow.pop %v2272
          %v2274 = vmul.f32 %v2232, 1.442695
          %v2275 = vpow.pop %v2274
          %v2276 = vmul.f32 %v2233, 1.442695
          %v2277 = vpow.pop %v2276
          %v2278 = vmul.f32 %v2234, 1.442695
          %v2279 = vpow.pop %v2278
          %v2280 = vmul.f32 %v2235, 1.442695
          %v2281 = vpow.pop %v2280
          %v2282 = vmul.f32 %v2236, 1.442695
          %v2283 = vpow.pop %v2282
          %v2284 = vmul.f32 %v2237, 1.442695
          %v2285 = vpow.pop %v2284
          %v2286 = vmul.f32 %v2238, 1.442695
          %v2287 = vpow.pop %v2286
          %v2288 = vmul.f32 %v2239, 1.442695
          %v2289 = vpow.pop %v2288
          %v2290 = vmul.f32 %v2240, 1.442695
          %v2291 = vpow.pop %v2290
          %v2292 = vmul.f32 %v2241, 1.442695
          %v2293 = vpow.pop %v2292
          %v2294 = vmul.f32 %v2242, 1.442695
          %v2295 = vpow.pop %v2294
          %v2296 = vmul.f32 %v2243, 1.442695
          %v2297 = vpow.pop %v2296
          %v2298 = vmul.f32 %v2244, 1.442695
          %v2299 = vpow.pop %v2298
          %v2300 = vmul.f32 %v2245, 1.442695
          %v2301 = vpow.pop %v2300
          %v2302 = vmul.f32 %v2246, 1.442695
          %v2303 = vpow.pop %v2302
          %v2304 = vmul.f32 %v2247, 1.442695
          %v2305 = vpow.pop %v2304
          %v2306 = vmul.f32 %v2248, 1.442695
          %v2307 = vpow.pop %v2306
          %v2308 = vmul.f32 %v2249, 1.442695
          %v2309 = vpow.pop %v2308
          %v2310 = vmul.f32 %v2250, 1.442695
          %v2311 = vpow.pop %v2310
          %v2312 = vmul.f32 %v2251, 1.442695
          %v2313 = vpow.pop %v2312
          %v2314 = vmul.f32 %v2252, 1.442695
          %v2315 = vpow.pop %v2314
          %v2316 = vmul.f32 %v2253, 1.442695
          %v2317 = vpow.pop %v2316
          %v2318 = vadd.f32 %v2255, 1.0
          %v2319 = vadd.f32 %v2257, 1.0
          %v2320 = vadd.f32 %v2259, 1.0
          %v2321 = vadd.f32 %v2261, 1.0
          %v2322 = vadd.f32 %v2263, 1.0
          %v2323 = vadd.f32 %v2265, 1.0
          %v2324 = vadd.f32 %v2267, 1.0
          %v2325 = vadd.f32 %v2269, 1.0
          %v2326 = vadd.f32 %v2271, 1.0
          %v2327 = vadd.f32 %v2273, 1.0
          %v2328 = vadd.f32 %v2275, 1.0
          %v2329 = vadd.f32 %v2277, 1.0
          %v2330 = vadd.f32 %v2279, 1.0
          %v2331 = vadd.f32 %v2281, 1.0
          %v2332 = vadd.f32 %v2283, 1.0
          %v2333 = vadd.f32 %v2285, 1.0
          %v2334 = vadd.f32 %v2287, 1.0
          %v2335 = vadd.f32 %v2289, 1.0
          %v2336 = vadd.f32 %v2291, 1.0
          %v2337 = vadd.f32 %v2293, 1.0
          %v2338 = vadd.f32 %v2295, 1.0
          %v2339 = vadd.f32 %v2297, 1.0
          %v2340 = vadd.f32 %v2299, 1.0
          %v2341 = vadd.f32 %v2301, 1.0
          %v2342 = vadd.f32 %v2303, 1.0
          %v2343 = vadd.f32 %v2305, 1.0
          %v2344 = vadd.f32 %v2307, 1.0
          %v2345 = vadd.f32 %v2309, 1.0
          %v2346 = vadd.f32 %v2311, 1.0
          %v2347 = vadd.f32 %v2313, 1.0
          %v2348 = vadd.f32 %v2315, 1.0
          %v2349 = vadd.f32 %v2317, 1.0
          %v2350 = vrcp.pop %v2318
          %v2351 = vmul.f32 1.0, %v2350
          %v2352 = vrcp.pop %v2319
          %v2353 = vmul.f32 1.0, %v2352
          %v2354 = vrcp.pop %v2320
          %v2355 = vmul.f32 1.0, %v2354
          %v2356 = vrcp.pop %v2321
          %v2357 = vmul.f32 1.0, %v2356
          %v2358 = vrcp.pop %v2322
          %v2359 = vmul.f32 1.0, %v2358
          %v2360 = vrcp.pop %v2323
          %v2361 = vmul.f32 1.0, %v2360
          %v2362 = vrcp.pop %v2324
          %v2363 = vmul.f32 1.0, %v2362
          %v2364 = vrcp.pop %v2325
          %v2365 = vmul.f32 1.0, %v2364
          %v2366 = vrcp.pop %v2326
          %v2367 = vmul.f32 1.0, %v2366
          %v2368 = vrcp.pop %v2327
          %v2369 = vmul.f32 1.0, %v2368
          %v2370 = vrcp.pop %v2328
          %v2371 = vmul.f32 1.0, %v2370
          %v2372 = vrcp.pop %v2329
          %v2373 = vmul.f32 1.0, %v2372
          %v2374 = vrcp.pop %v2330
          %v2375 = vmul.f32 1.0, %v2374
          %v2376 = vrcp.pop %v2331
          %v2377 = vmul.f32 1.0, %v2376
          %v2378 = vrcp.pop %v2332
          %v2379 = vmul.f32 1.0, %v2378
          %v2380 = vrcp.pop %v2333
          %v2381 = vmul.f32 1.0, %v2380
          %v2382 = vrcp.pop %v2334
          %v2383 = vmul.f32 1.0, %v2382
          %v2384 = vrcp.pop %v2335
          %v2385 = vmul.f32 1.0, %v2384
          %v2386 = vrcp.pop %v2336
          %v2387 = vmul.f32 1.0, %v2386
          %v2388 = vrcp.pop %v2337
          %v2389 = vmul.f32 1.0, %v2388
          %v2390 = vrcp.pop %v2338
          %v2391 = vmul.f32 1.0, %v2390
          %v2392 = vrcp.pop %v2339
          %v2393 = vmul.f32 1.0, %v2392
          %v2394 = vrcp.pop %v2340
          %v2395 = vmul.f32 1.0, %v2394
          %v2396 = vrcp.pop %v2341
          %v2397 = vmul.f32 1.0, %v2396
          %v2398 = vrcp.pop %v2342
          %v2399 = vmul.f32 1.0, %v2398
          %v2400 = vrcp.pop %v2343
          %v2401 = vmul.f32 1.0, %v2400
          %v2402 = vrcp.pop %v2344
          %v2403 = vmul.f32 1.0, %v2402
          %v2404 = vrcp.pop %v2345
          %v2405 = vmul.f32 1.0, %v2404
          %v2406 = vrcp.pop %v2346
          %v2407 = vmul.f32 1.0, %v2406
          %v2408 = vrcp.pop %v2347
          %v2409 = vmul.f32 1.0, %v2408
          %v2410 = vrcp.pop %v2348
          %v2411 = vmul.f32 1.0, %v2410
          %v2412 = vrcp.pop %v2349
          %v2413 = vmul.f32 1.0, %v2412
          %v2414 = vmul.f32 %v2190, %v2351
          %v2415 = vmul.f32 %v2191, %v2353
          %v2416 = vmul.f32 %v2192, %v2355
          %v2417 = vmul.f32 %v2193, %v2357
          %v2418 = vmul.f32 %v2194, %v2359
          %v2419 = vmul.f32 %v2195, %v2361
          %v2420 = vmul.f32 %v2196, %v2363
          %v2421 = vmul.f32 %v2197, %v2365
          %v2422 = vmul.f32 %v2198, %v2367
          %v2423 = vmul.f32 %v2199, %v2369
          %v2424 = vmul.f32 %v2200, %v2371
          %v2425 = vmul.f32 %v2201, %v2373
          %v2426 = vmul.f32 %v2202, %v2375
          %v2427 = vmul.f32 %v2203, %v2377
          %v2428 = vmul.f32 %v2204, %v2379
          %v2429 = vmul.f32 %v2205, %v2381
          %v2430 = vmul.f32 %v2206, %v2383
          %v2431 = vmul.f32 %v2207, %v2385
          %v2432 = vmul.f32 %v2208, %v2387
          %v2433 = vmul.f32 %v2209, %v2389
          %v2434 = vmul.f32 %v2210, %v2391
          %v2435 = vmul.f32 %v2211, %v2393
          %v2436 = vmul.f32 %v2212, %v2395
          %v2437 = vmul.f32 %v2213, %v2397
          %v2438 = vmul.f32 %v2214, %v2399
          %v2439 = vmul.f32 %v2215, %v2401
          %v2440 = vmul.f32 %v2216, %v2403
          %v2441 = vmul.f32 %v2217, %v2405
          %v2442 = vmul.f32 %v2218, %v2407
          %v2443 = vmul.f32 %v2219, %v2409
          %v2444 = vmul.f32 %v2220, %v2411
          %v2445 = vmul.f32 %v2221, %v2413
          %v2446 = vmul.f32 %v2072, %v2414
          %v2447 = vmul.f32 %v2073, %v2415
          %v2448 = vmul.f32 %v2074, %v2416
          %v2449 = vmul.f32 %v2075, %v2417
          %v2450 = vmul.f32 %v2076, %v2418
          %v2451 = vmul.f32 %v2077, %v2419
          %v2452 = vmul.f32 %v2078, %v2420
          %v2453 = vmul.f32 %v2079, %v2421
          %v2454 = vmul.f32 %v2080, %v2422
          %v2455 = vmul.f32 %v2081, %v2423
          %v2456 = vmul.f32 %v2082, %v2424
          %v2457 = vmul.f32 %v2083, %v2425
          %v2458 = vmul.f32 %v2084, %v2426
          %v2459 = vmul.f32 %v2085, %v2427
          %v2460 = vmul.f32 %v2086, %v2428
          %v2461 = vmul.f32 %v2087, %v2429
          %v2462 = vmul.f32 %v2088, %v2430
          %v2463 = vmul.f32 %v2089, %v2431
          %v2464 = vmul.f32 %v2090, %v2432
          %v2465 = vmul.f32 %v2091, %v2433
          %v2466 = vmul.f32 %v2092, %v2434
          %v2467 = vmul.f32 %v2093, %v2435
          %v2468 = vmul.f32 %v2094, %v2436
          %v2469 = vmul.f32 %v2095, %v2437
          %v2470 = vmul.f32 %v2096, %v2438
          %v2471 = vmul.f32 %v2097, %v2439
          %v2472 = vmul.f32 %v2098, %v2440
          %v2473 = vmul.f32 %v2099, %v2441
          %v2474 = vmul.f32 %v2100, %v2442
          %v2475 = vmul.f32 %v2101, %v2443
          %v2476 = vmul.f32 %v2102, %v2444
          %v2477 = vmul.f32 %v2103, %v2445
          %v2478 = vpack.c.bf16 %v2450, %v2446
          %v2479 = vpack.c.bf16 %v2451, %v2447
          %v2480 = vpack.c.bf16 %v2452, %v2448
          %v2481 = vpack.c.bf16 %v2453, %v2449
          %v2482 = vpack.c.bf16 %v2458, %v2454
          %v2483 = vpack.c.bf16 %v2459, %v2455
          %v2484 = vpack.c.bf16 %v2460, %v2456
          %v2485 = vpack.c.bf16 %v2461, %v2457
          %v2486 = vpack.c.bf16 %v2466, %v2462
          %v2487 = vpack.c.bf16 %v2467, %v2463
          %v2488 = vpack.c.bf16 %v2468, %v2464
          %v2489 = vpack.c.bf16 %v2469, %v2465
          %v2490 = vpack.c.bf16 %v2474, %v2470
          %v2491 = vpack.c.bf16 %v2475, %v2471
          %v2492 = vpack.c.bf16 %v2476, %v2472
          %v2493 = vpack.c.bf16 %v2477, %v2473
          %v2510 = vunpack.c.l.b16 %v2478
          %v2511 = vunpack.c.l.b16 %v2479
          %v2512 = vunpack.c.l.b16 %v2480
          %v2513 = vunpack.c.l.b16 %v2481
          %v2514 = vunpack.c.h.b16 %v2478
          %v2515 = vunpack.c.h.b16 %v2479
          %v2516 = vunpack.c.h.b16 %v2480
          %v2517 = vunpack.c.h.b16 %v2481
          %v2518 = vunpack.c.l.b16 %v2482
          %v2519 = vunpack.c.l.b16 %v2483
          %v2520 = vunpack.c.l.b16 %v2484
          %v2521 = vunpack.c.l.b16 %v2485
          %v2522 = vunpack.c.h.b16 %v2482
          %v2523 = vunpack.c.h.b16 %v2483
          %v2524 = vunpack.c.h.b16 %v2484
          %v2525 = vunpack.c.h.b16 %v2485
          %v2526 = vunpack.c.l.b16 %v2486
          %v2527 = vunpack.c.l.b16 %v2487
          %v2528 = vunpack.c.l.b16 %v2488
          %v2529 = vunpack.c.l.b16 %v2489
          %v2530 = vunpack.c.h.b16 %v2486
          %v2531 = vunpack.c.h.b16 %v2487
          %v2532 = vunpack.c.h.b16 %v2488
          %v2533 = vunpack.c.h.b16 %v2489
          %v2534 = vunpack.c.l.b16 %v2490
          %v2535 = vunpack.c.l.b16 %v2491
          %v2536 = vunpack.c.l.b16 %v2492
          %v2537 = vunpack.c.l.b16 %v2493
          %v2538 = vunpack.c.h.b16 %v2490
          %v2539 = vunpack.c.h.b16 %v2491
          %v2540 = vunpack.c.h.b16 %v2492
          %v2541 = vunpack.c.h.b16 %v2493
          %v2542 = vpack.c.b16 %v2511, %v2510
          %v2543 = vpack.c.b16 %v2513, %v2512
          %v2544 = vpack.c.b16 %v2515, %v2514
          %v2545 = vpack.c.b16 %v2517, %v2516
          %v2546 = vpack.c.b16 %v2519, %v2518
          %v2547 = vpack.c.b16 %v2521, %v2520
          %v2548 = vpack.c.b16 %v2523, %v2522
          %v2549 = vpack.c.b16 %v2525, %v2524
          %v2550 = vpack.c.b16 %v2527, %v2526
          %v2551 = vpack.c.b16 %v2529, %v2528
          %v2552 = vpack.c.b16 %v2531, %v2530
          %v2553 = vpack.c.b16 %v2533, %v2532
          %v2554 = vpack.c.b16 %v2535, %v2534
          %v2555 = vpack.c.b16 %v2537, %v2536
          %v2556 = vpack.c.b16 %v2539, %v2538
          %v2557 = vpack.c.b16 %v2541, %v2540
          %2574 = vst [vmem:[%s618] sm:$0xff] %v2542
          %2575 = vst [vmem:[%s618 + $0x8] sm:$0xff] %v2543
          %2576 = vst [vmem:[%s618 + $0x10] sm:$0xff] %v2544
          %2577 = vst [vmem:[%s618 + $0x18] sm:$0xff] %v2545
          %2578 = vst [vmem:[%s618 + $0x20] sm:$0xff] %v2546
          %2579 = vst [vmem:[%s618 + $0x28] sm:$0xff] %v2547
          %2580 = vst [vmem:[%s618 + $0x30] sm:$0xff] %v2548
          %2581 = vst [vmem:[%s618 + $0x38] sm:$0xff] %v2549
          %2582 = vst [vmem:[%s618 + $0x40] sm:$0xff] %v2550
          %2583 = vst [vmem:[%s618 + $0x48] sm:$0xff] %v2551
          %2584 = vst [vmem:[%s618 + $0x50] sm:$0xff] %v2552
          %2585 = vst [vmem:[%s618 + $0x58] sm:$0xff] %v2553
          %2586 = vst [vmem:[%s618 + $0x60] sm:$0xff] %v2554
          %2587 = vst [vmem:[%s618 + $0x68] sm:$0xff] %v2555
          %2588 = vst [vmem:[%s618 + $0x70] sm:$0xff] %v2556
          %2589 = vst [vmem:[%s618 + $0x78] sm:$0xff] %v2557
        $region94: #{ngpt_forward.17} parent=77 // pred_fallthru
          _
        %s2590 = sand.u32 %s181, 1
        %s2591 = sand.u32 %s181, 1
        %s2592 = smul.addr %s2591, 128
        %s2593 = scalar_lea.vmem [#allocation6], %s2592
        // Predicated region
        $region95: #{ngpt_forward.17} parent=77 // pred_check
          %p2594 = pneg %p191
        $region96: #{ngpt_forward.17} parent=77 // pred_check_branch
          %2596 = sbr.rel (%p2594) target = $region98
        $region97: #{ngpt_forward.17} parent=77 // pred_region
          %s2597 = smul.u32 8, %s21
          %s2598 = smul.u32 4, %s22
          %s2599 = smul.addr %s2597, 8
          %s2600 = sadd.s32 %s2598, %s2599
          %s2601 = smul.addr %s2600, 4
          %s2602 = scalar_lea.vmem %s5, %s2601
          // Predicated region
          $region99: #{ngpt_forward.17} parent=97 // pred_check
            _
          $region100: #{ngpt_forward.17} parent=97 // pred_check_branch
            %2604 = sbr.rel (0) target = $region102
          $region101: #{ngpt_forward.17} parent=97 // pred_region
            // Predicated region
            $region103: #{ngpt_forward.17} parent=101 // pred_check
              _
            $region104: #{ngpt_forward.17} parent=101 // pred_check_branch
              %2606 = sbr.rel (0) target = $region106
            $region105: #{ngpt_forward.17} parent=101 // pred_region
              loop: start=0, step=1, limit=1
              $region107: #{ngpt_forward.17} parent=105 // loop_pre_header
                _
              $region108: #{ngpt_forward.17} parent=105 // loop_header
                %s2608 = sphi 0, %s2612
                %p2609 = scmp.ge.s32.totalorder %s2608, 1
                %s2613 = sphi %s2593, %s2593
                %s2614 = sphi %s2602, %s2602
              $region109: #{ngpt_forward.17} parent=105 // loop_header_branch
                %2611 = sbr.rel (%p2609) target = $region113
              $region110: #{ngpt_forward.17} parent=105 // loop_body
                %v2615 = vld [vmem:[%s2613] sm:$0xff]
                %2616 = vst [vmem:[%s2614] sm:$0xff] %v2615
                %v2617 = vld [vmem:[%s2613 + $0x8] sm:$0xff]
                %2618 = vst [vmem:[%s2614 + $0x8] sm:$0xff] %v2617
                %v2619 = vld [vmem:[%s2613 + $0x10] sm:$0xff]
                %2620 = vst [vmem:[%s2614 + $0x20] sm:$0xff] %v2619
                %v2621 = vld [vmem:[%s2613 + $0x18] sm:$0xff]
                %2622 = vst [vmem:[%s2614 + $0x28] sm:$0xff] %v2621
                %v2623 = vld [vmem:[%s2613 + $0x20] sm:$0xff]
                %2624 = vst [vmem:[%s2614 + $0x40] sm:$0xff] %v2623
                %v2625 = vld [vmem:[%s2613 + $0x28] sm:$0xff]
                %2626 = vst [vmem:[%s2614 + $0x48] sm:$0xff] %v2625
                %v2627 = vld [vmem:[%s2613 + $0x30] sm:$0xff]
                %2628 = vst [vmem:[%s2614 + $0x60] sm:$0xff] %v2627
                %v2629 = vld [vmem:[%s2613 + $0x38] sm:$0xff]
                %2630 = vst [vmem:[%s2614 + $0x68] sm:$0xff] %v2629
                %v2631 = vld [vmem:[%s2613 + $0x40] sm:$0xff]
                %2632 = vst [vmem:[%s2614 + $0x80] sm:$0xff] %v2631
                %v2633 = vld [vmem:[%s2613 + $0x48] sm:$0xff]
                %2634 = vst [vmem:[%s2614 + $0x88] sm:$0xff] %v2633
                %v2635 = vld [vmem:[%s2613 + $0x50] sm:$0xff]
                %2636 = vst [vmem:[%s2614 + $0xa0] sm:$0xff] %v2635
                %v2637 = vld [vmem:[%s2613 + $0x58] sm:$0xff]
                %2638 = vst [vmem:[%s2614 + $0xa8] sm:$0xff] %v2637
                %v2639 = vld [vmem:[%s2613 + $0x60] sm:$0xff]
                %2640 = vst [vmem:[%s2614 + $0xc0] sm:$0xff] %v2639
                %v2641 = vld [vmem:[%s2613 + $0x68] sm:$0xff]
                %2642 = vst [vmem:[%s2614 + $0xc8] sm:$0xff] %v2641
                %v2643 = vld [vmem:[%s2613 + $0x70] sm:$0xff]
                %2644 = vst [vmem:[%s2614 + $0xe0] sm:$0xff] %v2643
                %v2645 = vld [vmem:[%s2613 + $0x78] sm:$0xff]
                %2646 = vst [vmem:[%s2614 + $0xe8] sm:$0xff] %v2645
              $region111: #{ngpt_forward.17} parent=105 // loop_footer
                %s2612 = sadd.s32 1, %s2608
              $region112: #{ngpt_forward.17} parent=105 // loop_footer_branch
                %2607 = sbr.rel target = $region108
              $region113: #{ngpt_forward.17} parent=105 // loop_exit
                _
            $region106: #{ngpt_forward.17} parent=101 // pred_fallthru
              _
            // Predicated region
            $region114: #{ngpt_forward.17} parent=101 // pred_check
              _
            $region115: #{ngpt_forward.17} parent=101 // pred_check_branch
              %2648 = sbr.rel target = $region117
            $region116: #{ngpt_forward.17} parent=101 // pred_region
              _
            $region117: #{ngpt_forward.17} parent=101 // pred_fallthru
              _
          $region102: #{ngpt_forward.17} parent=97 // pred_fallthru
            _
          %2649 = vnop
        $region98: #{ngpt_forward.17} parent=77 // pred_fallthru
          _
      $region78: #{ngpt_forward.17} parent=5 // pred_fallthru
        _
      %p2650 = scmp.le.s32.totalorder 2, %s11
      // Predicated region
      $region118: #{ngpt_forward.17} parent=5 // pred_check
        %p2651 = pneg %p2650
      $region119: #{ngpt_forward.17} parent=5 // pred_check_branch
        %2653 = sbr.rel (%p2651) target = $region121
      $region120: #{ngpt_forward.17} parent=5 // pred_region
        %s2654 = ssub.s32 %s11, 2
        // Predicated region
        $region122: #{ngpt_forward.17} parent=120 // pred_check
          %p2655 = pneg %p197
        $region123: #{ngpt_forward.17} parent=120 // pred_check_branch
          %2657 = sbr.rel (%p2655) target = $region125
        $region124: #{ngpt_forward.17} parent=120 // pred_region
          %s2658 = sand.u32 %s182, 1
          %s2659 = sand.u32 %s182, 1
          %s2660 = smul.addr %s2659, 128
          %s2661 = scalar_lea.vmem [#allocation6], %s2660
        $region125: #{ngpt_forward.17} parent=120 // pred_fallthru
          _
      $region121: #{ngpt_forward.17} parent=5 // pred_fallthru
        _
    $region6: #{ngpt_forward.17} parent=1 // loop_footer
      %s15 = sadd.s32 1, %s11
    $region7: #{ngpt_forward.17} parent=1 // loop_footer_branch
      %10 = sbr.rel target = $region3
    $region8: #{ngpt_forward.17} parent=1 // loop_exit
      _

// kernel: ngpt_forward.25
$region0: #{ngpt_forward.25}
  #allocation0 [shape = 'u32[]', space=smem, size = 0x4, offset = 0x4, fixed_abs, tag = 'smem constant byte address 0x4 - core index']
  #allocation1 [shape = 'u32[144,128]{1,0:T(1,128)}', space=vmem, size = 0x12000, scoped, tag = 'internal scratch']
  #allocation2 [shape = 'f32[64,256]{1,0:T(8,128)}', space=vmem, size = 0x10000, scoped, tag = 'scratch operand']
  %s0 = inlined_call_operand.vmem [shape: bf16[64,256], index: 0, kind: input, shape index: {}]
  %s1 = inlined_call_operand.vmem [shape: bf16[256,256], index: 1, kind: input, shape index: {}]
  %s2 = inlined_call_operand.vmem [shape: f32[1,256], index: 2, kind: input, shape index: {}]
  %s3 = inlined_call_operand.vmem [shape: f32[1,256], index: 3, kind: input, shape index: {}]
  %s4 = inlined_call_operand.hbm [shape: f32[64,256], index: 4, kind: output, shape index: {}]
  %s5 = sld [smem:[#allocation0]]
  $region34: #{ngpt_forward.25} parent=0
    _
  %s7 = ssub.s32 1, %s5
  %s8 = scalar_select 0, %s7, %s5
  $region1: #{ngpt_forward.25} parent=0
    #allocation3 [shape = 'u8[65536]{0}', space=vmem, size = 0x10000, scoped, tag = 'output window, operand 0, single buffered']
    #allocation4 [shape = 's32[1]{0}', space=sflag, size = 0x4, scoped, tag = 'scoped memory for ngpt_forward.25']
    %9 = vsyncpa [#allocation4], 0
    // Predicated region
    $region2: #{ngpt_forward.25} parent=1 // pred_check
      _
    $region3: #{ngpt_forward.25} parent=1 // pred_check_branch
      %11 = sbr.rel (0) target = $region5
    $region4: #{ngpt_forward.25} parent=1 // pred_region
      _
    $region5: #{ngpt_forward.25} parent=1 // pred_fallthru
      _
    // Predicated region
    $region6: #{ngpt_forward.25} parent=1 // pred_check
      _
    $region7: #{ngpt_forward.25} parent=1 // pred_check_branch
      %13 = sbr.rel (0) target = $region9
    $region8: #{ngpt_forward.25} parent=1 // pred_region
      _
    $region9: #{ngpt_forward.25} parent=1 // pred_fallthru
      _
    // Predicated region
    $region10: #{ngpt_forward.25} parent=1 // pred_check
      _
    $region11: #{ngpt_forward.25} parent=1 // pred_check_branch
      %15 = sbr.rel (0) target = $region13
    $region12: #{ngpt_forward.25} parent=1 // pred_region
      _
    $region13: #{ngpt_forward.25} parent=1 // pred_fallthru
      _
    // Predicated region
    $region14: #{ngpt_forward.25} parent=1 // pred_check
      _
    $region15: #{ngpt_forward.25} parent=1 // pred_check_branch
      %17 = sbr.rel (0) target = $region17
    $region16: #{ngpt_forward.25} parent=1 // pred_region
      _
    $region17: #{ngpt_forward.25} parent=1 // pred_fallthru
      _
    %p18 = scmp.eq.s32.totalorder 0, 0
    // Predicated region
    $region18: #{ngpt_forward.25} parent=1 // pred_check
      %p19 = pneg %p18
    $region19: #{ngpt_forward.25} parent=1 // pred_check_branch
      %21 = sbr.rel (%p19) target = $region21
    $region20: #{ngpt_forward.25} parent=1 // pred_region
      %22 = vst [vmem:[#allocation2] sm:$0xff] 0.0
      %23 = vst [vmem:[#allocation2 + $0x8] sm:$0xff] 0.0
      %24 = vst [vmem:[#allocation2 + $0x10] sm:$0xff] 0.0
      %25 = vst [vmem:[#allocation2 + $0x18] sm:$0xff] 0.0
      %26 = vst [vmem:[#allocation2 + $0x20] sm:$0xff] 0.0
      %27 = vst [vmem:[#allocation2 + $0x28] sm:$0xff] 0.0
      %28 = vst [vmem:[#allocation2 + $0x30] sm:$0xff] 0.0
      %29 = vst [vmem:[#allocation2 + $0x38] sm:$0xff] 0.0
      %30 = vst [vmem:[#allocation2 + $0x40] sm:$0xff] 0.0
      %31 = vst [vmem:[#allocation2 + $0x48] sm:$0xff] 0.0
      %32 = vst [vmem:[#allocation2 + $0x50] sm:$0xff] 0.0
      %33 = vst [vmem:[#allocation2 + $0x58] sm:$0xff] 0.0
      %34 = vst [vmem:[#allocation2 + $0x60] sm:$0xff] 0.0
      %35 = vst [vmem:[#allocation2 + $0x68] sm:$0xff] 0.0
      %36 = vst [vmem:[#allocation2 + $0x70] sm:$0xff] 0.0
      %37 = vst [vmem:[#allocation2 + $0x78] sm:$0xff] 0.0
    $region21: #{ngpt_forward.25} parent=1 // pred_fallthru
      _
    %v38 = vld [vmem:[#allocation2] sm:$0xff]
    %v39 = vld [vmem:[#allocation2 + $0x8] sm:$0xff]
    %v40 = vld [vmem:[#allocation2 + $0x10] sm:$0xff]
    %v41 = vld [vmem:[#allocation2 + $0x18] sm:$0xff]
    %v42 = vld [vmem:[#allocation2 + $0x20] sm:$0xff]
    %v43 = vld [vmem:[#allocation2 + $0x28] sm:$0xff]
    %v44 = vld [vmem:[#allocation2 + $0x30] sm:$0xff]
    %v45 = vld [vmem:[#allocation2 + $0x38] sm:$0xff]
    %v46 = vld [vmem:[#allocation2 + $0x40] sm:$0xff]
    %v47 = vld [vmem:[#allocation2 + $0x48] sm:$0xff]
    %v48 = vld [vmem:[#allocation2 + $0x50] sm:$0xff]
    %v49 = vld [vmem:[#allocation2 + $0x58] sm:$0xff]
    %v50 = vld [vmem:[#allocation2 + $0x60] sm:$0xff]
    %v51 = vld [vmem:[#allocation2 + $0x68] sm:$0xff]
    %v52 = vld [vmem:[#allocation2 + $0x70] sm:$0xff]
    %v53 = vld [vmem:[#allocation2 + $0x78] sm:$0xff]
    %v54 = vld [vmem:[%s0] sm:$0xff]
    %v55 = vld [vmem:[%s0 + $0x8] sm:$0xff]
    %v56 = vld [vmem:[%s0 + $0x10] sm:$0xff]
    %v57 = vld [vmem:[%s0 + $0x18] sm:$0xff]
    %v58 = vld [vmem:[%s0 + $0x20] sm:$0xff]
    %v59 = vld [vmem:[%s0 + $0x28] sm:$0xff]
    %v60 = vld [vmem:[%s0 + $0x30] sm:$0xff]
    %v61 = vld [vmem:[%s0 + $0x38] sm:$0xff]
    %v62 = vld [vmem:[%s1] sm:$0xff]
    %v63 = vld [vmem:[%s1 + $0x8] sm:$0xff]
    %v64 = vld [vmem:[%s1 + $0x10] sm:$0xff]
    %v65 = vld [vmem:[%s1 + $0x18] sm:$0xff]
    %v66 = vld [vmem:[%s1 + $0x20] sm:$0xff]
    %v67 = vld [vmem:[%s1 + $0x28] sm:$0xff]
    %v68 = vld [vmem:[%s1 + $0x30] sm:$0xff]
    %v69 = vld [vmem:[%s1 + $0x38] sm:$0xff]
    %v70 = vld [vmem:[%s1 + $0x40] sm:$0xff]
    %v71 = vld [vmem:[%s1 + $0x48] sm:$0xff]
    %v72 = vld [vmem:[%s1 + $0x50] sm:$0xff]
    %v73 = vld [vmem:[%s1 + $0x58] sm:$0xff]
    %v74 = vld [vmem:[%s1 + $0x60] sm:$0xff]
    %v75 = vld [vmem:[%s1 + $0x68] sm:$0xff]
    %v76 = vld [vmem:[%s1 + $0x70] sm:$0xff]
    %v77 = vld [vmem:[%s1 + $0x78] sm:$0xff]
    %v78 = vld [vmem:[%s1 + $0x80] sm:$0xff]
    %v79 = vld [vmem:[%s1 + $0x88] sm:$0xff]
    %v80 = vld [vmem:[%s1 + $0x90] sm:$0xff]
    %v81 = vld [vmem:[%s1 + $0x98] sm:$0xff]
    %v82 = vld [vmem:[%s1 + $0xa0] sm:$0xff]
    %v83 = vld [vmem:[%s1 + $0xa8] sm:$0xff]
    %v84 = vld [vmem:[%s1 + $0xb0] sm:$0xff]
    %v85 = vld [vmem:[%s1 + $0xb8] sm:$0xff]
    %v86 = vld [vmem:[%s1 + $0xc0] sm:$0xff]
    %v87 = vld [vmem:[%s1 + $0xc8] sm:$0xff]
    %v88 = vld [vmem:[%s1 + $0xd0] sm:$0xff]
    %v89 = vld [vmem:[%s1 + $0xd8] sm:$0xff]
    %v90 = vld [vmem:[%s1 + $0xe0] sm:$0xff]
    %v91 = vld [vmem:[%s1 + $0xe8] sm:$0xff]
    %v92 = vld [vmem:[%s1 + $0xf0] sm:$0xff]
    %v93 = vld [vmem:[%s1 + $0xf8] sm:$0xff]
    %v102 = vunpack.c.l.b16 %v54
    %v103 = vunpack.c.h.b16 %v54
    %v104 = vunpack.c.l.b16 %v55
    %v105 = vunpack.c.h.b16 %v55
    %v106 = vunpack.c.l.b16 %v56
    %v107 = vunpack.c.h.b16 %v56
    %v108 = vunpack.c.l.b16 %v57
    %v109 = vunpack.c.h.b16 %v57
    %v110 = vunpack.c.l.b16 %v58
    %v111 = vunpack.c.h.b16 %v58
    %v112 = vunpack.c.l.b16 %v59
    %v113 = vunpack.c.h.b16 %v59
    %v114 = vunpack.c.l.b16 %v60
    %v115 = vunpack.c.h.b16 %v60
    %v116 = vunpack.c.l.b16 %v61
    %v117 = vunpack.c.h.b16 %v61
    %v118 = vpack.c.b16 %v104, %v102
    %v119 = vpack.c.b16 %v105, %v103
    %v120 = vpack.c.b16 %v108, %v106
    %v121 = vpack.c.b16 %v109, %v107
    %v122 = vpack.c.b16 %v112, %v110
    %v123 = vpack.c.b16 %v113, %v111
    %v124 = vpack.c.b16 %v116, %v114
    %v125 = vpack.c.b16 %v117, %v115
    %v166 = vunpack.c.l.b16 %v62
    %v167 = vunpack.c.h.b16 %v62
    %v168 = vunpack.c.l.b16 %v63
    %v169 = vunpack.c.h.b16 %v63
    %v170 = vunpack.c.l.b16 %v64
    %v171 = vunpack.c.h.b16 %v64
    %v172 = vunpack.c.l.b16 %v65
    %v173 = vunpack.c.h.b16 %v65
    %v174 = vunpack.c.l.b16 %v66
    %v175 = vunpack.c.h.b16 %v66
    %v176 = vunpack.c.l.b16 %v67
    %v177 = vunpack.c.h.b16 %v67
    %v178 = vunpack.c.l.b16 %v68
    %v179 = vunpack.c.h.b16 %v68
    %v180 = vunpack.c.l.b16 %v69
    %v181 = vunpack.c.h.b16 %v69
    %v182 = vunpack.c.l.b16 %v70
    %v183 = vunpack.c.h.b16 %v70
    %v184 = vunpack.c.l.b16 %v71
    %v185 = vunpack.c.h.b16 %v71
    %v186 = vunpack.c.l.b16 %v72
    %v187 = vunpack.c.h.b16 %v72
    %v188 = vunpack.c.l.b16 %v73
    %v189 = vunpack.c.h.b16 %v73
    %v190 = vunpack.c.l.b16 %v74
    %v191 = vunpack.c.h.b16 %v74
    %v192 = vunpack.c.l.b16 %v75
    %v193 = vunpack.c.h.b16 %v75
    %v194 = vunpack.c.l.b16 %v76
    %v195 = vunpack.c.h.b16 %v76
    %v196 = vunpack.c.l.b16 %v77
    %v197 = vunpack.c.h.b16 %v77
    %v198 = vunpack.c.l.b16 %v78
    %v199 = vunpack.c.h.b16 %v78
    %v200 = vunpack.c.l.b16 %v79
    %v201 = vunpack.c.h.b16 %v79
    %v202 = vunpack.c.l.b16 %v80
    %v203 = vunpack.c.h.b16 %v80
    %v204 = vunpack.c.l.b16 %v81
    %v205 = vunpack.c.h.b16 %v81
    %v206 = vunpack.c.l.b16 %v82
    %v207 = vunpack.c.h.b16 %v82
    %v208 = vunpack.c.l.b16 %v83
    %v209 = vunpack.c.h.b16 %v83
    %v210 = vunpack.c.l.b16 %v84
    %v211 = vunpack.c.h.b16 %v84
    %v212 = vunpack.c.l.b16 %v85
    %v213 = vunpack.c.h.b16 %v85
    %v214 = vunpack.c.l.b16 %v86
    %v215 = vunpack.c.h.b16 %v86
    %v216 = vunpack.c.l.b16 %v87
    %v217 = vunpack.c.h.b16 %v87
    %v218 = vunpack.c.l.b16 %v88
    %v219 = vunpack.c.h.b16 %v88
    %v220 = vunpack.c.l.b16 %v89
    %v221 = vunpack.c.h.b16 %v89
    %v222 = vunpack.c.l.b16 %v90
    %v223 = vunpack.c.h.b16 %v90
    %v224 = vunpack.c.l.b16 %v91
    %v225 = vunpack.c.h.b16 %v91
    %v226 = vunpack.c.l.b16 %v92
    %v227 = vunpack.c.h.b16 %v92
    %v228 = vunpack.c.l.b16 %v93
    %v229 = vunpack.c.h.b16 %v93
    %v230 = vpack.c.b16 %v168, %v166
    %v231 = vpack.c.b16 %v169, %v167
    %v232 = vpack.c.b16 %v172, %v170
    %v233 = vpack.c.b16 %v173, %v171
    %v234 = vpack.c.b16 %v176, %v174
    %v235 = vpack.c.b16 %v177, %v175
    %v236 = vpack.c.b16 %v180, %v178
    %v237 = vpack.c.b16 %v181, %v179
    %v238 = vpack.c.b16 %v184, %v182
    %v239 = vpack.c.b16 %v185, %v183
    %v240 = vpack.c.b16 %v188, %v186
    %v241 = vpack.c.b16 %v189, %v187
    %v242 = vpack.c.b16 %v192, %v190
    %v243 = vpack.c.b16 %v193, %v191
    %v244 = vpack.c.b16 %v196, %v194
    %v245 = vpack.c.b16 %v197, %v195
    %v246 = vpack.c.b16 %v200, %v198
    %v247 = vpack.c.b16 %v201, %v199
    %v248 = vpack.c.b16 %v204, %v202
    %v249 = vpack.c.b16 %v205, %v203
    %v250 = vpack.c.b16 %v208, %v206
    %v251 = vpack.c.b16 %v209, %v207
    %v252 = vpack.c.b16 %v212, %v210
    %v253 = vpack.c.b16 %v213, %v211
    %v254 = vpack.c.b16 %v216, %v214
    %v255 = vpack.c.b16 %v217, %v215
    %v256 = vpack.c.b16 %v220, %v218
    %v257 = vpack.c.b16 %v221, %v219
    %v258 = vpack.c.b16 %v224, %v222
    %v259 = vpack.c.b16 %v225, %v223
    %v260 = vpack.c.b16 %v228, %v226
    %v261 = vpack.c.b16 %v229, %v227
    %294 = vmatprep.subr.bf16.mxu0 %v245
    %295 = vmatpush1.bf16.msra.mxu0 %v244
    %296 = vmatprep.subr.bf16.mxu0 %v243
    %297 = vmatpush1.bf16.msra.mxu0 %v242
    %298 = vmatprep.subr.bf16.mxu0 %v241
    %299 = vmatpush1.bf16.msra.mxu0 %v240
    %300 = vmatprep.subr.bf16.mxu0 %v239
    %301 = vmatpush1.bf16.msra.mxu0 %v238
    %302 = vmatprep.subr.bf16.mxu0 %v237
    %303 = vmatpush1.bf16.msra.mxu0 %v236
    %304 = vmatprep.subr.bf16.mxu0 %v235
    %305 = vmatpush1.bf16.msra.mxu0 %v234
    %306 = vmatprep.subr.bf16.mxu0 %v233
    %307 = vmatpush1.bf16.msra.mxu0 %v232
    %308 = vmatprep.subr.bf16.mxu0 %v231
    %309 = vmatpush1.bf16.msra.mxu0 %v230
    %310 = vmatprep.subr.bf16.mxu0 %v261
    %311 = vmatpush2.bf16.msra.mxu0 %v260
    %312 = vmatprep.subr.bf16.mxu0 %v259
    %313 = vmatpush2.bf16.msra.mxu0 %v258
    %314 = vmatprep.subr.bf16.mxu0 %v257
    %315 = vmatpush2.bf16.msra.mxu0 %v256
    %316 = vmatprep.subr.bf16.mxu0 %v255
    %317 = vmatpush2.bf16.msra.mxu0 %v254
    %318 = vmatprep.subr.bf16.mxu0 %v253
    %319 = vmatpush2.bf16.msra.mxu0 %v252
    %320 = vmatprep.subr.bf16.mxu0 %v251
    %321 = vmatpush2.bf16.msra.mxu0 %v250
    %322 = vmatprep.subr.bf16.mxu0 %v249
    %323 = vmatpush2.bf16.msra.mxu0 %v248
    %324 = vmatprep.subr.bf16.mxu0 %v247
    %325 = vmatpush2.bf16.msra.mxu0 %v246
    %326 = vmatprep.mubr.bf16.mxu0 %v119
    %327 = vmatmul.mubr.bf16.gmra.mxu0 %v118
    %v328 = vpop.f32.mrf.mxu0
    %v329 = vadd.f32 0.0, %v328
    %v330 = vpop.f32.mrf.mxu0
    %v331 = vadd.f32 0.0, %v330
    %v332 = vpop.f32.mrf.mxu0
    %v333 = vadd.f32 0.0, %v332
    %v334 = vpop.f32.mrf.mxu0
    %v335 = vadd.f32 0.0, %v334
    %336 = vmatprep.mubr.bf16.mxu0 %v121
    %337 = vmatmul.mubr.bf16.gmra.mxu0 %v120
    %v338 = vpop.f32.mrf.mxu0
    %v339 = vadd.f32 0.0, %v338
    %v340 = vpop.f32.mrf.mxu0
    %v341 = vadd.f32 0.0, %v340
    %v342 = vpop.f32.mrf.mxu0
    %v343 = vadd.f32 0.0, %v342
    %v344 = vpop.f32.mrf.mxu0
    %v345 = vadd.f32 0.0, %v344
    %346 = vmatprep.mubr.bf16.mxu0 %v123
    %347 = vmatmul.mubr.bf16.gmra.mxu0 %v122
    %v348 = vpop.f32.mrf.mxu0
    %v349 = vadd.f32 0.0, %v348
    %v350 = vpop.f32.mrf.mxu0
    %v351 = vadd.f32 0.0, %v350
    %v352 = vpop.f32.mrf.mxu0
    %v353 = vadd.f32 0.0, %v352
    %v354 = vpop.f32.mrf.mxu0
    %v355 = vadd.f32 0.0, %v354
    %356 = vmatprep.mubr.bf16.mxu0 %v125
    %357 = vmatmul.mubr.bf16.gmra.mxu0 %v124
    %v358 = vpop.f32.mrf.mxu0
    %v359 = vadd.f32 0.0, %v358
    %v360 = vpop.f32.mrf.mxu0
    %v361 = vadd.f32 0.0, %v360
    %v362 = vpop.f32.mrf.mxu0
    %v363 = vadd.f32 0.0, %v362
    %v364 = vpop.f32.mrf.mxu0
    %v365 = vadd.f32 0.0, %v364
    %366 = vdwg.mxu0
    %v367 = vadd.f32 %v38, %v329
    %v368 = vadd.f32 %v39, %v331
    %v369 = vadd.f32 %v40, %v333
    %v370 = vadd.f32 %v41, %v335
    %v371 = vadd.f32 %v42, %v339
    %v372 = vadd.f32 %v43, %v341
    %v373 = vadd.f32 %v44, %v343
    %v374 = vadd.f32 %v45, %v345
    %v375 = vadd.f32 %v46, %v349
    %v376 = vadd.f32 %v47, %v351
    %v377 = vadd.f32 %v48, %v353
    %v378 = vadd.f32 %v49, %v355
    %v379 = vadd.f32 %v50, %v359
    %v380 = vadd.f32 %v51, %v361
    %v381 = vadd.f32 %v52, %v363
    %v382 = vadd.f32 %v53, %v365
    %383 = vst [vmem:[#allocation2] sm:$0xff] %v367
    %384 = vst [vmem:[#allocation2 + $0x8] sm:$0xff] %v368
    %385 = vst [vmem:[#allocation2 + $0x10] sm:$0xff] %v369
    %386 = vst [vmem:[#allocation2 + $0x18] sm:$0xff] %v370
    %387 = vst [vmem:[#allocation2 + $0x20] sm:$0xff] %v371
    %388 = vst [vmem:[#allocation2 + $0x28] sm:$0xff] %v372
    %389 = vst [vmem:[#allocation2 + $0x30] sm:$0xff] %v373
    %390 = vst [vmem:[#allocation2 + $0x38] sm:$0xff] %v374
    %391 = vst [vmem:[#allocation2 + $0x40] sm:$0xff] %v375
    %392 = vst [vmem:[#allocation2 + $0x48] sm:$0xff] %v376
    %393 = vst [vmem:[#allocation2 + $0x50] sm:$0xff] %v377
    %394 = vst [vmem:[#allocation2 + $0x58] sm:$0xff] %v378
    %395 = vst [vmem:[#allocation2 + $0x60] sm:$0xff] %v379
    %396 = vst [vmem:[#allocation2 + $0x68] sm:$0xff] %v380
    %397 = vst [vmem:[#allocation2 + $0x70] sm:$0xff] %v381
    %398 = vst [vmem:[#allocation2 + $0x78] sm:$0xff] %v382
    // Predicated region
    $region22: #{ngpt_forward.25} parent=1 // pred_check
      %p399 = pneg %p18
    $region23: #{ngpt_forward.25} parent=1 // pred_check_branch
      %401 = sbr.rel (%p399) target = $region25
    $region24: #{ngpt_forward.25} parent=1 // pred_region
      %v402 = vld [vmem:[#allocation2] sm:$0xff]
      %v403 = vld [vmem:[#allocation2 + $0x8] sm:$0xff]
      %v404 = vld [vmem:[#allocation2 + $0x10] sm:$0xff]
      %v405 = vld [vmem:[#allocation2 + $0x18] sm:$0xff]
      %v406 = vld [vmem:[#allocation2 + $0x20] sm:$0xff]
      %v407 = vld [vmem:[#allocation2 + $0x28] sm:$0xff]
      %v408 = vld [vmem:[#allocation2 + $0x30] sm:$0xff]
      %v409 = vld [vmem:[#allocation2 + $0x38] sm:$0xff]
      %v410 = vld [vmem:[#allocation2 + $0x40] sm:$0xff]
      %v411 = vld [vmem:[#allocation2 + $0x48] sm:$0xff]
      %v412 = vld [vmem:[#allocation2 + $0x50] sm:$0xff]
      %v413 = vld [vmem:[#allocation2 + $0x58] sm:$0xff]
      %v414 = vld [vmem:[#allocation2 + $0x60] sm:$0xff]
      %v415 = vld [vmem:[#allocation2 + $0x68] sm:$0xff]
      %v416 = vld [vmem:[#allocation2 + $0x70] sm:$0xff]
      %v417 = vld [vmem:[#allocation2 + $0x78] sm:$0xff]
      %v418 = vld [vmem:[%s2] sm:$0x3]
      %v420 = vlaneseq
      %v421 = vshrl.u32 %v420, 7
      %v422 = vsub.s32 0, %v421
      %v423 = vrot.slane %v418, %v422
      %v424 = vlaneseq
      %v425 = vshrl.u32 %v424, 7
      %v426 = vsub.s32 1, %v425
      %v427 = vrot.slane %v418, %v426
      %v430 = vadd.f32 %v402, %v423
      %v431 = vadd.f32 %v403, %v427
      %v432 = vadd.f32 %v404, %v423
      %v433 = vadd.f32 %v405, %v427
      %v434 = vadd.f32 %v406, %v423
      %v435 = vadd.f32 %v407, %v427
      %v436 = vadd.f32 %v408, %v423
      %v437 = vadd.f32 %v409, %v427
      %v438 = vadd.f32 %v410, %v423
      %v439 = vadd.f32 %v411, %v427
      %v440 = vadd.f32 %v412, %v423
      %v441 = vadd.f32 %v413, %v427
      %v442 = vadd.f32 %v414, %v423
      %v443 = vadd.f32 %v415, %v427
      %v444 = vadd.f32 %v416, %v423
      %v445 = vadd.f32 %v417, %v427
      %v446 = vld [vmem:[%s3] sm:$0x3]
      %v448 = vlaneseq
      %v449 = vshrl.u32 %v448, 7
      %v450 = vsub.s32 0, %v449
      %v451 = vrot.slane %v446, %v450
      %v452 = vlaneseq
      %v453 = vshrl.u32 %v452, 7
      %v454 = vsub.s32 1, %v453
      %v455 = vrot.slane %v446, %v454
      %v458 = vmul.f32 %v430, %v451
      %v459 = vmul.f32 %v431, %v455
      %v460 = vmul.f32 %v432, %v451
      %v461 = vmul.f32 %v433, %v455
      %v462 = vmul.f32 %v434, %v451
      %v463 = vmul.f32 %v435, %v455
      %v464 = vmul.f32 %v436, %v451
      %v465 = vmul.f32 %v437, %v455
      %v466 = vmul.f32 %v438, %v451
      %v467 = vmul.f32 %v439, %v455
      %v468 = vmul.f32 %v440, %v451
      %v469 = vmul.f32 %v441, %v455
      %v470 = vmul.f32 %v442, %v451
      %v471 = vmul.f32 %v443, %v455
      %v472 = vmul.f32 %v444, %v451
      %v473 = vmul.f32 %v445, %v455
      %474 = vst [vmem:[#allocation3] sm:$0xff] %v458
      %475 = vst [vmem:[#allocation3 + $0x8] sm:$0xff] %v459
      %476 = vst [vmem:[#allocation3 + $0x10] sm:$0xff] %v460
      %477 = vst [vmem:[#allocation3 + $0x18] sm:$0xff] %v461
      %478 = vst [vmem:[#allocation3 + $0x20] sm:$0xff] %v462
      %479 = vst [vmem:[#allocation3 + $0x28] sm:$0xff] %v463
      %480 = vst [vmem:[#allocation3 + $0x30] sm:$0xff] %v464
      %481 = vst [vmem:[#allocation3 + $0x38] sm:$0xff] %v465
      %482 = vst [vmem:[#allocation3 + $0x40] sm:$0xff] %v466
      %483 = vst [vmem:[#allocation3 + $0x48] sm:$0xff] %v467
      %484 = vst [vmem:[#allocation3 + $0x50] sm:$0xff] %v468
      %485 = vst [vmem:[#allocation3 + $0x58] sm:$0xff] %v469
      %486 = vst [vmem:[#allocation3 + $0x60] sm:$0xff] %v470
      %487 = vst [vmem:[#allocation3 + $0x68] sm:$0xff] %v471
      %488 = vst [vmem:[#allocation3 + $0x70] sm:$0xff] %v472
      %489 = vst [vmem:[#allocation3 + $0x78] sm:$0xff] %v473
    $region25: #{ngpt_forward.25} parent=1 // pred_fallthru
      _
    // Predicated region
    $region26: #{ngpt_forward.25} parent=1 // pred_check
      _
    $region27: #{ngpt_forward.25} parent=1 // pred_check_branch
      %491 = sbr.rel (0) target = $region29
    $region28: #{ngpt_forward.25} parent=1 // pred_region
      %s493 = ssub.s32 2048, 2048
      %494 = vsyncadd [#allocation4], %s493
      %s495 = sshll.u32 [#allocation3], 4
      %s496 = int_to_ptr.vmem [resolvable:$true] %s495
      %501 = dma.vmem_to_hbm [thread:$0]  %s496, 2048, %s4, [#allocation4], 256, 256, 16
    $region29: #{ngpt_forward.25} parent=1 // pred_fallthru
      _
    // Predicated region
    $region30: #{ngpt_forward.25} parent=1 // pred_check
      _
    $region31: #{ngpt_forward.25} parent=1 // pred_check_branch
      %503 = sbr.rel (0) target = $region33
    $region32: #{ngpt_forward.25} parent=1 // pred_region
      %504 = dma.done [#allocation4], 2048
    $region33: #{ngpt_forward.25} parent=1 // pred_fallthru
      _
    %505 = vsyncpa [#allocation4], 1

</llo_original>
